<compile_context>
chip_gen: v7x
topology: tpu7x:2x2x1
jax: 0.10.0
libtpu: 0.0.40
codegen_flags: <defaults>
</compile_context>

<pallas_src>
import math

import jax
import jax.numpy as jnp
from jax.experimental import pallas as pl
from jax.experimental.pallas import tpu as pltpu


# ----------------------- fused layer kernel ---------------------------------
def _make_layer_kernel(head_dim, eps):
    D = head_dim

    def kernel(x_ref, slopes_ref, wqkv_ref, bqkv_ref, wo_ref, bo_ref,
               ln1_g_ref, ln1_b_ref, w1_ref, b1_ref, w2_ref, b2_ref,
               ln2_g_ref, ln2_b_ref, out_ref, acc_ref):
        h = pl.program_id(1)

        @pl.when(h == 0)
        def _init():
            # residual (hidden_states) + attention output-projection bias
            acc_ref[...] = x_ref[...].astype(jnp.float32) + bo_ref[...]

        x = x_ref[...]                                        # (S, H) bf16
        S = x.shape[0]

        # Fused QKV projection: one MXU push with N = 3*D output lanes.
        # 1/sqrt(D) is already folded into the q columns of wqkv / bqkv.
        qkv = jnp.dot(x, wqkv_ref[h],
                      preferred_element_type=jnp.float32) + bqkv_ref[h]
        q = qkv[:, 0 * D:1 * D].astype(x.dtype)
        k = qkv[:, 1 * D:2 * D].astype(x.dtype)
        v = qkv[:, 2 * D:3 * D].astype(x.dtype)

        # scores = q k^T (scale folded in) + in-kernel ALiBi bias
        scores = jax.lax.dot_general(
            q, k, (((1,), (1,)), ((), ())),
            preferred_element_type=jnp.float32)               # (S, S) f32
        ii = jax.lax.broadcasted_iota(jnp.int32, (S, S), 0)
        jj = jax.lax.broadcasted_iota(jnp.int32, (S, S), 1)
        dist = jnp.abs((ii - jj).astype(jnp.float32))
        scores = scores - slopes_ref[h] * dist

        m = jnp.max(scores, axis=-1, keepdims=True)
        p = jnp.exp(scores - m)
        denom = jnp.sum(p, axis=-1, keepdims=True)
        probs = p * pl.reciprocal(denom, approx=True)
        # attention dropout is identity in eval mode.

        ctx = jnp.dot(probs.astype(x.dtype), v,
                      preferred_element_type=jnp.float32)     # (S, D)

        # per-head slice of the output projection, accumulated over heads
        acc_ref[...] += jnp.dot(ctx.astype(x.dtype), wo_ref[h],
                                preferred_element_type=jnp.float32)

        @pl.when(h == pl.num_programs(1) - 1)
        def _finalize():
            cdt = w1_ref.dtype
            # ------ LayerNorm 1 (attention output) ------
            y = acc_ref[...]
            mean = jnp.mean(y, axis=-1, keepdims=True)
            d = y - mean
            var = jnp.mean(d * d, axis=-1, keepdims=True)
            a = d * jax.lax.rsqrt(var + eps) * ln1_g_ref[...] + ln1_b_ref[...]

            # ------ feed-forward: dense -> GELU -> dense -> +res -> LN2 ------
            h1 = jnp.dot(a.astype(cdt), w1_ref[...],
                         preferred_element_type=jnp.float32) + b1_ref[...]
            # TODO(synk): torch nn.GELU default is the exact erf form; tanh
            # approximation used for guaranteed Mosaic lowering (|diff| < 1e-3).
            c = 0.7978845608028654  # sqrt(2/pi)
            g = 0.5 * h1 * (1.0 + jnp.tanh(c * (h1 + 0.044715 * h1 * h1 * h1)))
            z = jnp.dot(g.astype(cdt), w2_ref[...],
                        preferred_element_type=jnp.float32) + b2_ref[...] + a
            mean2 = jnp.mean(z, axis=-1, keepdims=True)
            d2 = z - mean2
            var2 = jnp.mean(d2 * d2, axis=-1, keepdims=True)
            out_ref[...] = (d2 * jax.lax.rsqrt(var2 + eps) * ln2_g_ref[...]
                            + ln2_b_ref[...]).astype(out_ref.dtype)

    return kernel


# --------------------------------- wrapper -----------------------------------
def event_bert_layer(hidden_states, alibi_slopes, params, *, eps=1e-12,
                     compute_dtype=jnp.bfloat16, out_dtype=jnp.float32):
    """Forward pass of EventBertLayer (eval mode; ALiBi bias added to scores)."""
    B, S, H = hidden_states.shape
    nH, _, D = params["wq"].shape
    I = params["w1"].shape[1]
    scale = 1.0 / math.sqrt(D)

    x = hidden_states.astype(compute_dtype)

    # Fused QKV weights with the score scale folded into the q columns.
    wqkv = jnp.concatenate(
        [params["wq"] * scale, params["wk"], params["wv"]], axis=-1
    ).astype(compute_dtype)                                       # [nH, H, 3D]
    bqkv = jnp.concatenate(
        [params["bq"] * scale, params["bk"], params["bv"]], axis=-1
    ).reshape(nH, 1, 3 * D).astype(jnp.float32)                   # [nH, 1, 3D]

    wo = params["wo"].astype(compute_dtype)                       # [nH, D, H]
    bo = params["bo"].reshape(1, H).astype(jnp.float32)
    ln1_g = params["ln1_gamma"].reshape(1, H).astype(jnp.float32)
    ln1_b = params["ln1_beta"].reshape(1, H).astype(jnp.float32)
    w1 = params["w1"].astype(compute_dtype)                       # [H, I]
    fb1 = params["b1"].reshape(1, I).astype(jnp.float32)
    w2 = params["w2"].astype(compute_dtype)                       # [I, H]
    fb2 = params["b2"].reshape(1, H).astype(jnp.float32)
    ln2_g = params["ln2_gamma"].reshape(1, H).astype(jnp.float32)
    ln2_b = params["ln2_beta"].reshape(1, H).astype(jnp.float32)
    slopes = alibi_slopes.reshape(nH).astype(jnp.float32)

    def resident(shape):
        return pl.BlockSpec(shape, lambda b, h: tuple(0 for _ in shape))

    in_specs = [
        pl.BlockSpec((None, S, H), lambda b, h: (b, 0, 0)),        # x
        pl.BlockSpec(memory_space=pltpu.MemorySpace.SMEM),          # alibi slopes
        resident((nH, H, 3 * D)),                                   # wqkv
        resident((nH, 1, 3 * D)),                                   # bqkv
        resident((nH, D, H)),                                       # wo
        resident((1, H)),                                           # bo
        resident((1, H)), resident((1, H)),                         # ln1 gamma/beta
        resident((H, I)), resident((1, I)),                         # w1, b1
        resident((I, H)), resident((1, H)),                         # w2, b2
        resident((1, H)), resident((1, H)),                         # ln2 gamma/beta
    ]

    # Generation-safe VMEM budget: actual footprint (double-buffered blocks +
    # f32 accumulator + live scores/probs), clamped to [32 MiB, 48 MiB].
    cbytes = jnp.dtype(compute_dtype).itemsize
    obytes = jnp.dtype(out_dtype).itemsize
    blk_bytes = (S * H * cbytes + S * H * obytes
                 + nH * H * 3 * D * cbytes + nH * 3 * D * 4
                 + nH * D * H * cbytes
                 + H * I * cbytes + I * H * cbytes
                 + (6 * H + I) * 4)
    scratch_bytes = S * H * 4 + 2 * S * S * 4
    vmem_limit = int(min(48 * 1024 * 1024,
                         max(32 * 1024 * 1024, 2 * blk_bytes + scratch_bytes)))

    out = pl.pallas_call(
        _make_layer_kernel(D, eps),
        out_shape=jax.ShapeDtypeStruct((B, S, H), out_dtype),
        grid=(B, nH),
        in_specs=in_specs,
        out_specs=pl.BlockSpec((None, S, H), lambda b, h: (b, 0, 0)),
        scratch_shapes=[pltpu.VMEM((S, H), jnp.float32)],
        compiler_params=pltpu.CompilerParams(
            dimension_semantics=("parallel", "arbitrary"),
            vmem_limit_bytes=vmem_limit),
    )(x, slopes, wqkv, bqkv, wo, bo, ln1_g, ln1_b, w1, fb1, w2, fb2,
      ln2_g, ln2_b)

    return out


# --------------------------- pure-JAX reference ------------------------------
def event_bert_layer_ref(hidden_states, alibi_bias, params, *, eps=1e-12):
    x = hidden_states.astype(jnp.float32)
    wq, wk, wv, wo = params["wq"], params["wk"], params["wv"], params["wo"]
    nH, _, D = wq.shape

    q = jnp.einsum("bsh,nhd->bnsd", x, wq) + params["bq"][None, :, None, :]
    k = jnp.einsum("bsh,nhd->bnsd", x, wk) + params["bk"][None, :, None, :]
    v = jnp.einsum("bsh,nhd->bnsd", x, wv) + params["bv"][None, :, None, :]

    scores = jnp.einsum("bnqd,bnkd->bnqk", q, k) / math.sqrt(D)
    scores = scores + alibi_bias[None]
    probs = jax.nn.softmax(scores, axis=-1)
    ctx = jnp.einsum("bnqk,bnkd->bnqd", probs, v)
    attn_dense = jnp.einsum("bnsd,ndh->bsh", ctx, wo) + params["bo"]

    def ln(y, g, b):
        mu = jnp.mean(y, axis=-1, keepdims=True)
        var = jnp.mean((y - mu) ** 2, axis=-1, keepdims=True)
        return (y - mu) / jnp.sqrt(var + eps) * g + b

    attn_out = ln(attn_dense + x, params["ln1_gamma"], params["ln1_beta"])
    inter = jax.nn.gelu(attn_out @ params["w1"] + params["b1"], approximate=False)
    ffn = inter @ params["w2"] + params["b2"]
    return ln(ffn + attn_out, params["ln2_gamma"], params["ln2_beta"])


# --------------------------------- main --------------------------------------
if __name__ == "__main__":
    # Small, lane-aligned config consistent with the module.
    B, S, H, nH = 2, 128, 256, 2
    D = H // nH                     # 128
    I = 4 * H                       # 1024

    key = jax.random.PRNGKey(0)
    ks = jax.random.split(key, 16)
    nrm = jax.random.normal

    params = {
        "wq": 0.05 * nrm(ks[0], (nH, H, D), jnp.float32),
        "wk": 0.05 * nrm(ks[1], (nH, H, D), jnp.float32),
        "wv": 0.05 * nrm(ks[2], (nH, H, D), jnp.float32),
        "bq": 0.01 * nrm(ks[3], (nH, D), jnp.float32),
        "bk": 0.01 * nrm(ks[4], (nH, D), jnp.float32),
        "bv": 0.01 * nrm(ks[5], (nH, D), jnp.float32),
        "wo": 0.05 * nrm(ks[6], (nH, D, H), jnp.float32),
        "bo": 0.01 * nrm(ks[7], (H,), jnp.float32),
        "ln1_gamma": jnp.ones((H,), jnp.float32),
        "ln1_beta": jnp.zeros((H,), jnp.float32),
        "w1": 0.05 * nrm(ks[8], (H, I), jnp.float32),
        "b1": 0.01 * nrm(ks[9], (I,), jnp.float32),
        "w2": 0.05 * nrm(ks[10], (I, H), jnp.float32),
        "b2": 0.01 * nrm(ks[11], (H,), jnp.float32),
        "ln2_gamma": jnp.ones((H,), jnp.float32),
        "ln2_beta": jnp.zeros((H,), jnp.float32),
    }

    hidden_states = nrm(ks[12], (B, S, H), jnp.float32)

    # ALiBi: per-head slopes; the module receives the precomputed bias
    # -slope * |i - j|, which the kernel rebuilds in-kernel from the slopes.
    slopes = 2.0 ** (-8.0 * (jnp.arange(1, nH + 1, dtype=jnp.float32) / nH))
    pos = jnp.arange(S)
    dist = jnp.abs(pos[:, None] - pos[None, :]).astype(jnp.float32)
    alibi_bias = -slopes[:, None, None] * dist[None]          # [nH, S, S]

    out = event_bert_layer(hidden_states, slopes, params)
    out = jax.block_until_ready(out)

    ref = event_bert_layer_ref(hidden_states, alibi_bias, params)
    assert out.shape == (B, S, H)
    max_err = float(jnp.max(jnp.abs(out - ref)))
    assert jnp.allclose(out, ref, atol=5e-2, rtol=5e-2), f"mismatch vs reference: {max_err}"

    print("KERNEL_OK")
</pallas_src>

<mosaic_0001>
module attributes {stable_mosaic.version = 11 : i64} {
  func.func @kernel(%arg0: i32, %arg1: i32, %arg2: memref<1x128x256xbf16, #tpu.memory_space<vmem>>, %arg3: memref<2xf32, #tpu.memory_space<smem>>, %arg4: memref<2x256x384xbf16, #tpu.memory_space<vmem>>, %arg5: memref<2x1x384xf32, #tpu.memory_space<vmem>>, %arg6: memref<2x128x256xbf16, #tpu.memory_space<vmem>>, %arg7: memref<1x256xf32, #tpu.memory_space<vmem>>, %arg8: memref<1x256xf32, #tpu.memory_space<vmem>>, %arg9: memref<1x256xf32, #tpu.memory_space<vmem>>, %arg10: memref<256x1024xbf16, #tpu.memory_space<vmem>>, %arg11: memref<1x1024xf32, #tpu.memory_space<vmem>>, %arg12: memref<1024x256xbf16, #tpu.memory_space<vmem>>, %arg13: memref<1x256xf32, #tpu.memory_space<vmem>>, %arg14: memref<1x256xf32, #tpu.memory_space<vmem>>, %arg15: memref<1x256xf32, #tpu.memory_space<vmem>>, %arg16: memref<1x128x256xf32, #tpu.memory_space<vmem>>, %arg17: memref<128x256xf32, #tpu.memory_space<vmem>>) attributes {dimension_semantics = [#tpu.dimension_semantics<parallel>, #tpu.dimension_semantics<arbitrary>], iteration_bounds = array<i64: 2, 2>, scalar_prefetch = 0 : i64, scratch_operands = 1 : i64, tpu.core_type = #tpu.core_type<tc>, window_params = [{transform_indices = @transform_0, window_bounds = array<i64: 1, 128, 256>}, {transform_indices = @transform_1, window_bounds = array<i64: 2>}, {pipeline_mode = #tpu.pipeline_mode<synchronous>, transform_indices = @transform_2, window_bounds = array<i64: 2, 256, 384>}, {pipeline_mode = #tpu.pipeline_mode<synchronous>, transform_indices = @transform_3, window_bounds = array<i64: 2, 1, 384>}, {pipeline_mode = #tpu.pipeline_mode<synchronous>, transform_indices = @transform_4, window_bounds = array<i64: 2, 128, 256>}, {pipeline_mode = #tpu.pipeline_mode<synchronous>, transform_indices = @transform_5, window_bounds = array<i64: 1, 256>}, {pipeline_mode = #tpu.pipeline_mode<synchronous>, transform_indices = @transform_6, window_bounds = array<i64: 1, 256>}, {pipeline_mode = #tpu.pipeline_mode<synchronous>, transform_indices = @transform_7, window_bounds = array<i64: 1, 256>}, {pipeline_mode = #tpu.pipeline_mode<synchronous>, transform_indices = @transform_8, window_bounds = array<i64: 256, 1024>}, {pipeline_mode = #tpu.pipeline_mode<synchronous>, transform_indices = @transform_9, window_bounds = array<i64: 1, 1024>}, {pipeline_mode = #tpu.pipeline_mode<synchronous>, transform_indices = @transform_10, window_bounds = array<i64: 1024, 256>}, {pipeline_mode = #tpu.pipeline_mode<synchronous>, transform_indices = @transform_11, window_bounds = array<i64: 1, 256>}, {pipeline_mode = #tpu.pipeline_mode<synchronous>, transform_indices = @transform_12, window_bounds = array<i64: 1, 256>}, {pipeline_mode = #tpu.pipeline_mode<synchronous>, transform_indices = @transform_13, window_bounds = array<i64: 1, 256>}, {transform_indices = @transform_14, window_bounds = array<i64: 1, 128, 256>}]} {
    %c0_i32 = arith.constant 0 : i32
    %0 = arith.cmpi eq, %arg1, %c0_i32 : i32
    %1 = arith.extui %0 : i1 to i32
    %c0_i32_0 = arith.constant 0 : i32
    %2 = arith.cmpi ne, %1, %c0_i32_0 : i32
    scf.if %2 {
      %c0_19 = arith.constant 0 : index
      %c0_20 = arith.constant 0 : index
      %c0_21 = arith.constant 0 : index
      %54 = vector.load %arg2[%c0_19, %c0_20, %c0_21] : memref<1x128x256xbf16, #tpu.memory_space<vmem>>, vector<1x128x256xbf16>
      %55 = vector.shape_cast %54 : vector<1x128x256xbf16> to vector<128x256xbf16>
      %56 = arith.extf %55 : vector<128x256xbf16> to vector<128x256xf32>
      %c0_22 = arith.constant 0 : index
      %c0_23 = arith.constant 0 : index
      %57 = vector.load %arg7[%c0_22, %c0_23] : memref<1x256xf32, #tpu.memory_space<vmem>>, vector<1x256xf32>
      %58 = vector.broadcast %57 : vector<1x256xf32> to vector<128x256xf32>
      %59 = arith.addf %56, %58 : vector<128x256xf32>
      %c0_24 = arith.constant 0 : index
      %c0_25 = arith.constant 0 : index
      %60 = vector.load %arg17[%c0_24, %c0_25] : memref<128x256xf32, #tpu.memory_space<vmem>>, vector<128x256xf32>
      tpu.vector_store %arg17[%c0_24, %c0_25], %59 {strides = array<i32>} : memref<128x256xf32, #tpu.memory_space<vmem>>, vector<128x256xf32>,
    } else {
    }
    %c0 = arith.constant 0 : index
    %c0_1 = arith.constant 0 : index
    %c0_2 = arith.constant 0 : index
    %3 = vector.load %arg2[%c0, %c0_1, %c0_2] : memref<1x128x256xbf16, #tpu.memory_space<vmem>>, vector<1x128x256xbf16>
    %4 = vector.shape_cast %3 : vector<1x128x256xbf16> to vector<128x256xbf16>
    %5 = arith.index_cast %arg1 : i32 to index
    %c0_3 = arith.constant 0 : index
    %c0_4 = arith.constant 0 : index
    %6 = vector.load %arg4[%5, %c0_3, %c0_4] : memref<2x256x384xbf16, #tpu.memory_space<vmem>>, vector<1x256x384xbf16>
    %7 = vector.shape_cast %6 : vector<1x256x384xbf16> to vector<256x384xbf16>
    %cst = arith.constant dense<0.000000e+00> : vector<128x384xf32>
    %8 = tpu.matmul %4, %7, %cst {dimension_numbers = #tpu.dot_dimension_numbers<[1], [0], [0], [1], [0, 0, 1, 1], [], []>} : vector<128x256xbf16>, vector<256x384xbf16>, vector<128x384xf32> -> vector<128x384xf32>
    %9 = arith.index_cast %arg1 : i32 to index
    %c0_5 = arith.constant 0 : index
    %c0_6 = arith.constant 0 : index
    %10 = vector.load %arg5[%9, %c0_5, %c0_6] : memref<2x1x384xf32, #tpu.memory_space<vmem>>, vector<1x1x384xf32>
    %11 = vector.shape_cast %10 : vector<1x1x384xf32> to vector<1x384xf32>
    %12 = vector.broadcast %11 : vector<1x384xf32> to vector<128x384xf32>
    %13 = arith.addf %8, %12 : vector<128x384xf32>
    %14 = vector.extract_strided_slice %13 {offsets = [0, 0], sizes = [128, 128], strides = [1, 1]} : vector<128x384xf32> to vector<128x128xf32>
    %15 = arith.truncf %14 : vector<128x128xf32> to vector<128x128xbf16>
    %16 = vector.extract_strided_slice %13 {offsets = [0, 128], sizes = [128, 128], strides = [1, 1]} : vector<128x384xf32> to vector<128x128xf32>
    %17 = arith.truncf %16 : vector<128x128xf32> to vector<128x128xbf16>
    %18 = vector.extract_strided_slice %13 {offsets = [0, 256], sizes = [128, 128], strides = [1, 1]} : vector<128x384xf32> to vector<128x128xf32>
    %19 = arith.truncf %18 : vector<128x128xf32> to vector<128x128xbf16>
    %cst_7 = arith.constant dense<0.000000e+00> : vector<128x128xf32>
    %20 = tpu.matmul %15, %17, %cst_7 {dimension_numbers = #tpu.dot_dimension_numbers<[1], [1], [0], [0], [0, 0, 1, 0], [], []>} : vector<128x128xbf16>, vector<128x128xbf16>, vector<128x128xf32> -> vector<128x128xf32>
    %21 = tpu.iota {dimensions = array<i32: 0>} : vector<128x128xi32>
    %22 = tpu.iota {dimensions = array<i32: 1>} : vector<128x128xi32>
    %23 = arith.subi %21, %22 : vector<128x128xi32>
    %24 = arith.sitofp %23 : vector<128x128xi32> to vector<128x128xf32>
    %25 = math.absf %24 : vector<128x128xf32>
    %26 = arith.index_cast %arg1 : i32 to index
    %27 = memref.load %arg3[%26] : memref<2xf32, #tpu.memory_space<smem>>
    %28 = vector.broadcast %27 : f32 to vector<128x128xf32>
    %29 = arith.mulf %28, %25 : vector<128x128xf32>
    %30 = arith.subf %20, %29 : vector<128x128xf32>
    %cst_8 = arith.constant dense<0xFF800000> : vector<128xf32>
    %31 = vector.multi_reduction <maximumf>, %30, %cst_8 [1] : vector<128x128xf32> to vector<128xf32>
    %32 = vector.shape_cast %31 : vector<128xf32> to vector<128x1xf32>
    %33 = vector.broadcast %32 : vector<128x1xf32> to vector<128x128xf32>
    %34 = arith.subf %30, %33 : vector<128x128xf32>
    %35 = math.exp %34 : vector<128x128xf32>
    %cst_9 = arith.constant dense<0.000000e+00> : vector<128xf32>
    %36 = vector.multi_reduction <add>, %35, %cst_9 [1] : vector<128x128xf32> to vector<128xf32>
    %37 = vector.shape_cast %36 : vector<128xf32> to vector<128x1xf32>
    %38 = tpu.reciprocal %37 {approx = true} : vector<128x1xf32> -> vector<128x1xf32>
    %39 = vector.broadcast %38 : vector<128x1xf32> to vector<128x128xf32>
    %40 = arith.mulf %35, %39 : vector<128x128xf32>
    %41 = arith.truncf %40 : vector<128x128xf32> to vector<128x128xbf16>
    %cst_10 = arith.constant dense<0.000000e+00> : vector<128x128xf32>
    %42 = tpu.matmul %41, %19, %cst_10 {dimension_numbers = #tpu.dot_dimension_numbers<[1], [0], [0], [1], [0, 0, 1, 1], [], []>} : vector<128x128xbf16>, vector<128x128xbf16>, vector<128x128xf32> -> vector<128x128xf32>
    %c0_11 = arith.constant 0 : index
    %c0_12 = arith.constant 0 : index
    %43 = vector.load %arg17[%c0_11, %c0_12] : memref<128x256xf32, #tpu.memory_space<vmem>>, vector<128x256xf32>
    %44 = arith.truncf %42 : vector<128x128xf32> to vector<128x128xbf16>
    %45 = arith.index_cast %arg1 : i32 to index
    %c0_13 = arith.constant 0 : index
    %c0_14 = arith.constant 0 : index
    %46 = vector.load %arg6[%45, %c0_13, %c0_14] : memref<2x128x256xbf16, #tpu.memory_space<vmem>>, vector<1x128x256xbf16>
    %47 = vector.shape_cast %46 : vector<1x128x256xbf16> to vector<128x256xbf16>
    %cst_15 = arith.constant dense<0.000000e+00> : vector<128x256xf32>
    %48 = tpu.matmul %44, %47, %cst_15 {dimension_numbers = #tpu.dot_dimension_numbers<[1], [0], [0], [1], [0, 0, 1, 1], [], []>} : vector<128x128xbf16>, vector<128x256xbf16>, vector<128x256xf32> -> vector<128x256xf32>
    %49 = arith.addf %43, %48 : vector<128x256xf32>
    %c0_16 = arith.constant 0 : index
    %c0_17 = arith.constant 0 : index
    %50 = vector.load %arg17[%c0_16, %c0_17] : memref<128x256xf32, #tpu.memory_space<vmem>>, vector<128x256xf32>
    tpu.vector_store %arg17[%c0_16, %c0_17], %49 {strides = array<i32>} : memref<128x256xf32, #tpu.memory_space<vmem>>, vector<128x256xf32>,
    %c1_i32 = arith.constant 1 : i32
    %51 = arith.cmpi eq, %arg1, %c1_i32 : i32
    %52 = arith.extui %51 : i1 to i32
    %c0_i32_18 = arith.constant 0 : i32
    %53 = arith.cmpi ne, %52, %c0_i32_18 : i32
    scf.if %53 {
      %c0_19 = arith.constant 0 : index
      %c0_20 = arith.constant 0 : index
      %54 = vector.load %arg17[%c0_19, %c0_20] : memref<128x256xf32, #tpu.memory_space<vmem>>, vector<128x256xf32>
      %cst_21 = arith.constant dense<0.000000e+00> : vector<128xf32>
      %55 = vector.multi_reduction <add>, %54, %cst_21 [1] : vector<128x256xf32> to vector<128xf32>
      %56 = vector.shape_cast %55 : vector<128xf32> to vector<128x1xf32>
      %cst_22 = arith.constant 2.560000e+02 : f32
      %57 = vector.broadcast %cst_22 : f32 to vector<128x1xf32>
      %58 = arith.divf %56, %57 : vector<128x1xf32>
      %59 = vector.broadcast %58 : vector<128x1xf32> to vector<128x256xf32>
      %60 = arith.subf %54, %59 : vector<128x256xf32>
      %61 = arith.mulf %60, %60 : vector<128x256xf32>
      %cst_23 = arith.constant dense<0.000000e+00> : vector<128xf32>
      %62 = vector.multi_reduction <add>, %61, %cst_23 [1] : vector<128x256xf32> to vector<128xf32>
      %63 = vector.shape_cast %62 : vector<128xf32> to vector<128x1xf32>
      %cst_24 = arith.constant 2.560000e+02 : f32
      %64 = vector.broadcast %cst_24 : f32 to vector<128x1xf32>
      %65 = arith.divf %63, %64 : vector<128x1xf32>
      %cst_25 = arith.constant 9.99999996E-13 : f32
      %66 = vector.broadcast %cst_25 : f32 to vector<128x1xf32>
      %67 = arith.addf %65, %66 : vector<128x1xf32>
      %68 = math.rsqrt %67 : vector<128x1xf32>
      %69 = vector.broadcast %68 : vector<128x1xf32> to vector<128x256xf32>
      %70 = arith.mulf %60, %69 : vector<128x256xf32>
      %c0_26 = arith.constant 0 : index
      %c0_27 = arith.constant 0 : index
      %71 = vector.load %arg8[%c0_26, %c0_27] : memref<1x256xf32, #tpu.memory_space<vmem>>, vector<1x256xf32>
      %72 = vector.broadcast %71 : vector<1x256xf32> to vector<128x256xf32>
      %73 = arith.mulf %70, %72 : vector<128x256xf32>
      %c0_28 = arith.constant 0 : index
      %c0_29 = arith.constant 0 : index
      %74 = vector.load %arg9[%c0_28, %c0_29] : memref<1x256xf32, #tpu.memory_space<vmem>>, vector<1x256xf32>
      %75 = vector.broadcast %74 : vector<1x256xf32> to vector<128x256xf32>
      %76 = arith.addf %73, %75 : vector<128x256xf32>
      %77 = arith.truncf %76 : vector<128x256xf32> to vector<128x256xbf16>
      %c0_30 = arith.constant 0 : index
      %c0_31 = arith.constant 0 : index
      %78 = vector.load %arg10[%c0_30, %c0_31] : memref<256x1024xbf16, #tpu.memory_space<vmem>>, vector<256x1024xbf16>
      %cst_32 = arith.constant dense<0.000000e+00> : vector<128x1024xf32>
      %79 = tpu.matmul %77, %78, %cst_32 {dimension_numbers = #tpu.dot_dimension_numbers<[1], [0], [0], [1], [0, 0, 1, 1], [], []>} : vector<128x256xbf16>, vector<256x1024xbf16>, vector<128x1024xf32> -> vector<128x1024xf32>
      %c0_33 = arith.constant 0 : index
      %c0_34 = arith.constant 0 : index
      %80 = vector.load %arg11[%c0_33, %c0_34] : memref<1x1024xf32, #tpu.memory_space<vmem>>, vector<1x1024xf32>
      %81 = vector.broadcast %80 : vector<1x1024xf32> to vector<128x1024xf32>
      %82 = arith.addf %79, %81 : vector<128x1024xf32>
      %cst_35 = arith.constant 5.000000e-01 : f32
      %83 = vector.broadcast %cst_35 : f32 to vector<128x1024xf32>
      %84 = arith.mulf %83, %82 : vector<128x1024xf32>
      %cst_36 = arith.constant 4.471500e-02 : f32
      %85 = vector.broadcast %cst_36 : f32 to vector<128x1024xf32>
      %86 = arith.mulf %85, %82 : vector<128x1024xf32>
      %87 = arith.mulf %86, %82 : vector<128x1024xf32>
      %88 = arith.mulf %87, %82 : vector<128x1024xf32>
      %89 = arith.addf %82, %88 : vector<128x1024xf32>
      %cst_37 = arith.constant 0.797884583 : f32
      %90 = vector.broadcast %cst_37 : f32 to vector<128x1024xf32>
      %91 = arith.mulf %90, %89 : vector<128x1024xf32>
      %92 = math.tanh %91 : vector<128x1024xf32>
      %cst_38 = arith.constant 1.000000e+00 : f32
      %93 = vector.broadcast %cst_38 : f32 to vector<128x1024xf32>
      %94 = arith.addf %93, %92 : vector<128x1024xf32>
      %95 = arith.mulf %84, %94 : vector<128x1024xf32>
      %96 = arith.truncf %95 : vector<128x1024xf32> to vector<128x1024xbf16>
      %c0_39 = arith.constant 0 : index
      %c0_40 = arith.constant 0 : index
      %97 = vector.load %arg12[%c0_39, %c0_40] : memref<1024x256xbf16, #tpu.memory_space<vmem>>, vector<1024x256xbf16>
      %cst_41 = arith.constant dense<0.000000e+00> : vector<128x256xf32>
      %98 = tpu.matmul %96, %97, %cst_41 {dimension_numbers = #tpu.dot_dimension_numbers<[1], [0], [0], [1], [0, 0, 1, 1], [], []>} : vector<128x1024xbf16>, vector<1024x256xbf16>, vector<128x256xf32> -> vector<128x256xf32>
      %c0_42 = arith.constant 0 : index
      %c0_43 = arith.constant 0 : index
      %99 = vector.load %arg13[%c0_42, %c0_43] : memref<1x256xf32, #tpu.memory_space<vmem>>, vector<1x256xf32>
      %100 = vector.broadcast %99 : vector<1x256xf32> to vector<128x256xf32>
      %101 = arith.addf %98, %100 : vector<128x256xf32>
      %102 = arith.addf %101, %76 : vector<128x256xf32>
      %cst_44 = arith.constant dense<0.000000e+00> : vector<128xf32>
      %103 = vector.multi_reduction <add>, %102, %cst_44 [1] : vector<128x256xf32> to vector<128xf32>
      %104 = vector.shape_cast %103 : vector<128xf32> to vector<128x1xf32>
      %cst_45 = arith.constant 2.560000e+02 : f32
      %105 = vector.broadcast %cst_45 : f32 to vector<128x1xf32>
      %106 = arith.divf %104, %105 : vector<128x1xf32>
      %107 = vector.broadcast %106 : vector<128x1xf32> to vector<128x256xf32>
      %108 = arith.subf %102, %107 : vector<128x256xf32>
      %109 = arith.mulf %108, %108 : vector<128x256xf32>
      %cst_46 = arith.constant dense<0.000000e+00> : vector<128xf32>
      %110 = vector.multi_reduction <add>, %109, %cst_46 [1] : vector<128x256xf32> to vector<128xf32>
      %111 = vector.shape_cast %110 : vector<128xf32> to vector<128x1xf32>
      %cst_47 = arith.constant 2.560000e+02 : f32
      %112 = vector.broadcast %cst_47 : f32 to vector<128x1xf32>
      %113 = arith.divf %111, %112 : vector<128x1xf32>
      %cst_48 = arith.constant 9.99999996E-13 : f32
      %114 = vector.broadcast %cst_48 : f32 to vector<128x1xf32>
      %115 = arith.addf %113, %114 : vector<128x1xf32>
      %116 = math.rsqrt %115 : vector<128x1xf32>
      %117 = vector.broadcast %116 : vector<128x1xf32> to vector<128x256xf32>
      %118 = arith.mulf %108, %117 : vector<128x256xf32>
      %c0_49 = arith.constant 0 : index
      %c0_50 = arith.constant 0 : index
      %119 = vector.load %arg14[%c0_49, %c0_50] : memref<1x256xf32, #tpu.memory_space<vmem>>, vector<1x256xf32>
      %120 = vector.broadcast %119 : vector<1x256xf32> to vector<128x256xf32>
      %121 = arith.mulf %118, %120 : vector<128x256xf32>
      %c0_51 = arith.constant 0 : index
      %c0_52 = arith.constant 0 : index
      %122 = vector.load %arg15[%c0_51, %c0_52] : memref<1x256xf32, #tpu.memory_space<vmem>>, vector<1x256xf32>
      %123 = vector.broadcast %122 : vector<1x256xf32> to vector<128x256xf32>
      %124 = arith.addf %121, %123 : vector<128x256xf32>
      %c0_53 = arith.constant 0 : index
      %c0_54 = arith.constant 0 : index
      %c0_55 = arith.constant 0 : index
      %125 = vector.load %arg16[%c0_53, %c0_54, %c0_55] : memref<1x128x256xf32, #tpu.memory_space<vmem>>, vector<1x128x256xf32>
      %126 = vector.shape_cast %125 : vector<1x128x256xf32> to vector<128x256xf32>
      %127 = vector.shape_cast %124 : vector<128x256xf32> to vector<1x128x256xf32>
      tpu.vector_store %arg16[%c0_53, %c0_54, %c0_55], %127 {strides = array<i32>} : memref<1x128x256xf32, #tpu.memory_space<vmem>>, vector<1x128x256xf32>,
    } else {
    }
    return
  }
  func.func @transform_0(%arg0: i32, %arg1: i32) -> (i32, i32, i32) {
    %c0_i32 = arith.constant 0 : i32
    %c0_i32_0 = arith.constant 0 : i32
    %c0_i32_1 = arith.constant 0 : i32
    return %arg0, %c0_i32, %c0_i32_0 : i32, i32, i32
  }
  func.func @transform_1(%arg0: i32, %arg1: i32) -> i32 {
    %c0_i32 = arith.constant 0 : i32
    %c0_i32_0 = arith.constant 0 : i32
    return %c0_i32 : i32
  }
  func.func @transform_2(%arg0: i32, %arg1: i32) -> (i32, i32, i32) {
    %c0_i32 = arith.constant 0 : i32
    %c0_i32_0 = arith.constant 0 : i32
    %c0_i32_1 = arith.constant 0 : i32
    %c0_i32_2 = arith.constant 0 : i32
    return %c0_i32, %c0_i32_0, %c0_i32_1 : i32, i32, i32
  }
  func.func @transform_3(%arg0: i32, %arg1: i32) -> (i32, i32, i32) {
    %c0_i32 = arith.constant 0 : i32
    %c0_i32_0 = arith.constant 0 : i32
    %c0_i32_1 = arith.constant 0 : i32
    %c0_i32_2 = arith.constant 0 : i32
    return %c0_i32, %c0_i32_0, %c0_i32_1 : i32, i32, i32
  }
  func.func @transform_4(%arg0: i32, %arg1: i32) -> (i32, i32, i32) {
    %c0_i32 = arith.constant 0 : i32
    %c0_i32_0 = arith.constant 0 : i32
    %c0_i32_1 = arith.constant 0 : i32
    %c0_i32_2 = arith.constant 0 : i32
    return %c0_i32, %c0_i32_0, %c0_i32_1 : i32, i32, i32
  }
  func.func @transform_5(%arg0: i32, %arg1: i32) -> (i32, i32) {
    %c0_i32 = arith.constant 0 : i32
    %c0_i32_0 = arith.constant 0 : i32
    %c0_i32_1 = arith.constant 0 : i32
    return %c0_i32, %c0_i32_0 : i32, i32
  }
  func.func @transform_6(%arg0: i32, %arg1: i32) -> (i32, i32) {
    %c0_i32 = arith.constant 0 : i32
    %c0_i32_0 = arith.constant 0 : i32
    %c0_i32_1 = arith.constant 0 : i32
    return %c0_i32, %c0_i32_0 : i32, i32
  }
  func.func @transform_7(%arg0: i32, %arg1: i32) -> (i32, i32) {
    %c0_i32 = arith.constant 0 : i32
    %c0_i32_0 = arith.constant 0 : i32
    %c0_i32_1 = arith.constant 0 : i32
    return %c0_i32, %c0_i32_0 : i32, i32
  }
  func.func @transform_8(%arg0: i32, %arg1: i32) -> (i32, i32) {
    %c0_i32 = arith.constant 0 : i32
    %c0_i32_0 = arith.constant 0 : i32
    %c0_i32_1 = arith.constant 0 : i32
    return %c0_i32, %c0_i32_0 : i32, i32
  }
  func.func @transform_9(%arg0: i32, %arg1: i32) -> (i32, i32) {
    %c0_i32 = arith.constant 0 : i32
    %c0_i32_0 = arith.constant 0 : i32
    %c0_i32_1 = arith.constant 0 : i32
    return %c0_i32, %c0_i32_0 : i32, i32
  }
  func.func @transform_10(%arg0: i32, %arg1: i32) -> (i32, i32) {
    %c0_i32 = arith.constant 0 : i32
    %c0_i32_0 = arith.constant 0 : i32
    %c0_i32_1 = arith.constant 0 : i32
    return %c0_i32, %c0_i32_0 : i32, i32
  }
  func.func @transform_11(%arg0: i32, %arg1: i32) -> (i32, i32) {
    %c0_i32 = arith.constant 0 : i32
    %c0_i32_0 = arith.constant 0 : i32
    %c0_i32_1 = arith.constant 0 : i32
    return %c0_i32, %c0_i32_0 : i32, i32
  }
  func.func @transform_12(%arg0: i32, %arg1: i32) -> (i32, i32) {
    %c0_i32 = arith.constant 0 : i32
    %c0_i32_0 = arith.constant 0 : i32
    %c0_i32_1 = arith.constant 0 : i32
    return %c0_i32, %c0_i32_0 : i32, i32
  }
  func.func @transform_13(%arg0: i32, %arg1: i32) -> (i32, i32) {
    %c0_i32 = arith.constant 0 : i32
    %c0_i32_0 = arith.constant 0 : i32
    %c0_i32_1 = arith.constant 0 : i32
    return %c0_i32, %c0_i32_0 : i32, i32
  }
  func.func @transform_14(%arg0: i32, %arg1: i32) -> (i32, i32, i32) {
    %c0_i32 = arith.constant 0 : i32
    %c0_i32_0 = arith.constant 0 : i32
    %c0_i32_1 = arith.constant 0 : i32
    return %arg0, %c0_i32, %c0_i32_0 : i32, i32, i32
  }
}

</mosaic_0001>

<llo_original>
// kernel: tpu_custom_call.1
$region0: #{tpu_custom_call.1}
  #allocation0 [shape = 'u32[]', space=smem, size = 0x4, offset = 0x4, fixed_abs, tag = 'smem constant byte address 0x4 - core index']
  #allocation1 [shape = 'u32[144,128]{1,0:T(1,128)}', space=vmem, size = 0x12000, scoped, tag = 'internal scratch']
  #allocation2 [shape = 'f32[128,256]{1,0:T(8,128)}', space=vmem, size = 0x20000, scoped, tag = 'scratch operand']
  %s0 = inlined_call_operand.hbm [shape: bf16[2,128,256], index: 0, kind: input, shape index: {}]
  %s1 = inlined_call_operand.hbm [shape: f32[2], index: 1, kind: input, shape index: {}]
  %s2 = inlined_call_operand.hbm [shape: bf16[2,256,384], index: 2, kind: input, shape index: {}]
  %s3 = inlined_call_operand.vmem [shape: f32[2,1,384], index: 3, kind: input, shape index: {}]
  %s4 = inlined_call_operand.hbm [shape: bf16[2,128,256], index: 4, kind: input, shape index: {}]
  %s5 = inlined_call_operand.vmem [shape: f32[1,256], index: 5, kind: input, shape index: {}]
  %s6 = inlined_call_operand.vmem [shape: f32[1,256], index: 6, kind: input, shape index: {}]
  %s7 = inlined_call_operand.vmem [shape: f32[1,256], index: 7, kind: input, shape index: {}]
  %s8 = inlined_call_operand.hbm [shape: bf16[256,1024], index: 8, kind: input, shape index: {}]
  %s9 = inlined_call_operand.vmem [shape: f32[1,1024], index: 9, kind: input, shape index: {}]
  %s10 = inlined_call_operand.hbm [shape: bf16[1024,256], index: 10, kind: input, shape index: {}]
  %s11 = inlined_call_operand.vmem [shape: f32[1,256], index: 11, kind: input, shape index: {}]
  %s12 = inlined_call_operand.vmem [shape: f32[1,256], index: 12, kind: input, shape index: {}]
  %s13 = inlined_call_operand.vmem [shape: f32[1,256], index: 13, kind: input, shape index: {}]
  %s14 = inlined_call_operand.hbm [shape: f32[2,128,256], index: 14, kind: output, shape index: {}]
  %s15 = sld [smem:[#allocation0]]
  $region121: #{tpu_custom_call.1} parent=0
    _
  %s17 = ssub.s32 1, %s15
  %s18 = scalar_select 0, %s17, %s15
  $region1: #{tpu_custom_call.1} parent=0
    #allocation3 [shape = 'u8[131072]{0}', space=vmem, size = 0x20000, scoped, tag = 'input window, operand 0']
    #allocation4 [shape = 's32[2]{0}', space=sflag, size = 0x8, scoped, tag = 'scoped memory for tpu_custom_call.1']
    #allocation5 [shape = 's32[2]{0}', space=sflag, size = 0x8, scoped, tag = 'scoped memory for tpu_custom_call.1']
    #allocation6 [shape = 's32[2]{0}', space=sflag, size = 0x8, scoped, tag = 'scoped memory for tpu_custom_call.1']
    #allocation7 [shape = 'u8[512]{0}', space=smem, size = 0x200, scoped, tag = 'input window, operand 1, single buffered']
    #allocation8 [shape = 'u8[393216]{0}', space=vmem, size = 0x60000, scoped, tag = 'input window, operand 2, single buffered']
    #allocation9 [shape = 's32[1]{0}', space=sflag, size = 0x4, scoped, tag = 'scoped memory for tpu_custom_call.1']
    #allocation10 [shape = 'u8[131072]{0}', space=vmem, size = 0x20000, scoped, tag = 'input window, operand 4, single buffered']
    #allocation11 [shape = 'u8[524288]{0}', space=vmem, size = 0x80000, scoped, tag = 'input window, operand 8, single buffered']
    #allocation12 [shape = 's32[1]{0}', space=sflag, size = 0x4, scoped, tag = 'scoped memory for tpu_custom_call.1']
    #allocation13 [shape = 'u8[524288]{0}', space=vmem, size = 0x80000, scoped, tag = 'input window, operand 10, single buffered']
    #allocation14 [shape = 'u8[262144]{0}', space=vmem, size = 0x40000, scoped, tag = 'output window, operand 0']
    %19 = vsyncpa [#allocation4], 0
    %s20 = scalar_lea.sflag [#allocation4], 1
    %21 = vsyncpa %s20, 0
    %22 = vsyncpa [#allocation6], 0
    %23 = vsyncpa [#allocation9], 0
    %24 = vsyncpa [#allocation12], 0
    %25 = vsyncpa [#allocation5], 0
    %s26 = scalar_lea.sflag [#allocation5], 1
    %27 = vsyncpa %s26, 0
    loop: start=0, step=1, limit=6
    $region2: #{tpu_custom_call.1} parent=1 // loop_pre_header
      _
    $region3: #{tpu_custom_call.1} parent=1 // loop_header
      %s29 = sphi 0, %s33
      %p30 = scmp.ge.s32.totalorder %s29, 6
      %s36 = sphi 0, %s48
      %s37 = sphi 0, %s44
      %s38 = sphi 0, %s36
      %s39 = sphi 0, %s37
      %s40 = sphi 0, %s38
      %s41 = sphi 0, %s39
      %s51 = sphi 0, %s53
      %s54 = sphi 0, %s51
      %s55 = sphi 0, %s54
      %s71 = sphi 0, %s55
      %s75 = sphi 0, %s75
      %s77 = sphi 0, %s75
      %s78 = sphi 0, %s77
      %s92 = sphi 0, %s78
      %s96 = sphi 0, %s96
      %s98 = sphi 0, %s96
      %s99 = sphi 0, %s98
      %s113 = sphi 0, %s99
      %s117 = sphi 0, %s117
      %s119 = sphi 0, %s117
      %s120 = sphi 0, %s119
      %s134 = sphi 0, %s120
      %s138 = sphi 0, %s138
      %s140 = sphi 0, %s138
      %s141 = sphi 0, %s140
      %s155 = sphi 0, %s141
      %s159 = sphi 0, %s159
      %s161 = sphi 0, %s159
      %s162 = sphi 0, %s161
      %s176 = sphi 0, %s162
      %s180 = sphi 0, %s180
      %s182 = sphi 0, %s180
      %s183 = sphi 0, %s182
      %s197 = sphi 0, %s183
      %s201 = sphi 0, %s201
      %s203 = sphi 0, %s201
      %s204 = sphi 0, %s203
      %s218 = sphi 0, %s204
      %s222 = sphi 0, %s222
      %s224 = sphi 0, %s222
      %s225 = sphi 0, %s224
      %s239 = sphi 0, %s225
      %s243 = sphi 0, %s243
      %s245 = sphi 0, %s243
      %s246 = sphi 0, %s245
      %s260 = sphi 0, %s246
      %s264 = sphi 0, %s264
      %s266 = sphi 0, %s264
      %s267 = sphi 0, %s266
      %s281 = sphi 0, %s267
      %s285 = sphi 0, %s285
      %s287 = sphi 0, %s285
      %s288 = sphi 0, %s287
      %s302 = sphi 0, %s288
      %s306 = sphi 0, %s306
      %s308 = sphi 0, %s306
      %s309 = sphi 0, %s308
      %s323 = sphi 0, %s309
      %s327 = sphi 0, %s327
      %s329 = sphi 0, %s327
      %s330 = sphi 0, %s329
      %s344 = sphi 0, %s330
      %s350 = sphi 0, %s352
      %s353 = sphi 0, %s350
      %s354 = sphi 0, %s353
      %s370 = sphi 0, %s354
    $region4: #{tpu_custom_call.1} parent=1 // loop_header_branch
      %32 = sbr.rel (%p30) target = $region8
    $region5: #{tpu_custom_call.1} parent=1 // loop_body
      %s34 = ssub.s32 %s29, 1
      %s35 = ssub.s32 %s29, 2
      %s42 = sadd.s32 1, %s37
      %p43 = scmp.ge.s32.totalorder %s42, 2
      %s44 = scalar_select %p43, 0, %s42
      %s45 = sadd.s32 1, %s36
      %s46 = scalar_select %p43, %s45, %s36
      %p47 = scmp.ge.s32.totalorder %s46, 2
      %s48 = scalar_select %p47, 0, %s46
      %s49 = ssub.s32 %s36, %s48
      %p50 = scmp.eq.s32.totalorder %s49, 0
      %s52 = sadd.s32 %s51, 1
      %s53 = scalar_select %p50, %s51, %s52
      %p56 = pneg %p50
      %p57 = scmp.eq.s32.totalorder %s29, 3
      %p58 = por %p56, %p57
      %p59 = scmp.ne.s32.totalorder %s51, %s54
      %p60 = scmp.eq.s32.totalorder %s29, 0
      %p61 = por %p59, %p60
      %p62 = scmp.ne.s32.totalorder %s51, %s54
      %p63 = scmp.eq.s32.totalorder %s34, 3
      %p64 = por %p62, %p63
      %p65 = scmp.ne.s32.totalorder %s54, %s55
      %p66 = scmp.eq.s32.totalorder %s34, 0
      %p67 = por %p65, %p66
      %p68 = scmp.ne.s32.totalorder %s54, %s55
      %p69 = scmp.eq.s32.totalorder %s35, 3
      %p70 = por %p68, %p69
      %p72 = scmp.ne.s32.totalorder %s55, %s71
      %p73 = scmp.eq.s32.totalorder %s35, 0
      %p74 = por %p72, %p73
      %s76 = sadd.s32 %s75, 1
      %p79 = scmp.eq.s32.totalorder %s29, 3
      %p80 = scmp.ne.s32.totalorder %s75, %s77
      %p81 = scmp.eq.s32.totalorder %s29, 0
      %p82 = por %p80, %p81
      %p83 = scmp.ne.s32.totalorder %s75, %s77
      %p84 = scmp.eq.s32.totalorder %s34, 3
      %p85 = por %p83, %p84
      %p86 = scmp.ne.s32.totalorder %s77, %s78
      %p87 = scmp.eq.s32.totalorder %s34, 0
      %p88 = por %p86, %p87
      %p89 = scmp.ne.s32.totalorder %s77, %s78
      %p90 = scmp.eq.s32.totalorder %s35, 3
      %p91 = por %p89, %p90
      %p93 = scmp.ne.s32.totalorder %s78, %s92
      %p94 = scmp.eq.s32.totalorder %s35, 0
      %p95 = por %p93, %p94
      %s97 = sadd.s32 %s96, 1
      %p100 = scmp.eq.s32.totalorder %s29, 3
      %p101 = scmp.ne.s32.totalorder %s96, %s98
      %p102 = scmp.eq.s32.totalorder %s29, 0
      %p103 = por %p101, %p102
      %p104 = scmp.ne.s32.totalorder %s96, %s98
      %p105 = scmp.eq.s32.totalorder %s34, 3
      %p106 = por %p104, %p105
      %p107 = scmp.ne.s32.totalorder %s98, %s99
      %p108 = scmp.eq.s32.totalorder %s34, 0
      %p109 = por %p107, %p108
      %p110 = scmp.ne.s32.totalorder %s98, %s99
      %p111 = scmp.eq.s32.totalorder %s35, 3
      %p112 = por %p110, %p111
      %p114 = scmp.ne.s32.totalorder %s99, %s113
      %p115 = scmp.eq.s32.totalorder %s35, 0
      %p116 = por %p114, %p115
      %s118 = sadd.s32 %s117, 1
      %p121 = scmp.eq.s32.totalorder %s29, 3
      %p122 = scmp.ne.s32.totalorder %s117, %s119
      %p123 = scmp.eq.s32.totalorder %s29, 0
      %p124 = por %p122, %p123
      %p125 = scmp.ne.s32.totalorder %s117, %s119
      %p126 = scmp.eq.s32.totalorder %s34, 3
      %p127 = por %p125, %p126
      %p128 = scmp.ne.s32.totalorder %s119, %s120
      %p129 = scmp.eq.s32.totalorder %s34, 0
      %p130 = por %p128, %p129
      %p131 = scmp.ne.s32.totalorder %s119, %s120
      %p132 = scmp.eq.s32.totalorder %s35, 3
      %p133 = por %p131, %p132
      %p135 = scmp.ne.s32.totalorder %s120, %s134
      %p136 = scmp.eq.s32.totalorder %s35, 0
      %p137 = por %p135, %p136
      %s139 = sadd.s32 %s138, 1
      %p142 = scmp.eq.s32.totalorder %s29, 3
      %p143 = scmp.ne.s32.totalorder %s138, %s140
      %p144 = scmp.eq.s32.totalorder %s29, 0
      %p145 = por %p143, %p144
      %p146 = scmp.ne.s32.totalorder %s138, %s140
      %p147 = scmp.eq.s32.totalorder %s34, 3
      %p148 = por %p146, %p147
      %p149 = scmp.ne.s32.totalorder %s140, %s141
      %p150 = scmp.eq.s32.totalorder %s34, 0
      %p151 = por %p149, %p150
      %p152 = scmp.ne.s32.totalorder %s140, %s141
      %p153 = scmp.eq.s32.totalorder %s35, 3
      %p154 = por %p152, %p153
      %p156 = scmp.ne.s32.totalorder %s141, %s155
      %p157 = scmp.eq.s32.totalorder %s35, 0
      %p158 = por %p156, %p157
      %s160 = sadd.s32 %s159, 1
      %p163 = scmp.eq.s32.totalorder %s29, 3
      %p164 = scmp.ne.s32.totalorder %s159, %s161
      %p165 = scmp.eq.s32.totalorder %s29, 0
      %p166 = por %p164, %p165
      %p167 = scmp.ne.s32.totalorder %s159, %s161
      %p168 = scmp.eq.s32.totalorder %s34, 3
      %p169 = por %p167, %p168
      %p170 = scmp.ne.s32.totalorder %s161, %s162
      %p171 = scmp.eq.s32.totalorder %s34, 0
      %p172 = por %p170, %p171
      %p173 = scmp.ne.s32.totalorder %s161, %s162
      %p174 = scmp.eq.s32.totalorder %s35, 3
      %p175 = por %p173, %p174
      %p177 = scmp.ne.s32.totalorder %s162, %s176
      %p178 = scmp.eq.s32.totalorder %s35, 0
      %p179 = por %p177, %p178
      %s181 = sadd.s32 %s180, 1
      %p184 = scmp.eq.s32.totalorder %s29, 3
      %p185 = scmp.ne.s32.totalorder %s180, %s182
      %p186 = scmp.eq.s32.totalorder %s29, 0
      %p187 = por %p185, %p186
      %p188 = scmp.ne.s32.totalorder %s180, %s182
      %p189 = scmp.eq.s32.totalorder %s34, 3
      %p190 = por %p188, %p189
      %p191 = scmp.ne.s32.totalorder %s182, %s183
      %p192 = scmp.eq.s32.totalorder %s34, 0
      %p193 = por %p191, %p192
      %p194 = scmp.ne.s32.totalorder %s182, %s183
      %p195 = scmp.eq.s32.totalorder %s35, 3
      %p196 = por %p194, %p195
      %p198 = scmp.ne.s32.totalorder %s183, %s197
      %p199 = scmp.eq.s32.totalorder %s35, 0
      %p200 = por %p198, %p199
      %s202 = sadd.s32 %s201, 1
      %p205 = scmp.eq.s32.totalorder %s29, 3
      %p206 = scmp.ne.s32.totalorder %s201, %s203
      %p207 = scmp.eq.s32.totalorder %s29, 0
      %p208 = por %p206, %p207
      %p209 = scmp.ne.s32.totalorder %s201, %s203
      %p210 = scmp.eq.s32.totalorder %s34, 3
      %p211 = por %p209, %p210
      %p212 = scmp.ne.s32.totalorder %s203, %s204
      %p213 = scmp.eq.s32.totalorder %s34, 0
      %p214 = por %p212, %p213
      %p215 = scmp.ne.s32.totalorder %s203, %s204
      %p216 = scmp.eq.s32.totalorder %s35, 3
      %p217 = por %p215, %p216
      %p219 = scmp.ne.s32.totalorder %s204, %s218
      %p220 = scmp.eq.s32.totalorder %s35, 0
      %p221 = por %p219, %p220
      %s223 = sadd.s32 %s222, 1
      %p226 = scmp.eq.s32.totalorder %s29, 3
      %p227 = scmp.ne.s32.totalorder %s222, %s224
      %p228 = scmp.eq.s32.totalorder %s29, 0
      %p229 = por %p227, %p228
      %p230 = scmp.ne.s32.totalorder %s222, %s224
      %p231 = scmp.eq.s32.totalorder %s34, 3
      %p232 = por %p230, %p231
      %p233 = scmp.ne.s32.totalorder %s224, %s225
      %p234 = scmp.eq.s32.totalorder %s34, 0
      %p235 = por %p233, %p234
      %p236 = scmp.ne.s32.totalorder %s224, %s225
      %p237 = scmp.eq.s32.totalorder %s35, 3
      %p238 = por %p236, %p237
      %p240 = scmp.ne.s32.totalorder %s225, %s239
      %p241 = scmp.eq.s32.totalorder %s35, 0
      %p242 = por %p240, %p241
      %s244 = sadd.s32 %s243, 1
      %p247 = scmp.eq.s32.totalorder %s29, 3
      %p248 = scmp.ne.s32.totalorder %s243, %s245
      %p249 = scmp.eq.s32.totalorder %s29, 0
      %p250 = por %p248, %p249
      %p251 = scmp.ne.s32.totalorder %s243, %s245
      %p252 = scmp.eq.s32.totalorder %s34, 3
      %p253 = por %p251, %p252
      %p254 = scmp.ne.s32.totalorder %s245, %s246
      %p255 = scmp.eq.s32.totalorder %s34, 0
      %p256 = por %p254, %p255
      %p257 = scmp.ne.s32.totalorder %s245, %s246
      %p258 = scmp.eq.s32.totalorder %s35, 3
      %p259 = por %p257, %p258
      %p261 = scmp.ne.s32.totalorder %s246, %s260
      %p262 = scmp.eq.s32.totalorder %s35, 0
      %p263 = por %p261, %p262
      %s265 = sadd.s32 %s264, 1
      %p268 = scmp.eq.s32.totalorder %s29, 3
      %p269 = scmp.ne.s32.totalorder %s264, %s266
      %p270 = scmp.eq.s32.totalorder %s29, 0
      %p271 = por %p269, %p270
      %p272 = scmp.ne.s32.totalorder %s264, %s266
      %p273 = scmp.eq.s32.totalorder %s34, 3
      %p274 = por %p272, %p273
      %p275 = scmp.ne.s32.totalorder %s266, %s267
      %p276 = scmp.eq.s32.totalorder %s34, 0
      %p277 = por %p275, %p276
      %p278 = scmp.ne.s32.totalorder %s266, %s267
      %p279 = scmp.eq.s32.totalorder %s35, 3
      %p280 = por %p278, %p279
      %p282 = scmp.ne.s32.totalorder %s267, %s281
      %p283 = scmp.eq.s32.totalorder %s35, 0
      %p284 = por %p282, %p283
      %s286 = sadd.s32 %s285, 1
      %p289 = scmp.eq.s32.totalorder %s29, 3
      %p290 = scmp.ne.s32.totalorder %s285, %s287
      %p291 = scmp.eq.s32.totalorder %s29, 0
      %p292 = por %p290, %p291
      %p293 = scmp.ne.s32.totalorder %s285, %s287
      %p294 = scmp.eq.s32.totalorder %s34, 3
      %p295 = por %p293, %p294
      %p296 = scmp.ne.s32.totalorder %s287, %s288
      %p297 = scmp.eq.s32.totalorder %s34, 0
      %p298 = por %p296, %p297
      %p299 = scmp.ne.s32.totalorder %s287, %s288
      %p300 = scmp.eq.s32.totalorder %s35, 3
      %p301 = por %p299, %p300
      %p303 = scmp.ne.s32.totalorder %s288, %s302
      %p304 = scmp.eq.s32.totalorder %s35, 0
      %p305 = por %p303, %p304
      %s307 = sadd.s32 %s306, 1
      %p310 = scmp.eq.s32.totalorder %s29, 3
      %p311 = scmp.ne.s32.totalorder %s306, %s308
      %p312 = scmp.eq.s32.totalorder %s29, 0
      %p313 = por %p311, %p312
      %p314 = scmp.ne.s32.totalorder %s306, %s308
      %p315 = scmp.eq.s32.totalorder %s34, 3
      %p316 = por %p314, %p315
      %p317 = scmp.ne.s32.totalorder %s308, %s309
      %p318 = scmp.eq.s32.totalorder %s34, 0
      %p319 = por %p317, %p318
      %p320 = scmp.ne.s32.totalorder %s308, %s309
      %p321 = scmp.eq.s32.totalorder %s35, 3
      %p322 = por %p320, %p321
      %p324 = scmp.ne.s32.totalorder %s309, %s323
      %p325 = scmp.eq.s32.totalorder %s35, 0
      %p326 = por %p324, %p325
      %s328 = sadd.s32 %s327, 1
      %p331 = scmp.eq.s32.totalorder %s29, 3
      %p332 = scmp.ne.s32.totalorder %s327, %s329
      %p333 = scmp.eq.s32.totalorder %s29, 0
      %p334 = por %p332, %p333
      %p335 = scmp.ne.s32.totalorder %s327, %s329
      %p336 = scmp.eq.s32.totalorder %s34, 3
      %p337 = por %p335, %p336
      %p338 = scmp.ne.s32.totalorder %s329, %s330
      %p339 = scmp.eq.s32.totalorder %s34, 0
      %p340 = por %p338, %p339
      %p341 = scmp.ne.s32.totalorder %s329, %s330
      %p342 = scmp.eq.s32.totalorder %s35, 3
      %p343 = por %p341, %p342
      %p345 = scmp.ne.s32.totalorder %s330, %s344
      %p346 = scmp.eq.s32.totalorder %s35, 0
      %p347 = por %p345, %p346
      %s348 = ssub.s32 %s36, %s48
      %p349 = scmp.eq.s32.totalorder %s348, 0
      %s351 = sadd.s32 %s350, 1
      %s352 = scalar_select %p349, %s350, %s351
      %p355 = pneg %p349
      %p356 = scmp.eq.s32.totalorder %s29, 3
      %p357 = por %p355, %p356
      %p358 = scmp.ne.s32.totalorder %s350, %s353
      %p359 = scmp.eq.s32.totalorder %s29, 0
      %p360 = por %p358, %p359
      %p361 = scmp.ne.s32.totalorder %s350, %s353
      %p362 = scmp.eq.s32.totalorder %s34, 3
      %p363 = por %p361, %p362
      %p364 = scmp.ne.s32.totalorder %s353, %s354
      %p365 = scmp.eq.s32.totalorder %s34, 0
      %p366 = por %p364, %p365
      %p367 = scmp.ne.s32.totalorder %s353, %s354
      %p368 = scmp.eq.s32.totalorder %s35, 3
      %p369 = por %p367, %p368
      %p371 = scmp.ne.s32.totalorder %s354, %s370
      %p372 = scmp.eq.s32.totalorder %s35, 0
      %p373 = por %p371, %p372
      %p374 = scmp.le.s32.totalorder 1, %s29
      %p375 = scmp.lt.s32.totalorder %s29, 5
      %p376 = pnand %p374, %p375
      %p377 = pneg %p376
      // Predicated region
      $region9: #{tpu_custom_call.1} parent=5 // pred_check
        _
      $region10: #{tpu_custom_call.1} parent=5 // pred_check_branch
        %379 = sbr.rel (%p376) target = $region12
      $region11: #{tpu_custom_call.1} parent=5 // pred_region
        %s380 = ssub.s32 %s29, 1
        // Predicated region
        $region13: #{tpu_custom_call.1} parent=11 // pred_check
          %p381 = pneg %p88
        $region14: #{tpu_custom_call.1} parent=11 // pred_check_branch
          %383 = sbr.rel (%p381) target = $region16
        $region15: #{tpu_custom_call.1} parent=11 // pred_region
          %s385 = ssub.s32 16, 16
          %386 = vsyncadd [#allocation6], %s385
          %389 = dma.hbm_to_smem %s1, 16, [#allocation7], [#allocation6]
        $region16: #{tpu_custom_call.1} parent=11 // pred_fallthru
          _
        // Predicated region
        $region17: #{tpu_custom_call.1} parent=11 // pred_check
          %p390 = pneg %p109
        $region18: #{tpu_custom_call.1} parent=11 // pred_check_branch
          %392 = sbr.rel (%p390) target = $region20
        $region19: #{tpu_custom_call.1} parent=11 // pred_region
          %s394 = ssub.s32 12288, 12288
          %395 = vsyncadd [#allocation9], %s394
          %s396 = sshll.u32 [#allocation8], 4
          %s397 = int_to_ptr.vmem [resolvable:$true] %s396
          %402 = dma.hbm_to_vmem [thread:$0]  %s2, 12288, %s397, [#allocation9], 192, 192, 12
        $region20: #{tpu_custom_call.1} parent=11 // pred_fallthru
          _
        // Predicated region
        $region21: #{tpu_custom_call.1} parent=11 // pred_check
          %p403 = pneg %p130
        $region22: #{tpu_custom_call.1} parent=11 // pred_check_branch
          %405 = sbr.rel (%p403) target = $region24
        $region23: #{tpu_custom_call.1} parent=11 // pred_region
          _
        $region24: #{tpu_custom_call.1} parent=11 // pred_fallthru
          _
        // Predicated region
        $region25: #{tpu_custom_call.1} parent=11 // pred_check
          %p406 = pneg %p151
        $region26: #{tpu_custom_call.1} parent=11 // pred_check_branch
          %408 = sbr.rel (%p406) target = $region28
        $region27: #{tpu_custom_call.1} parent=11 // pred_region
          %s410 = ssub.s32 4096, 4096
          %411 = vsyncadd [#allocation9], %s410
          %s412 = sshll.u32 [#allocation10], 4
          %s413 = int_to_ptr.vmem [resolvable:$true] %s412
          %418 = dma.hbm_to_vmem [thread:$0]  %s4, 4096, %s413, [#allocation9], 128, 128, 8
        $region28: #{tpu_custom_call.1} parent=11 // pred_fallthru
          _
        // Predicated region
        $region29: #{tpu_custom_call.1} parent=11 // pred_check
          %p419 = pneg %p172
        $region30: #{tpu_custom_call.1} parent=11 // pred_check_branch
          %421 = sbr.rel (%p419) target = $region32
        $region31: #{tpu_custom_call.1} parent=11 // pred_region
          _
        $region32: #{tpu_custom_call.1} parent=11 // pred_fallthru
          _
        // Predicated region
        $region33: #{tpu_custom_call.1} parent=11 // pred_check
          %p422 = pneg %p193
        $region34: #{tpu_custom_call.1} parent=11 // pred_check_branch
          %424 = sbr.rel (%p422) target = $region36
        $region35: #{tpu_custom_call.1} parent=11 // pred_region
          _
        $region36: #{tpu_custom_call.1} parent=11 // pred_fallthru
          _
        // Predicated region
        $region37: #{tpu_custom_call.1} parent=11 // pred_check
          %p425 = pneg %p214
        $region38: #{tpu_custom_call.1} parent=11 // pred_check_branch
          %427 = sbr.rel (%p425) target = $region40
        $region39: #{tpu_custom_call.1} parent=11 // pred_region
          _
        $region40: #{tpu_custom_call.1} parent=11 // pred_fallthru
          _
        // Predicated region
        $region41: #{tpu_custom_call.1} parent=11 // pred_check
          %p428 = pneg %p235
        $region42: #{tpu_custom_call.1} parent=11 // pred_check_branch
          %430 = sbr.rel (%p428) target = $region44
        $region43: #{tpu_custom_call.1} parent=11 // pred_region
          %s432 = ssub.s32 16384, 16384
          %433 = vsyncadd [#allocation12], %s432
          %s434 = sshll.u32 [#allocation11], 4
          %s435 = int_to_ptr.vmem [resolvable:$true] %s434
          %440 = dma.hbm_to_vmem [thread:$0]  %s8, 16384, %s435, [#allocation12], 512, 512, 32
        $region44: #{tpu_custom_call.1} parent=11 // pred_fallthru
          _
        // Predicated region
        $region45: #{tpu_custom_call.1} parent=11 // pred_check
          %p441 = pneg %p256
        $region46: #{tpu_custom_call.1} parent=11 // pred_check_branch
          %443 = sbr.rel (%p441) target = $region48
        $region47: #{tpu_custom_call.1} parent=11 // pred_region
          _
        $region48: #{tpu_custom_call.1} parent=11 // pred_fallthru
          _
        // Predicated region
        $region49: #{tpu_custom_call.1} parent=11 // pred_check
          %p444 = pneg %p277
        $region50: #{tpu_custom_call.1} parent=11 // pred_check_branch
          %446 = sbr.rel (%p444) target = $region52
        $region51: #{tpu_custom_call.1} parent=11 // pred_region
          %s448 = ssub.s32 16384, 16384
          %449 = vsyncadd [#allocation12], %s448
          %s450 = sshll.u32 [#allocation13], 4
          %s451 = int_to_ptr.vmem [resolvable:$true] %s450
          %456 = dma.hbm_to_vmem [thread:$0]  %s10, 16384, %s451, [#allocation12], 128, 128, 8
        $region52: #{tpu_custom_call.1} parent=11 // pred_fallthru
          _
        // Predicated region
        $region53: #{tpu_custom_call.1} parent=11 // pred_check
          %p457 = pneg %p298
        $region54: #{tpu_custom_call.1} parent=11 // pred_check_branch
          %459 = sbr.rel (%p457) target = $region56
        $region55: #{tpu_custom_call.1} parent=11 // pred_region
          _
        $region56: #{tpu_custom_call.1} parent=11 // pred_fallthru
          _
        // Predicated region
        $region57: #{tpu_custom_call.1} parent=11 // pred_check
          %p460 = pneg %p319
        $region58: #{tpu_custom_call.1} parent=11 // pred_check_branch
          %462 = sbr.rel (%p460) target = $region60
        $region59: #{tpu_custom_call.1} parent=11 // pred_region
          _
        $region60: #{tpu_custom_call.1} parent=11 // pred_fallthru
          _
        // Predicated region
        $region61: #{tpu_custom_call.1} parent=11 // pred_check
          %p463 = pneg %p340
        $region62: #{tpu_custom_call.1} parent=11 // pred_check_branch
          %465 = sbr.rel (%p463) target = $region64
        $region63: #{tpu_custom_call.1} parent=11 // pred_region
          _
        $region64: #{tpu_custom_call.1} parent=11 // pred_fallthru
          _
      $region12: #{tpu_custom_call.1} parent=5 // pred_fallthru
        _
      %p466 = scmp.lt.s32.totalorder %s29, 4
      // Predicated region
      $region65: #{tpu_custom_call.1} parent=5 // pred_check
        %p467 = pneg %p466
      $region66: #{tpu_custom_call.1} parent=5 // pred_check_branch
        %469 = sbr.rel (%p467) target = $region68
      $region67: #{tpu_custom_call.1} parent=5 // pred_region
        // Predicated region
        $region69: #{tpu_custom_call.1} parent=67 // pred_check
          %p470 = pneg %p61
        $region70: #{tpu_custom_call.1} parent=67 // pred_check_branch
          %472 = sbr.rel (%p470) target = $region72
        $region71: #{tpu_custom_call.1} parent=67 // pred_region
          %s473 = sand.u32 %s51, 1
          %s474 = scalar_lea.sflag [#allocation4], %s473
          %s475 = sand.u32 %s51, 1
          %s476 = smul.addr %s475, 128
          %s477 = scalar_lea.vmem [#allocation3], %s476
          %s479 = ssub.s32 2048, 2048
          %480 = vsyncadd %s474, %s479
          %s481 = smul.addr %s36, 32
          %s482 = smul.addr %s481, 64
          %s483 = scalar_lea.hbm %s0, %s482
          %s484 = sshll.u32 %s477, 4
          %s485 = int_to_ptr.vmem [resolvable:$true] %s484
          %490 = dma.hbm_to_vmem [thread:$0]  %s483, 2048, %s485, %s474, 128, 128, 8
        $region72: #{tpu_custom_call.1} parent=67 // pred_fallthru
          _
      $region68: #{tpu_custom_call.1} parent=5 // pred_fallthru
        _
      %p491 = scmp.le.s32.totalorder 1, %s29
      %p492 = scmp.lt.s32.totalorder %s29, 5
      %p493 = pnand %p491, %p492
      %p494 = pneg %p493
      // Predicated region
      $region73: #{tpu_custom_call.1} parent=5 // pred_check
        _
      $region74: #{tpu_custom_call.1} parent=5 // pred_check_branch
        %496 = sbr.rel (%p493) target = $region76
      $region75: #{tpu_custom_call.1} parent=5 // pred_region
        %s497 = ssub.s32 %s29, 1
        %s498 = sand.u32 %s54, 1
        %s499 = scalar_lea.sflag [#allocation4], %s498
        %s500 = sand.u32 %s54, 1
        %s501 = smul.addr %s500, 128
        %s502 = scalar_lea.vmem [#allocation3], %s501
        // Predicated region
        $region77: #{tpu_custom_call.1} parent=75 // pred_check
          %p503 = pneg %p67
        $region78: #{tpu_custom_call.1} parent=75 // pred_check_branch
          %505 = sbr.rel (%p503) target = $region80
        $region79: #{tpu_custom_call.1} parent=75 // pred_region
          %506 = dma.done %s499, 2048
        $region80: #{tpu_custom_call.1} parent=75 // pred_fallthru
          _
        // Predicated region
        $region81: #{tpu_custom_call.1} parent=75 // pred_check
          %p507 = pneg %p88
        $region82: #{tpu_custom_call.1} parent=75 // pred_check_branch
          %509 = sbr.rel (%p507) target = $region84
        $region83: #{tpu_custom_call.1} parent=75 // pred_region
          %510 = dma.done [#allocation6], 16
        $region84: #{tpu_custom_call.1} parent=75 // pred_fallthru
          _
        // Predicated region
        $region85: #{tpu_custom_call.1} parent=75 // pred_check
          %p511 = pneg %p109
        $region86: #{tpu_custom_call.1} parent=75 // pred_check_branch
          %513 = sbr.rel (%p511) target = $region88
        $region87: #{tpu_custom_call.1} parent=75 // pred_region
          %514 = dma.done [#allocation9], 12288
        $region88: #{tpu_custom_call.1} parent=75 // pred_fallthru
          _
        // Predicated region
        $region89: #{tpu_custom_call.1} parent=75 // pred_check
          %p515 = pneg %p151
        $region90: #{tpu_custom_call.1} parent=75 // pred_check_branch
          %517 = sbr.rel (%p515) target = $region92
        $region91: #{tpu_custom_call.1} parent=75 // pred_region
          %518 = dma.done [#allocation9], 4096
        $region92: #{tpu_custom_call.1} parent=75 // pred_fallthru
          _
        // Predicated region
        $region93: #{tpu_custom_call.1} parent=75 // pred_check
          %p519 = pneg %p235
        $region94: #{tpu_custom_call.1} parent=75 // pred_check_branch
          %521 = sbr.rel (%p519) target = $region96
        $region95: #{tpu_custom_call.1} parent=75 // pred_region
          %522 = dma.done [#allocation12], 16384
        $region96: #{tpu_custom_call.1} parent=75 // pred_fallthru
          _
        // Predicated region
        $region97: #{tpu_custom_call.1} parent=75 // pred_check
          %p523 = pneg %p277
        $region98: #{tpu_custom_call.1} parent=75 // pred_check_branch
          %525 = sbr.rel (%p523) target = $region100
        $region99: #{tpu_custom_call.1} parent=75 // pred_region
          %526 = dma.done [#allocation12], 16384
        $region100: #{tpu_custom_call.1} parent=75 // pred_fallthru
          _
        %527 = sfence
        %s528 = sand.u32 %s54, 1
        %s529 = scalar_lea.sflag [#allocation4], %s528
        %s530 = sand.u32 %s54, 1
        %s531 = smul.addr %s530, 128
        %s532 = scalar_lea.vmem [#allocation3], %s531
        %p533 = pneg %p67
        %p534 = pneg %p64
        %p535 = pneg %p88
        %p536 = pneg %p85
        %p537 = pneg %p109
        %p538 = pneg %p106
        %p539 = pneg %p130
        %p540 = pneg %p127
        %p541 = pneg %p151
        %p542 = pneg %p148
        %p543 = pneg %p172
        %p544 = pneg %p169
        %p545 = pneg %p193
        %p546 = pneg %p190
        %p547 = pneg %p214
        %p548 = pneg %p211
        %p549 = pneg %p235
        %p550 = pneg %p232
        %p551 = pneg %p256
        %p552 = pneg %p253
        %p553 = pneg %p277
        %p554 = pneg %p274
        %p555 = pneg %p298
        %p556 = pneg %p295
        %p557 = pneg %p319
        %p558 = pneg %p316
        %p559 = pneg %p340
        %p560 = pneg %p337
        %p561 = pneg %p366
        %p562 = pneg %p363
        %s563 = sand.u32 %s353, 1
        %s564 = scalar_lea.sflag [#allocation5], %s563
        %s565 = sand.u32 %s353, 1
        %s566 = smul.addr %s565, 256
        %s567 = scalar_lea.vmem [#allocation14], %s566
        %p569 = scmp.eq.s32.totalorder %s39, 0
        // Predicated region
        $region101: #{tpu_custom_call.1} parent=75 // pred_check
          %p570 = pneg %p569
        $region102: #{tpu_custom_call.1} parent=75 // pred_check_branch
          %572 = sbr.rel (%p570) target = $region104
        $region103: #{tpu_custom_call.1} parent=75 // pred_region
          %v573 = vld [vmem:[%s502] sm:$0xff]
          %v574 = vld [vmem:[%s502 + $0x8] sm:$0xff]
          %v575 = vld [vmem:[%s502 + $0x10] sm:$0xff]
          %v576 = vld [vmem:[%s502 + $0x18] sm:$0xff]
          %v577 = vld [vmem:[%s502 + $0x20] sm:$0xff]
          %v578 = vld [vmem:[%s502 + $0x28] sm:$0xff]
          %v579 = vld [vmem:[%s502 + $0x30] sm:$0xff]
          %v580 = vld [vmem:[%s502 + $0x38] sm:$0xff]
          %v581 = vld [vmem:[%s502 + $0x40] sm:$0xff]
          %v582 = vld [vmem:[%s502 + $0x48] sm:$0xff]
          %v583 = vld [vmem:[%s502 + $0x50] sm:$0xff]
          %v584 = vld [vmem:[%s502 + $0x58] sm:$0xff]
          %v585 = vld [vmem:[%s502 + $0x60] sm:$0xff]
          %v586 = vld [vmem:[%s502 + $0x68] sm:$0xff]
          %v587 = vld [vmem:[%s502 + $0x70] sm:$0xff]
          %v588 = vld [vmem:[%s502 + $0x78] sm:$0xff]
          %v589 = vunpack.c.l.bf16 %v573
          %v590 = vunpack.c.h.bf16 %v573
          %v591 = vunpack.c.l.bf16 %v574
          %v592 = vunpack.c.h.bf16 %v574
          %v593 = vunpack.c.l.bf16 %v575
          %v594 = vunpack.c.h.bf16 %v575
          %v595 = vunpack.c.l.bf16 %v576
          %v596 = vunpack.c.h.bf16 %v576
          %v597 = vunpack.c.l.bf16 %v577
          %v598 = vunpack.c.h.bf16 %v577
          %v599 = vunpack.c.l.bf16 %v578
          %v600 = vunpack.c.h.bf16 %v578
          %v601 = vunpack.c.l.bf16 %v579
          %v602 = vunpack.c.h.bf16 %v579
          %v603 = vunpack.c.l.bf16 %v580
          %v604 = vunpack.c.h.bf16 %v580
          %v605 = vunpack.c.l.bf16 %v581
          %v606 = vunpack.c.h.bf16 %v581
          %v607 = vunpack.c.l.bf16 %v582
          %v608 = vunpack.c.h.bf16 %v582
          %v609 = vunpack.c.l.bf16 %v583
          %v610 = vunpack.c.h.bf16 %v583
          %v611 = vunpack.c.l.bf16 %v584
          %v612 = vunpack.c.h.bf16 %v584
          %v613 = vunpack.c.l.bf16 %v585
          %v614 = vunpack.c.h.bf16 %v585
          %v615 = vunpack.c.l.bf16 %v586
          %v616 = vunpack.c.h.bf16 %v586
          %v617 = vunpack.c.l.bf16 %v587
          %v618 = vunpack.c.h.bf16 %v587
          %v619 = vunpack.c.l.bf16 %v588
          %v620 = vunpack.c.h.bf16 %v588
          %v621 = vld [vmem:[%s5] sm:$0x3]
          %v623 = vlaneseq
          %v624 = vshrl.u32 %v623, 7
          %v625 = vsub.s32 0, %v624
          %v626 = vrot.slane %v621, %v625
          %v627 = vlaneseq
          %v628 = vshrl.u32 %v627, 7
          %v629 = vsub.s32 1, %v628
          %v630 = vrot.slane %v621, %v629
          %v633 = vadd.f32 %v589, %v626
          %v634 = vadd.f32 %v590, %v630
          %v635 = vadd.f32 %v591, %v626
          %v636 = vadd.f32 %v592, %v630
          %v637 = vadd.f32 %v593, %v626
          %v638 = vadd.f32 %v594, %v630
          %v639 = vadd.f32 %v595, %v626
          %v640 = vadd.f32 %v596, %v630
          %v641 = vadd.f32 %v597, %v626
          %v642 = vadd.f32 %v598, %v630
          %v643 = vadd.f32 %v599, %v626
          %v644 = vadd.f32 %v600, %v630
          %v645 = vadd.f32 %v601, %v626
          %v646 = vadd.f32 %v602, %v630
          %v647 = vadd.f32 %v603, %v626
          %v648 = vadd.f32 %v604, %v630
          %v649 = vadd.f32 %v605, %v626
          %v650 = vadd.f32 %v606, %v630
          %v651 = vadd.f32 %v607, %v626
          %v652 = vadd.f32 %v608, %v630
          %v653 = vadd.f32 %v609, %v626
          %v654 = vadd.f32 %v610, %v630
          %v655 = vadd.f32 %v611, %v626
          %v656 = vadd.f32 %v612, %v630
          %v657 = vadd.f32 %v613, %v626
          %v658 = vadd.f32 %v614, %v630
          %v659 = vadd.f32 %v615, %v626
          %v660 = vadd.f32 %v616, %v630
          %v661 = vadd.f32 %v617, %v626
          %v662 = vadd.f32 %v618, %v630
          %v663 = vadd.f32 %v619, %v626
          %v664 = vadd.f32 %v620, %v630
          %665 = vst [vmem:[#allocation2] sm:$0xff] %v633
          %666 = vst [vmem:[#allocation2 + $0x8] sm:$0xff] %v634
          %667 = vst [vmem:[#allocation2 + $0x10] sm:$0xff] %v635
          %668 = vst [vmem:[#allocation2 + $0x18] sm:$0xff] %v636
          %669 = vst [vmem:[#allocation2 + $0x20] sm:$0xff] %v637
          %670 = vst [vmem:[#allocation2 + $0x28] sm:$0xff] %v638
          %671 = vst [vmem:[#allocation2 + $0x30] sm:$0xff] %v639
          %672 = vst [vmem:[#allocation2 + $0x38] sm:$0xff] %v640
          %673 = vst [vmem:[#allocation2 + $0x40] sm:$0xff] %v641
          %674 = vst [vmem:[#allocation2 + $0x48] sm:$0xff] %v642
          %675 = vst [vmem:[#allocation2 + $0x50] sm:$0xff] %v643
          %676 = vst [vmem:[#allocation2 + $0x58] sm:$0xff] %v644
          %677 = vst [vmem:[#allocation2 + $0x60] sm:$0xff] %v645
          %678 = vst [vmem:[#allocation2 + $0x68] sm:$0xff] %v646
          %679 = vst [vmem:[#allocation2 + $0x70] sm:$0xff] %v647
          %680 = vst [vmem:[#allocation2 + $0x78] sm:$0xff] %v648
          %681 = vst [vmem:[#allocation2 + $0x80] sm:$0xff] %v649
          %682 = vst [vmem:[#allocation2 + $0x88] sm:$0xff] %v650
          %683 = vst [vmem:[#allocation2 + $0x90] sm:$0xff] %v651
          %684 = vst [vmem:[#allocation2 + $0x98] sm:$0xff] %v652
          %685 = vst [vmem:[#allocation2 + $0xa0] sm:$0xff] %v653
          %686 = vst [vmem:[#allocation2 + $0xa8] sm:$0xff] %v654
          %687 = vst [vmem:[#allocation2 + $0xb0] sm:$0xff] %v655
          %688 = vst [vmem:[#allocation2 + $0xb8] sm:$0xff] %v656
          %689 = vst [vmem:[#allocation2 + $0xc0] sm:$0xff] %v657
          %690 = vst [vmem:[#allocation2 + $0xc8] sm:$0xff] %v658
          %691 = vst [vmem:[#allocation2 + $0xd0] sm:$0xff] %v659
          %692 = vst [vmem:[#allocation2 + $0xd8] sm:$0xff] %v660
          %693 = vst [vmem:[#allocation2 + $0xe0] sm:$0xff] %v661
          %694 = vst [vmem:[#allocation2 + $0xe8] sm:$0xff] %v662
          %695 = vst [vmem:[#allocation2 + $0xf0] sm:$0xff] %v663
          %696 = vst [vmem:[#allocation2 + $0xf8] sm:$0xff] %v664
        $region104: #{tpu_custom_call.1} parent=75 // pred_fallthru
          _
        %v697 = vld [vmem:[%s502] sm:$0xff]
        %v698 = vld [vmem:[%s502 + $0x8] sm:$0xff]
        %v699 = vld [vmem:[%s502 + $0x10] sm:$0xff]
        %v700 = vld [vmem:[%s502 + $0x18] sm:$0xff]
        %v701 = vld [vmem:[%s502 + $0x20] sm:$0xff]
        %v702 = vld [vmem:[%s502 + $0x28] sm:$0xff]
        %v703 = vld [vmem:[%s502 + $0x30] sm:$0xff]
        %v704 = vld [vmem:[%s502 + $0x38] sm:$0xff]
        %v705 = vld [vmem:[%s502 + $0x40] sm:$0xff]
        %v706 = vld [vmem:[%s502 + $0x48] sm:$0xff]
        %v707 = vld [vmem:[%s502 + $0x50] sm:$0xff]
        %v708 = vld [vmem:[%s502 + $0x58] sm:$0xff]
        %v709 = vld [vmem:[%s502 + $0x60] sm:$0xff]
        %v710 = vld [vmem:[%s502 + $0x68] sm:$0xff]
        %v711 = vld [vmem:[%s502 + $0x70] sm:$0xff]
        %v712 = vld [vmem:[%s502 + $0x78] sm:$0xff]
        %s713 = smul.u32 %s39, 96
        %s714 = smul.addr %s713, 4
        %s715 = scalar_lea.vmem [#allocation8], %s714
        %v716 = vld [vmem:[%s715] sm:$0xff]
        %v717 = vld [vmem:[%s715 + $0x8] sm:$0xf]
        %v718 = vld [vmem:[%s715 + $0xc] sm:$0xff]
        %v719 = vld [vmem:[%s715 + $0x14] sm:$0xf]
        %v720 = vld [vmem:[%s715 + $0x18] sm:$0xff]
        %v721 = vld [vmem:[%s715 + $0x20] sm:$0xf]
        %v722 = vld [vmem:[%s715 + $0x24] sm:$0xff]
        %v723 = vld [vmem:[%s715 + $0x2c] sm:$0xf]
        %v724 = vld [vmem:[%s715 + $0x30] sm:$0xff]
        %v725 = vld [vmem:[%s715 + $0x38] sm:$0xf]
        %v726 = vld [vmem:[%s715 + $0x3c] sm:$0xff]
        %v727 = vld [vmem:[%s715 + $0x44] sm:$0xf]
        %v728 = vld [vmem:[%s715 + $0x48] sm:$0xff]
        %v729 = vld [vmem:[%s715 + $0x50] sm:$0xf]
        %v730 = vld [vmem:[%s715 + $0x54] sm:$0xff]
        %v731 = vld [vmem:[%s715 + $0x5c] sm:$0xf]
        %v732 = vld [vmem:[%s715 + $0x60] sm:$0xff]
        %v733 = vld [vmem:[%s715 + $0x68] sm:$0xf]
        %v734 = vld [vmem:[%s715 + $0x6c] sm:$0xff]
        %v735 = vld [vmem:[%s715 + $0x74] sm:$0xf]
        %v736 = vld [vmem:[%s715 + $0x78] sm:$0xff]
        %v737 = vld [vmem:[%s715 + $0x80] sm:$0xf]
        %v738 = vld [vmem:[%s715 + $0x84] sm:$0xff]
        %v739 = vld [vmem:[%s715 + $0x8c] sm:$0xf]
        %v740 = vld [vmem:[%s715 + $0x90] sm:$0xff]
        %v741 = vld [vmem:[%s715 + $0x98] sm:$0xf]
        %v742 = vld [vmem:[%s715 + $0x9c] sm:$0xff]
        %v743 = vld [vmem:[%s715 + $0xa4] sm:$0xf]
        %v744 = vld [vmem:[%s715 + $0xa8] sm:$0xff]
        %v745 = vld [vmem:[%s715 + $0xb0] sm:$0xf]
        %v746 = vld [vmem:[%s715 + $0xb4] sm:$0xff]
        %v747 = vld [vmem:[%s715 + $0xbc] sm:$0xf]
        %v748 = vld [vmem:[%s715 + $0xc0] sm:$0xff]
        %v749 = vld [vmem:[%s715 + $0xc8] sm:$0xf]
        %v750 = vld [vmem:[%s715 + $0xcc] sm:$0xff]
        %v751 = vld [vmem:[%s715 + $0xd4] sm:$0xf]
        %v752 = vld [vmem:[%s715 + $0xd8] sm:$0xff]
        %v753 = vld [vmem:[%s715 + $0xe0] sm:$0xf]
        %v754 = vld [vmem:[%s715 + $0xe4] sm:$0xff]
        %v755 = vld [vmem:[%s715 + $0xec] sm:$0xf]
        %v756 = vld [vmem:[%s715 + $0xf0] sm:$0xff]
        %v757 = vld [vmem:[%s715 + $0xf8] sm:$0xf]
        %v758 = vld [vmem:[%s715 + $0xfc] sm:$0xff]
        %v759 = vld [vmem:[%s715 + $0x104] sm:$0xf]
        %v760 = vld [vmem:[%s715 + $0x108] sm:$0xff]
        %v761 = vld [vmem:[%s715 + $0x110] sm:$0xf]
        %v762 = vld [vmem:[%s715 + $0x114] sm:$0xff]
        %v763 = vld [vmem:[%s715 + $0x11c] sm:$0xf]
        %v764 = vld [vmem:[%s715 + $0x120] sm:$0xff]
        %v765 = vld [vmem:[%s715 + $0x128] sm:$0xf]
        %v766 = vld [vmem:[%s715 + $0x12c] sm:$0xff]
        %v767 = vld [vmem:[%s715 + $0x134] sm:$0xf]
        %v768 = vld [vmem:[%s715 + $0x138] sm:$0xff]
        %v769 = vld [vmem:[%s715 + $0x140] sm:$0xf]
        %v770 = vld [vmem:[%s715 + $0x144] sm:$0xff]
        %v771 = vld [vmem:[%s715 + $0x14c] sm:$0xf]
        %v772 = vld [vmem:[%s715 + $0x150] sm:$0xff]
        %v773 = vld [vmem:[%s715 + $0x158] sm:$0xf]
        %v774 = vld [vmem:[%s715 + $0x15c] sm:$0xff]
        %v775 = vld [vmem:[%s715 + $0x164] sm:$0xf]
        %v776 = vld [vmem:[%s715 + $0x168] sm:$0xff]
        %v777 = vld [vmem:[%s715 + $0x170] sm:$0xf]
        %v778 = vld [vmem:[%s715 + $0x174] sm:$0xff]
        %v779 = vld [vmem:[%s715 + $0x17c] sm:$0xf]
        %s780 = smul.u32 %s39, 3
        %s781 = scalar_lea.vmem %s3, %s780
        %v782 = vld [vmem:[%s781] sm:$0x7]
        %v784 = vlaneseq
        %v785 = vshrl.u32 %v784, 7
        %v786 = vsub.s32 0, %v785
        %v787 = vrot.slane %v782, %v786
        %v788 = vlaneseq
        %v789 = vshrl.u32 %v788, 7
        %v790 = vsub.s32 1, %v789
        %v791 = vrot.slane %v782, %v790
        %v792 = vlaneseq
        %v793 = vshrl.u32 %v792, 7
        %v794 = vsub.s32 2, %v793
        %v795 = vrot.slane %v782, %v794
        %v815 = vunpack.c.l.b16 %v697
        %v816 = vunpack.c.h.b16 %v697
        %v817 = vunpack.c.l.b16 %v698
        %v818 = vunpack.c.h.b16 %v698
        %v819 = vunpack.c.l.b16 %v699
        %v820 = vunpack.c.h.b16 %v699
        %v821 = vunpack.c.l.b16 %v700
        %v822 = vunpack.c.h.b16 %v700
        %v823 = vunpack.c.l.b16 %v701
        %v824 = vunpack.c.h.b16 %v701
        %v825 = vunpack.c.l.b16 %v702
        %v826 = vunpack.c.h.b16 %v702
        %v827 = vunpack.c.l.b16 %v703
        %v828 = vunpack.c.h.b16 %v703
        %v829 = vunpack.c.l.b16 %v704
        %v830 = vunpack.c.h.b16 %v704
        %v831 = vunpack.c.l.b16 %v705
        %v832 = vunpack.c.h.b16 %v705
        %v833 = vunpack.c.l.b16 %v706
        %v834 = vunpack.c.h.b16 %v706
        %v835 = vunpack.c.l.b16 %v707
        %v836 = vunpack.c.h.b16 %v707
        %v837 = vunpack.c.l.b16 %v708
        %v838 = vunpack.c.h.b16 %v708
        %v839 = vunpack.c.l.b16 %v709
        %v840 = vunpack.c.h.b16 %v709
        %v841 = vunpack.c.l.b16 %v710
        %v842 = vunpack.c.h.b16 %v710
        %v843 = vunpack.c.l.b16 %v711
        %v844 = vunpack.c.h.b16 %v711
        %v845 = vunpack.c.l.b16 %v712
        %v846 = vunpack.c.h.b16 %v712
        %v847 = vpack.c.b16 %v817, %v815
        %v848 = vpack.c.b16 %v818, %v816
        %v849 = vpack.c.b16 %v821, %v819
        %v850 = vpack.c.b16 %v822, %v820
        %v851 = vpack.c.b16 %v825, %v823
        %v852 = vpack.c.b16 %v826, %v824
        %v853 = vpack.c.b16 %v829, %v827
        %v854 = vpack.c.b16 %v830, %v828
        %v855 = vpack.c.b16 %v833, %v831
        %v856 = vpack.c.b16 %v834, %v832
        %v857 = vpack.c.b16 %v837, %v835
        %v858 = vpack.c.b16 %v838, %v836
        %v859 = vpack.c.b16 %v841, %v839
        %v860 = vpack.c.b16 %v842, %v840
        %v861 = vpack.c.b16 %v845, %v843
        %v862 = vpack.c.b16 %v846, %v844
        %v943 = vunpack.c.l.b16 %v716
        %v944 = vunpack.c.h.b16 %v716
        %v945 = vunpack.c.l.b16 %v717
        %v946 = vunpack.c.l.b16 %v718
        %v947 = vunpack.c.h.b16 %v718
        %v948 = vunpack.c.l.b16 %v719
        %v949 = vunpack.c.l.b16 %v720
        %v950 = vunpack.c.h.b16 %v720
        %v951 = vunpack.c.l.b16 %v721
        %v952 = vunpack.c.l.b16 %v722
        %v953 = vunpack.c.h.b16 %v722
        %v954 = vunpack.c.l.b16 %v723
        %v955 = vunpack.c.l.b16 %v724
        %v956 = vunpack.c.h.b16 %v724
        %v957 = vunpack.c.l.b16 %v725
        %v958 = vunpack.c.l.b16 %v726
        %v959 = vunpack.c.h.b16 %v726
        %v960 = vunpack.c.l.b16 %v727
        %v961 = vunpack.c.l.b16 %v728
        %v962 = vunpack.c.h.b16 %v728
        %v963 = vunpack.c.l.b16 %v729
        %v964 = vunpack.c.l.b16 %v730
        %v965 = vunpack.c.h.b16 %v730
        %v966 = vunpack.c.l.b16 %v731
        %v967 = vunpack.c.l.b16 %v732
        %v968 = vunpack.c.h.b16 %v732
        %v969 = vunpack.c.l.b16 %v733
        %v970 = vunpack.c.l.b16 %v734
        %v971 = vunpack.c.h.b16 %v734
        %v972 = vunpack.c.l.b16 %v735
        %v973 = vunpack.c.l.b16 %v736
        %v974 = vunpack.c.h.b16 %v736
        %v975 = vunpack.c.l.b16 %v737
        %v976 = vunpack.c.l.b16 %v738
        %v977 = vunpack.c.h.b16 %v738
        %v978 = vunpack.c.l.b16 %v739
        %v979 = vunpack.c.l.b16 %v740
        %v980 = vunpack.c.h.b16 %v740
        %v981 = vunpack.c.l.b16 %v741
        %v982 = vunpack.c.l.b16 %v742
        %v983 = vunpack.c.h.b16 %v742
        %v984 = vunpack.c.l.b16 %v743
        %v985 = vunpack.c.l.b16 %v744
        %v986 = vunpack.c.h.b16 %v744
        %v987 = vunpack.c.l.b16 %v745
        %v988 = vunpack.c.l.b16 %v746
        %v989 = vunpack.c.h.b16 %v746
        %v990 = vunpack.c.l.b16 %v747
        %v991 = vunpack.c.l.b16 %v748
        %v992 = vunpack.c.h.b16 %v748
        %v993 = vunpack.c.l.b16 %v749
        %v994 = vunpack.c.l.b16 %v750
        %v995 = vunpack.c.h.b16 %v750
        %v996 = vunpack.c.l.b16 %v751
        %v997 = vunpack.c.l.b16 %v752
        %v998 = vunpack.c.h.b16 %v752
        %v999 = vunpack.c.l.b16 %v753
        %v1000 = vunpack.c.l.b16 %v754
        %v1001 = vunpack.c.h.b16 %v754
        %v1002 = vunpack.c.l.b16 %v755
        %v1003 = vunpack.c.l.b16 %v756
        %v1004 = vunpack.c.h.b16 %v756
        %v1005 = vunpack.c.l.b16 %v757
        %v1006 = vunpack.c.l.b16 %v758
        %v1007 = vunpack.c.h.b16 %v758
        %v1008 = vunpack.c.l.b16 %v759
        %v1009 = vunpack.c.l.b16 %v760
        %v1010 = vunpack.c.h.b16 %v760
        %v1011 = vunpack.c.l.b16 %v761
        %v1012 = vunpack.c.l.b16 %v762
        %v1013 = vunpack.c.h.b16 %v762
        %v1014 = vunpack.c.l.b16 %v763
        %v1015 = vunpack.c.l.b16 %v764
        %v1016 = vunpack.c.h.b16 %v764
        %v1017 = vunpack.c.l.b16 %v765
        %v1018 = vunpack.c.l.b16 %v766
        %v1019 = vunpack.c.h.b16 %v766
        %v1020 = vunpack.c.l.b16 %v767
        %v1021 = vunpack.c.l.b16 %v768
        %v1022 = vunpack.c.h.b16 %v768
        %v1023 = vunpack.c.l.b16 %v769
        %v1024 = vunpack.c.l.b16 %v770
        %v1025 = vunpack.c.h.b16 %v770
        %v1026 = vunpack.c.l.b16 %v771
        %v1027 = vunpack.c.l.b16 %v772
        %v1028 = vunpack.c.h.b16 %v772
        %v1029 = vunpack.c.l.b16 %v773
        %v1030 = vunpack.c.l.b16 %v774
        %v1031 = vunpack.c.h.b16 %v774
        %v1032 = vunpack.c.l.b16 %v775
        %v1033 = vunpack.c.l.b16 %v776
        %v1034 = vunpack.c.h.b16 %v776
        %v1035 = vunpack.c.l.b16 %v777
        %v1036 = vunpack.c.l.b16 %v778
        %v1037 = vunpack.c.h.b16 %v778
        %v1038 = vunpack.c.l.b16 %v779
        %v1039 = vpack.c.b16 %v946, %v943
        %v1040 = vpack.c.b16 %v947, %v944
        %v1041 = vpack.c.b16 %v948, %v945
        %v1042 = vpack.c.b16 %v952, %v949
        %v1043 = vpack.c.b16 %v953, %v950
        %v1044 = vpack.c.b16 %v954, %v951
        %v1045 = vpack.c.b16 %v958, %v955
        %v1046 = vpack.c.b16 %v959, %v956
        %v1047 = vpack.c.b16 %v960, %v957
        %v1048 = vpack.c.b16 %v964, %v961
        %v1049 = vpack.c.b16 %v965, %v962
        %v1050 = vpack.c.b16 %v966, %v963
        %v1051 = vpack.c.b16 %v970, %v967
        %v1052 = vpack.c.b16 %v971, %v968
        %v1053 = vpack.c.b16 %v972, %v969
        %v1054 = vpack.c.b16 %v976, %v973
        %v1055 = vpack.c.b16 %v977, %v974
        %v1056 = vpack.c.b16 %v978, %v975
        %v1057 = vpack.c.b16 %v982, %v979
        %v1058 = vpack.c.b16 %v983, %v980
        %v1059 = vpack.c.b16 %v984, %v981
        %v1060 = vpack.c.b16 %v988, %v985
        %v1061 = vpack.c.b16 %v989, %v986
        %v1062 = vpack.c.b16 %v990, %v987
        %v1063 = vpack.c.b16 %v994, %v991
        %v1064 = vpack.c.b16 %v995, %v992
        %v1065 = vpack.c.b16 %v996, %v993
        %v1066 = vpack.c.b16 %v1000, %v997
        %v1067 = vpack.c.b16 %v1001, %v998
        %v1068 = vpack.c.b16 %v1002, %v999
        %v1069 = vpack.c.b16 %v1006, %v1003
        %v1070 = vpack.c.b16 %v1007, %v1004
        %v1071 = vpack.c.b16 %v1008, %v1005
        %v1072 = vpack.c.b16 %v1012, %v1009
        %v1073 = vpack.c.b16 %v1013, %v1010
        %v1074 = vpack.c.b16 %v1014, %v1011
        %v1075 = vpack.c.b16 %v1018, %v1015
        %v1076 = vpack.c.b16 %v1019, %v1016
        %v1077 = vpack.c.b16 %v1020, %v1017
        %v1078 = vpack.c.b16 %v1024, %v1021
        %v1079 = vpack.c.b16 %v1025, %v1022
        %v1080 = vpack.c.b16 %v1026, %v1023
        %v1081 = vpack.c.b16 %v1030, %v1027
        %v1082 = vpack.c.b16 %v1031, %v1028
        %v1083 = vpack.c.b16 %v1032, %v1029
        %v1084 = vpack.c.b16 %v1036, %v1033
        %v1085 = vpack.c.b16 %v1037, %v1034
        %v1086 = vpack.c.b16 %v1038, %v1035
        %1135 = vmatprep.subr.bf16.mxu0 %v1040
        %1136 = vmatpush1.bf16.msra.mxu0 %v1039
        %1137 = vmatprep.subr.bf16.mxu0 %v1043
        %1138 = vmatpush1.bf16.msra.mxu0 %v1042
        %1139 = vmatprep.subr.bf16.mxu0 %v1046
        %1140 = vmatpush1.bf16.msra.mxu0 %v1045
        %1141 = vmatprep.subr.bf16.mxu0 %v1049
        %1142 = vmatpush1.bf16.msra.mxu0 %v1048
        %1143 = vmatprep.subr.bf16.mxu0 %v1052
        %1144 = vmatpush1.bf16.msra.mxu0 %v1051
        %1145 = vmatprep.subr.bf16.mxu0 %v1055
        %1146 = vmatpush1.bf16.msra.mxu0 %v1054
        %1147 = vmatprep.subr.bf16.mxu0 %v1058
        %1148 = vmatpush1.bf16.msra.mxu0 %v1057
        %1149 = vmatprep.subr.bf16.mxu0 %v1061
        %1150 = vmatpush1.bf16.msra.mxu0 %v1060
        %1151 = vmatprep.subr.bf16.mxu0 %v1064
        %1152 = vmatpush1.bf16.msra.mxu0 %v1063
        %1153 = vmatprep.subr.bf16.mxu0 %v1067
        %1154 = vmatpush1.bf16.msra.mxu0 %v1066
        %1155 = vmatprep.subr.bf16.mxu0 %v1070
        %1156 = vmatpush1.bf16.msra.mxu0 %v1069
        %1157 = vmatprep.subr.bf16.mxu0 %v1073
        %1158 = vmatpush1.bf16.msra.mxu0 %v1072
        %1159 = vmatprep.subr.bf16.mxu0 %v1076
        %1160 = vmatpush1.bf16.msra.mxu0 %v1075
        %1161 = vmatprep.subr.bf16.mxu0 %v1079
        %1162 = vmatpush1.bf16.msra.mxu0 %v1078
        %1163 = vmatprep.subr.bf16.mxu0 %v1082
        %1164 = vmatpush1.bf16.msra.mxu0 %v1081
        %1165 = vmatprep.subr.bf16.mxu0 %v1085
        %1166 = vmatpush1.bf16.msra.mxu0 %v1084
        %1167 = vmatprep.mubr.bf16.mxu0 %v848
        %1168 = vmatmul.mubr.bf16.gmra.mrb[0].mxu0 %v847
        %v1169 = vpop.f32.mrb[0].mxu0
        %v1170 = vadd.f32 %v787, %v1169
        %v1171 = vpop.f32.mrb[0].mxu0
        %v1172 = vadd.f32 %v791, %v1171
        %v1173 = vpop.f32.mrb[0].mxu0
        %v1174 = vadd.f32 %v787, %v1173
        %v1175 = vpop.f32.mrb[0].mxu0
        %v1176 = vadd.f32 %v791, %v1175
        %1177 = vmatprep.mubr.bf16.mxu0 %v850
        %1178 = vmatmul.mubr.bf16.gmra.mrb[0].mxu0 %v849
        %v1179 = vpop.f32.mrb[0].mxu0
        %v1180 = vadd.f32 %v787, %v1179
        %v1181 = vpop.f32.mrb[0].mxu0
        %v1182 = vadd.f32 %v791, %v1181
        %v1183 = vpop.f32.mrb[0].mxu0
        %v1184 = vadd.f32 %v787, %v1183
        %v1185 = vpop.f32.mrb[0].mxu0
        %v1186 = vadd.f32 %v791, %v1185
        %1187 = vmatprep.mubr.bf16.mxu0 %v852
        %1188 = vmatmul.mubr.bf16.gmra.mrb[0].mxu0 %v851
        %v1189 = vpop.f32.mrb[0].mxu0
        %v1190 = vadd.f32 %v787, %v1189
        %v1191 = vpop.f32.mrb[0].mxu0
        %v1192 = vadd.f32 %v791, %v1191
        %v1193 = vpop.f32.mrb[0].mxu0
        %v1194 = vadd.f32 %v787, %v1193
        %v1195 = vpop.f32.mrb[0].mxu0
        %v1196 = vadd.f32 %v791, %v1195
        %1197 = vmatprep.mubr.bf16.mxu0 %v854
        %1198 = vmatmul.mubr.bf16.gmra.mrb[0].mxu0 %v853
        %v1199 = vpop.f32.mrb[0].mxu0
        %v1200 = vadd.f32 %v787, %v1199
        %v1201 = vpop.f32.mrb[0].mxu0
        %v1202 = vadd.f32 %v791, %v1201
        %v1203 = vpop.f32.mrb[0].mxu0
        %v1204 = vadd.f32 %v787, %v1203
        %v1205 = vpop.f32.mrb[0].mxu0
        %v1206 = vadd.f32 %v791, %v1205
        %1207 = vmatprep.mubr.bf16.mxu0 %v856
        %1208 = vmatmul.mubr.bf16.gmra.mrb[0].mxu0 %v855
        %v1209 = vpop.f32.mrb[0].mxu0
        %v1210 = vadd.f32 %v787, %v1209
        %v1211 = vpop.f32.mrb[0].mxu0
        %v1212 = vadd.f32 %v791, %v1211
        %v1213 = vpop.f32.mrb[0].mxu0
        %v1214 = vadd.f32 %v787, %v1213
        %v1215 = vpop.f32.mrb[0].mxu0
        %v1216 = vadd.f32 %v791, %v1215
        %1217 = vmatprep.mubr.bf16.mxu0 %v858
        %1218 = vmatmul.mubr.bf16.gmra.mrb[0].mxu0 %v857
        %v1219 = vpop.f32.mrb[0].mxu0
        %v1220 = vadd.f32 %v787, %v1219
        %v1221 = vpop.f32.mrb[0].mxu0
        %v1222 = vadd.f32 %v791, %v1221
        %v1223 = vpop.f32.mrb[0].mxu0
        %v1224 = vadd.f32 %v787, %v1223
        %v1225 = vpop.f32.mrb[0].mxu0
        %v1226 = vadd.f32 %v791, %v1225
        %1227 = vmatprep.mubr.bf16.mxu0 %v860
        %1228 = vmatmul.mubr.bf16.gmra.mrb[0].mxu0 %v859
        %v1229 = vpop.f32.mrb[0].mxu0
        %v1230 = vadd.f32 %v787, %v1229
        %v1231 = vpop.f32.mrb[0].mxu0
        %v1232 = vadd.f32 %v791, %v1231
        %v1233 = vpop.f32.mrb[0].mxu0
        %v1234 = vadd.f32 %v787, %v1233
        %v1235 = vpop.f32.mrb[0].mxu0
        %v1236 = vadd.f32 %v791, %v1235
        %1237 = vmatprep.mubr.bf16.mxu0 %v862
        %1238 = vmatmul.mubr.bf16.gmra.mrb[0].mxu0 %v861
        %v1239 = vpop.f32.mrb[0].mxu0
        %v1240 = vadd.f32 %v787, %v1239
        %v1241 = vpop.f32.mrb[0].mxu0
        %v1242 = vadd.f32 %v791, %v1241
        %v1243 = vpop.f32.mrb[0].mxu0
        %v1244 = vadd.f32 %v787, %v1243
        %v1245 = vpop.f32.mrb[0].mxu0
        %v1246 = vadd.f32 %v791, %v1245
        %1247 = vdwg.mxu0
        %1248 = vmatprep.subr.bf16.mxu0 0
        %1249 = vmatpush1.bf16.msra.mxu0 %v1041
        %1250 = vmatprep.subr.bf16.mxu0 0
        %1251 = vmatpush1.bf16.msra.mxu0 %v1044
        %1252 = vmatprep.subr.bf16.mxu0 0
        %1253 = vmatpush1.bf16.msra.mxu0 %v1047
        %1254 = vmatprep.subr.bf16.mxu0 0
        %1255 = vmatpush1.bf16.msra.mxu0 %v1050
        %1256 = vmatprep.subr.bf16.mxu0 0
        %1257 = vmatpush1.bf16.msra.mxu0 %v1053
        %1258 = vmatprep.subr.bf16.mxu0 0
        %1259 = vmatpush1.bf16.msra.mxu0 %v1056
        %1260 = vmatprep.subr.bf16.mxu0 0
        %1261 = vmatpush1.bf16.msra.mxu0 %v1059
        %1262 = vmatprep.subr.bf16.mxu0 0
        %1263 = vmatpush1.bf16.msra.mxu0 %v1062
        %1264 = vmatprep.subr.bf16.mxu0 0
        %1265 = vmatpush1.bf16.msra.mxu0 %v1065
        %1266 = vmatprep.subr.bf16.mxu0 0
        %1267 = vmatpush1.bf16.msra.mxu0 %v1068
        %1268 = vmatprep.subr.bf16.mxu0 0
        %1269 = vmatpush1.bf16.msra.mxu0 %v1071
        %1270 = vmatprep.subr.bf16.mxu0 0
        %1271 = vmatpush1.bf16.msra.mxu0 %v1074
        %1272 = vmatprep.subr.bf16.mxu0 0
        %1273 = vmatpush1.bf16.msra.mxu0 %v1077
        %1274 = vmatprep.subr.bf16.mxu0 0
        %1275 = vmatpush1.bf16.msra.mxu0 %v1080
        %1276 = vmatprep.subr.bf16.mxu0 0
        %1277 = vmatpush1.bf16.msra.mxu0 %v1083
        %1278 = vmatprep.subr.bf16.mxu0 0
        %1279 = vmatpush1.bf16.msra.mxu0 %v1086
        %1280 = vmatprep.mubr.bf16.mxu0 %v848
        %1281 = vmatmul.mubr.bf16.gmra.mrb[0].mxu0 %v847
        %v1282 = vpop.f32.mrb[0].mxu0
        %v1283 = vadd.f32 %v795, %v1282
        %v1284 = vpop.f32.mrb[0].mxu0
        %v1285 = vpop.f32.mrb[0].mxu0
        %v1286 = vadd.f32 %v795, %v1285
        %v1287 = vpop.f32.mrb[0].mxu0
        %1288 = vmatprep.mubr.bf16.mxu0 %v850
        %1289 = vmatmul.mubr.bf16.gmra.mrb[0].mxu0 %v849
        %v1290 = vpop.f32.mrb[0].mxu0
        %v1291 = vadd.f32 %v795, %v1290
        %v1292 = vpop.f32.mrb[0].mxu0
        %v1293 = vpop.f32.mrb[0].mxu0
        %v1294 = vadd.f32 %v795, %v1293
        %v1295 = vpop.f32.mrb[0].mxu0
        %1296 = vmatprep.mubr.bf16.mxu0 %v852
        %1297 = vmatmul.mubr.bf16.gmra.mrb[0].mxu0 %v851
        %v1298 = vpop.f32.mrb[0].mxu0
        %v1299 = vadd.f32 %v795, %v1298
        %v1300 = vpop.f32.mrb[0].mxu0
        %v1301 = vpop.f32.mrb[0].mxu0
        %v1302 = vadd.f32 %v795, %v1301
        %v1303 = vpop.f32.mrb[0].mxu0
        %1304 = vmatprep.mubr.bf16.mxu0 %v854
        %1305 = vmatmul.mubr.bf16.gmra.mrb[0].mxu0 %v853
        %v1306 = vpop.f32.mrb[0].mxu0
        %v1307 = vadd.f32 %v795, %v1306
        %v1308 = vpop.f32.mrb[0].mxu0
        %v1309 = vpop.f32.mrb[0].mxu0
        %v1310 = vadd.f32 %v795, %v1309
        %v1311 = vpop.f32.mrb[0].mxu0
        %1312 = vmatprep.mubr.bf16.mxu0 %v856
        %1313 = vmatmul.mubr.bf16.gmra.mrb[0].mxu0 %v855
        %v1314 = vpop.f32.mrb[0].mxu0
        %v1315 = vadd.f32 %v795, %v1314
        %v1316 = vpop.f32.mrb[0].mxu0
        %v1317 = vpop.f32.mrb[0].mxu0
        %v1318 = vadd.f32 %v795, %v1317
        %v1319 = vpop.f32.mrb[0].mxu0
        %1320 = vmatprep.mubr.bf16.mxu0 %v858
        %1321 = vmatmul.mubr.bf16.gmra.mrb[0].mxu0 %v857
        %v1322 = vpop.f32.mrb[0].mxu0
        %v1323 = vadd.f32 %v795, %v1322
        %v1324 = vpop.f32.mrb[0].mxu0
        %v1325 = vpop.f32.mrb[0].mxu0
        %v1326 = vadd.f32 %v795, %v1325
        %v1327 = vpop.f32.mrb[0].mxu0
        %1328 = vmatprep.mubr.bf16.mxu0 %v860
        %1329 = vmatmul.mubr.bf16.gmra.mrb[0].mxu0 %v859
        %v1330 = vpop.f32.mrb[0].mxu0
        %v1331 = vadd.f32 %v795, %v1330
        %v1332 = vpop.f32.mrb[0].mxu0
        %v1333 = vpop.f32.mrb[0].mxu0
        %v1334 = vadd.f32 %v795, %v1333
        %v1335 = vpop.f32.mrb[0].mxu0
        %1336 = vmatprep.mubr.bf16.mxu0 %v862
        %1337 = vmatmul.mubr.bf16.gmra.mrb[0].mxu0 %v861
        %v1338 = vpop.f32.mrb[0].mxu0
        %v1339 = vadd.f32 %v795, %v1338
        %v1340 = vpop.f32.mrb[0].mxu0
        %v1341 = vpop.f32.mrb[0].mxu0
        %v1342 = vadd.f32 %v795, %v1341
        %v1343 = vpop.f32.mrb[0].mxu0
        %1344 = vdwg.mxu0
        %v1345 = vpack.c.bf16 %v1174, %v1170
        %v1346 = vpack.c.bf16 %v1184, %v1180
        %v1347 = vpack.c.bf16 %v1194, %v1190
        %v1348 = vpack.c.bf16 %v1204, %v1200
        %v1349 = vpack.c.bf16 %v1214, %v1210
        %v1350 = vpack.c.bf16 %v1224, %v1220
        %v1351 = vpack.c.bf16 %v1234, %v1230
        %v1352 = vpack.c.bf16 %v1244, %v1240
        %v1353 = vpack.c.bf16 %v1176, %v1172
        %v1354 = vpack.c.bf16 %v1186, %v1182
        %v1355 = vpack.c.bf16 %v1196, %v1192
        %v1356 = vpack.c.bf16 %v1206, %v1202
        %v1357 = vpack.c.bf16 %v1216, %v1212
        %v1358 = vpack.c.bf16 %v1226, %v1222
        %v1359 = vpack.c.bf16 %v1236, %v1232
        %v1360 = vpack.c.bf16 %v1246, %v1242
        %v1361 = vpack.c.bf16 %v1286, %v1283
        %v1362 = vpack.c.bf16 %v1294, %v1291
        %v1363 = vpack.c.bf16 %v1302, %v1299
        %v1364 = vpack.c.bf16 %v1310, %v1307
        %v1365 = vpack.c.bf16 %v1318, %v1315
        %v1366 = vpack.c.bf16 %v1326, %v1323
        %v1367 = vpack.c.bf16 %v1334, %v1331
        %v1368 = vpack.c.bf16 %v1342, %v1339
        %1369 = vmatprep.subr.bf16.mxu0 0
        %1370 = vmatpush1.bf16.xpose.msra.mxu0 %v1353
        %1371 = vmatprep.subr.bf16.mxu0 0
        %1372 = vmatpush1.bf16.xpose.msra.mxu0 %v1354
        %1373 = vmatprep.subr.bf16.mxu0 0
        %1374 = vmatpush1.bf16.xpose.msra.mxu0 %v1355
        %1375 = vmatprep.subr.bf16.mxu0 0
        %1376 = vmatpush1.bf16.xpose.msra.mxu0 %v1356
        %1377 = vmatprep.subr.bf16.mxu0 0
        %1378 = vmatpush1.bf16.xpose.msra.mxu0 %v1357
        %1379 = vmatprep.subr.bf16.mxu0 0
        %1380 = vmatpush1.bf16.xpose.msra.mxu0 %v1358
        %1381 = vmatprep.subr.bf16.mxu0 0
        %1382 = vmatpush1.bf16.xpose.msra.mxu0 %v1359
        %1383 = vmatprep.subr.bf16.mxu0 0
        %1384 = vmatpush1.bf16.xpose.msra.mxu0 %v1360
        %1385 = vmatprep.subr.bf16.mxu0 0
        %1386 = vmatpush1.bf16.xpose.msra.mxu0 0
        %1387 = vmatprep.subr.bf16.mxu0 0
        %1388 = vmatpush1.bf16.xpose.msra.mxu0 0
        %1389 = vmatprep.subr.bf16.mxu0 0
        %1390 = vmatpush1.bf16.xpose.msra.mxu0 0
        %1391 = vmatprep.subr.bf16.mxu0 0
        %1392 = vmatpush1.bf16.xpose.msra.mxu0 0
        %1393 = vmatprep.subr.bf16.mxu0 0
        %1394 = vmatpush1.bf16.xpose.msra.mxu0 0
        %1395 = vmatprep.subr.bf16.mxu0 0
        %1396 = vmatpush1.bf16.xpose.msra.mxu0 0
        %1397 = vmatprep.subr.bf16.mxu0 0
        %1398 = vmatpush1.bf16.xpose.msra.mxu0 0
        %1399 = vmatprep.subr.bf16.mxu0 0
        %1400 = vmatpush1.bf16.xpose.msra.mxu0 0
        %1401 = vmatprep.mubr.bf16.mxu0 0
        %1402 = vmatmul.mubr.bf16.gmra.mrb[0].mxu0 %v1345
        %v1403 = vpop.f32.mrb[0].mxu0
        %v1404 = vadd.f32 0.0, %v1403
        %v1405 = vpop.f32.mrb[0].mxu0
        %v1406 = vpop.f32.mrb[0].mxu0
        %v1407 = vadd.f32 0.0, %v1406
        %v1408 = vpop.f32.mrb[0].mxu0
        %1409 = vmatprep.mubr.bf16.mxu0 0
        %1410 = vmatmul.mubr.bf16.gmra.mrb[0].mxu0 %v1346
        %v1411 = vpop.f32.mrb[0].mxu0
        %v1412 = vadd.f32 0.0, %v1411
        %v1413 = vpop.f32.mrb[0].mxu0
        %v1414 = vpop.f32.mrb[0].mxu0
        %v1415 = vadd.f32 0.0, %v1414
        %v1416 = vpop.f32.mrb[0].mxu0
        %1417 = vmatprep.mubr.bf16.mxu0 0
        %1418 = vmatmul.mubr.bf16.gmra.mrb[0].mxu0 %v1347
        %v1419 = vpop.f32.mrb[0].mxu0
        %v1420 = vadd.f32 0.0, %v1419
        %v1421 = vpop.f32.mrb[0].mxu0
        %v1422 = vpop.f32.mrb[0].mxu0
        %v1423 = vadd.f32 0.0, %v1422
        %v1424 = vpop.f32.mrb[0].mxu0
        %1425 = vmatprep.mubr.bf16.mxu0 0
        %1426 = vmatmul.mubr.bf16.gmra.mrb[0].mxu0 %v1348
        %v1427 = vpop.f32.mrb[0].mxu0
        %v1428 = vadd.f32 0.0, %v1427
        %v1429 = vpop.f32.mrb[0].mxu0
        %v1430 = vpop.f32.mrb[0].mxu0
        %v1431 = vadd.f32 0.0, %v1430
        %v1432 = vpop.f32.mrb[0].mxu0
        %1433 = vmatprep.mubr.bf16.mxu0 0
        %1434 = vmatmul.mubr.bf16.gmra.mrb[0].mxu0 %v1349
        %v1435 = vpop.f32.mrb[0].mxu0
        %v1436 = vadd.f32 0.0, %v1435
        %v1437 = vpop.f32.mrb[0].mxu0
        %v1438 = vpop.f32.mrb[0].mxu0
        %v1439 = vadd.f32 0.0, %v1438
        %v1440 = vpop.f32.mrb[0].mxu0
        %1441 = vmatprep.mubr.bf16.mxu0 0
        %1442 = vmatmul.mubr.bf16.gmra.mrb[0].mxu0 %v1350
        %v1443 = vpop.f32.mrb[0].mxu0
        %v1444 = vadd.f32 0.0, %v1443
        %v1445 = vpop.f32.mrb[0].mxu0
        %v1446 = vpop.f32.mrb[0].mxu0
        %v1447 = vadd.f32 0.0, %v1446
        %v1448 = vpop.f32.mrb[0].mxu0
        %1449 = vmatprep.mubr.bf16.mxu0 0
        %1450 = vmatmul.mubr.bf16.gmra.mrb[0].mxu0 %v1351
        %v1451 = vpop.f32.mrb[0].mxu0
        %v1452 = vadd.f32 0.0, %v1451
        %v1453 = vpop.f32.mrb[0].mxu0
        %v1454 = vpop.f32.mrb[0].mxu0
        %v1455 = vadd.f32 0.0, %v1454
        %v1456 = vpop.f32.mrb[0].mxu0
        %1457 = vmatprep.mubr.bf16.mxu0 0
        %1458 = vmatmul.mubr.bf16.gmra.mrb[0].mxu0 %v1352
        %v1459 = vpop.f32.mrb[0].mxu0
        %v1460 = vadd.f32 0.0, %v1459
        %v1461 = vpop.f32.mrb[0].mxu0
        %v1462 = vpop.f32.mrb[0].mxu0
        %v1463 = vadd.f32 0.0, %v1462
        %v1464 = vpop.f32.mrb[0].mxu0
        %1465 = vdwg.mxu0
        %v1466 = vlaneseq
        %v1467 = vshrl.u32 %v1466, 7
        %v1468 = vadd.s32 %v1467, 8
        %v1469 = vadd.s32 %v1467, 16
        %v1470 = vadd.s32 %v1467, 24
        %v1471 = vadd.s32 %v1467, 32
        %v1472 = vadd.s32 %v1467, 40
        %v1473 = vadd.s32 %v1467, 48
        %v1474 = vadd.s32 %v1467, 56
        %v1475 = vadd.s32 %v1467, 64
        %v1476 = vadd.s32 %v1467, 72
        %v1477 = vadd.s32 %v1467, 80
        %v1478 = vadd.s32 %v1467, 88
        %v1479 = vadd.s32 %v1467, 96
        %v1480 = vadd.s32 %v1467, 104
        %v1481 = vadd.s32 %v1467, 112
        %v1482 = vadd.s32 %v1467, 120
        %v1483 = vlaneseq
        %v1484 = vand.u32 %v1483, 127
        %v1485 = vsub.s32 %v1467, %v1484
        %v1486 = vsub.s32 %v1468, %v1484
        %v1487 = vsub.s32 %v1469, %v1484
        %v1488 = vsub.s32 %v1470, %v1484
        %v1489 = vsub.s32 %v1471, %v1484
        %v1490 = vsub.s32 %v1472, %v1484
        %v1491 = vsub.s32 %v1473, %v1484
        %v1492 = vsub.s32 %v1474, %v1484
        %v1493 = vsub.s32 %v1475, %v1484
        %v1494 = vsub.s32 %v1476, %v1484
        %v1495 = vsub.s32 %v1477, %v1484
        %v1496 = vsub.s32 %v1478, %v1484
        %v1497 = vsub.s32 %v1479, %v1484
        %v1498 = vsub.s32 %v1480, %v1484
        %v1499 = vsub.s32 %v1481, %v1484
        %v1500 = vsub.s32 %v1482, %v1484
        %v1501 = vcvt.s32.f32 %v1485
        %v1502 = vcvt.s32.f32 %v1486
        %v1503 = vcvt.s32.f32 %v1487
        %v1504 = vcvt.s32.f32 %v1488
        %v1505 = vcvt.s32.f32 %v1489
        %v1506 = vcvt.s32.f32 %v1490
        %v1507 = vcvt.s32.f32 %v1491
        %v1508 = vcvt.s32.f32 %v1492
        %v1509 = vcvt.s32.f32 %v1493
        %v1510 = vcvt.s32.f32 %v1494
        %v1511 = vcvt.s32.f32 %v1495
        %v1512 = vcvt.s32.f32 %v1496
        %v1513 = vcvt.s32.f32 %v1497
        %v1514 = vcvt.s32.f32 %v1498
        %v1515 = vcvt.s32.f32 %v1499
        %v1516 = vcvt.s32.f32 %v1500
        %v1517 = vand.u32 2147483647, %v1501
        %v1518 = vand.u32 2147483647, %v1502
        %v1519 = vand.u32 2147483647, %v1503
        %v1520 = vand.u32 2147483647, %v1504
        %v1521 = vand.u32 2147483647, %v1505
        %v1522 = vand.u32 2147483647, %v1506
        %v1523 = vand.u32 2147483647, %v1507
        %v1524 = vand.u32 2147483647, %v1508
        %v1525 = vand.u32 2147483647, %v1509
        %v1526 = vand.u32 2147483647, %v1510
        %v1527 = vand.u32 2147483647, %v1511
        %v1528 = vand.u32 2147483647, %v1512
        %v1529 = vand.u32 2147483647, %v1513
        %v1530 = vand.u32 2147483647, %v1514
        %v1531 = vand.u32 2147483647, %v1515
        %v1532 = vand.u32 2147483647, %v1516
        %s1533 = sld [smem:[#allocation7 + %s39]]
        %v1534 = vstv %s1533
        %v1535 = vmul.f32 %v1534, %v1517
        %v1536 = vmul.f32 %v1534, %v1518
        %v1537 = vmul.f32 %v1534, %v1519
        %v1538 = vmul.f32 %v1534, %v1520
        %v1539 = vmul.f32 %v1534, %v1521
        %v1540 = vmul.f32 %v1534, %v1522
        %v1541 = vmul.f32 %v1534, %v1523
        %v1542 = vmul.f32 %v1534, %v1524
        %v1543 = vmul.f32 %v1534, %v1525
        %v1544 = vmul.f32 %v1534, %v1526
        %v1545 = vmul.f32 %v1534, %v1527
        %v1546 = vmul.f32 %v1534, %v1528
        %v1547 = vmul.f32 %v1534, %v1529
        %v1548 = vmul.f32 %v1534, %v1530
        %v1549 = vmul.f32 %v1534, %v1531
        %v1550 = vmul.f32 %v1534, %v1532
        %v1551 = vsub.f32 %v1404, %v1535
        %v1552 = vsub.f32 %v1407, %v1536
        %v1553 = vsub.f32 %v1412, %v1537
        %v1554 = vsub.f32 %v1415, %v1538
        %v1555 = vsub.f32 %v1420, %v1539
        %v1556 = vsub.f32 %v1423, %v1540
        %v1557 = vsub.f32 %v1428, %v1541
        %v1558 = vsub.f32 %v1431, %v1542
        %v1559 = vsub.f32 %v1436, %v1543
        %v1560 = vsub.f32 %v1439, %v1544
        %v1561 = vsub.f32 %v1444, %v1545
        %v1562 = vsub.f32 %v1447, %v1546
        %v1563 = vsub.f32 %v1452, %v1547
        %v1564 = vsub.f32 %v1455, %v1548
        %v1565 = vsub.f32 %v1460, %v1549
        %v1566 = vsub.f32 %v1463, %v1550
        %1567 = vmax.xlane.f32.xlu0 %v1551
        %v1568 = vpop.xlane.xlu0 %1567
        %1569 = vmax.xlane.f32.xlu0 %v1552
        %v1570 = vpop.xlane.xlu0 %1569
        %1571 = vmax.xlane.f32.xlu0 %v1553
        %v1572 = vpop.xlane.xlu0 %1571
        %1573 = vmax.xlane.f32.xlu0 %v1554
        %v1574 = vpop.xlane.xlu0 %1573
        %1575 = vmax.xlane.f32.xlu0 %v1555
        %v1576 = vpop.xlane.xlu0 %1575
        %1577 = vmax.xlane.f32.xlu0 %v1556
        %v1578 = vpop.xlane.xlu0 %1577
        %1579 = vmax.xlane.f32.xlu0 %v1557
        %v1580 = vpop.xlane.xlu0 %1579
        %1581 = vmax.xlane.f32.xlu0 %v1558
        %v1582 = vpop.xlane.xlu0 %1581
        %1583 = vmax.xlane.f32.xlu0 %v1559
        %v1584 = vpop.xlane.xlu0 %1583
        %1585 = vmax.xlane.f32.xlu0 %v1560
        %v1586 = vpop.xlane.xlu0 %1585
        %1587 = vmax.xlane.f32.xlu0 %v1561
        %v1588 = vpop.xlane.xlu0 %1587
        %1589 = vmax.xlane.f32.xlu0 %v1562
        %v1590 = vpop.xlane.xlu0 %1589
        %1591 = vmax.xlane.f32.xlu0 %v1563
        %v1592 = vpop.xlane.xlu0 %1591
        %1593 = vmax.xlane.f32.xlu0 %v1564
        %v1594 = vpop.xlane.xlu0 %1593
        %1595 = vmax.xlane.f32.xlu0 %v1565
        %v1596 = vpop.xlane.xlu0 %1595
        %1597 = vmax.xlane.f32.xlu0 %v1566
        %v1598 = vpop.xlane.xlu0 %1597
        %v1599 = vsub.f32 %v1551, %v1568
        %v1600 = vsub.f32 %v1552, %v1570
        %v1601 = vsub.f32 %v1553, %v1572
        %v1602 = vsub.f32 %v1554, %v1574
        %v1603 = vsub.f32 %v1555, %v1576
        %v1604 = vsub.f32 %v1556, %v1578
        %v1605 = vsub.f32 %v1557, %v1580
        %v1606 = vsub.f32 %v1558, %v1582
        %v1607 = vsub.f32 %v1559, %v1584
        %v1608 = vsub.f32 %v1560, %v1586
        %v1609 = vsub.f32 %v1561, %v1588
        %v1610 = vsub.f32 %v1562, %v1590
        %v1611 = vsub.f32 %v1563, %v1592
        %v1612 = vsub.f32 %v1564, %v1594
        %v1613 = vsub.f32 %v1565, %v1596
        %v1614 = vsub.f32 %v1566, %v1598
        %v1615 = vmul.f32 %v1599, 1.442695
        %v1616 = vpow.pop %v1615
        %v1617 = vmul.f32 %v1600, 1.442695
        %v1618 = vpow.pop %v1617
        %v1619 = vmul.f32 %v1601, 1.442695
        %v1620 = vpow.pop %v1619
        %v1621 = vmul.f32 %v1602, 1.442695
        %v1622 = vpow.pop %v1621
        %v1623 = vmul.f32 %v1603, 1.442695
        %v1624 = vpow.pop %v1623
        %v1625 = vmul.f32 %v1604, 1.442695
        %v1626 = vpow.pop %v1625
        %v1627 = vmul.f32 %v1605, 1.442695
        %v1628 = vpow.pop %v1627
        %v1629 = vmul.f32 %v1606, 1.442695
        %v1630 = vpow.pop %v1629
        %v1631 = vmul.f32 %v1607, 1.442695
        %v1632 = vpow.pop %v1631
        %v1633 = vmul.f32 %v1608, 1.442695
        %v1634 = vpow.pop %v1633
        %v1635 = vmul.f32 %v1609, 1.442695
        %v1636 = vpow.pop %v1635
        %v1637 = vmul.f32 %v1610, 1.442695
        %v1638 = vpow.pop %v1637
        %v1639 = vmul.f32 %v1611, 1.442695
        %v1640 = vpow.pop %v1639
        %v1641 = vmul.f32 %v1612, 1.442695
        %v1642 = vpow.pop %v1641
        %v1643 = vmul.f32 %v1613, 1.442695
        %v1644 = vpow.pop %v1643
        %v1645 = vmul.f32 %v1614, 1.442695
        %v1646 = vpow.pop %v1645
        %1647 = vadd.xlane.f32.xlu0 %v1616
        %v1648 = vpop.xlane.xlu0 %1647
        %1649 = vadd.xlane.f32.xlu0 %v1618
        %v1650 = vpop.xlane.xlu0 %1649
        %1651 = vadd.xlane.f32.xlu0 %v1620
        %v1652 = vpop.xlane.xlu0 %1651
        %1653 = vadd.xlane.f32.xlu0 %v1622
        %v1654 = vpop.xlane.xlu0 %1653
        %1655 = vadd.xlane.f32.xlu0 %v1624
        %v1656 = vpop.xlane.xlu0 %1655
        %1657 = vadd.xlane.f32.xlu0 %v1626
        %v1658 = vpop.xlane.xlu0 %1657
        %1659 = vadd.xlane.f32.xlu0 %v1628
        %v1660 = vpop.xlane.xlu0 %1659
        %1661 = vadd.xlane.f32.xlu0 %v1630
        %v1662 = vpop.xlane.xlu0 %1661
        %1663 = vadd.xlane.f32.xlu0 %v1632
        %v1664 = vpop.xlane.xlu0 %1663
        %1665 = vadd.xlane.f32.xlu0 %v1634
        %v1666 = vpop.xlane.xlu0 %1665
        %1667 = vadd.xlane.f32.xlu0 %v1636
        %v1668 = vpop.xlane.xlu0 %1667
        %1669 = vadd.xlane.f32.xlu0 %v1638
        %v1670 = vpop.xlane.xlu0 %1669
        %1671 = vadd.xlane.f32.xlu0 %v1640
        %v1672 = vpop.xlane.xlu0 %1671
        %1673 = vadd.xlane.f32.xlu0 %v1642
        %v1674 = vpop.xlane.xlu0 %1673
        %1675 = vadd.xlane.f32.xlu0 %v1644
        %v1676 = vpop.xlane.xlu0 %1675
        %1677 = vadd.xlane.f32.xlu0 %v1646
        %v1678 = vpop.xlane.xlu0 %1677
        %v1679 = vrcp.pop %v1648
        %v1680 = vrcp.pop %v1650
        %v1681 = vrcp.pop %v1652
        %v1682 = vrcp.pop %v1654
        %v1683 = vrcp.pop %v1656
        %v1684 = vrcp.pop %v1658
        %v1685 = vrcp.pop %v1660
        %v1686 = vrcp.pop %v1662
        %v1687 = vrcp.pop %v1664
        %v1688 = vrcp.pop %v1666
        %v1689 = vrcp.pop %v1668
        %v1690 = vrcp.pop %v1670
        %v1691 = vrcp.pop %v1672
        %v1692 = vrcp.pop %v1674
        %v1693 = vrcp.pop %v1676
        %v1694 = vrcp.pop %v1678
        %v1695 = vmul.f32 %v1616, %v1679
        %v1696 = vmul.f32 %v1618, %v1680
        %v1697 = vmul.f32 %v1620, %v1681
        %v1698 = vmul.f32 %v1622, %v1682
        %v1699 = vmul.f32 %v1624, %v1683
        %v1700 = vmul.f32 %v1626, %v1684
        %v1701 = vmul.f32 %v1628, %v1685
        %v1702 = vmul.f32 %v1630, %v1686
        %v1703 = vmul.f32 %v1632, %v1687
        %v1704 = vmul.f32 %v1634, %v1688
        %v1705 = vmul.f32 %v1636, %v1689
        %v1706 = vmul.f32 %v1638, %v1690
        %v1707 = vmul.f32 %v1640, %v1691
        %v1708 = vmul.f32 %v1642, %v1692
        %v1709 = vmul.f32 %v1644, %v1693
        %v1710 = vmul.f32 %v1646, %v1694
        %v1711 = vpack.c.bf16 %v1696, %v1695
        %v1712 = vpack.c.bf16 %v1698, %v1697
        %v1713 = vpack.c.bf16 %v1700, %v1699
        %v1714 = vpack.c.bf16 %v1702, %v1701
        %v1715 = vpack.c.bf16 %v1704, %v1703
        %v1716 = vpack.c.bf16 %v1706, %v1705
        %v1717 = vpack.c.bf16 %v1708, %v1707
        %v1718 = vpack.c.bf16 %v1710, %v1709
        %1719 = vmatprep.subr.bf16.mxu0 0
        %1720 = vmatpush1.bf16.msra.mxu0 %v1361
        %1721 = vmatprep.subr.bf16.mxu0 0
        %1722 = vmatpush1.bf16.msra.mxu0 %v1362
        %1723 = vmatprep.subr.bf16.mxu0 0
        %1724 = vmatpush1.bf16.msra.mxu0 %v1363
        %1725 = vmatprep.subr.bf16.mxu0 0
        %1726 = vmatpush1.bf16.msra.mxu0 %v1364
        %1727 = vmatprep.subr.bf16.mxu0 0
        %1728 = vmatpush1.bf16.msra.mxu0 %v1365
        %1729 = vmatprep.subr.bf16.mxu0 0
        %1730 = vmatpush1.bf16.msra.mxu0 %v1366
        %1731 = vmatprep.subr.bf16.mxu0 0
        %1732 = vmatpush1.bf16.msra.mxu0 %v1367
        %1733 = vmatprep.subr.bf16.mxu0 0
        %1734 = vmatpush1.bf16.msra.mxu0 %v1368
        %1735 = vmatprep.subr.bf16.mxu0 0
        %1736 = vmatpush1.bf16.msra.mxu0 0
        %1737 = vmatprep.subr.bf16.mxu0 0
        %1738 = vmatpush1.bf16.msra.mxu0 0
        %1739 = vmatprep.subr.bf16.mxu0 0
        %1740 = vmatpush1.bf16.msra.mxu0 0
        %1741 = vmatprep.subr.bf16.mxu0 0
        %1742 = vmatpush1.bf16.msra.mxu0 0
        %1743 = vmatprep.subr.bf16.mxu0 0
        %1744 = vmatpush1.bf16.msra.mxu0 0
        %1745 = vmatprep.subr.bf16.mxu0 0
        %1746 = vmatpush1.bf16.msra.mxu0 0
        %1747 = vmatprep.subr.bf16.mxu0 0
        %1748 = vmatpush1.bf16.msra.mxu0 0
        %1749 = vmatprep.subr.bf16.mxu0 0
        %1750 = vmatpush1.bf16.msra.mxu0 0
        %1751 = vmatprep.mubr.bf16.mxu0 0
        %1752 = vmatmul.mubr.bf16.gmra.mrb[0].mxu0 %v1711
        %v1753 = vpop.f32.mrb[0].mxu0
        %v1754 = vadd.f32 0.0, %v1753
        %v1755 = vpop.f32.mrb[0].mxu0
        %v1756 = vpop.f32.mrb[0].mxu0
        %v1757 = vadd.f32 0.0, %v1756
        %v1758 = vpop.f32.mrb[0].mxu0
        %1759 = vmatprep.mubr.bf16.mxu0 0
        %1760 = vmatmul.mubr.bf16.gmra.mrb[0].mxu0 %v1712
        %v1761 = vpop.f32.mrb[0].mxu0
        %v1762 = vadd.f32 0.0, %v1761
        %v1763 = vpop.f32.mrb[0].mxu0
        %v1764 = vpop.f32.mrb[0].mxu0
        %v1765 = vadd.f32 0.0, %v1764
        %v1766 = vpop.f32.mrb[0].mxu0
        %1767 = vmatprep.mubr.bf16.mxu0 0
        %1768 = vmatmul.mubr.bf16.gmra.mrb[0].mxu0 %v1713
        %v1769 = vpop.f32.mrb[0].mxu0
        %v1770 = vadd.f32 0.0, %v1769
        %v1771 = vpop.f32.mrb[0].mxu0
        %v1772 = vpop.f32.mrb[0].mxu0
        %v1773 = vadd.f32 0.0, %v1772
        %v1774 = vpop.f32.mrb[0].mxu0
        %1775 = vmatprep.mubr.bf16.mxu0 0
        %1776 = vmatmul.mubr.bf16.gmra.mrb[0].mxu0 %v1714
        %v1777 = vpop.f32.mrb[0].mxu0
        %v1778 = vadd.f32 0.0, %v1777
        %v1779 = vpop.f32.mrb[0].mxu0
        %v1780 = vpop.f32.mrb[0].mxu0
        %v1781 = vadd.f32 0.0, %v1780
        %v1782 = vpop.f32.mrb[0].mxu0
        %1783 = vmatprep.mubr.bf16.mxu0 0
        %1784 = vmatmul.mubr.bf16.gmra.mrb[0].mxu0 %v1715
        %v1785 = vpop.f32.mrb[0].mxu0
        %v1786 = vadd.f32 0.0, %v1785
        %v1787 = vpop.f32.mrb[0].mxu0
        %v1788 = vpop.f32.mrb[0].mxu0
        %v1789 = vadd.f32 0.0, %v1788
        %v1790 = vpop.f32.mrb[0].mxu0
        %1791 = vmatprep.mubr.bf16.mxu0 0
        %1792 = vmatmul.mubr.bf16.gmra.mrb[0].mxu0 %v1716
        %v1793 = vpop.f32.mrb[0].mxu0
        %v1794 = vadd.f32 0.0, %v1793
        %v1795 = vpop.f32.mrb[0].mxu0
        %v1796 = vpop.f32.mrb[0].mxu0
        %v1797 = vadd.f32 0.0, %v1796
        %v1798 = vpop.f32.mrb[0].mxu0
        %1799 = vmatprep.mubr.bf16.mxu0 0
        %1800 = vmatmul.mubr.bf16.gmra.mrb[0].mxu0 %v1717
        %v1801 = vpop.f32.mrb[0].mxu0
        %v1802 = vadd.f32 0.0, %v1801
        %v1803 = vpop.f32.mrb[0].mxu0
        %v1804 = vpop.f32.mrb[0].mxu0
        %v1805 = vadd.f32 0.0, %v1804
        %v1806 = vpop.f32.mrb[0].mxu0
        %1807 = vmatprep.mubr.bf16.mxu0 0
        %1808 = vmatmul.mubr.bf16.gmra.mrb[0].mxu0 %v1718
        %v1809 = vpop.f32.mrb[0].mxu0
        %v1810 = vadd.f32 0.0, %v1809
        %v1811 = vpop.f32.mrb[0].mxu0
        %v1812 = vpop.f32.mrb[0].mxu0
        %v1813 = vadd.f32 0.0, %v1812
        %v1814 = vpop.f32.mrb[0].mxu0
        %1815 = vdwg.mxu0
        %v1816 = vld [vmem:[#allocation2] sm:$0xff]
        %v1817 = vld [vmem:[#allocation2 + $0x8] sm:$0xff]
        %v1818 = vld [vmem:[#allocation2 + $0x10] sm:$0xff]
        %v1819 = vld [vmem:[#allocation2 + $0x18] sm:$0xff]
        %v1820 = vld [vmem:[#allocation2 + $0x20] sm:$0xff]
        %v1821 = vld [vmem:[#allocation2 + $0x28] sm:$0xff]
        %v1822 = vld [vmem:[#allocation2 + $0x30] sm:$0xff]
        %v1823 = vld [vmem:[#allocation2 + $0x38] sm:$0xff]
        %v1824 = vld [vmem:[#allocation2 + $0x40] sm:$0xff]
        %v1825 = vld [vmem:[#allocation2 + $0x48] sm:$0xff]
        %v1826 = vld [vmem:[#allocation2 + $0x50] sm:$0xff]
        %v1827 = vld [vmem:[#allocation2 + $0x58] sm:$0xff]
        %v1828 = vld [vmem:[#allocation2 + $0x60] sm:$0xff]
        %v1829 = vld [vmem:[#allocation2 + $0x68] sm:$0xff]
        %v1830 = vld [vmem:[#allocation2 + $0x70] sm:$0xff]
        %v1831 = vld [vmem:[#allocation2 + $0x78] sm:$0xff]
        %v1832 = vld [vmem:[#allocation2 + $0x80] sm:$0xff]
        %v1833 = vld [vmem:[#allocation2 + $0x88] sm:$0xff]
        %v1834 = vld [vmem:[#allocation2 + $0x90] sm:$0xff]
        %v1835 = vld [vmem:[#allocation2 + $0x98] sm:$0xff]
        %v1836 = vld [vmem:[#allocation2 + $0xa0] sm:$0xff]
        %v1837 = vld [vmem:[#allocation2 + $0xa8] sm:$0xff]
        %v1838 = vld [vmem:[#allocation2 + $0xb0] sm:$0xff]
        %v1839 = vld [vmem:[#allocation2 + $0xb8] sm:$0xff]
        %v1840 = vld [vmem:[#allocation2 + $0xc0] sm:$0xff]
        %v1841 = vld [vmem:[#allocation2 + $0xc8] sm:$0xff]
        %v1842 = vld [vmem:[#allocation2 + $0xd0] sm:$0xff]
        %v1843 = vld [vmem:[#allocation2 + $0xd8] sm:$0xff]
        %v1844 = vld [vmem:[#allocation2 + $0xe0] sm:$0xff]
        %v1845 = vld [vmem:[#allocation2 + $0xe8] sm:$0xff]
        %v1846 = vld [vmem:[#allocation2 + $0xf0] sm:$0xff]
        %v1847 = vld [vmem:[#allocation2 + $0xf8] sm:$0xff]
        %v1848 = vpack.c.bf16 %v1757, %v1754
        %v1849 = vpack.c.bf16 %v1765, %v1762
        %v1850 = vpack.c.bf16 %v1773, %v1770
        %v1851 = vpack.c.bf16 %v1781, %v1778
        %v1852 = vpack.c.bf16 %v1789, %v1786
        %v1853 = vpack.c.bf16 %v1797, %v1794
        %v1854 = vpack.c.bf16 %v1805, %v1802
        %v1855 = vpack.c.bf16 %v1813, %v1810
        %s1856 = smul.u32 %s39, 32
        %s1857 = smul.addr %s1856, 4
        %s1858 = scalar_lea.vmem [#allocation10], %s1857
        %v1859 = vld [vmem:[%s1858] sm:$0xff]
        %v1860 = vld [vmem:[%s1858 + $0x8] sm:$0xff]
        %v1861 = vld [vmem:[%s1858 + $0x10] sm:$0xff]
        %v1862 = vld [vmem:[%s1858 + $0x18] sm:$0xff]
        %v1863 = vld [vmem:[%s1858 + $0x20] sm:$0xff]
        %v1864 = vld [vmem:[%s1858 + $0x28] sm:$0xff]
        %v1865 = vld [vmem:[%s1858 + $0x30] sm:$0xff]
        %v1866 = vld [vmem:[%s1858 + $0x38] sm:$0xff]
        %v1867 = vld [vmem:[%s1858 + $0x40] sm:$0xff]
        %v1868 = vld [vmem:[%s1858 + $0x48] sm:$0xff]
        %v1869 = vld [vmem:[%s1858 + $0x50] sm:$0xff]
        %v1870 = vld [vmem:[%s1858 + $0x58] sm:$0xff]
        %v1871 = vld [vmem:[%s1858 + $0x60] sm:$0xff]
        %v1872 = vld [vmem:[%s1858 + $0x68] sm:$0xff]
        %v1873 = vld [vmem:[%s1858 + $0x70] sm:$0xff]
        %v1874 = vld [vmem:[%s1858 + $0x78] sm:$0xff]
        %v1891 = vunpack.c.l.b16 %v1859
        %v1892 = vunpack.c.h.b16 %v1859
        %v1893 = vunpack.c.l.b16 %v1860
        %v1894 = vunpack.c.h.b16 %v1860
        %v1895 = vunpack.c.l.b16 %v1861
        %v1896 = vunpack.c.h.b16 %v1861
        %v1897 = vunpack.c.l.b16 %v1862
        %v1898 = vunpack.c.h.b16 %v1862
        %v1899 = vunpack.c.l.b16 %v1863
        %v1900 = vunpack.c.h.b16 %v1863
        %v1901 = vunpack.c.l.b16 %v1864
        %v1902 = vunpack.c.h.b16 %v1864
        %v1903 = vunpack.c.l.b16 %v1865
        %v1904 = vunpack.c.h.b16 %v1865
        %v1905 = vunpack.c.l.b16 %v1866
        %v1906 = vunpack.c.h.b16 %v1866
        %v1907 = vunpack.c.l.b16 %v1867
        %v1908 = vunpack.c.h.b16 %v1867
        %v1909 = vunpack.c.l.b16 %v1868
        %v1910 = vunpack.c.h.b16 %v1868
        %v1911 = vunpack.c.l.b16 %v1869
        %v1912 = vunpack.c.h.b16 %v1869
        %v1913 = vunpack.c.l.b16 %v1870
        %v1914 = vunpack.c.h.b16 %v1870
        %v1915 = vunpack.c.l.b16 %v1871
        %v1916 = vunpack.c.h.b16 %v1871
        %v1917 = vunpack.c.l.b16 %v1872
        %v1918 = vunpack.c.h.b16 %v1872
        %v1919 = vunpack.c.l.b16 %v1873
        %v1920 = vunpack.c.h.b16 %v1873
        %v1921 = vunpack.c.l.b16 %v1874
        %v1922 = vunpack.c.h.b16 %v1874
        %v1923 = vpack.c.b16 %v1893, %v1891
        %v1924 = vpack.c.b16 %v1894, %v1892
        %v1925 = vpack.c.b16 %v1897, %v1895
        %v1926 = vpack.c.b16 %v1898, %v1896
        %v1927 = vpack.c.b16 %v1901, %v1899
        %v1928 = vpack.c.b16 %v1902, %v1900
        %v1929 = vpack.c.b16 %v1905, %v1903
        %v1930 = vpack.c.b16 %v1906, %v1904
        %v1931 = vpack.c.b16 %v1909, %v1907
        %v1932 = vpack.c.b16 %v1910, %v1908
        %v1933 = vpack.c.b16 %v1913, %v1911
        %v1934 = vpack.c.b16 %v1914, %v1912
        %v1935 = vpack.c.b16 %v1917, %v1915
        %v1936 = vpack.c.b16 %v1918, %v1916
        %v1937 = vpack.c.b16 %v1921, %v1919
        %v1938 = vpack.c.b16 %v1922, %v1920
        %1955 = vmatprep.subr.bf16.mxu0 %v1924
        %1956 = vmatpush1.bf16.msra.mxu0 %v1923
        %1957 = vmatprep.subr.bf16.mxu0 %v1926
        %1958 = vmatpush1.bf16.msra.mxu0 %v1925
        %1959 = vmatprep.subr.bf16.mxu0 %v1928
        %1960 = vmatpush1.bf16.msra.mxu0 %v1927
        %1961 = vmatprep.subr.bf16.mxu0 %v1930
        %1962 = vmatpush1.bf16.msra.mxu0 %v1929
        %1963 = vmatprep.subr.bf16.mxu0 %v1932
        %1964 = vmatpush1.bf16.msra.mxu0 %v1931
        %1965 = vmatprep.subr.bf16.mxu0 %v1934
        %1966 = vmatpush1.bf16.msra.mxu0 %v1933
        %1967 = vmatprep.subr.bf16.mxu0 %v1936
        %1968 = vmatpush1.bf16.msra.mxu0 %v1935
        %1969 = vmatprep.subr.bf16.mxu0 %v1938
        %1970 = vmatpush1.bf16.msra.mxu0 %v1937
        %1971 = vmatprep.subr.bf16.mxu0 0
        %1972 = vmatpush1.bf16.msra.mxu0 0
        %1973 = vmatprep.subr.bf16.mxu0 0
        %1974 = vmatpush1.bf16.msra.mxu0 0
        %1975 = vmatprep.subr.bf16.mxu0 0
        %1976 = vmatpush1.bf16.msra.mxu0 0
        %1977 = vmatprep.subr.bf16.mxu0 0
        %1978 = vmatpush1.bf16.msra.mxu0 0
        %1979 = vmatprep.subr.bf16.mxu0 0
        %1980 = vmatpush1.bf16.msra.mxu0 0
        %1981 = vmatprep.subr.bf16.mxu0 0
        %1982 = vmatpush1.bf16.msra.mxu0 0
        %1983 = vmatprep.subr.bf16.mxu0 0
        %1984 = vmatpush1.bf16.msra.mxu0 0
        %1985 = vmatprep.subr.bf16.mxu0 0
        %1986 = vmatpush1.bf16.msra.mxu0 0
        %1987 = vmatprep.mubr.bf16.mxu0 0
        %1988 = vmatmul.mubr.bf16.gmra.mrb[0].mxu0 %v1848
        %v1989 = vpop.f32.mrb[0].mxu0
        %v1990 = vadd.f32 0.0, %v1989
        %v1991 = vpop.f32.mrb[0].mxu0
        %v1992 = vadd.f32 0.0, %v1991
        %v1993 = vpop.f32.mrb[0].mxu0
        %v1994 = vadd.f32 0.0, %v1993
        %v1995 = vpop.f32.mrb[0].mxu0
        %v1996 = vadd.f32 0.0, %v1995
        %1997 = vmatprep.mubr.bf16.mxu0 0
        %1998 = vmatmul.mubr.bf16.gmra.mrb[0].mxu0 %v1849
        %v1999 = vpop.f32.mrb[0].mxu0
        %v2000 = vadd.f32 0.0, %v1999
        %v2001 = vpop.f32.mrb[0].mxu0
        %v2002 = vadd.f32 0.0, %v2001
        %v2003 = vpop.f32.mrb[0].mxu0
        %v2004 = vadd.f32 0.0, %v2003
        %v2005 = vpop.f32.mrb[0].mxu0
        %v2006 = vadd.f32 0.0, %v2005
        %2007 = vmatprep.mubr.bf16.mxu0 0
        %2008 = vmatmul.mubr.bf16.gmra.mrb[0].mxu0 %v1850
        %v2009 = vpop.f32.mrb[0].mxu0
        %v2010 = vadd.f32 0.0, %v2009
        %v2011 = vpop.f32.mrb[0].mxu0
        %v2012 = vadd.f32 0.0, %v2011
        %v2013 = vpop.f32.mrb[0].mxu0
        %v2014 = vadd.f32 0.0, %v2013
        %v2015 = vpop.f32.mrb[0].mxu0
        %v2016 = vadd.f32 0.0, %v2015
        %2017 = vmatprep.mubr.bf16.mxu0 0
        %2018 = vmatmul.mubr.bf16.gmra.mrb[0].mxu0 %v1851
        %v2019 = vpop.f32.mrb[0].mxu0
        %v2020 = vadd.f32 0.0, %v2019
        %v2021 = vpop.f32.mrb[0].mxu0
        %v2022 = vadd.f32 0.0, %v2021
        %v2023 = vpop.f32.mrb[0].mxu0
        %v2024 = vadd.f32 0.0, %v2023
        %v2025 = vpop.f32.mrb[0].mxu0
        %v2026 = vadd.f32 0.0, %v2025
        %2027 = vmatprep.mubr.bf16.mxu0 0
        %2028 = vmatmul.mubr.bf16.gmra.mrb[0].mxu0 %v1852
        %v2029 = vpop.f32.mrb[0].mxu0
        %v2030 = vadd.f32 0.0, %v2029
        %v2031 = vpop.f32.mrb[0].mxu0
        %v2032 = vadd.f32 0.0, %v2031
        %v2033 = vpop.f32.mrb[0].mxu0
        %v2034 = vadd.f32 0.0, %v2033
        %v2035 = vpop.f32.mrb[0].mxu0
        %v2036 = vadd.f32 0.0, %v2035
        %2037 = vmatprep.mubr.bf16.mxu0 0
        %2038 = vmatmul.mubr.bf16.gmra.mrb[0].mxu0 %v1853
        %v2039 = vpop.f32.mrb[0].mxu0
        %v2040 = vadd.f32 0.0, %v2039
        %v2041 = vpop.f32.mrb[0].mxu0
        %v2042 = vadd.f32 0.0, %v2041
        %v2043 = vpop.f32.mrb[0].mxu0
        %v2044 = vadd.f32 0.0, %v2043
        %v2045 = vpop.f32.mrb[0].mxu0
        %v2046 = vadd.f32 0.0, %v2045
        %2047 = vmatprep.mubr.bf16.mxu0 0
        %2048 = vmatmul.mubr.bf16.gmra.mrb[0].mxu0 %v1854
        %v2049 = vpop.f32.mrb[0].mxu0
        %v2050 = vadd.f32 0.0, %v2049
        %v2051 = vpop.f32.mrb[0].mxu0
        %v2052 = vadd.f32 0.0, %v2051
        %v2053 = vpop.f32.mrb[0].mxu0
        %v2054 = vadd.f32 0.0, %v2053
        %v2055 = vpop.f32.mrb[0].mxu0
        %v2056 = vadd.f32 0.0, %v2055
        %2057 = vmatprep.mubr.bf16.mxu0 0
        %2058 = vmatmul.mubr.bf16.gmra.mrb[0].mxu0 %v1855
        %v2059 = vpop.f32.mrb[0].mxu0
        %v2060 = vadd.f32 0.0, %v2059
        %v2061 = vpop.f32.mrb[0].mxu0
        %v2062 = vadd.f32 0.0, %v2061
        %v2063 = vpop.f32.mrb[0].mxu0
        %v2064 = vadd.f32 0.0, %v2063
        %v2065 = vpop.f32.mrb[0].mxu0
        %v2066 = vadd.f32 0.0, %v2065
        %2067 = vdwg.mxu0
        %v2068 = vadd.f32 %v1816, %v1990
        %v2069 = vadd.f32 %v1817, %v1992
        %v2070 = vadd.f32 %v1818, %v1994
        %v2071 = vadd.f32 %v1819, %v1996
        %v2072 = vadd.f32 %v1820, %v2000
        %v2073 = vadd.f32 %v1821, %v2002
        %v2074 = vadd.f32 %v1822, %v2004
        %v2075 = vadd.f32 %v1823, %v2006
        %v2076 = vadd.f32 %v1824, %v2010
        %v2077 = vadd.f32 %v1825, %v2012
        %v2078 = vadd.f32 %v1826, %v2014
        %v2079 = vadd.f32 %v1827, %v2016
        %v2080 = vadd.f32 %v1828, %v2020
        %v2081 = vadd.f32 %v1829, %v2022
        %v2082 = vadd.f32 %v1830, %v2024
        %v2083 = vadd.f32 %v1831, %v2026
        %v2084 = vadd.f32 %v1832, %v2030
        %v2085 = vadd.f32 %v1833, %v2032
        %v2086 = vadd.f32 %v1834, %v2034
        %v2087 = vadd.f32 %v1835, %v2036
        %v2088 = vadd.f32 %v1836, %v2040
        %v2089 = vadd.f32 %v1837, %v2042
        %v2090 = vadd.f32 %v1838, %v2044
        %v2091 = vadd.f32 %v1839, %v2046
        %v2092 = vadd.f32 %v1840, %v2050
        %v2093 = vadd.f32 %v1841, %v2052
        %v2094 = vadd.f32 %v1842, %v2054
        %v2095 = vadd.f32 %v1843, %v2056
        %v2096 = vadd.f32 %v1844, %v2060
        %v2097 = vadd.f32 %v1845, %v2062
        %v2098 = vadd.f32 %v1846, %v2064
        %v2099 = vadd.f32 %v1847, %v2066
        %2100 = vst [vmem:[#allocation2] sm:$0xff] %v2068
        %2101 = vst [vmem:[#allocation2 + $0x8] sm:$0xff] %v2069
        %2102 = vst [vmem:[#allocation2 + $0x10] sm:$0xff] %v2070
        %2103 = vst [vmem:[#allocation2 + $0x18] sm:$0xff] %v2071
        %2104 = vst [vmem:[#allocation2 + $0x20] sm:$0xff] %v2072
        %2105 = vst [vmem:[#allocation2 + $0x28] sm:$0xff] %v2073
        %2106 = vst [vmem:[#allocation2 + $0x30] sm:$0xff] %v2074
        %2107 = vst [vmem:[#allocation2 + $0x38] sm:$0xff] %v2075
        %2108 = vst [vmem:[#allocation2 + $0x40] sm:$0xff] %v2076
        %2109 = vst [vmem:[#allocation2 + $0x48] sm:$0xff] %v2077
        %2110 = vst [vmem:[#allocation2 + $0x50] sm:$0xff] %v2078
        %2111 = vst [vmem:[#allocation2 + $0x58] sm:$0xff] %v2079
        %2112 = vst [vmem:[#allocation2 + $0x60] sm:$0xff] %v2080
        %2113 = vst [vmem:[#allocation2 + $0x68] sm:$0xff] %v2081
        %2114 = vst [vmem:[#allocation2 + $0x70] sm:$0xff] %v2082
        %2115 = vst [vmem:[#allocation2 + $0x78] sm:$0xff] %v2083
        %2116 = vst [vmem:[#allocation2 + $0x80] sm:$0xff] %v2084
        %2117 = vst [vmem:[#allocation2 + $0x88] sm:$0xff] %v2085
        %2118 = vst [vmem:[#allocation2 + $0x90] sm:$0xff] %v2086
        %2119 = vst [vmem:[#allocation2 + $0x98] sm:$0xff] %v2087
        %2120 = vst [vmem:[#allocation2 + $0xa0] sm:$0xff] %v2088
        %2121 = vst [vmem:[#allocation2 + $0xa8] sm:$0xff] %v2089
        %2122 = vst [vmem:[#allocation2 + $0xb0] sm:$0xff] %v2090
        %2123 = vst [vmem:[#allocation2 + $0xb8] sm:$0xff] %v2091
        %2124 = vst [vmem:[#allocation2 + $0xc0] sm:$0xff] %v2092
        %2125 = vst [vmem:[#allocation2 + $0xc8] sm:$0xff] %v2093
        %2126 = vst [vmem:[#allocation2 + $0xd0] sm:$0xff] %v2094
        %2127 = vst [vmem:[#allocation2 + $0xd8] sm:$0xff] %v2095
        %2128 = vst [vmem:[#allocation2 + $0xe0] sm:$0xff] %v2096
        %2129 = vst [vmem:[#allocation2 + $0xe8] sm:$0xff] %v2097
        %2130 = vst [vmem:[#allocation2 + $0xf0] sm:$0xff] %v2098
        %2131 = vst [vmem:[#allocation2 + $0xf8] sm:$0xff] %v2099
        %p2132 = scmp.eq.s32.totalorder %s39, 1
        // Predicated region
        $region105: #{tpu_custom_call.1} parent=75 // pred_check
          %p2133 = pneg %p2132
        $region106: #{tpu_custom_call.1} parent=75 // pred_check_branch
          %2135 = sbr.rel (%p2133) target = $region108
        $region107: #{tpu_custom_call.1} parent=75 // pred_region
          %v2136 = vld [vmem:[#allocation2] sm:$0xff]
          %v2137 = vld [vmem:[#allocation2 + $0x8] sm:$0xff]
          %v2138 = vld [vmem:[#allocation2 + $0x10] sm:$0xff]
          %v2139 = vld [vmem:[#allocation2 + $0x18] sm:$0xff]
          %v2140 = vld [vmem:[#allocation2 + $0x20] sm:$0xff]
          %v2141 = vld [vmem:[#allocation2 + $0x28] sm:$0xff]
          %v2142 = vld [vmem:[#allocation2 + $0x30] sm:$0xff]
          %v2143 = vld [vmem:[#allocation2 + $0x38] sm:$0xff]
          %v2144 = vld [vmem:[#allocation2 + $0x40] sm:$0xff]
          %v2145 = vld [vmem:[#allocation2 + $0x48] sm:$0xff]
          %v2146 = vld [vmem:[#allocation2 + $0x50] sm:$0xff]
          %v2147 = vld [vmem:[#allocation2 + $0x58] sm:$0xff]
          %v2148 = vld [vmem:[#allocation2 + $0x60] sm:$0xff]
          %v2149 = vld [vmem:[#allocation2 + $0x68] sm:$0xff]
          %v2150 = vld [vmem:[#allocation2 + $0x70] sm:$0xff]
          %v2151 = vld [vmem:[#allocation2 + $0x78] sm:$0xff]
          %v2152 = vld [vmem:[#allocation2 + $0x80] sm:$0xff]
          %v2153 = vld [vmem:[#allocation2 + $0x88] sm:$0xff]
          %v2154 = vld [vmem:[#allocation2 + $0x90] sm:$0xff]
          %v2155 = vld [vmem:[#allocation2 + $0x98] sm:$0xff]
          %v2156 = vld [vmem:[#allocation2 + $0xa0] sm:$0xff]
          %v2157 = vld [vmem:[#allocation2 + $0xa8] sm:$0xff]
          %v2158 = vld [vmem:[#allocation2 + $0xb0] sm:$0xff]
          %v2159 = vld [vmem:[#allocation2 + $0xb8] sm:$0xff]
          %v2160 = vld [vmem:[#allocation2 + $0xc0] sm:$0xff]
          %v2161 = vld [vmem:[#allocation2 + $0xc8] sm:$0xff]
          %v2162 = vld [vmem:[#allocation2 + $0xd0] sm:$0xff]
          %v2163 = vld [vmem:[#allocation2 + $0xd8] sm:$0xff]
          %v2164 = vld [vmem:[#allocation2 + $0xe0] sm:$0xff]
          %v2165 = vld [vmem:[#allocation2 + $0xe8] sm:$0xff]
          %v2166 = vld [vmem:[#allocation2 + $0xf0] sm:$0xff]
          %v2167 = vld [vmem:[#allocation2 + $0xf8] sm:$0xff]
          %v2168 = vadd.f32 %v2136, %v2137
          %2169 = vadd.xlane.f32.xlu0 %v2168
          %v2170 = vpop.xlane.xlu0 %2169
          %v2171 = vadd.f32 %v2138, %v2139
          %2172 = vadd.xlane.f32.xlu0 %v2171
          %v2173 = vpop.xlane.xlu0 %2172
          %v2174 = vadd.f32 %v2140, %v2141
          %2175 = vadd.xlane.f32.xlu0 %v2174
          %v2176 = vpop.xlane.xlu0 %2175
          %v2177 = vadd.f32 %v2142, %v2143
          %2178 = vadd.xlane.f32.xlu0 %v2177
          %v2179 = vpop.xlane.xlu0 %2178
          %v2180 = vadd.f32 %v2144, %v2145
          %2181 = vadd.xlane.f32.xlu0 %v2180
          %v2182 = vpop.xlane.xlu0 %2181
          %v2183 = vadd.f32 %v2146, %v2147
          %2184 = vadd.xlane.f32.xlu0 %v2183
          %v2185 = vpop.xlane.xlu0 %2184
          %v2186 = vadd.f32 %v2148, %v2149
          %2187 = vadd.xlane.f32.xlu0 %v2186
          %v2188 = vpop.xlane.xlu0 %2187
          %v2189 = vadd.f32 %v2150, %v2151
          %2190 = vadd.xlane.f32.xlu0 %v2189
          %v2191 = vpop.xlane.xlu0 %2190
          %v2192 = vadd.f32 %v2152, %v2153
          %2193 = vadd.xlane.f32.xlu0 %v2192
          %v2194 = vpop.xlane.xlu0 %2193
          %v2195 = vadd.f32 %v2154, %v2155
          %2196 = vadd.xlane.f32.xlu0 %v2195
          %v2197 = vpop.xlane.xlu0 %2196
          %v2198 = vadd.f32 %v2156, %v2157
          %2199 = vadd.xlane.f32.xlu0 %v2198
          %v2200 = vpop.xlane.xlu0 %2199
          %v2201 = vadd.f32 %v2158, %v2159
          %2202 = vadd.xlane.f32.xlu0 %v2201
          %v2203 = vpop.xlane.xlu0 %2202
          %v2204 = vadd.f32 %v2160, %v2161
          %2205 = vadd.xlane.f32.xlu0 %v2204
          %v2206 = vpop.xlane.xlu0 %2205
          %v2207 = vadd.f32 %v2162, %v2163
          %2208 = vadd.xlane.f32.xlu0 %v2207
          %v2209 = vpop.xlane.xlu0 %2208
          %v2210 = vadd.f32 %v2164, %v2165
          %2211 = vadd.xlane.f32.xlu0 %v2210
          %v2212 = vpop.xlane.xlu0 %2211
          %v2213 = vadd.f32 %v2166, %v2167
          %2214 = vadd.xlane.f32.xlu0 %v2213
          %v2215 = vpop.xlane.xlu0 %2214
          %v2216 = vrcp.pop 256.0
          %v2217 = vmul.f32 %v2170, %v2216
          %v2218 = vmul.f32 %v2173, %v2216
          %v2219 = vmul.f32 %v2176, %v2216
          %v2220 = vmul.f32 %v2179, %v2216
          %v2221 = vmul.f32 %v2182, %v2216
          %v2222 = vmul.f32 %v2185, %v2216
          %v2223 = vmul.f32 %v2188, %v2216
          %v2224 = vmul.f32 %v2191, %v2216
          %v2225 = vmul.f32 %v2194, %v2216
          %v2226 = vmul.f32 %v2197, %v2216
          %v2227 = vmul.f32 %v2200, %v2216
          %v2228 = vmul.f32 %v2203, %v2216
          %v2229 = vmul.f32 %v2206, %v2216
          %v2230 = vmul.f32 %v2209, %v2216
          %v2231 = vmul.f32 %v2212, %v2216
          %v2232 = vmul.f32 %v2215, %v2216
          %v2233 = vsub.f32 %v2136, %v2217
          %v2234 = vsub.f32 %v2137, %v2217
          %v2235 = vsub.f32 %v2138, %v2218
          %v2236 = vsub.f32 %v2139, %v2218
          %v2237 = vsub.f32 %v2140, %v2219
          %v2238 = vsub.f32 %v2141, %v2219
          %v2239 = vsub.f32 %v2142, %v2220
          %v2240 = vsub.f32 %v2143, %v2220
          %v2241 = vsub.f32 %v2144, %v2221
          %v2242 = vsub.f32 %v2145, %v2221
          %v2243 = vsub.f32 %v2146, %v2222
          %v2244 = vsub.f32 %v2147, %v2222
          %v2245 = vsub.f32 %v2148, %v2223
          %v2246 = vsub.f32 %v2149, %v2223
          %v2247 = vsub.f32 %v2150, %v2224
          %v2248 = vsub.f32 %v2151, %v2224
          %v2249 = vsub.f32 %v2152, %v2225
          %v2250 = vsub.f32 %v2153, %v2225
          %v2251 = vsub.f32 %v2154, %v2226
          %v2252 = vsub.f32 %v2155, %v2226
          %v2253 = vsub.f32 %v2156, %v2227
          %v2254 = vsub.f32 %v2157, %v2227
          %v2255 = vsub.f32 %v2158, %v2228
          %v2256 = vsub.f32 %v2159, %v2228
          %v2257 = vsub.f32 %v2160, %v2229
          %v2258 = vsub.f32 %v2161, %v2229
          %v2259 = vsub.f32 %v2162, %v2230
          %v2260 = vsub.f32 %v2163, %v2230
          %v2261 = vsub.f32 %v2164, %v2231
          %v2262 = vsub.f32 %v2165, %v2231
          %v2263 = vsub.f32 %v2166, %v2232
          %v2264 = vsub.f32 %v2167, %v2232
          %v2265 = vmul.f32 %v2233, %v2233
          %v2266 = vmul.f32 %v2234, %v2234
          %v2267 = vmul.f32 %v2235, %v2235
          %v2268 = vmul.f32 %v2236, %v2236
          %v2269 = vmul.f32 %v2237, %v2237
          %v2270 = vmul.f32 %v2238, %v2238
          %v2271 = vmul.f32 %v2239, %v2239
          %v2272 = vmul.f32 %v2240, %v2240
          %v2273 = vmul.f32 %v2241, %v2241
          %v2274 = vmul.f32 %v2242, %v2242
          %v2275 = vmul.f32 %v2243, %v2243
          %v2276 = vmul.f32 %v2244, %v2244
          %v2277 = vmul.f32 %v2245, %v2245
          %v2278 = vmul.f32 %v2246, %v2246
          %v2279 = vmul.f32 %v2247, %v2247
          %v2280 = vmul.f32 %v2248, %v2248
          %v2281 = vmul.f32 %v2249, %v2249
          %v2282 = vmul.f32 %v2250, %v2250
          %v2283 = vmul.f32 %v2251, %v2251
          %v2284 = vmul.f32 %v2252, %v2252
          %v2285 = vmul.f32 %v2253, %v2253
          %v2286 = vmul.f32 %v2254, %v2254
          %v2287 = vmul.f32 %v2255, %v2255
          %v2288 = vmul.f32 %v2256, %v2256
          %v2289 = vmul.f32 %v2257, %v2257
          %v2290 = vmul.f32 %v2258, %v2258
          %v2291 = vmul.f32 %v2259, %v2259
          %v2292 = vmul.f32 %v2260, %v2260
          %v2293 = vmul.f32 %v2261, %v2261
          %v2294 = vmul.f32 %v2262, %v2262
          %v2295 = vmul.f32 %v2263, %v2263
          %v2296 = vmul.f32 %v2264, %v2264
          %v2297 = vadd.f32 %v2265, %v2266
          %2298 = vadd.xlane.f32.xlu0 %v2297
          %v2299 = vpop.xlane.xlu0 %2298
          %v2300 = vadd.f32 %v2267, %v2268
          %2301 = vadd.xlane.f32.xlu0 %v2300
          %v2302 = vpop.xlane.xlu0 %2301
          %v2303 = vadd.f32 %v2269, %v2270
          %2304 = vadd.xlane.f32.xlu0 %v2303
          %v2305 = vpop.xlane.xlu0 %2304
          %v2306 = vadd.f32 %v2271, %v2272
          %2307 = vadd.xlane.f32.xlu0 %v2306
          %v2308 = vpop.xlane.xlu0 %2307
          %v2309 = vadd.f32 %v2273, %v2274
          %2310 = vadd.xlane.f32.xlu0 %v2309
          %v2311 = vpop.xlane.xlu0 %2310
          %v2312 = vadd.f32 %v2275, %v2276
          %2313 = vadd.xlane.f32.xlu0 %v2312
          %v2314 = vpop.xlane.xlu0 %2313
          %v2315 = vadd.f32 %v2277, %v2278
          %2316 = vadd.xlane.f32.xlu0 %v2315
          %v2317 = vpop.xlane.xlu0 %2316
          %v2318 = vadd.f32 %v2279, %v2280
          %2319 = vadd.xlane.f32.xlu0 %v2318
          %v2320 = vpop.xlane.xlu0 %2319
          %v2321 = vadd.f32 %v2281, %v2282
          %2322 = vadd.xlane.f32.xlu0 %v2321
          %v2323 = vpop.xlane.xlu0 %2322
          %v2324 = vadd.f32 %v2283, %v2284
          %2325 = vadd.xlane.f32.xlu0 %v2324
          %v2326 = vpop.xlane.xlu0 %2325
          %v2327 = vadd.f32 %v2285, %v2286
          %2328 = vadd.xlane.f32.xlu0 %v2327
          %v2329 = vpop.xlane.xlu0 %2328
          %v2330 = vadd.f32 %v2287, %v2288
          %2331 = vadd.xlane.f32.xlu0 %v2330
          %v2332 = vpop.xlane.xlu0 %2331
          %v2333 = vadd.f32 %v2289, %v2290
          %2334 = vadd.xlane.f32.xlu0 %v2333
          %v2335 = vpop.xlane.xlu0 %2334
          %v2336 = vadd.f32 %v2291, %v2292
          %2337 = vadd.xlane.f32.xlu0 %v2336
          %v2338 = vpop.xlane.xlu0 %2337
          %v2339 = vadd.f32 %v2293, %v2294
          %2340 = vadd.xlane.f32.xlu0 %v2339
          %v2341 = vpop.xlane.xlu0 %2340
          %v2342 = vadd.f32 %v2295, %v2296
          %2343 = vadd.xlane.f32.xlu0 %v2342
          %v2344 = vpop.xlane.xlu0 %2343
          %v2345 = vmul.f32 %v2299, %v2216
          %v2346 = vmul.f32 %v2302, %v2216
          %v2347 = vmul.f32 %v2305, %v2216
          %v2348 = vmul.f32 %v2308, %v2216
          %v2349 = vmul.f32 %v2311, %v2216
          %v2350 = vmul.f32 %v2314, %v2216
          %v2351 = vmul.f32 %v2317, %v2216
          %v2352 = vmul.f32 %v2320, %v2216
          %v2353 = vmul.f32 %v2323, %v2216
          %v2354 = vmul.f32 %v2326, %v2216
          %v2355 = vmul.f32 %v2329, %v2216
          %v2356 = vmul.f32 %v2332, %v2216
          %v2357 = vmul.f32 %v2335, %v2216
          %v2358 = vmul.f32 %v2338, %v2216
          %v2359 = vmul.f32 %v2341, %v2216
          %v2360 = vmul.f32 %v2344, %v2216
          %v2361 = vadd.f32 %v2345, 1e-12
          %v2362 = vadd.f32 %v2346, 1e-12
          %v2363 = vadd.f32 %v2347, 1e-12
          %v2364 = vadd.f32 %v2348, 1e-12
          %v2365 = vadd.f32 %v2349, 1e-12
          %v2366 = vadd.f32 %v2350, 1e-12
          %v2367 = vadd.f32 %v2351, 1e-12
          %v2368 = vadd.f32 %v2352, 1e-12
          %v2369 = vadd.f32 %v2353, 1e-12
          %v2370 = vadd.f32 %v2354, 1e-12
          %v2371 = vadd.f32 %v2355, 1e-12
          %v2372 = vadd.f32 %v2356, 1e-12
          %v2373 = vadd.f32 %v2357, 1e-12
          %v2374 = vadd.f32 %v2358, 1e-12
          %v2375 = vadd.f32 %v2359, 1e-12
          %v2376 = vadd.f32 %v2360, 1e-12
          %v2377 = vrsqrt.pop %v2361
          %v2378 = vrsqrt.pop %v2362
          %v2379 = vrsqrt.pop %v2363
          %v2380 = vrsqrt.pop %v2364
          %v2381 = vrsqrt.pop %v2365
          %v2382 = vrsqrt.pop %v2366
          %v2383 = vrsqrt.pop %v2367
          %v2384 = vrsqrt.pop %v2368
          %v2385 = vrsqrt.pop %v2369
          %v2386 = vrsqrt.pop %v2370
          %v2387 = vrsqrt.pop %v2371
          %v2388 = vrsqrt.pop %v2372
          %v2389 = vrsqrt.pop %v2373
          %v2390 = vrsqrt.pop %v2374
          %v2391 = vrsqrt.pop %v2375
          %v2392 = vrsqrt.pop %v2376
          %v2393 = vmul.f32 %v2233, %v2377
          %v2394 = vmul.f32 %v2234, %v2377
          %v2395 = vmul.f32 %v2235, %v2378
          %v2396 = vmul.f32 %v2236, %v2378
          %v2397 = vmul.f32 %v2237, %v2379
          %v2398 = vmul.f32 %v2238, %v2379
          %v2399 = vmul.f32 %v2239, %v2380
          %v2400 = vmul.f32 %v2240, %v2380
          %v2401 = vmul.f32 %v2241, %v2381
          %v2402 = vmul.f32 %v2242, %v2381
          %v2403 = vmul.f32 %v2243, %v2382
          %v2404 = vmul.f32 %v2244, %v2382
          %v2405 = vmul.f32 %v2245, %v2383
          %v2406 = vmul.f32 %v2246, %v2383
          %v2407 = vmul.f32 %v2247, %v2384
          %v2408 = vmul.f32 %v2248, %v2384
          %v2409 = vmul.f32 %v2249, %v2385
          %v2410 = vmul.f32 %v2250, %v2385
          %v2411 = vmul.f32 %v2251, %v2386
          %v2412 = vmul.f32 %v2252, %v2386
          %v2413 = vmul.f32 %v2253, %v2387
          %v2414 = vmul.f32 %v2254, %v2387
          %v2415 = vmul.f32 %v2255, %v2388
          %v2416 = vmul.f32 %v2256, %v2388
          %v2417 = vmul.f32 %v2257, %v2389
          %v2418 = vmul.f32 %v2258, %v2389
          %v2419 = vmul.f32 %v2259, %v2390
          %v2420 = vmul.f32 %v2260, %v2390
          %v2421 = vmul.f32 %v2261, %v2391
          %v2422 = vmul.f32 %v2262, %v2391
          %v2423 = vmul.f32 %v2263, %v2392
          %v2424 = vmul.f32 %v2264, %v2392
          %v2425 = vld [vmem:[%s6] sm:$0x3]
          %v2427 = vlaneseq
          %v2428 = vshrl.u32 %v2427, 7
          %v2429 = vsub.s32 0, %v2428
          %v2430 = vrot.slane %v2425, %v2429
          %v2431 = vlaneseq
          %v2432 = vshrl.u32 %v2431, 7
          %v2433 = vsub.s32 1, %v2432
          %v2434 = vrot.slane %v2425, %v2433
          %v2437 = vmul.f32 %v2393, %v2430
          %v2438 = vmul.f32 %v2394, %v2434
          %v2439 = vmul.f32 %v2395, %v2430
          %v2440 = vmul.f32 %v2396, %v2434
          %v2441 = vmul.f32 %v2397, %v2430
          %v2442 = vmul.f32 %v2398, %v2434
          %v2443 = vmul.f32 %v2399, %v2430
          %v2444 = vmul.f32 %v2400, %v2434
          %v2445 = vmul.f32 %v2401, %v2430
          %v2446 = vmul.f32 %v2402, %v2434
          %v2447 = vmul.f32 %v2403, %v2430
          %v2448 = vmul.f32 %v2404, %v2434
          %v2449 = vmul.f32 %v2405, %v2430
          %v2450 = vmul.f32 %v2406, %v2434
          %v2451 = vmul.f32 %v2407, %v2430
          %v2452 = vmul.f32 %v2408, %v2434
          %v2453 = vmul.f32 %v2409, %v2430
          %v2454 = vmul.f32 %v2410, %v2434
          %v2455 = vmul.f32 %v2411, %v2430
          %v2456 = vmul.f32 %v2412, %v2434
          %v2457 = vmul.f32 %v2413, %v2430
          %v2458 = vmul.f32 %v2414, %v2434
          %v2459 = vmul.f32 %v2415, %v2430
          %v2460 = vmul.f32 %v2416, %v2434
          %v2461 = vmul.f32 %v2417, %v2430
          %v2462 = vmul.f32 %v2418, %v2434
          %v2463 = vmul.f32 %v2419, %v2430
          %v2464 = vmul.f32 %v2420, %v2434
          %v2465 = vmul.f32 %v2421, %v2430
          %v2466 = vmul.f32 %v2422, %v2434
          %v2467 = vmul.f32 %v2423, %v2430
          %v2468 = vmul.f32 %v2424, %v2434
          %v2469 = vld [vmem:[%s7] sm:$0x3]
          %v2471 = vlaneseq
          %v2472 = vshrl.u32 %v2471, 7
          %v2473 = vsub.s32 0, %v2472
          %v2474 = vrot.slane %v2469, %v2473
          %v2475 = vlaneseq
          %v2476 = vshrl.u32 %v2475, 7
          %v2477 = vsub.s32 1, %v2476
          %v2478 = vrot.slane %v2469, %v2477
          %v2481 = vadd.f32 %v2437, %v2474
          %v2482 = vadd.f32 %v2438, %v2478
          %v2483 = vadd.f32 %v2439, %v2474
          %v2484 = vadd.f32 %v2440, %v2478
          %v2485 = vadd.f32 %v2441, %v2474
          %v2486 = vadd.f32 %v2442, %v2478
          %v2487 = vadd.f32 %v2443, %v2474
          %v2488 = vadd.f32 %v2444, %v2478
          %v2489 = vadd.f32 %v2445, %v2474
          %v2490 = vadd.f32 %v2446, %v2478
          %v2491 = vadd.f32 %v2447, %v2474
          %v2492 = vadd.f32 %v2448, %v2478
          %v2493 = vadd.f32 %v2449, %v2474
          %v2494 = vadd.f32 %v2450, %v2478
          %v2495 = vadd.f32 %v2451, %v2474
          %v2496 = vadd.f32 %v2452, %v2478
          %v2497 = vadd.f32 %v2453, %v2474
          %v2498 = vadd.f32 %v2454, %v2478
          %v2499 = vadd.f32 %v2455, %v2474
          %v2500 = vadd.f32 %v2456, %v2478
          %v2501 = vadd.f32 %v2457, %v2474
          %v2502 = vadd.f32 %v2458, %v2478
          %v2503 = vadd.f32 %v2459, %v2474
          %v2504 = vadd.f32 %v2460, %v2478
          %v2505 = vadd.f32 %v2461, %v2474
          %v2506 = vadd.f32 %v2462, %v2478
          %v2507 = vadd.f32 %v2463, %v2474
          %v2508 = vadd.f32 %v2464, %v2478
          %v2509 = vadd.f32 %v2465, %v2474
          %v2510 = vadd.f32 %v2466, %v2478
          %v2511 = vadd.f32 %v2467, %v2474
          %v2512 = vadd.f32 %v2468, %v2478
          %v2513 = vpack.c.bf16 %v2483, %v2481
          %v2514 = vpack.c.bf16 %v2484, %v2482
          %v2515 = vpack.c.bf16 %v2487, %v2485
          %v2516 = vpack.c.bf16 %v2488, %v2486
          %v2517 = vpack.c.bf16 %v2491, %v2489
          %v2518 = vpack.c.bf16 %v2492, %v2490
          %v2519 = vpack.c.bf16 %v2495, %v2493
          %v2520 = vpack.c.bf16 %v2496, %v2494
          %v2521 = vpack.c.bf16 %v2499, %v2497
          %v2522 = vpack.c.bf16 %v2500, %v2498
          %v2523 = vpack.c.bf16 %v2503, %v2501
          %v2524 = vpack.c.bf16 %v2504, %v2502
          %v2525 = vpack.c.bf16 %v2507, %v2505
          %v2526 = vpack.c.bf16 %v2508, %v2506
          %v2527 = vpack.c.bf16 %v2511, %v2509
          %v2528 = vpack.c.bf16 %v2512, %v2510
          %v2529 = vld [vmem:[#allocation11] sm:$0xff]
          %v2530 = vld [vmem:[#allocation11 + $0x8] sm:$0xff]
          %v2531 = vld [vmem:[#allocation11 + $0x10] sm:$0xff]
          %v2532 = vld [vmem:[#allocation11 + $0x18] sm:$0xff]
          %v2533 = vld [vmem:[#allocation11 + $0x20] sm:$0xff]
          %v2534 = vld [vmem:[#allocation11 + $0x28] sm:$0xff]
          %v2535 = vld [vmem:[#allocation11 + $0x30] sm:$0xff]
          %v2536 = vld [vmem:[#allocation11 + $0x38] sm:$0xff]
          %v2537 = vld [vmem:[#allocation11 + $0x40] sm:$0xff]
          %v2538 = vld [vmem:[#allocation11 + $0x48] sm:$0xff]
          %v2539 = vld [vmem:[#allocation11 + $0x50] sm:$0xff]
          %v2540 = vld [vmem:[#allocation11 + $0x58] sm:$0xff]
          %v2541 = vld [vmem:[#allocation11 + $0x60] sm:$0xff]
          %v2542 = vld [vmem:[#allocation11 + $0x68] sm:$0xff]
          %v2543 = vld [vmem:[#allocation11 + $0x70] sm:$0xff]
          %v2544 = vld [vmem:[#allocation11 + $0x78] sm:$0xff]
          %v2545 = vld [vmem:[#allocation11 + $0x80] sm:$0xff]
          %v2546 = vld [vmem:[#allocation11 + $0x88] sm:$0xff]
          %v2547 = vld [vmem:[#allocation11 + $0x90] sm:$0xff]
          %v2548 = vld [vmem:[#allocation11 + $0x98] sm:$0xff]
          %v2549 = vld [vmem:[#allocation11 + $0xa0] sm:$0xff]
          %v2550 = vld [vmem:[#allocation11 + $0xa8] sm:$0xff]
          %v2551 = vld [vmem:[#allocation11 + $0xb0] sm:$0xff]
          %v2552 = vld [vmem:[#allocation11 + $0xb8] sm:$0xff]
          %v2553 = vld [vmem:[#allocation11 + $0xc0] sm:$0xff]
          %v2554 = vld [vmem:[#allocation11 + $0xc8] sm:$0xff]
          %v2555 = vld [vmem:[#allocation11 + $0xd0] sm:$0xff]
          %v2556 = vld [vmem:[#allocation11 + $0xd8] sm:$0xff]
          %v2557 = vld [vmem:[#allocation11 + $0xe0] sm:$0xff]
          %v2558 = vld [vmem:[#allocation11 + $0xe8] sm:$0xff]
          %v2559 = vld [vmem:[#allocation11 + $0xf0] sm:$0xff]
          %v2560 = vld [vmem:[#allocation11 + $0xf8] sm:$0xff]
          %v2561 = vld [vmem:[#allocation11 + $0x100] sm:$0xff]
          %v2562 = vld [vmem:[#allocation11 + $0x108] sm:$0xff]
          %v2563 = vld [vmem:[#allocation11 + $0x110] sm:$0xff]
          %v2564 = vld [vmem:[#allocation11 + $0x118] sm:$0xff]
          %v2565 = vld [vmem:[#allocation11 + $0x120] sm:$0xff]
          %v2566 = vld [vmem:[#allocation11 + $0x128] sm:$0xff]
          %v2567 = vld [vmem:[#allocation11 + $0x130] sm:$0xff]
          %v2568 = vld [vmem:[#allocation11 + $0x138] sm:$0xff]
          %v2569 = vld [vmem:[#allocation11 + $0x140] sm:$0xff]
          %v2570 = vld [vmem:[#allocation11 + $0x148] sm:$0xff]
          %v2571 = vld [vmem:[#allocation11 + $0x150] sm:$0xff]
          %v2572 = vld [vmem:[#allocation11 + $0x158] sm:$0xff]
          %v2573 = vld [vmem:[#allocation11 + $0x160] sm:$0xff]
          %v2574 = vld [vmem:[#allocation11 + $0x168] sm:$0xff]
          %v2575 = vld [vmem:[#allocation11 + $0x170] sm:$0xff]
          %v2576 = vld [vmem:[#allocation11 + $0x178] sm:$0xff]
          %v2577 = vld [vmem:[#allocation11 + $0x180] sm:$0xff]
          %v2578 = vld [vmem:[#allocation11 + $0x188] sm:$0xff]
          %v2579 = vld [vmem:[#allocation11 + $0x190] sm:$0xff]
          %v2580 = vld [vmem:[#allocation11 + $0x198] sm:$0xff]
          %v2581 = vld [vmem:[#allocation11 + $0x1a0] sm:$0xff]
          %v2582 = vld [vmem:[#allocation11 + $0x1a8] sm:$0xff]
          %v2583 = vld [vmem:[#allocation11 + $0x1b0] sm:$0xff]
          %v2584 = vld [vmem:[#allocation11 + $0x1b8] sm:$0xff]
          %v2585 = vld [vmem:[#allocation11 + $0x1c0] sm:$0xff]
          %v2586 = vld [vmem:[#allocation11 + $0x1c8] sm:$0xff]
          %v2587 = vld [vmem:[#allocation11 + $0x1d0] sm:$0xff]
          %v2588 = vld [vmem:[#allocation11 + $0x1d8] sm:$0xff]
          %v2589 = vld [vmem:[#allocation11 + $0x1e0] sm:$0xff]
          %v2590 = vld [vmem:[#allocation11 + $0x1e8] sm:$0xff]
          %v2591 = vld [vmem:[#allocation11 + $0x1f0] sm:$0xff]
          %v2592 = vld [vmem:[#allocation11 + $0x1f8] sm:$0xff]
          %v2593 = vld [vmem:[#allocation11 + $0x200] sm:$0xff]
          %v2594 = vld [vmem:[#allocation11 + $0x208] sm:$0xff]
          %v2595 = vld [vmem:[#allocation11 + $0x210] sm:$0xff]
          %v2596 = vld [vmem:[#allocation11 + $0x218] sm:$0xff]
          %v2597 = vld [vmem:[#allocation11 + $0x220] sm:$0xff]
          %v2598 = vld [vmem:[#allocation11 + $0x228] sm:$0xff]
          %v2599 = vld [vmem:[#allocation11 + $0x230] sm:$0xff]
          %v2600 = vld [vmem:[#allocation11 + $0x238] sm:$0xff]
          %v2601 = vld [vmem:[#allocation11 + $0x240] sm:$0xff]
          %v2602 = vld [vmem:[#allocation11 + $0x248] sm:$0xff]
          %v2603 = vld [vmem:[#allocation11 + $0x250] sm:$0xff]
          %v2604 = vld [vmem:[#allocation11 + $0x258] sm:$0xff]
          %v2605 = vld [vmem:[#allocation11 + $0x260] sm:$0xff]
          %v2606 = vld [vmem:[#allocation11 + $0x268] sm:$0xff]
          %v2607 = vld [vmem:[#allocation11 + $0x270] sm:$0xff]
          %v2608 = vld [vmem:[#allocation11 + $0x278] sm:$0xff]
          %v2609 = vld [vmem:[#allocation11 + $0x280] sm:$0xff]
          %v2610 = vld [vmem:[#allocation11 + $0x288] sm:$0xff]
          %v2611 = vld [vmem:[#allocation11 + $0x290] sm:$0xff]
          %v2612 = vld [vmem:[#allocation11 + $0x298] sm:$0xff]
          %v2613 = vld [vmem:[#allocation11 + $0x2a0] sm:$0xff]
          %v2614 = vld [vmem:[#allocation11 + $0x2a8] sm:$0xff]
          %v2615 = vld [vmem:[#allocation11 + $0x2b0] sm:$0xff]
          %v2616 = vld [vmem:[#allocation11 + $0x2b8] sm:$0xff]
          %v2617 = vld [vmem:[#allocation11 + $0x2c0] sm:$0xff]
          %v2618 = vld [vmem:[#allocation11 + $0x2c8] sm:$0xff]
          %v2619 = vld [vmem:[#allocation11 + $0x2d0] sm:$0xff]
          %v2620 = vld [vmem:[#allocation11 + $0x2d8] sm:$0xff]
          %v2621 = vld [vmem:[#allocation11 + $0x2e0] sm:$0xff]
          %v2622 = vld [vmem:[#allocation11 + $0x2e8] sm:$0xff]
          %v2623 = vld [vmem:[#allocation11 + $0x2f0] sm:$0xff]
          %v2624 = vld [vmem:[#allocation11 + $0x2f8] sm:$0xff]
          %v2625 = vld [vmem:[#allocation11 + $0x300] sm:$0xff]
          %v2626 = vld [vmem:[#allocation11 + $0x308] sm:$0xff]
          %v2627 = vld [vmem:[#allocation11 + $0x310] sm:$0xff]
          %v2628 = vld [vmem:[#allocation11 + $0x318] sm:$0xff]
          %v2629 = vld [vmem:[#allocation11 + $0x320] sm:$0xff]
          %v2630 = vld [vmem:[#allocation11 + $0x328] sm:$0xff]
          %v2631 = vld [vmem:[#allocation11 + $0x330] sm:$0xff]
          %v2632 = vld [vmem:[#allocation11 + $0x338] sm:$0xff]
          %v2633 = vld [vmem:[#allocation11 + $0x340] sm:$0xff]
          %v2634 = vld [vmem:[#allocation11 + $0x348] sm:$0xff]
          %v2635 = vld [vmem:[#allocation11 + $0x350] sm:$0xff]
          %v2636 = vld [vmem:[#allocation11 + $0x358] sm:$0xff]
          %v2637 = vld [vmem:[#allocation11 + $0x360] sm:$0xff]
          %v2638 = vld [vmem:[#allocation11 + $0x368] sm:$0xff]
          %v2639 = vld [vmem:[#allocation11 + $0x370] sm:$0xff]
          %v2640 = vld [vmem:[#allocation11 + $0x378] sm:$0xff]
          %v2641 = vld [vmem:[#allocation11 + $0x380] sm:$0xff]
          %v2642 = vld [vmem:[#allocation11 + $0x388] sm:$0xff]
          %v2643 = vld [vmem:[#allocation11 + $0x390] sm:$0xff]
          %v2644 = vld [vmem:[#allocation11 + $0x398] sm:$0xff]
          %v2645 = vld [vmem:[#allocation11 + $0x3a0] sm:$0xff]
          %v2646 = vld [vmem:[#allocation11 + $0x3a8] sm:$0xff]
          %v2647 = vld [vmem:[#allocation11 + $0x3b0] sm:$0xff]
          %v2648 = vld [vmem:[#allocation11 + $0x3b8] sm:$0xff]
          %v2649 = vld [vmem:[#allocation11 + $0x3c0] sm:$0xff]
          %v2650 = vld [vmem:[#allocation11 + $0x3c8] sm:$0xff]
          %v2651 = vld [vmem:[#allocation11 + $0x3d0] sm:$0xff]
          %v2652 = vld [vmem:[#allocation11 + $0x3d8] sm:$0xff]
          %v2653 = vld [vmem:[#allocation11 + $0x3e0] sm:$0xff]
          %v2654 = vld [vmem:[#allocation11 + $0x3e8] sm:$0xff]
          %v2655 = vld [vmem:[#allocation11 + $0x3f0] sm:$0xff]
          %v2656 = vld [vmem:[#allocation11 + $0x3f8] sm:$0xff]
          %v2657 = vld [vmem:[%s9] sm:$0xff]
          %v2659 = vlaneseq
          %v2660 = vshrl.u32 %v2659, 7
          %v2661 = vsub.s32 0, %v2660
          %v2662 = vrot.slane %v2657, %v2661
          %v2663 = vlaneseq
          %v2664 = vshrl.u32 %v2663, 7
          %v2665 = vsub.s32 1, %v2664
          %v2666 = vrot.slane %v2657, %v2665
          %v2667 = vlaneseq
          %v2668 = vshrl.u32 %v2667, 7
          %v2669 = vsub.s32 2, %v2668
          %v2670 = vrot.slane %v2657, %v2669
          %v2671 = vlaneseq
          %v2672 = vshrl.u32 %v2671, 7
          %v2673 = vsub.s32 3, %v2672
          %v2674 = vrot.slane %v2657, %v2673
          %v2675 = vlaneseq
          %v2676 = vshrl.u32 %v2675, 7
          %v2677 = vsub.s32 4, %v2676
          %v2678 = vrot.slane %v2657, %v2677
          %v2679 = vlaneseq
          %v2680 = vshrl.u32 %v2679, 7
          %v2681 = vsub.s32 5, %v2680
          %v2682 = vrot.slane %v2657, %v2681
          %v2683 = vlaneseq
          %v2684 = vshrl.u32 %v2683, 7
          %v2685 = vsub.s32 6, %v2684
          %v2686 = vrot.slane %v2657, %v2685
          %v2687 = vlaneseq
          %v2688 = vshrl.u32 %v2687, 7
          %v2689 = vsub.s32 7, %v2688
          %v2690 = vrot.slane %v2657, %v2689
          %v2827 = vunpack.c.l.b16 %v2529
          %v2828 = vunpack.c.h.b16 %v2529
          %v2829 = vunpack.c.l.b16 %v2530
          %v2830 = vunpack.c.h.b16 %v2530
          %v2831 = vunpack.c.l.b16 %v2531
          %v2832 = vunpack.c.h.b16 %v2531
          %v2833 = vunpack.c.l.b16 %v2532
          %v2834 = vunpack.c.h.b16 %v2532
          %v2835 = vunpack.c.l.b16 %v2533
          %v2836 = vunpack.c.h.b16 %v2533
          %v2837 = vunpack.c.l.b16 %v2534
          %v2838 = vunpack.c.h.b16 %v2534
          %v2839 = vunpack.c.l.b16 %v2535
          %v2840 = vunpack.c.h.b16 %v2535
          %v2841 = vunpack.c.l.b16 %v2536
          %v2842 = vunpack.c.h.b16 %v2536
          %v2843 = vunpack.c.l.b16 %v2537
          %v2844 = vunpack.c.h.b16 %v2537
          %v2845 = vunpack.c.l.b16 %v2538
          %v2846 = vunpack.c.h.b16 %v2538
          %v2847 = vunpack.c.l.b16 %v2539
          %v2848 = vunpack.c.h.b16 %v2539
          %v2849 = vunpack.c.l.b16 %v2540
          %v2850 = vunpack.c.h.b16 %v2540
          %v2851 = vunpack.c.l.b16 %v2541
          %v2852 = vunpack.c.h.b16 %v2541
          %v2853 = vunpack.c.l.b16 %v2542
          %v2854 = vunpack.c.h.b16 %v2542
          %v2855 = vunpack.c.l.b16 %v2543
          %v2856 = vunpack.c.h.b16 %v2543
          %v2857 = vunpack.c.l.b16 %v2544
          %v2858 = vunpack.c.h.b16 %v2544
          %v2859 = vunpack.c.l.b16 %v2545
          %v2860 = vunpack.c.h.b16 %v2545
          %v2861 = vunpack.c.l.b16 %v2546
          %v2862 = vunpack.c.h.b16 %v2546
          %v2863 = vunpack.c.l.b16 %v2547
          %v2864 = vunpack.c.h.b16 %v2547
          %v2865 = vunpack.c.l.b16 %v2548
          %v2866 = vunpack.c.h.b16 %v2548
          %v2867 = vunpack.c.l.b16 %v2549
          %v2868 = vunpack.c.h.b16 %v2549
          %v2869 = vunpack.c.l.b16 %v2550
          %v2870 = vunpack.c.h.b16 %v2550
          %v2871 = vunpack.c.l.b16 %v2551
          %v2872 = vunpack.c.h.b16 %v2551
          %v2873 = vunpack.c.l.b16 %v2552
          %v2874 = vunpack.c.h.b16 %v2552
          %v2875 = vunpack.c.l.b16 %v2553
          %v2876 = vunpack.c.h.b16 %v2553
          %v2877 = vunpack.c.l.b16 %v2554
          %v2878 = vunpack.c.h.b16 %v2554
          %v2879 = vunpack.c.l.b16 %v2555
          %v2880 = vunpack.c.h.b16 %v2555
          %v2881 = vunpack.c.l.b16 %v2556
          %v2882 = vunpack.c.h.b16 %v2556
          %v2883 = vunpack.c.l.b16 %v2557
          %v2884 = vunpack.c.h.b16 %v2557
          %v2885 = vunpack.c.l.b16 %v2558
          %v2886 = vunpack.c.h.b16 %v2558
          %v2887 = vunpack.c.l.b16 %v2559
          %v2888 = vunpack.c.h.b16 %v2559
          %v2889 = vunpack.c.l.b16 %v2560
          %v2890 = vunpack.c.h.b16 %v2560
          %v2891 = vunpack.c.l.b16 %v2561
          %v2892 = vunpack.c.h.b16 %v2561
          %v2893 = vunpack.c.l.b16 %v2562
          %v2894 = vunpack.c.h.b16 %v2562
          %v2895 = vunpack.c.l.b16 %v2563
          %v2896 = vunpack.c.h.b16 %v2563
          %v2897 = vunpack.c.l.b16 %v2564
          %v2898 = vunpack.c.h.b16 %v2564
          %v2899 = vunpack.c.l.b16 %v2565
          %v2900 = vunpack.c.h.b16 %v2565
          %v2901 = vunpack.c.l.b16 %v2566
          %v2902 = vunpack.c.h.b16 %v2566
          %v2903 = vunpack.c.l.b16 %v2567
          %v2904 = vunpack.c.h.b16 %v2567
          %v2905 = vunpack.c.l.b16 %v2568
          %v2906 = vunpack.c.h.b16 %v2568
          %v2907 = vunpack.c.l.b16 %v2569
          %v2908 = vunpack.c.h.b16 %v2569
          %v2909 = vunpack.c.l.b16 %v2570
          %v2910 = vunpack.c.h.b16 %v2570
          %v2911 = vunpack.c.l.b16 %v2571
          %v2912 = vunpack.c.h.b16 %v2571
          %v2913 = vunpack.c.l.b16 %v2572
          %v2914 = vunpack.c.h.b16 %v2572
          %v2915 = vunpack.c.l.b16 %v2573
          %v2916 = vunpack.c.h.b16 %v2573
          %v2917 = vunpack.c.l.b16 %v2574
          %v2918 = vunpack.c.h.b16 %v2574
          %v2919 = vunpack.c.l.b16 %v2575
          %v2920 = vunpack.c.h.b16 %v2575
          %v2921 = vunpack.c.l.b16 %v2576
          %v2922 = vunpack.c.h.b16 %v2576
          %v2923 = vunpack.c.l.b16 %v2577
          %v2924 = vunpack.c.h.b16 %v2577
          %v2925 = vunpack.c.l.b16 %v2578
          %v2926 = vunpack.c.h.b16 %v2578
          %v2927 = vunpack.c.l.b16 %v2579
          %v2928 = vunpack.c.h.b16 %v2579
          %v2929 = vunpack.c.l.b16 %v2580
          %v2930 = vunpack.c.h.b16 %v2580
          %v2931 = vunpack.c.l.b16 %v2581
          %v2932 = vunpack.c.h.b16 %v2581
          %v2933 = vunpack.c.l.b16 %v2582
          %v2934 = vunpack.c.h.b16 %v2582
          %v2935 = vunpack.c.l.b16 %v2583
          %v2936 = vunpack.c.h.b16 %v2583
          %v2937 = vunpack.c.l.b16 %v2584
          %v2938 = vunpack.c.h.b16 %v2584
          %v2939 = vunpack.c.l.b16 %v2585
          %v2940 = vunpack.c.h.b16 %v2585
          %v2941 = vunpack.c.l.b16 %v2586
          %v2942 = vunpack.c.h.b16 %v2586
          %v2943 = vunpack.c.l.b16 %v2587
          %v2944 = vunpack.c.h.b16 %v2587
          %v2945 = vunpack.c.l.b16 %v2588
          %v2946 = vunpack.c.h.b16 %v2588
          %v2947 = vunpack.c.l.b16 %v2589
          %v2948 = vunpack.c.h.b16 %v2589
          %v2949 = vunpack.c.l.b16 %v2590
          %v2950 = vunpack.c.h.b16 %v2590
          %v2951 = vunpack.c.l.b16 %v2591
          %v2952 = vunpack.c.h.b16 %v2591
          %v2953 = vunpack.c.l.b16 %v2592
          %v2954 = vunpack.c.h.b16 %v2592
          %v2955 = vunpack.c.l.b16 %v2593
          %v2956 = vunpack.c.h.b16 %v2593
          %v2957 = vunpack.c.l.b16 %v2594
          %v2958 = vunpack.c.h.b16 %v2594
          %v2959 = vunpack.c.l.b16 %v2595
          %v2960 = vunpack.c.h.b16 %v2595
          %v2961 = vunpack.c.l.b16 %v2596
          %v2962 = vunpack.c.h.b16 %v2596
          %v2963 = vunpack.c.l.b16 %v2597
          %v2964 = vunpack.c.h.b16 %v2597
          %v2965 = vunpack.c.l.b16 %v2598
          %v2966 = vunpack.c.h.b16 %v2598
          %v2967 = vunpack.c.l.b16 %v2599
          %v2968 = vunpack.c.h.b16 %v2599
          %v2969 = vunpack.c.l.b16 %v2600
          %v2970 = vunpack.c.h.b16 %v2600
          %v2971 = vunpack.c.l.b16 %v2601
          %v2972 = vunpack.c.h.b16 %v2601
          %v2973 = vunpack.c.l.b16 %v2602
          %v2974 = vunpack.c.h.b16 %v2602
          %v2975 = vunpack.c.l.b16 %v2603
          %v2976 = vunpack.c.h.b16 %v2603
          %v2977 = vunpack.c.l.b16 %v2604
          %v2978 = vunpack.c.h.b16 %v2604
          %v2979 = vunpack.c.l.b16 %v2605
          %v2980 = vunpack.c.h.b16 %v2605
          %v2981 = vunpack.c.l.b16 %v2606
          %v2982 = vunpack.c.h.b16 %v2606
          %v2983 = vunpack.c.l.b16 %v2607
          %v2984 = vunpack.c.h.b16 %v2607
          %v2985 = vunpack.c.l.b16 %v2608
          %v2986 = vunpack.c.h.b16 %v2608
          %v2987 = vunpack.c.l.b16 %v2609
          %v2988 = vunpack.c.h.b16 %v2609
          %v2989 = vunpack.c.l.b16 %v2610
          %v2990 = vunpack.c.h.b16 %v2610
          %v2991 = vunpack.c.l.b16 %v2611
          %v2992 = vunpack.c.h.b16 %v2611
          %v2993 = vunpack.c.l.b16 %v2612
          %v2994 = vunpack.c.h.b16 %v2612
          %v2995 = vunpack.c.l.b16 %v2613
          %v2996 = vunpack.c.h.b16 %v2613
          %v2997 = vunpack.c.l.b16 %v2614
          %v2998 = vunpack.c.h.b16 %v2614
          %v2999 = vunpack.c.l.b16 %v2615
          %v3000 = vunpack.c.h.b16 %v2615
          %v3001 = vunpack.c.l.b16 %v2616
          %v3002 = vunpack.c.h.b16 %v2616
          %v3003 = vunpack.c.l.b16 %v2617
          %v3004 = vunpack.c.h.b16 %v2617
          %v3005 = vunpack.c.l.b16 %v2618
          %v3006 = vunpack.c.h.b16 %v2618
          %v3007 = vunpack.c.l.b16 %v2619
          %v3008 = vunpack.c.h.b16 %v2619
          %v3009 = vunpack.c.l.b16 %v2620
          %v3010 = vunpack.c.h.b16 %v2620
          %v3011 = vunpack.c.l.b16 %v2621
          %v3012 = vunpack.c.h.b16 %v2621
          %v3013 = vunpack.c.l.b16 %v2622
          %v3014 = vunpack.c.h.b16 %v2622
          %v3015 = vunpack.c.l.b16 %v2623
          %v3016 = vunpack.c.h.b16 %v2623
          %v3017 = vunpack.c.l.b16 %v2624
          %v3018 = vunpack.c.h.b16 %v2624
          %v3019 = vunpack.c.l.b16 %v2625
          %v3020 = vunpack.c.h.b16 %v2625
          %v3021 = vunpack.c.l.b16 %v2626
          %v3022 = vunpack.c.h.b16 %v2626
          %v3023 = vunpack.c.l.b16 %v2627
          %v3024 = vunpack.c.h.b16 %v2627
          %v3025 = vunpack.c.l.b16 %v2628
          %v3026 = vunpack.c.h.b16 %v2628
          %v3027 = vunpack.c.l.b16 %v2629
          %v3028 = vunpack.c.h.b16 %v2629
          %v3029 = vunpack.c.l.b16 %v2630
          %v3030 = vunpack.c.h.b16 %v2630
          %v3031 = vunpack.c.l.b16 %v2631
          %v3032 = vunpack.c.h.b16 %v2631
          %v3033 = vunpack.c.l.b16 %v2632
          %v3034 = vunpack.c.h.b16 %v2632
          %v3035 = vunpack.c.l.b16 %v2633
          %v3036 = vunpack.c.h.b16 %v2633
          %v3037 = vunpack.c.l.b16 %v2634
          %v3038 = vunpack.c.h.b16 %v2634
          %v3039 = vunpack.c.l.b16 %v2635
          %v3040 = vunpack.c.h.b16 %v2635
          %v3041 = vunpack.c.l.b16 %v2636
          %v3042 = vunpack.c.h.b16 %v2636
          %v3043 = vunpack.c.l.b16 %v2637
          %v3044 = vunpack.c.h.b16 %v2637
          %v3045 = vunpack.c.l.b16 %v2638
          %v3046 = vunpack.c.h.b16 %v2638
          %v3047 = vunpack.c.l.b16 %v2639
          %v3048 = vunpack.c.h.b16 %v2639
          %v3049 = vunpack.c.l.b16 %v2640
          %v3050 = vunpack.c.h.b16 %v2640
          %v3051 = vunpack.c.l.b16 %v2641
          %v3052 = vunpack.c.h.b16 %v2641
          %v3053 = vunpack.c.l.b16 %v2642
          %v3054 = vunpack.c.h.b16 %v2642
          %v3055 = vunpack.c.l.b16 %v2643
          %v3056 = vunpack.c.h.b16 %v2643
          %v3057 = vunpack.c.l.b16 %v2644
          %v3058 = vunpack.c.h.b16 %v2644
          %v3059 = vunpack.c.l.b16 %v2645
          %v3060 = vunpack.c.h.b16 %v2645
          %v3061 = vunpack.c.l.b16 %v2646
          %v3062 = vunpack.c.h.b16 %v2646
          %v3063 = vunpack.c.l.b16 %v2647
          %v3064 = vunpack.c.h.b16 %v2647
          %v3065 = vunpack.c.l.b16 %v2648
          %v3066 = vunpack.c.h.b16 %v2648
          %v3067 = vunpack.c.l.b16 %v2649
          %v3068 = vunpack.c.h.b16 %v2649
          %v3069 = vunpack.c.l.b16 %v2650
          %v3070 = vunpack.c.h.b16 %v2650
          %v3071 = vunpack.c.l.b16 %v2651
          %v3072 = vunpack.c.h.b16 %v2651
          %v3073 = vunpack.c.l.b16 %v2652
          %v3074 = vunpack.c.h.b16 %v2652
          %v3075 = vunpack.c.l.b16 %v2653
          %v3076 = vunpack.c.h.b16 %v2653
          %v3077 = vunpack.c.l.b16 %v2654
          %v3078 = vunpack.c.h.b16 %v2654
          %v3079 = vunpack.c.l.b16 %v2655
          %v3080 = vunpack.c.h.b16 %v2655
          %v3081 = vunpack.c.l.b16 %v2656
          %v3082 = vunpack.c.h.b16 %v2656
          %v3083 = vpack.c.b16 %v2835, %v2827
          %v3084 = vpack.c.b16 %v2836, %v2828
          %v3085 = vpack.c.b16 %v2837, %v2829
          %v3086 = vpack.c.b16 %v2838, %v2830
          %v3087 = vpack.c.b16 %v2839, %v2831
          %v3088 = vpack.c.b16 %v2840, %v2832
          %v3089 = vpack.c.b16 %v2841, %v2833
          %v3090 = vpack.c.b16 %v2842, %v2834
          %v3091 = vpack.c.b16 %v2851, %v2843
          %v3092 = vpack.c.b16 %v2852, %v2844
          %v3093 = vpack.c.b16 %v2853, %v2845
          %v3094 = vpack.c.b16 %v2854, %v2846
          %v3095 = vpack.c.b16 %v2855, %v2847
          %v3096 = vpack.c.b16 %v2856, %v2848
          %v3097 = vpack.c.b16 %v2857, %v2849
          %v3098 = vpack.c.b16 %v2858, %v2850
          %v3099 = vpack.c.b16 %v2867, %v2859
          %v3100 = vpack.c.b16 %v2868, %v2860
          %v3101 = vpack.c.b16 %v2869, %v2861
          %v3102 = vpack.c.b16 %v2870, %v2862
          %v3103 = vpack.c.b16 %v2871, %v2863
          %v3104 = vpack.c.b16 %v2872, %v2864
          %v3105 = vpack.c.b16 %v2873, %v2865
          %v3106 = vpack.c.b16 %v2874, %v2866
          %v3107 = vpack.c.b16 %v2883, %v2875
          %v3108 = vpack.c.b16 %v2884, %v2876
          %v3109 = vpack.c.b16 %v2885, %v2877
          %v3110 = vpack.c.b16 %v2886, %v2878
          %v3111 = vpack.c.b16 %v2887, %v2879
          %v3112 = vpack.c.b16 %v2888, %v2880
          %v3113 = vpack.c.b16 %v2889, %v2881
          %v3114 = vpack.c.b16 %v2890, %v2882
          %v3115 = vpack.c.b16 %v2899, %v2891
          %v3116 = vpack.c.b16 %v2900, %v2892
          %v3117 = vpack.c.b16 %v2901, %v2893
          %v3118 = vpack.c.b16 %v2902, %v2894
          %v3119 = vpack.c.b16 %v2903, %v2895
          %v3120 = vpack.c.b16 %v2904, %v2896
          %v3121 = vpack.c.b16 %v2905, %v2897
          %v3122 = vpack.c.b16 %v2906, %v2898
          %v3123 = vpack.c.b16 %v2915, %v2907
          %v3124 = vpack.c.b16 %v2916, %v2908
          %v3125 = vpack.c.b16 %v2917, %v2909
          %v3126 = vpack.c.b16 %v2918, %v2910
          %v3127 = vpack.c.b16 %v2919, %v2911
          %v3128 = vpack.c.b16 %v2920, %v2912
          %v3129 = vpack.c.b16 %v2921, %v2913
          %v3130 = vpack.c.b16 %v2922, %v2914
          %v3131 = vpack.c.b16 %v2931, %v2923
          %v3132 = vpack.c.b16 %v2932, %v2924
          %v3133 = vpack.c.b16 %v2933, %v2925
          %v3134 = vpack.c.b16 %v2934, %v2926
          %v3135 = vpack.c.b16 %v2935, %v2927
          %v3136 = vpack.c.b16 %v2936, %v2928
          %v3137 = vpack.c.b16 %v2937, %v2929
          %v3138 = vpack.c.b16 %v2938, %v2930
          %v3139 = vpack.c.b16 %v2947, %v2939
          %v3140 = vpack.c.b16 %v2948, %v2940
          %v3141 = vpack.c.b16 %v2949, %v2941
          %v3142 = vpack.c.b16 %v2950, %v2942
          %v3143 = vpack.c.b16 %v2951, %v2943
          %v3144 = vpack.c.b16 %v2952, %v2944
          %v3145 = vpack.c.b16 %v2953, %v2945
          %v3146 = vpack.c.b16 %v2954, %v2946
          %v3147 = vpack.c.b16 %v2963, %v2955
          %v3148 = vpack.c.b16 %v2964, %v2956
          %v3149 = vpack.c.b16 %v2965, %v2957
          %v3150 = vpack.c.b16 %v2966, %v2958
          %v3151 = vpack.c.b16 %v2967, %v2959
          %v3152 = vpack.c.b16 %v2968, %v2960
          %v3153 = vpack.c.b16 %v2969, %v2961
          %v3154 = vpack.c.b16 %v2970, %v2962
          %v3155 = vpack.c.b16 %v2979, %v2971
          %v3156 = vpack.c.b16 %v2980, %v2972
          %v3157 = vpack.c.b16 %v2981, %v2973
          %v3158 = vpack.c.b16 %v2982, %v2974
          %v3159 = vpack.c.b16 %v2983, %v2975
          %v3160 = vpack.c.b16 %v2984, %v2976
          %v3161 = vpack.c.b16 %v2985, %v2977
          %v3162 = vpack.c.b16 %v2986, %v2978
          %v3163 = vpack.c.b16 %v2995, %v2987
          %v3164 = vpack.c.b16 %v2996, %v2988
          %v3165 = vpack.c.b16 %v2997, %v2989
          %v3166 = vpack.c.b16 %v2998, %v2990
          %v3167 = vpack.c.b16 %v2999, %v2991
          %v3168 = vpack.c.b16 %v3000, %v2992
          %v3169 = vpack.c.b16 %v3001, %v2993
          %v3170 = vpack.c.b16 %v3002, %v2994
          %v3171 = vpack.c.b16 %v3011, %v3003
          %v3172 = vpack.c.b16 %v3012, %v3004
          %v3173 = vpack.c.b16 %v3013, %v3005
          %v3174 = vpack.c.b16 %v3014, %v3006
          %v3175 = vpack.c.b16 %v3015, %v3007
          %v3176 = vpack.c.b16 %v3016, %v3008
          %v3177 = vpack.c.b16 %v3017, %v3009
          %v3178 = vpack.c.b16 %v3018, %v3010
          %v3179 = vpack.c.b16 %v3027, %v3019
          %v3180 = vpack.c.b16 %v3028, %v3020
          %v3181 = vpack.c.b16 %v3029, %v3021
          %v3182 = vpack.c.b16 %v3030, %v3022
          %v3183 = vpack.c.b16 %v3031, %v3023
          %v3184 = vpack.c.b16 %v3032, %v3024
          %v3185 = vpack.c.b16 %v3033, %v3025
          %v3186 = vpack.c.b16 %v3034, %v3026
          %v3187 = vpack.c.b16 %v3043, %v3035
          %v3188 = vpack.c.b16 %v3044, %v3036
          %v3189 = vpack.c.b16 %v3045, %v3037
          %v3190 = vpack.c.b16 %v3046, %v3038
          %v3191 = vpack.c.b16 %v3047, %v3039
          %v3192 = vpack.c.b16 %v3048, %v3040
          %v3193 = vpack.c.b16 %v3049, %v3041
          %v3194 = vpack.c.b16 %v3050, %v3042
          %v3195 = vpack.c.b16 %v3059, %v3051
          %v3196 = vpack.c.b16 %v3060, %v3052
          %v3197 = vpack.c.b16 %v3061, %v3053
          %v3198 = vpack.c.b16 %v3062, %v3054
          %v3199 = vpack.c.b16 %v3063, %v3055
          %v3200 = vpack.c.b16 %v3064, %v3056
          %v3201 = vpack.c.b16 %v3065, %v3057
          %v3202 = vpack.c.b16 %v3066, %v3058
          %v3203 = vpack.c.b16 %v3075, %v3067
          %v3204 = vpack.c.b16 %v3076, %v3068
          %v3205 = vpack.c.b16 %v3077, %v3069
          %v3206 = vpack.c.b16 %v3078, %v3070
          %v3207 = vpack.c.b16 %v3079, %v3071
          %v3208 = vpack.c.b16 %v3080, %v3072
          %v3209 = vpack.c.b16 %v3081, %v3073
          %v3210 = vpack.c.b16 %v3082, %v3074
          %3339 = vmatprep.subr.bf16.mxu0 %v3084
          %3340 = vmatpush1.bf16.msra.mxu0 %v3083
          %3341 = vmatprep.subr.bf16.mxu0 %v3092
          %3342 = vmatpush1.bf16.msra.mxu0 %v3091
          %3343 = vmatprep.subr.bf16.mxu0 %v3100
          %3344 = vmatpush1.bf16.msra.mxu0 %v3099
          %3345 = vmatprep.subr.bf16.mxu0 %v3108
          %3346 = vmatpush1.bf16.msra.mxu0 %v3107
          %3347 = vmatprep.subr.bf16.mxu0 %v3116
          %3348 = vmatpush1.bf16.msra.mxu0 %v3115
          %3349 = vmatprep.subr.bf16.mxu0 %v3124
          %3350 = vmatpush1.bf16.msra.mxu0 %v3123
          %3351 = vmatprep.subr.bf16.mxu0 %v3132
          %3352 = vmatpush1.bf16.msra.mxu0 %v3131
          %3353 = vmatprep.subr.bf16.mxu0 %v3140
          %3354 = vmatpush1.bf16.msra.mxu0 %v3139
          %3355 = vmatprep.subr.bf16.mxu0 %v3148
          %3356 = vmatpush1.bf16.msra.mxu0 %v3147
          %3357 = vmatprep.subr.bf16.mxu0 %v3156
          %3358 = vmatpush1.bf16.msra.mxu0 %v3155
          %3359 = vmatprep.subr.bf16.mxu0 %v3164
          %3360 = vmatpush1.bf16.msra.mxu0 %v3163
          %3361 = vmatprep.subr.bf16.mxu0 %v3172
          %3362 = vmatpush1.bf16.msra.mxu0 %v3171
          %3363 = vmatprep.subr.bf16.mxu0 %v3180
          %3364 = vmatpush1.bf16.msra.mxu0 %v3179
          %3365 = vmatprep.subr.bf16.mxu0 %v3188
          %3366 = vmatpush1.bf16.msra.mxu0 %v3187
          %3367 = vmatprep.subr.bf16.mxu0 %v3196
          %3368 = vmatpush1.bf16.msra.mxu0 %v3195
          %3369 = vmatprep.subr.bf16.mxu0 %v3204
          %3370 = vmatpush1.bf16.msra.mxu0 %v3203
          %3371 = vmatprep.mubr.bf16.mxu0 %v2514
          %3372 = vmatmul.mubr.bf16.gmra.mrb[0].mxu0 %v2513
          %v3373 = vpop.f32.mrb[0].mxu0
          %v3374 = vadd.f32 %v2662, %v3373
          %v3375 = vpop.f32.mrb[0].mxu0
          %v3376 = vadd.f32 %v2666, %v3375
          %v3377 = vpop.f32.mrb[0].mxu0
          %v3378 = vadd.f32 %v2662, %v3377
          %v3379 = vpop.f32.mrb[0].mxu0
          %v3380 = vadd.f32 %v2666, %v3379
          %3381 = vmatprep.mubr.bf16.mxu0 %v2516
          %3382 = vmatmul.mubr.bf16.gmra.mrb[0].mxu0 %v2515
          %v3383 = vpop.f32.mrb[0].mxu0
          %v3384 = vadd.f32 %v2662, %v3383
          %v3385 = vpop.f32.mrb[0].mxu0
          %v3386 = vadd.f32 %v2666, %v3385
          %v3387 = vpop.f32.mrb[0].mxu0
          %v3388 = vadd.f32 %v2662, %v3387
          %v3389 = vpop.f32.mrb[0].mxu0
          %v3390 = vadd.f32 %v2666, %v3389
          %3391 = vmatprep.mubr.bf16.mxu0 %v2518
          %3392 = vmatmul.mubr.bf16.gmra.mrb[0].mxu0 %v2517
          %v3393 = vpop.f32.mrb[0].mxu0
          %v3394 = vadd.f32 %v2662, %v3393
          %v3395 = vpop.f32.mrb[0].mxu0
          %v3396 = vadd.f32 %v2666, %v3395
          %v3397 = vpop.f32.mrb[0].mxu0
          %v3398 = vadd.f32 %v2662, %v3397
          %v3399 = vpop.f32.mrb[0].mxu0
          %v3400 = vadd.f32 %v2666, %v3399
          %3401 = vmatprep.mubr.bf16.mxu0 %v2520
          %3402 = vmatmul.mubr.bf16.gmra.mrb[0].mxu0 %v2519
          %v3403 = vpop.f32.mrb[0].mxu0
          %v3404 = vadd.f32 %v2662, %v3403
          %v3405 = vpop.f32.mrb[0].mxu0
          %v3406 = vadd.f32 %v2666, %v3405
          %v3407 = vpop.f32.mrb[0].mxu0
          %v3408 = vadd.f32 %v2662, %v3407
          %v3409 = vpop.f32.mrb[0].mxu0
          %v3410 = vadd.f32 %v2666, %v3409
          %3411 = vmatprep.mubr.bf16.mxu0 %v2522
          %3412 = vmatmul.mubr.bf16.gmra.mrb[0].mxu0 %v2521
          %v3413 = vpop.f32.mrb[0].mxu0
          %v3414 = vadd.f32 %v2662, %v3413
          %v3415 = vpop.f32.mrb[0].mxu0
          %v3416 = vadd.f32 %v2666, %v3415
          %v3417 = vpop.f32.mrb[0].mxu0
          %v3418 = vadd.f32 %v2662, %v3417
          %v3419 = vpop.f32.mrb[0].mxu0
          %v3420 = vadd.f32 %v2666, %v3419
          %3421 = vmatprep.mubr.bf16.mxu0 %v2524
          %3422 = vmatmul.mubr.bf16.gmra.mrb[0].mxu0 %v2523
          %v3423 = vpop.f32.mrb[0].mxu0
          %v3424 = vadd.f32 %v2662, %v3423
          %v3425 = vpop.f32.mrb[0].mxu0
          %v3426 = vadd.f32 %v2666, %v3425
          %v3427 = vpop.f32.mrb[0].mxu0
          %v3428 = vadd.f32 %v2662, %v3427
          %v3429 = vpop.f32.mrb[0].mxu0
          %v3430 = vadd.f32 %v2666, %v3429
          %3431 = vmatprep.mubr.bf16.mxu0 %v2526
          %3432 = vmatmul.mubr.bf16.gmra.mrb[0].mxu0 %v2525
          %v3433 = vpop.f32.mrb[0].mxu0
          %v3434 = vadd.f32 %v2662, %v3433
          %v3435 = vpop.f32.mrb[0].mxu0
          %v3436 = vadd.f32 %v2666, %v3435
          %v3437 = vpop.f32.mrb[0].mxu0
          %v3438 = vadd.f32 %v2662, %v3437
          %v3439 = vpop.f32.mrb[0].mxu0
          %v3440 = vadd.f32 %v2666, %v3439
          %3441 = vmatprep.mubr.bf16.mxu0 %v2528
          %3442 = vmatmul.mubr.bf16.gmra.mrb[0].mxu0 %v2527
          %v3443 = vpop.f32.mrb[0].mxu0
          %v3444 = vadd.f32 %v2662, %v3443
          %v3445 = vpop.f32.mrb[0].mxu0
          %v3446 = vadd.f32 %v2666, %v3445
          %v3447 = vpop.f32.mrb[0].mxu0
          %v3448 = vadd.f32 %v2662, %v3447
          %v3449 = vpop.f32.mrb[0].mxu0
          %v3450 = vadd.f32 %v2666, %v3449
          %3451 = vdwg.mxu0
          %3452 = vmatprep.subr.bf16.mxu0 %v3086
          %3453 = vmatpush1.bf16.msra.mxu0 %v3085
          %3454 = vmatprep.subr.bf16.mxu0 %v3094
          %3455 = vmatpush1.bf16.msra.mxu0 %v3093
          %3456 = vmatprep.subr.bf16.mxu0 %v3102
          %3457 = vmatpush1.bf16.msra.mxu0 %v3101
          %3458 = vmatprep.subr.bf16.mxu0 %v3110
          %3459 = vmatpush1.bf16.msra.mxu0 %v3109
          %3460 = vmatprep.subr.bf16.mxu0 %v3118
          %3461 = vmatpush1.bf16.msra.mxu0 %v3117
          %3462 = vmatprep.subr.bf16.mxu0 %v3126
          %3463 = vmatpush1.bf16.msra.mxu0 %v3125
          %3464 = vmatprep.subr.bf16.mxu0 %v3134
          %3465 = vmatpush1.bf16.msra.mxu0 %v3133
          %3466 = vmatprep.subr.bf16.mxu0 %v3142
          %3467 = vmatpush1.bf16.msra.mxu0 %v3141
          %3468 = vmatprep.subr.bf16.mxu0 %v3150
          %3469 = vmatpush1.bf16.msra.mxu0 %v3149
          %3470 = vmatprep.subr.bf16.mxu0 %v3158
          %3471 = vmatpush1.bf16.msra.mxu0 %v3157
          %3472 = vmatprep.subr.bf16.mxu0 %v3166
          %3473 = vmatpush1.bf16.msra.mxu0 %v3165
          %3474 = vmatprep.subr.bf16.mxu0 %v3174
          %3475 = vmatpush1.bf16.msra.mxu0 %v3173
          %3476 = vmatprep.subr.bf16.mxu0 %v3182
          %3477 = vmatpush1.bf16.msra.mxu0 %v3181
          %3478 = vmatprep.subr.bf16.mxu0 %v3190
          %3479 = vmatpush1.bf16.msra.mxu0 %v3189
          %3480 = vmatprep.subr.bf16.mxu0 %v3198
          %3481 = vmatpush1.bf16.msra.mxu0 %v3197
          %3482 = vmatprep.subr.bf16.mxu0 %v3206
          %3483 = vmatpush1.bf16.msra.mxu0 %v3205
          %3484 = vmatprep.mubr.bf16.mxu0 %v2514
          %3485 = vmatmul.mubr.bf16.gmra.mrb[0].mxu0 %v2513
          %v3486 = vpop.f32.mrb[0].mxu0
          %v3487 = vadd.f32 %v2670, %v3486
          %v3488 = vpop.f32.mrb[0].mxu0
          %v3489 = vadd.f32 %v2674, %v3488
          %v3490 = vpop.f32.mrb[0].mxu0
          %v3491 = vadd.f32 %v2670, %v3490
          %v3492 = vpop.f32.mrb[0].mxu0
          %v3493 = vadd.f32 %v2674, %v3492
          %3494 = vmatprep.mubr.bf16.mxu0 %v2516
          %3495 = vmatmul.mubr.bf16.gmra.mrb[0].mxu0 %v2515
          %v3496 = vpop.f32.mrb[0].mxu0
          %v3497 = vadd.f32 %v2670, %v3496
          %v3498 = vpop.f32.mrb[0].mxu0
          %v3499 = vadd.f32 %v2674, %v3498
          %v3500 = vpop.f32.mrb[0].mxu0
          %v3501 = vadd.f32 %v2670, %v3500
          %v3502 = vpop.f32.mrb[0].mxu0
          %v3503 = vadd.f32 %v2674, %v3502
          %3504 = vmatprep.mubr.bf16.mxu0 %v2518
          %3505 = vmatmul.mubr.bf16.gmra.mrb[0].mxu0 %v2517
          %v3506 = vpop.f32.mrb[0].mxu0
          %v3507 = vadd.f32 %v2670, %v3506
          %v3508 = vpop.f32.mrb[0].mxu0
          %v3509 = vadd.f32 %v2674, %v3508
          %v3510 = vpop.f32.mrb[0].mxu0
          %v3511 = vadd.f32 %v2670, %v3510
          %v3512 = vpop.f32.mrb[0].mxu0
          %v3513 = vadd.f32 %v2674, %v3512
          %3514 = vmatprep.mubr.bf16.mxu0 %v2520
          %3515 = vmatmul.mubr.bf16.gmra.mrb[0].mxu0 %v2519
          %v3516 = vpop.f32.mrb[0].mxu0
          %v3517 = vadd.f32 %v2670, %v3516
          %v3518 = vpop.f32.mrb[0].mxu0
          %v3519 = vadd.f32 %v2674, %v3518
          %v3520 = vpop.f32.mrb[0].mxu0
          %v3521 = vadd.f32 %v2670, %v3520
          %v3522 = vpop.f32.mrb[0].mxu0
          %v3523 = vadd.f32 %v2674, %v3522
          %3524 = vmatprep.mubr.bf16.mxu0 %v2522
          %3525 = vmatmul.mubr.bf16.gmra.mrb[0].mxu0 %v2521
          %v3526 = vpop.f32.mrb[0].mxu0
          %v3527 = vadd.f32 %v2670, %v3526
          %v3528 = vpop.f32.mrb[0].mxu0
          %v3529 = vadd.f32 %v2674, %v3528
          %v3530 = vpop.f32.mrb[0].mxu0
          %v3531 = vadd.f32 %v2670, %v3530
          %v3532 = vpop.f32.mrb[0].mxu0
          %v3533 = vadd.f32 %v2674, %v3532
          %3534 = vmatprep.mubr.bf16.mxu0 %v2524
          %3535 = vmatmul.mubr.bf16.gmra.mrb[0].mxu0 %v2523
          %v3536 = vpop.f32.mrb[0].mxu0
          %v3537 = vadd.f32 %v2670, %v3536
          %v3538 = vpop.f32.mrb[0].mxu0
          %v3539 = vadd.f32 %v2674, %v3538
          %v3540 = vpop.f32.mrb[0].mxu0
          %v3541 = vadd.f32 %v2670, %v3540
          %v3542 = vpop.f32.mrb[0].mxu0
          %v3543 = vadd.f32 %v2674, %v3542
          %3544 = vmatprep.mubr.bf16.mxu0 %v2526
          %3545 = vmatmul.mubr.bf16.gmra.mrb[0].mxu0 %v2525
          %v3546 = vpop.f32.mrb[0].mxu0
          %v3547 = vadd.f32 %v2670, %v3546
          %v3548 = vpop.f32.mrb[0].mxu0
          %v3549 = vadd.f32 %v2674, %v3548
          %v3550 = vpop.f32.mrb[0].mxu0
          %v3551 = vadd.f32 %v2670, %v3550
          %v3552 = vpop.f32.mrb[0].mxu0
          %v3553 = vadd.f32 %v2674, %v3552
          %3554 = vmatprep.mubr.bf16.mxu0 %v2528
          %3555 = vmatmul.mubr.bf16.gmra.mrb[0].mxu0 %v2527
          %v3556 = vpop.f32.mrb[0].mxu0
          %v3557 = vadd.f32 %v2670, %v3556
          %v3558 = vpop.f32.mrb[0].mxu0
          %v3559 = vadd.f32 %v2674, %v3558
          %v3560 = vpop.f32.mrb[0].mxu0
          %v3561 = vadd.f32 %v2670, %v3560
          %v3562 = vpop.f32.mrb[0].mxu0
          %v3563 = vadd.f32 %v2674, %v3562
          %3564 = vdwg.mxu0
          %3565 = vmatprep.subr.bf16.mxu0 %v3088
          %3566 = vmatpush1.bf16.msra.mxu0 %v3087
          %3567 = vmatprep.subr.bf16.mxu0 %v3096
          %3568 = vmatpush1.bf16.msra.mxu0 %v3095
          %3569 = vmatprep.subr.bf16.mxu0 %v3104
          %3570 = vmatpush1.bf16.msra.mxu0 %v3103
          %3571 = vmatprep.subr.bf16.mxu0 %v3112
          %3572 = vmatpush1.bf16.msra.mxu0 %v3111
          %3573 = vmatprep.subr.bf16.mxu0 %v3120
          %3574 = vmatpush1.bf16.msra.mxu0 %v3119
          %3575 = vmatprep.subr.bf16.mxu0 %v3128
          %3576 = vmatpush1.bf16.msra.mxu0 %v3127
          %3577 = vmatprep.subr.bf16.mxu0 %v3136
          %3578 = vmatpush1.bf16.msra.mxu0 %v3135
          %3579 = vmatprep.subr.bf16.mxu0 %v3144
          %3580 = vmatpush1.bf16.msra.mxu0 %v3143
          %3581 = vmatprep.subr.bf16.mxu0 %v3152
          %3582 = vmatpush1.bf16.msra.mxu0 %v3151
          %3583 = vmatprep.subr.bf16.mxu0 %v3160
          %3584 = vmatpush1.bf16.msra.mxu0 %v3159
          %3585 = vmatprep.subr.bf16.mxu0 %v3168
          %3586 = vmatpush1.bf16.msra.mxu0 %v3167
          %3587 = vmatprep.subr.bf16.mxu0 %v3176
          %3588 = vmatpush1.bf16.msra.mxu0 %v3175
          %3589 = vmatprep.subr.bf16.mxu0 %v3184
          %3590 = vmatpush1.bf16.msra.mxu0 %v3183
          %3591 = vmatprep.subr.bf16.mxu0 %v3192
          %3592 = vmatpush1.bf16.msra.mxu0 %v3191
          %3593 = vmatprep.subr.bf16.mxu0 %v3200
          %3594 = vmatpush1.bf16.msra.mxu0 %v3199
          %3595 = vmatprep.subr.bf16.mxu0 %v3208
          %3596 = vmatpush1.bf16.msra.mxu0 %v3207
          %3597 = vmatprep.mubr.bf16.mxu0 %v2514
          %3598 = vmatmul.mubr.bf16.gmra.mrb[0].mxu0 %v2513
          %v3599 = vpop.f32.mrb[0].mxu0
          %v3600 = vadd.f32 %v2678, %v3599
          %v3601 = vpop.f32.mrb[0].mxu0
          %v3602 = vadd.f32 %v2682, %v3601
          %v3603 = vpop.f32.mrb[0].mxu0
          %v3604 = vadd.f32 %v2678, %v3603
          %v3605 = vpop.f32.mrb[0].mxu0
          %v3606 = vadd.f32 %v2682, %v3605
          %3607 = vmatprep.mubr.bf16.mxu0 %v2516
          %3608 = vmatmul.mubr.bf16.gmra.mrb[0].mxu0 %v2515
          %v3609 = vpop.f32.mrb[0].mxu0
          %v3610 = vadd.f32 %v2678, %v3609
          %v3611 = vpop.f32.mrb[0].mxu0
          %v3612 = vadd.f32 %v2682, %v3611
          %v3613 = vpop.f32.mrb[0].mxu0
          %v3614 = vadd.f32 %v2678, %v3613
          %v3615 = vpop.f32.mrb[0].mxu0
          %v3616 = vadd.f32 %v2682, %v3615
          %3617 = vmatprep.mubr.bf16.mxu0 %v2518
          %3618 = vmatmul.mubr.bf16.gmra.mrb[0].mxu0 %v2517
          %v3619 = vpop.f32.mrb[0].mxu0
          %v3620 = vadd.f32 %v2678, %v3619
          %v3621 = vpop.f32.mrb[0].mxu0
          %v3622 = vadd.f32 %v2682, %v3621
          %v3623 = vpop.f32.mrb[0].mxu0
          %v3624 = vadd.f32 %v2678, %v3623
          %v3625 = vpop.f32.mrb[0].mxu0
          %v3626 = vadd.f32 %v2682, %v3625
          %3627 = vmatprep.mubr.bf16.mxu0 %v2520
          %3628 = vmatmul.mubr.bf16.gmra.mrb[0].mxu0 %v2519
          %v3629 = vpop.f32.mrb[0].mxu0
          %v3630 = vadd.f32 %v2678, %v3629
          %v3631 = vpop.f32.mrb[0].mxu0
          %v3632 = vadd.f32 %v2682, %v3631
          %v3633 = vpop.f32.mrb[0].mxu0
          %v3634 = vadd.f32 %v2678, %v3633
          %v3635 = vpop.f32.mrb[0].mxu0
          %v3636 = vadd.f32 %v2682, %v3635
          %3637 = vmatprep.mubr.bf16.mxu0 %v2522
          %3638 = vmatmul.mubr.bf16.gmra.mrb[0].mxu0 %v2521
          %v3639 = vpop.f32.mrb[0].mxu0
          %v3640 = vadd.f32 %v2678, %v3639
          %v3641 = vpop.f32.mrb[0].mxu0
          %v3642 = vadd.f32 %v2682, %v3641
          %v3643 = vpop.f32.mrb[0].mxu0
          %v3644 = vadd.f32 %v2678, %v3643
          %v3645 = vpop.f32.mrb[0].mxu0
          %v3646 = vadd.f32 %v2682, %v3645
          %3647 = vmatprep.mubr.bf16.mxu0 %v2524
          %3648 = vmatmul.mubr.bf16.gmra.mrb[0].mxu0 %v2523
          %v3649 = vpop.f32.mrb[0].mxu0
          %v3650 = vadd.f32 %v2678, %v3649
          %v3651 = vpop.f32.mrb[0].mxu0
          %v3652 = vadd.f32 %v2682, %v3651
          %v3653 = vpop.f32.mrb[0].mxu0
          %v3654 = vadd.f32 %v2678, %v3653
          %v3655 = vpop.f32.mrb[0].mxu0
          %v3656 = vadd.f32 %v2682, %v3655
          %3657 = vmatprep.mubr.bf16.mxu0 %v2526
          %3658 = vmatmul.mubr.bf16.gmra.mrb[0].mxu0 %v2525
          %v3659 = vpop.f32.mrb[0].mxu0
          %v3660 = vadd.f32 %v2678, %v3659
          %v3661 = vpop.f32.mrb[0].mxu0
          %v3662 = vadd.f32 %v2682, %v3661
          %v3663 = vpop.f32.mrb[0].mxu0
          %v3664 = vadd.f32 %v2678, %v3663
          %v3665 = vpop.f32.mrb[0].mxu0
          %v3666 = vadd.f32 %v2682, %v3665
          %3667 = vmatprep.mubr.bf16.mxu0 %v2528
          %3668 = vmatmul.mubr.bf16.gmra.mrb[0].mxu0 %v2527
          %v3669 = vpop.f32.mrb[0].mxu0
          %v3670 = vadd.f32 %v2678, %v3669
          %v3671 = vpop.f32.mrb[0].mxu0
          %v3672 = vadd.f32 %v2682, %v3671
          %v3673 = vpop.f32.mrb[0].mxu0
          %v3674 = vadd.f32 %v2678, %v3673
          %v3675 = vpop.f32.mrb[0].mxu0
          %v3676 = vadd.f32 %v2682, %v3675
          %3677 = vdwg.mxu0
          %3678 = vmatprep.subr.bf16.mxu0 %v3090
          %3679 = vmatpush1.bf16.msra.mxu0 %v3089
          %3680 = vmatprep.subr.bf16.mxu0 %v3098
          %3681 = vmatpush1.bf16.msra.mxu0 %v3097
          %3682 = vmatprep.subr.bf16.mxu0 %v3106
          %3683 = vmatpush1.bf16.msra.mxu0 %v3105
          %3684 = vmatprep.subr.bf16.mxu0 %v3114
          %3685 = vmatpush1.bf16.msra.mxu0 %v3113
          %3686 = vmatprep.subr.bf16.mxu0 %v3122
          %3687 = vmatpush1.bf16.msra.mxu0 %v3121
          %3688 = vmatprep.subr.bf16.mxu0 %v3130
          %3689 = vmatpush1.bf16.msra.mxu0 %v3129
          %3690 = vmatprep.subr.bf16.mxu0 %v3138
          %3691 = vmatpush1.bf16.msra.mxu0 %v3137
          %3692 = vmatprep.subr.bf16.mxu0 %v3146
          %3693 = vmatpush1.bf16.msra.mxu0 %v3145
          %3694 = vmatprep.subr.bf16.mxu0 %v3154
          %3695 = vmatpush1.bf16.msra.mxu0 %v3153
          %3696 = vmatprep.subr.bf16.mxu0 %v3162
          %3697 = vmatpush1.bf16.msra.mxu0 %v3161
          %3698 = vmatprep.subr.bf16.mxu0 %v3170
          %3699 = vmatpush1.bf16.msra.mxu0 %v3169
          %3700 = vmatprep.subr.bf16.mxu0 %v3178
          %3701 = vmatpush1.bf16.msra.mxu0 %v3177
          %3702 = vmatprep.subr.bf16.mxu0 %v3186
          %3703 = vmatpush1.bf16.msra.mxu0 %v3185
          %3704 = vmatprep.subr.bf16.mxu0 %v3194
          %3705 = vmatpush1.bf16.msra.mxu0 %v3193
          %3706 = vmatprep.subr.bf16.mxu0 %v3202
          %3707 = vmatpush1.bf16.msra.mxu0 %v3201
          %3708 = vmatprep.subr.bf16.mxu0 %v3210
          %3709 = vmatpush1.bf16.msra.mxu0 %v3209
          %3710 = vmatprep.mubr.bf16.mxu0 %v2514
          %3711 = vmatmul.mubr.bf16.gmra.mrb[0].mxu0 %v2513
          %v3712 = vpop.f32.mrb[0].mxu0
          %v3713 = vadd.f32 %v2686, %v3712
          %v3714 = vpop.f32.mrb[0].mxu0
          %v3715 = vadd.f32 %v2690, %v3714
          %v3716 = vpop.f32.mrb[0].mxu0
          %v3717 = vadd.f32 %v2686, %v3716
          %v3718 = vpop.f32.mrb[0].mxu0
          %v3719 = vadd.f32 %v2690, %v3718
          %3720 = vmatprep.mubr.bf16.mxu0 %v2516
          %3721 = vmatmul.mubr.bf16.gmra.mrb[0].mxu0 %v2515
          %v3722 = vpop.f32.mrb[0].mxu0
          %v3723 = vadd.f32 %v2686, %v3722
          %v3724 = vpop.f32.mrb[0].mxu0
          %v3725 = vadd.f32 %v2690, %v3724
          %v3726 = vpop.f32.mrb[0].mxu0
          %v3727 = vadd.f32 %v2686, %v3726
          %v3728 = vpop.f32.mrb[0].mxu0
          %v3729 = vadd.f32 %v2690, %v3728
          %3730 = vmatprep.mubr.bf16.mxu0 %v2518
          %3731 = vmatmul.mubr.bf16.gmra.mrb[0].mxu0 %v2517
          %v3732 = vpop.f32.mrb[0].mxu0
          %v3733 = vadd.f32 %v2686, %v3732
          %v3734 = vpop.f32.mrb[0].mxu0
          %v3735 = vadd.f32 %v2690, %v3734
          %v3736 = vpop.f32.mrb[0].mxu0
          %v3737 = vadd.f32 %v2686, %v3736
          %v3738 = vpop.f32.mrb[0].mxu0
          %v3739 = vadd.f32 %v2690, %v3738
          %3740 = vmatprep.mubr.bf16.mxu0 %v2520
          %3741 = vmatmul.mubr.bf16.gmra.mrb[0].mxu0 %v2519
          %v3742 = vpop.f32.mrb[0].mxu0
          %v3743 = vadd.f32 %v2686, %v3742
          %v3744 = vpop.f32.mrb[0].mxu0
          %v3745 = vadd.f32 %v2690, %v3744
          %v3746 = vpop.f32.mrb[0].mxu0
          %v3747 = vadd.f32 %v2686, %v3746
          %v3748 = vpop.f32.mrb[0].mxu0
          %v3749 = vadd.f32 %v2690, %v3748
          %3750 = vmatprep.mubr.bf16.mxu0 %v2522
          %3751 = vmatmul.mubr.bf16.gmra.mrb[0].mxu0 %v2521
          %v3752 = vpop.f32.mrb[0].mxu0
          %v3753 = vadd.f32 %v2686, %v3752
          %v3754 = vpop.f32.mrb[0].mxu0
          %v3755 = vadd.f32 %v2690, %v3754
          %v3756 = vpop.f32.mrb[0].mxu0
          %v3757 = vadd.f32 %v2686, %v3756
          %v3758 = vpop.f32.mrb[0].mxu0
          %v3759 = vadd.f32 %v2690, %v3758
          %3760 = vmatprep.mubr.bf16.mxu0 %v2524
          %3761 = vmatmul.mubr.bf16.gmra.mrb[0].mxu0 %v2523
          %v3762 = vpop.f32.mrb[0].mxu0
          %v3763 = vadd.f32 %v2686, %v3762
          %v3764 = vpop.f32.mrb[0].mxu0
          %v3765 = vadd.f32 %v2690, %v3764
          %v3766 = vpop.f32.mrb[0].mxu0
          %v3767 = vadd.f32 %v2686, %v3766
          %v3768 = vpop.f32.mrb[0].mxu0
          %v3769 = vadd.f32 %v2690, %v3768
          %3770 = vmatprep.mubr.bf16.mxu0 %v2526
          %3771 = vmatmul.mubr.bf16.gmra.mrb[0].mxu0 %v2525
          %v3772 = vpop.f32.mrb[0].mxu0
          %v3773 = vadd.f32 %v2686, %v3772
          %v3774 = vpop.f32.mrb[0].mxu0
          %v3775 = vadd.f32 %v2690, %v3774
          %v3776 = vpop.f32.mrb[0].mxu0
          %v3777 = vadd.f32 %v2686, %v3776
          %v3778 = vpop.f32.mrb[0].mxu0
          %v3779 = vadd.f32 %v2690, %v3778
          %3780 = vmatprep.mubr.bf16.mxu0 %v2528
          %3781 = vmatmul.mubr.bf16.gmra.mrb[0].mxu0 %v2527
          %v3782 = vpop.f32.mrb[0].mxu0
          %v3783 = vadd.f32 %v2686, %v3782
          %v3784 = vpop.f32.mrb[0].mxu0
          %v3785 = vadd.f32 %v2690, %v3784
          %v3786 = vpop.f32.mrb[0].mxu0
          %v3787 = vadd.f32 %v2686, %v3786
          %v3788 = vpop.f32.mrb[0].mxu0
          %v3789 = vadd.f32 %v2690, %v3788
          %3790 = vdwg.mxu0
          %v3791 = vmul.f32 %v3374, 0.5
          %v3792 = vmul.f32 %v3376, 0.5
          %v3793 = vmul.f32 %v3487, 0.5
          %v3794 = vmul.f32 %v3489, 0.5
          %v3795 = vmul.f32 %v3600, 0.5
          %v3796 = vmul.f32 %v3602, 0.5
          %v3797 = vmul.f32 %v3713, 0.5
          %v3798 = vmul.f32 %v3715, 0.5
          %v3799 = vmul.f32 %v3378, 0.5
          %v3800 = vmul.f32 %v3380, 0.5
          %v3801 = vmul.f32 %v3491, 0.5
          %v3802 = vmul.f32 %v3493, 0.5
          %v3803 = vmul.f32 %v3604, 0.5
          %v3804 = vmul.f32 %v3606, 0.5
          %v3805 = vmul.f32 %v3717, 0.5
          %v3806 = vmul.f32 %v3719, 0.5
          %v3807 = vmul.f32 %v3384, 0.5
          %v3808 = vmul.f32 %v3386, 0.5
          %v3809 = vmul.f32 %v3497, 0.5
          %v3810 = vmul.f32 %v3499, 0.5
          %v3811 = vmul.f32 %v3610, 0.5
          %v3812 = vmul.f32 %v3612, 0.5
          %v3813 = vmul.f32 %v3723, 0.5
          %v3814 = vmul.f32 %v3725, 0.5
          %v3815 = vmul.f32 %v3388, 0.5
          %v3816 = vmul.f32 %v3390, 0.5
          %v3817 = vmul.f32 %v3501, 0.5
          %v3818 = vmul.f32 %v3503, 0.5
          %v3819 = vmul.f32 %v3614, 0.5
          %v3820 = vmul.f32 %v3616, 0.5
          %v3821 = vmul.f32 %v3727, 0.5
          %v3822 = vmul.f32 %v3729, 0.5
          %v3823 = vmul.f32 %v3394, 0.5
          %v3824 = vmul.f32 %v3396, 0.5
          %v3825 = vmul.f32 %v3507, 0.5
          %v3826 = vmul.f32 %v3509, 0.5
          %v3827 = vmul.f32 %v3620, 0.5
          %v3828 = vmul.f32 %v3622, 0.5
          %v3829 = vmul.f32 %v3733, 0.5
          %v3830 = vmul.f32 %v3735, 0.5
          %v3831 = vmul.f32 %v3398, 0.5
          %v3832 = vmul.f32 %v3400, 0.5
          %v3833 = vmul.f32 %v3511, 0.5
          %v3834 = vmul.f32 %v3513, 0.5
          %v3835 = vmul.f32 %v3624, 0.5
          %v3836 = vmul.f32 %v3626, 0.5
          %v3837 = vmul.f32 %v3737, 0.5
          %v3838 = vmul.f32 %v3739, 0.5
          %v3839 = vmul.f32 %v3404, 0.5
          %v3840 = vmul.f32 %v3406, 0.5
          %v3841 = vmul.f32 %v3517, 0.5
          %v3842 = vmul.f32 %v3519, 0.5
          %v3843 = vmul.f32 %v3630, 0.5
          %v3844 = vmul.f32 %v3632, 0.5
          %v3845 = vmul.f32 %v3743, 0.5
          %v3846 = vmul.f32 %v3745, 0.5
          %v3847 = vmul.f32 %v3408, 0.5
          %v3848 = vmul.f32 %v3410, 0.5
          %v3849 = vmul.f32 %v3521, 0.5
          %v3850 = vmul.f32 %v3523, 0.5
          %v3851 = vmul.f32 %v3634, 0.5
          %v3852 = vmul.f32 %v3636, 0.5
          %v3853 = vmul.f32 %v3747, 0.5
          %v3854 = vmul.f32 %v3749, 0.5
          %v3855 = vmul.f32 %v3414, 0.5
          %v3856 = vmul.f32 %v3416, 0.5
          %v3857 = vmul.f32 %v3527, 0.5
          %v3858 = vmul.f32 %v3529, 0.5
          %v3859 = vmul.f32 %v3640, 0.5
          %v3860 = vmul.f32 %v3642, 0.5
          %v3861 = vmul.f32 %v3753, 0.5
          %v3862 = vmul.f32 %v3755, 0.5
          %v3863 = vmul.f32 %v3418, 0.5
          %v3864 = vmul.f32 %v3420, 0.5
          %v3865 = vmul.f32 %v3531, 0.5
          %v3866 = vmul.f32 %v3533, 0.5
          %v3867 = vmul.f32 %v3644, 0.5
          %v3868 = vmul.f32 %v3646, 0.5
          %v3869 = vmul.f32 %v3757, 0.5
          %v3870 = vmul.f32 %v3759, 0.5
          %v3871 = vmul.f32 %v3424, 0.5
          %v3872 = vmul.f32 %v3426, 0.5
          %v3873 = vmul.f32 %v3537, 0.5
          %v3874 = vmul.f32 %v3539, 0.5
          %v3875 = vmul.f32 %v3650, 0.5
          %v3876 = vmul.f32 %v3652, 0.5
          %v3877 = vmul.f32 %v3763, 0.5
          %v3878 = vmul.f32 %v3765, 0.5
          %v3879 = vmul.f32 %v3428, 0.5
          %v3880 = vmul.f32 %v3430, 0.5
          %v3881 = vmul.f32 %v3541, 0.5
          %v3882 = vmul.f32 %v3543, 0.5
          %v3883 = vmul.f32 %v3654, 0.5
          %v3884 = vmul.f32 %v3656, 0.5
          %v3885 = vmul.f32 %v3767, 0.5
          %v3886 = vmul.f32 %v3769, 0.5
          %v3887 = vmul.f32 %v3434, 0.5
          %v3888 = vmul.f32 %v3436, 0.5
          %v3889 = vmul.f32 %v3547, 0.5
          %v3890 = vmul.f32 %v3549, 0.5
          %v3891 = vmul.f32 %v3660, 0.5
          %v3892 = vmul.f32 %v3662, 0.5
          %v3893 = vmul.f32 %v3773, 0.5
          %v3894 = vmul.f32 %v3775, 0.5
          %v3895 = vmul.f32 %v3438, 0.5
          %v3896 = vmul.f32 %v3440, 0.5
          %v3897 = vmul.f32 %v3551, 0.5
          %v3898 = vmul.f32 %v3553, 0.5
          %v3899 = vmul.f32 %v3664, 0.5
          %v3900 = vmul.f32 %v3666, 0.5
          %v3901 = vmul.f32 %v3777, 0.5
          %v3902 = vmul.f32 %v3779, 0.5
          %v3903 = vmul.f32 %v3444, 0.5
          %v3904 = vmul.f32 %v3446, 0.5
          %v3905 = vmul.f32 %v3557, 0.5
          %v3906 = vmul.f32 %v3559, 0.5
          %v3907 = vmul.f32 %v3670, 0.5
          %v3908 = vmul.f32 %v3672, 0.5
          %v3909 = vmul.f32 %v3783, 0.5
          %v3910 = vmul.f32 %v3785, 0.5
          %v3911 = vmul.f32 %v3448, 0.5
          %v3912 = vmul.f32 %v3450, 0.5
          %v3913 = vmul.f32 %v3561, 0.5
          %v3914 = vmul.f32 %v3563, 0.5
          %v3915 = vmul.f32 %v3674, 0.5
          %v3916 = vmul.f32 %v3676, 0.5
          %v3917 = vmul.f32 %v3787, 0.5
          %v3918 = vmul.f32 %v3789, 0.5
          %v3919 = vmul.f32 %v3374, 0.044715
          %v3920 = vmul.f32 %v3376, 0.044715
          %v3921 = vmul.f32 %v3487, 0.044715
          %v3922 = vmul.f32 %v3489, 0.044715
          %v3923 = vmul.f32 %v3600, 0.044715
          %v3924 = vmul.f32 %v3602, 0.044715
          %v3925 = vmul.f32 %v3713, 0.044715
          %v3926 = vmul.f32 %v3715, 0.044715
          %v3927 = vmul.f32 %v3378, 0.044715
          %v3928 = vmul.f32 %v3380, 0.044715
          %v3929 = vmul.f32 %v3491, 0.044715
          %v3930 = vmul.f32 %v3493, 0.044715
          %v3931 = vmul.f32 %v3604, 0.044715
          %v3932 = vmul.f32 %v3606, 0.044715
          %v3933 = vmul.f32 %v3717, 0.044715
          %v3934 = vmul.f32 %v3719, 0.044715
          %v3935 = vmul.f32 %v3384, 0.044715
          %v3936 = vmul.f32 %v3386, 0.044715
          %v3937 = vmul.f32 %v3497, 0.044715
          %v3938 = vmul.f32 %v3499, 0.044715
          %v3939 = vmul.f32 %v3610, 0.044715
          %v3940 = vmul.f32 %v3612, 0.044715
          %v3941 = vmul.f32 %v3723, 0.044715
          %v3942 = vmul.f32 %v3725, 0.044715
          %v3943 = vmul.f32 %v3388, 0.044715
          %v3944 = vmul.f32 %v3390, 0.044715
          %v3945 = vmul.f32 %v3501, 0.044715
          %v3946 = vmul.f32 %v3503, 0.044715
          %v3947 = vmul.f32 %v3614, 0.044715
          %v3948 = vmul.f32 %v3616, 0.044715
          %v3949 = vmul.f32 %v3727, 0.044715
          %v3950 = vmul.f32 %v3729, 0.044715
          %v3951 = vmul.f32 %v3394, 0.044715
          %v3952 = vmul.f32 %v3396, 0.044715
          %v3953 = vmul.f32 %v3507, 0.044715
          %v3954 = vmul.f32 %v3509, 0.044715
          %v3955 = vmul.f32 %v3620, 0.044715
          %v3956 = vmul.f32 %v3622, 0.044715
          %v3957 = vmul.f32 %v3733, 0.044715
          %v3958 = vmul.f32 %v3735, 0.044715
          %v3959 = vmul.f32 %v3398, 0.044715
          %v3960 = vmul.f32 %v3400, 0.044715
          %v3961 = vmul.f32 %v3511, 0.044715
          %v3962 = vmul.f32 %v3513, 0.044715
          %v3963 = vmul.f32 %v3624, 0.044715
          %v3964 = vmul.f32 %v3626, 0.044715
          %v3965 = vmul.f32 %v3737, 0.044715
          %v3966 = vmul.f32 %v3739, 0.044715
          %v3967 = vmul.f32 %v3404, 0.044715
          %v3968 = vmul.f32 %v3406, 0.044715
          %v3969 = vmul.f32 %v3517, 0.044715
          %v3970 = vmul.f32 %v3519, 0.044715
          %v3971 = vmul.f32 %v3630, 0.044715
          %v3972 = vmul.f32 %v3632, 0.044715
          %v3973 = vmul.f32 %v3743, 0.044715
          %v3974 = vmul.f32 %v3745, 0.044715
          %v3975 = vmul.f32 %v3408, 0.044715
          %v3976 = vmul.f32 %v3410, 0.044715
          %v3977 = vmul.f32 %v3521, 0.044715
          %v3978 = vmul.f32 %v3523, 0.044715
          %v3979 = vmul.f32 %v3634, 0.044715
          %v3980 = vmul.f32 %v3636, 0.044715
          %v3981 = vmul.f32 %v3747, 0.044715
          %v3982 = vmul.f32 %v3749, 0.044715
          %v3983 = vmul.f32 %v3414, 0.044715
          %v3984 = vmul.f32 %v3416, 0.044715
          %v3985 = vmul.f32 %v3527, 0.044715
          %v3986 = vmul.f32 %v3529, 0.044715
          %v3987 = vmul.f32 %v3640, 0.044715
          %v3988 = vmul.f32 %v3642, 0.044715
          %v3989 = vmul.f32 %v3753, 0.044715
          %v3990 = vmul.f32 %v3755, 0.044715
          %v3991 = vmul.f32 %v3418, 0.044715
          %v3992 = vmul.f32 %v3420, 0.044715
          %v3993 = vmul.f32 %v3531, 0.044715
          %v3994 = vmul.f32 %v3533, 0.044715
          %v3995 = vmul.f32 %v3644, 0.044715
          %v3996 = vmul.f32 %v3646, 0.044715
          %v3997 = vmul.f32 %v3757, 0.044715
          %v3998 = vmul.f32 %v3759, 0.044715
          %v3999 = vmul.f32 %v3424, 0.044715
          %v4000 = vmul.f32 %v3426, 0.044715
          %v4001 = vmul.f32 %v3537, 0.044715
          %v4002 = vmul.f32 %v3539, 0.044715
          %v4003 = vmul.f32 %v3650, 0.044715
          %v4004 = vmul.f32 %v3652, 0.044715
          %v4005 = vmul.f32 %v3763, 0.044715
          %v4006 = vmul.f32 %v3765, 0.044715
          %v4007 = vmul.f32 %v3428, 0.044715
          %v4008 = vmul.f32 %v3430, 0.044715
          %v4009 = vmul.f32 %v3541, 0.044715
          %v4010 = vmul.f32 %v3543, 0.044715
          %v4011 = vmul.f32 %v3654, 0.044715
          %v4012 = vmul.f32 %v3656, 0.044715
          %v4013 = vmul.f32 %v3767, 0.044715
          %v4014 = vmul.f32 %v3769, 0.044715
          %v4015 = vmul.f32 %v3434, 0.044715
          %v4016 = vmul.f32 %v3436, 0.044715
          %v4017 = vmul.f32 %v3547, 0.044715
          %v4018 = vmul.f32 %v3549, 0.044715
          %v4019 = vmul.f32 %v3660, 0.044715
          %v4020 = vmul.f32 %v3662, 0.044715
          %v4021 = vmul.f32 %v3773, 0.044715
          %v4022 = vmul.f32 %v3775, 0.044715
          %v4023 = vmul.f32 %v3438, 0.044715
          %v4024 = vmul.f32 %v3440, 0.044715
          %v4025 = vmul.f32 %v3551, 0.044715
          %v4026 = vmul.f32 %v3553, 0.044715
          %v4027 = vmul.f32 %v3664, 0.044715
          %v4028 = vmul.f32 %v3666, 0.044715
          %v4029 = vmul.f32 %v3777, 0.044715
          %v4030 = vmul.f32 %v3779, 0.044715
          %v4031 = vmul.f32 %v3444, 0.044715
          %v4032 = vmul.f32 %v3446, 0.044715
          %v4033 = vmul.f32 %v3557, 0.044715
          %v4034 = vmul.f32 %v3559, 0.044715
          %v4035 = vmul.f32 %v3670, 0.044715
          %v4036 = vmul.f32 %v3672, 0.044715
          %v4037 = vmul.f32 %v3783, 0.044715
          %v4038 = vmul.f32 %v3785, 0.044715
          %v4039 = vmul.f32 %v3448, 0.044715
          %v4040 = vmul.f32 %v3450, 0.044715
          %v4041 = vmul.f32 %v3561, 0.044715
          %v4042 = vmul.f32 %v3563, 0.044715
          %v4043 = vmul.f32 %v3674, 0.044715
          %v4044 = vmul.f32 %v3676, 0.044715
          %v4045 = vmul.f32 %v3787, 0.044715
          %v4046 = vmul.f32 %v3789, 0.044715
          %v4047 = vmul.f32 %v3919, %v3374
          %v4048 = vmul.f32 %v3920, %v3376
          %v4049 = vmul.f32 %v3921, %v3487
          %v4050 = vmul.f32 %v3922, %v3489
          %v4051 = vmul.f32 %v3923, %v3600
          %v4052 = vmul.f32 %v3924, %v3602
          %v4053 = vmul.f32 %v3925, %v3713
          %v4054 = vmul.f32 %v3926, %v3715
          %v4055 = vmul.f32 %v3927, %v3378
          %v4056 = vmul.f32 %v3928, %v3380
          %v4057 = vmul.f32 %v3929, %v3491
          %v4058 = vmul.f32 %v3930, %v3493
          %v4059 = vmul.f32 %v3931, %v3604
          %v4060 = vmul.f32 %v3932, %v3606
          %v4061 = vmul.f32 %v3933, %v3717
          %v4062 = vmul.f32 %v3934, %v3719
          %v4063 = vmul.f32 %v3935, %v3384
          %v4064 = vmul.f32 %v3936, %v3386
          %v4065 = vmul.f32 %v3937, %v3497
          %v4066 = vmul.f32 %v3938, %v3499
          %v4067 = vmul.f32 %v3939, %v3610
          %v4068 = vmul.f32 %v3940, %v3612
          %v4069 = vmul.f32 %v3941, %v3723
          %v4070 = vmul.f32 %v3942, %v3725
          %v4071 = vmul.f32 %v3943, %v3388
          %v4072 = vmul.f32 %v3944, %v3390
          %v4073 = vmul.f32 %v3945, %v3501
          %v4074 = vmul.f32 %v3946, %v3503
          %v4075 = vmul.f32 %v3947, %v3614
          %v4076 = vmul.f32 %v3948, %v3616
          %v4077 = vmul.f32 %v3949, %v3727
          %v4078 = vmul.f32 %v3950, %v3729
          %v4079 = vmul.f32 %v3951, %v3394
          %v4080 = vmul.f32 %v3952, %v3396
          %v4081 = vmul.f32 %v3953, %v3507
          %v4082 = vmul.f32 %v3954, %v3509
          %v4083 = vmul.f32 %v3955, %v3620
          %v4084 = vmul.f32 %v3956, %v3622
          %v4085 = vmul.f32 %v3957, %v3733
          %v4086 = vmul.f32 %v3958, %v3735
          %v4087 = vmul.f32 %v3959, %v3398
          %v4088 = vmul.f32 %v3960, %v3400
          %v4089 = vmul.f32 %v3961, %v3511
          %v4090 = vmul.f32 %v3962, %v3513
          %v4091 = vmul.f32 %v3963, %v3624
          %v4092 = vmul.f32 %v3964, %v3626
          %v4093 = vmul.f32 %v3965, %v3737
          %v4094 = vmul.f32 %v3966, %v3739
          %v4095 = vmul.f32 %v3967, %v3404
          %v4096 = vmul.f32 %v3968, %v3406
          %v4097 = vmul.f32 %v3969, %v3517
          %v4098 = vmul.f32 %v3970, %v3519
          %v4099 = vmul.f32 %v3971, %v3630
          %v4100 = vmul.f32 %v3972, %v3632
          %v4101 = vmul.f32 %v3973, %v3743
          %v4102 = vmul.f32 %v3974, %v3745
          %v4103 = vmul.f32 %v3975, %v3408
          %v4104 = vmul.f32 %v3976, %v3410
          %v4105 = vmul.f32 %v3977, %v3521
          %v4106 = vmul.f32 %v3978, %v3523
          %v4107 = vmul.f32 %v3979, %v3634
          %v4108 = vmul.f32 %v3980, %v3636
          %v4109 = vmul.f32 %v3981, %v3747
          %v4110 = vmul.f32 %v3982, %v3749
          %v4111 = vmul.f32 %v3983, %v3414
          %v4112 = vmul.f32 %v3984, %v3416
          %v4113 = vmul.f32 %v3985, %v3527
          %v4114 = vmul.f32 %v3986, %v3529
          %v4115 = vmul.f32 %v3987, %v3640
          %v4116 = vmul.f32 %v3988, %v3642
          %v4117 = vmul.f32 %v3989, %v3753
          %v4118 = vmul.f32 %v3990, %v3755
          %v4119 = vmul.f32 %v3991, %v3418
          %v4120 = vmul.f32 %v3992, %v3420
          %v4121 = vmul.f32 %v3993, %v3531
          %v4122 = vmul.f32 %v3994, %v3533
          %v4123 = vmul.f32 %v3995, %v3644
          %v4124 = vmul.f32 %v3996, %v3646
          %v4125 = vmul.f32 %v3997, %v3757
          %v4126 = vmul.f32 %v3998, %v3759
          %v4127 = vmul.f32 %v3999, %v3424
          %v4128 = vmul.f32 %v4000, %v3426
          %v4129 = vmul.f32 %v4001, %v3537
          %v4130 = vmul.f32 %v4002, %v3539
          %v4131 = vmul.f32 %v4003, %v3650
          %v4132 = vmul.f32 %v4004, %v3652
          %v4133 = vmul.f32 %v4005, %v3763
          %v4134 = vmul.f32 %v4006, %v3765
          %v4135 = vmul.f32 %v4007, %v3428
          %v4136 = vmul.f32 %v4008, %v3430
          %v4137 = vmul.f32 %v4009, %v3541
          %v4138 = vmul.f32 %v4010, %v3543
          %v4139 = vmul.f32 %v4011, %v3654
          %v4140 = vmul.f32 %v4012, %v3656
          %v4141 = vmul.f32 %v4013, %v3767
          %v4142 = vmul.f32 %v4014, %v3769
          %v4143 = vmul.f32 %v4015, %v3434
          %v4144 = vmul.f32 %v4016, %v3436
          %v4145 = vmul.f32 %v4017, %v3547
          %v4146 = vmul.f32 %v4018, %v3549
          %v4147 = vmul.f32 %v4019, %v3660
          %v4148 = vmul.f32 %v4020, %v3662
          %v4149 = vmul.f32 %v4021, %v3773
          %v4150 = vmul.f32 %v4022, %v3775
          %v4151 = vmul.f32 %v4023, %v3438
          %v4152 = vmul.f32 %v4024, %v3440
          %v4153 = vmul.f32 %v4025, %v3551
          %v4154 = vmul.f32 %v4026, %v3553
          %v4155 = vmul.f32 %v4027, %v3664
          %v4156 = vmul.f32 %v4028, %v3666
          %v4157 = vmul.f32 %v4029, %v3777
          %v4158 = vmul.f32 %v4030, %v3779
          %v4159 = vmul.f32 %v4031, %v3444
          %v4160 = vmul.f32 %v4032, %v3446
          %v4161 = vmul.f32 %v4033, %v3557
          %v4162 = vmul.f32 %v4034, %v3559
          %v4163 = vmul.f32 %v4035, %v3670
          %v4164 = vmul.f32 %v4036, %v3672
          %v4165 = vmul.f32 %v4037, %v3783
          %v4166 = vmul.f32 %v4038, %v3785
          %v4167 = vmul.f32 %v4039, %v3448
          %v4168 = vmul.f32 %v4040, %v3450
          %v4169 = vmul.f32 %v4041, %v3561
          %v4170 = vmul.f32 %v4042, %v3563
          %v4171 = vmul.f32 %v4043, %v3674
          %v4172 = vmul.f32 %v4044, %v3676
          %v4173 = vmul.f32 %v4045, %v3787
          %v4174 = vmul.f32 %v4046, %v3789
          %v4175 = vmul.f32 %v4047, %v3374
          %v4176 = vmul.f32 %v4048, %v3376
          %v4177 = vmul.f32 %v4049, %v3487
          %v4178 = vmul.f32 %v4050, %v3489
          %v4179 = vmul.f32 %v4051, %v3600
          %v4180 = vmul.f32 %v4052, %v3602
          %v4181 = vmul.f32 %v4053, %v3713
          %v4182 = vmul.f32 %v4054, %v3715
          %v4183 = vmul.f32 %v4055, %v3378
          %v4184 = vmul.f32 %v4056, %v3380
          %v4185 = vmul.f32 %v4057, %v3491
          %v4186 = vmul.f32 %v4058, %v3493
          %v4187 = vmul.f32 %v4059, %v3604
          %v4188 = vmul.f32 %v4060, %v3606
          %v4189 = vmul.f32 %v4061, %v3717
          %v4190 = vmul.f32 %v4062, %v3719
          %v4191 = vmul.f32 %v4063, %v3384
          %v4192 = vmul.f32 %v4064, %v3386
          %v4193 = vmul.f32 %v4065, %v3497
          %v4194 = vmul.f32 %v4066, %v3499
          %v4195 = vmul.f32 %v4067, %v3610
          %v4196 = vmul.f32 %v4068, %v3612
          %v4197 = vmul.f32 %v4069, %v3723
          %v4198 = vmul.f32 %v4070, %v3725
          %v4199 = vmul.f32 %v4071, %v3388
          %v4200 = vmul.f32 %v4072, %v3390
          %v4201 = vmul.f32 %v4073, %v3501
          %v4202 = vmul.f32 %v4074, %v3503
          %v4203 = vmul.f32 %v4075, %v3614
          %v4204 = vmul.f32 %v4076, %v3616
          %v4205 = vmul.f32 %v4077, %v3727
          %v4206 = vmul.f32 %v4078, %v3729
          %v4207 = vmul.f32 %v4079, %v3394
          %v4208 = vmul.f32 %v4080, %v3396
          %v4209 = vmul.f32 %v4081, %v3507
          %v4210 = vmul.f32 %v4082, %v3509
          %v4211 = vmul.f32 %v4083, %v3620
          %v4212 = vmul.f32 %v4084, %v3622
          %v4213 = vmul.f32 %v4085, %v3733
          %v4214 = vmul.f32 %v4086, %v3735
          %v4215 = vmul.f32 %v4087, %v3398
          %v4216 = vmul.f32 %v4088, %v3400
          %v4217 = vmul.f32 %v4089, %v3511
          %v4218 = vmul.f32 %v4090, %v3513
          %v4219 = vmul.f32 %v4091, %v3624
          %v4220 = vmul.f32 %v4092, %v3626
          %v4221 = vmul.f32 %v4093, %v3737
          %v4222 = vmul.f32 %v4094, %v3739
          %v4223 = vmul.f32 %v4095, %v3404
          %v4224 = vmul.f32 %v4096, %v3406
          %v4225 = vmul.f32 %v4097, %v3517
          %v4226 = vmul.f32 %v4098, %v3519
          %v4227 = vmul.f32 %v4099, %v3630
          %v4228 = vmul.f32 %v4100, %v3632
          %v4229 = vmul.f32 %v4101, %v3743
          %v4230 = vmul.f32 %v4102, %v3745
          %v4231 = vmul.f32 %v4103, %v3408
          %v4232 = vmul.f32 %v4104, %v3410
          %v4233 = vmul.f32 %v4105, %v3521
          %v4234 = vmul.f32 %v4106, %v3523
          %v4235 = vmul.f32 %v4107, %v3634
          %v4236 = vmul.f32 %v4108, %v3636
          %v4237 = vmul.f32 %v4109, %v3747
          %v4238 = vmul.f32 %v4110, %v3749
          %v4239 = vmul.f32 %v4111, %v3414
          %v4240 = vmul.f32 %v4112, %v3416
          %v4241 = vmul.f32 %v4113, %v3527
          %v4242 = vmul.f32 %v4114, %v3529
          %v4243 = vmul.f32 %v4115, %v3640
          %v4244 = vmul.f32 %v4116, %v3642
          %v4245 = vmul.f32 %v4117, %v3753
          %v4246 = vmul.f32 %v4118, %v3755
          %v4247 = vmul.f32 %v4119, %v3418
          %v4248 = vmul.f32 %v4120, %v3420
          %v4249 = vmul.f32 %v4121, %v3531
          %v4250 = vmul.f32 %v4122, %v3533
          %v4251 = vmul.f32 %v4123, %v3644
          %v4252 = vmul.f32 %v4124, %v3646
          %v4253 = vmul.f32 %v4125, %v3757
          %v4254 = vmul.f32 %v4126, %v3759
          %v4255 = vmul.f32 %v4127, %v3424
          %v4256 = vmul.f32 %v4128, %v3426
          %v4257 = vmul.f32 %v4129, %v3537
          %v4258 = vmul.f32 %v4130, %v3539
          %v4259 = vmul.f32 %v4131, %v3650
          %v4260 = vmul.f32 %v4132, %v3652
          %v4261 = vmul.f32 %v4133, %v3763
          %v4262 = vmul.f32 %v4134, %v3765
          %v4263 = vmul.f32 %v4135, %v3428
          %v4264 = vmul.f32 %v4136, %v3430
          %v4265 = vmul.f32 %v4137, %v3541
          %v4266 = vmul.f32 %v4138, %v3543
          %v4267 = vmul.f32 %v4139, %v3654
          %v4268 = vmul.f32 %v4140, %v3656
          %v4269 = vmul.f32 %v4141, %v3767
          %v4270 = vmul.f32 %v4142, %v3769
          %v4271 = vmul.f32 %v4143, %v3434
          %v4272 = vmul.f32 %v4144, %v3436
          %v4273 = vmul.f32 %v4145, %v3547
          %v4274 = vmul.f32 %v4146, %v3549
          %v4275 = vmul.f32 %v4147, %v3660
          %v4276 = vmul.f32 %v4148, %v3662
          %v4277 = vmul.f32 %v4149, %v3773
          %v4278 = vmul.f32 %v4150, %v3775
          %v4279 = vmul.f32 %v4151, %v3438
          %v4280 = vmul.f32 %v4152, %v3440
          %v4281 = vmul.f32 %v4153, %v3551
          %v4282 = vmul.f32 %v4154, %v3553
          %v4283 = vmul.f32 %v4155, %v3664
          %v4284 = vmul.f32 %v4156, %v3666
          %v4285 = vmul.f32 %v4157, %v3777
          %v4286 = vmul.f32 %v4158, %v3779
          %v4287 = vmul.f32 %v4159, %v3444
          %v4288 = vmul.f32 %v4160, %v3446
          %v4289 = vmul.f32 %v4161, %v3557
          %v4290 = vmul.f32 %v4162, %v3559
          %v4291 = vmul.f32 %v4163, %v3670
          %v4292 = vmul.f32 %v4164, %v3672
          %v4293 = vmul.f32 %v4165, %v3783
          %v4294 = vmul.f32 %v4166, %v3785
          %v4295 = vmul.f32 %v4167, %v3448
          %v4296 = vmul.f32 %v4168, %v3450
          %v4297 = vmul.f32 %v4169, %v3561
          %v4298 = vmul.f32 %v4170, %v3563
          %v4299 = vmul.f32 %v4171, %v3674
          %v4300 = vmul.f32 %v4172, %v3676
          %v4301 = vmul.f32 %v4173, %v3787
          %v4302 = vmul.f32 %v4174, %v3789
          %v4303 = vadd.f32 %v3374, %v4175
          %v4304 = vadd.f32 %v3376, %v4176
          %v4305 = vadd.f32 %v3487, %v4177
          %v4306 = vadd.f32 %v3489, %v4178
          %v4307 = vadd.f32 %v3600, %v4179
          %v4308 = vadd.f32 %v3602, %v4180
          %v4309 = vadd.f32 %v3713, %v4181
          %v4310 = vadd.f32 %v3715, %v4182
          %v4311 = vadd.f32 %v3378, %v4183
          %v4312 = vadd.f32 %v3380, %v4184
          %v4313 = vadd.f32 %v3491, %v4185
          %v4314 = vadd.f32 %v3493, %v4186
          %v4315 = vadd.f32 %v3604, %v4187
          %v4316 = vadd.f32 %v3606, %v4188
          %v4317 = vadd.f32 %v3717, %v4189
          %v4318 = vadd.f32 %v3719, %v4190
          %v4319 = vadd.f32 %v3384, %v4191
          %v4320 = vadd.f32 %v3386, %v4192
          %v4321 = vadd.f32 %v3497, %v4193
          %v4322 = vadd.f32 %v3499, %v4194
          %v4323 = vadd.f32 %v3610, %v4195
          %v4324 = vadd.f32 %v3612, %v4196
          %v4325 = vadd.f32 %v3723, %v4197
          %v4326 = vadd.f32 %v3725, %v4198
          %v4327 = vadd.f32 %v3388, %v4199
          %v4328 = vadd.f32 %v3390, %v4200
          %v4329 = vadd.f32 %v3501, %v4201
          %v4330 = vadd.f32 %v3503, %v4202
          %v4331 = vadd.f32 %v3614, %v4203
          %v4332 = vadd.f32 %v3616, %v4204
          %v4333 = vadd.f32 %v3727, %v4205
          %v4334 = vadd.f32 %v3729, %v4206
          %v4335 = vadd.f32 %v3394, %v4207
          %v4336 = vadd.f32 %v3396, %v4208
          %v4337 = vadd.f32 %v3507, %v4209
          %v4338 = vadd.f32 %v3509, %v4210
          %v4339 = vadd.f32 %v3620, %v4211
          %v4340 = vadd.f32 %v3622, %v4212
          %v4341 = vadd.f32 %v3733, %v4213
          %v4342 = vadd.f32 %v3735, %v4214
          %v4343 = vadd.f32 %v3398, %v4215
          %v4344 = vadd.f32 %v3400, %v4216
          %v4345 = vadd.f32 %v3511, %v4217
          %v4346 = vadd.f32 %v3513, %v4218
          %v4347 = vadd.f32 %v3624, %v4219
          %v4348 = vadd.f32 %v3626, %v4220
          %v4349 = vadd.f32 %v3737, %v4221
          %v4350 = vadd.f32 %v3739, %v4222
          %v4351 = vadd.f32 %v3404, %v4223
          %v4352 = vadd.f32 %v3406, %v4224
          %v4353 = vadd.f32 %v3517, %v4225
          %v4354 = vadd.f32 %v3519, %v4226
          %v4355 = vadd.f32 %v3630, %v4227
          %v4356 = vadd.f32 %v3632, %v4228
          %v4357 = vadd.f32 %v3743, %v4229
          %v4358 = vadd.f32 %v3745, %v4230
          %v4359 = vadd.f32 %v3408, %v4231
          %v4360 = vadd.f32 %v3410, %v4232
          %v4361 = vadd.f32 %v3521, %v4233
          %v4362 = vadd.f32 %v3523, %v4234
          %v4363 = vadd.f32 %v3634, %v4235
          %v4364 = vadd.f32 %v3636, %v4236
          %v4365 = vadd.f32 %v3747, %v4237
          %v4366 = vadd.f32 %v3749, %v4238
          %v4367 = vadd.f32 %v3414, %v4239
          %v4368 = vadd.f32 %v3416, %v4240
          %v4369 = vadd.f32 %v3527, %v4241
          %v4370 = vadd.f32 %v3529, %v4242
          %v4371 = vadd.f32 %v3640, %v4243
          %v4372 = vadd.f32 %v3642, %v4244
          %v4373 = vadd.f32 %v3753, %v4245
          %v4374 = vadd.f32 %v3755, %v4246
          %v4375 = vadd.f32 %v3418, %v4247
          %v4376 = vadd.f32 %v3420, %v4248
          %v4377 = vadd.f32 %v3531, %v4249
          %v4378 = vadd.f32 %v3533, %v4250
          %v4379 = vadd.f32 %v3644, %v4251
          %v4380 = vadd.f32 %v3646, %v4252
          %v4381 = vadd.f32 %v3757, %v4253
          %v4382 = vadd.f32 %v3759, %v4254
          %v4383 = vadd.f32 %v3424, %v4255
          %v4384 = vadd.f32 %v3426, %v4256
          %v4385 = vadd.f32 %v3537, %v4257
          %v4386 = vadd.f32 %v3539, %v4258
          %v4387 = vadd.f32 %v3650, %v4259
          %v4388 = vadd.f32 %v3652, %v4260
          %v4389 = vadd.f32 %v3763, %v4261
          %v4390 = vadd.f32 %v3765, %v4262
          %v4391 = vadd.f32 %v3428, %v4263
          %v4392 = vadd.f32 %v3430, %v4264
          %v4393 = vadd.f32 %v3541, %v4265
          %v4394 = vadd.f32 %v3543, %v4266
          %v4395 = vadd.f32 %v3654, %v4267
          %v4396 = vadd.f32 %v3656, %v4268
          %v4397 = vadd.f32 %v3767, %v4269
          %v4398 = vadd.f32 %v3769, %v4270
          %v4399 = vadd.f32 %v3434, %v4271
          %v4400 = vadd.f32 %v3436, %v4272
          %v4401 = vadd.f32 %v3547, %v4273
          %v4402 = vadd.f32 %v3549, %v4274
          %v4403 = vadd.f32 %v3660, %v4275
          %v4404 = vadd.f32 %v3662, %v4276
          %v4405 = vadd.f32 %v3773, %v4277
          %v4406 = vadd.f32 %v3775, %v4278
          %v4407 = vadd.f32 %v3438, %v4279
          %v4408 = vadd.f32 %v3440, %v4280
          %v4409 = vadd.f32 %v3551, %v4281
          %v4410 = vadd.f32 %v3553, %v4282
          %v4411 = vadd.f32 %v3664, %v4283
          %v4412 = vadd.f32 %v3666, %v4284
          %v4413 = vadd.f32 %v3777, %v4285
          %v4414 = vadd.f32 %v3779, %v4286
          %v4415 = vadd.f32 %v3444, %v4287
          %v4416 = vadd.f32 %v3446, %v4288
          %v4417 = vadd.f32 %v3557, %v4289
          %v4418 = vadd.f32 %v3559, %v4290
          %v4419 = vadd.f32 %v3670, %v4291
          %v4420 = vadd.f32 %v3672, %v4292
          %v4421 = vadd.f32 %v3783, %v4293
          %v4422 = vadd.f32 %v3785, %v4294
          %v4423 = vadd.f32 %v3448, %v4295
          %v4424 = vadd.f32 %v3450, %v4296
          %v4425 = vadd.f32 %v3561, %v4297
          %v4426 = vadd.f32 %v3563, %v4298
          %v4427 = vadd.f32 %v3674, %v4299
          %v4428 = vadd.f32 %v3676, %v4300
          %v4429 = vadd.f32 %v3787, %v4301
          %v4430 = vadd.f32 %v3789, %v4302
          %v4431 = vmul.f32 %v4303, 0.7978846
          %v4432 = vmul.f32 %v4304, 0.7978846
          %v4433 = vmul.f32 %v4305, 0.7978846
          %v4434 = vmul.f32 %v4306, 0.7978846
          %v4435 = vmul.f32 %v4307, 0.7978846
          %v4436 = vmul.f32 %v4308, 0.7978846
          %v4437 = vmul.f32 %v4309, 0.7978846
          %v4438 = vmul.f32 %v4310, 0.7978846
          %v4439 = vmul.f32 %v4311, 0.7978846
          %v4440 = vmul.f32 %v4312, 0.7978846
          %v4441 = vmul.f32 %v4313, 0.7978846
          %v4442 = vmul.f32 %v4314, 0.7978846
          %v4443 = vmul.f32 %v4315, 0.7978846
          %v4444 = vmul.f32 %v4316, 0.7978846
          %v4445 = vmul.f32 %v4317, 0.7978846
          %v4446 = vmul.f32 %v4318, 0.7978846
          %v4447 = vmul.f32 %v4319, 0.7978846
          %v4448 = vmul.f32 %v4320, 0.7978846
          %v4449 = vmul.f32 %v4321, 0.7978846
          %v4450 = vmul.f32 %v4322, 0.7978846
          %v4451 = vmul.f32 %v4323, 0.7978846
          %v4452 = vmul.f32 %v4324, 0.7978846
          %v4453 = vmul.f32 %v4325, 0.7978846
          %v4454 = vmul.f32 %v4326, 0.7978846
          %v4455 = vmul.f32 %v4327, 0.7978846
          %v4456 = vmul.f32 %v4328, 0.7978846
          %v4457 = vmul.f32 %v4329, 0.7978846
          %v4458 = vmul.f32 %v4330, 0.7978846
          %v4459 = vmul.f32 %v4331, 0.7978846
          %v4460 = vmul.f32 %v4332, 0.7978846
          %v4461 = vmul.f32 %v4333, 0.7978846
          %v4462 = vmul.f32 %v4334, 0.7978846
          %v4463 = vmul.f32 %v4335, 0.7978846
          %v4464 = vmul.f32 %v4336, 0.7978846
          %v4465 = vmul.f32 %v4337, 0.7978846
          %v4466 = vmul.f32 %v4338, 0.7978846
          %v4467 = vmul.f32 %v4339, 0.7978846
          %v4468 = vmul.f32 %v4340, 0.7978846
          %v4469 = vmul.f32 %v4341, 0.7978846
          %v4470 = vmul.f32 %v4342, 0.7978846
          %v4471 = vmul.f32 %v4343, 0.7978846
          %v4472 = vmul.f32 %v4344, 0.7978846
          %v4473 = vmul.f32 %v4345, 0.7978846
          %v4474 = vmul.f32 %v4346, 0.7978846
          %v4475 = vmul.f32 %v4347, 0.7978846
          %v4476 = vmul.f32 %v4348, 0.7978846
          %v4477 = vmul.f32 %v4349, 0.7978846
          %v4478 = vmul.f32 %v4350, 0.7978846
          %v4479 = vmul.f32 %v4351, 0.7978846
          %v4480 = vmul.f32 %v4352, 0.7978846
          %v4481 = vmul.f32 %v4353, 0.7978846
          %v4482 = vmul.f32 %v4354, 0.7978846
          %v4483 = vmul.f32 %v4355, 0.7978846
          %v4484 = vmul.f32 %v4356, 0.7978846
          %v4485 = vmul.f32 %v4357, 0.7978846
          %v4486 = vmul.f32 %v4358, 0.7978846
          %v4487 = vmul.f32 %v4359, 0.7978846
          %v4488 = vmul.f32 %v4360, 0.7978846
          %v4489 = vmul.f32 %v4361, 0.7978846
          %v4490 = vmul.f32 %v4362, 0.7978846
          %v4491 = vmul.f32 %v4363, 0.7978846
          %v4492 = vmul.f32 %v4364, 0.7978846
          %v4493 = vmul.f32 %v4365, 0.7978846
          %v4494 = vmul.f32 %v4366, 0.7978846
          %v4495 = vmul.f32 %v4367, 0.7978846
          %v4496 = vmul.f32 %v4368, 0.7978846
          %v4497 = vmul.f32 %v4369, 0.7978846
          %v4498 = vmul.f32 %v4370, 0.7978846
          %v4499 = vmul.f32 %v4371, 0.7978846
          %v4500 = vmul.f32 %v4372, 0.7978846
          %v4501 = vmul.f32 %v4373, 0.7978846
          %v4502 = vmul.f32 %v4374, 0.7978846
          %v4503 = vmul.f32 %v4375, 0.7978846
          %v4504 = vmul.f32 %v4376, 0.7978846
          %v4505 = vmul.f32 %v4377, 0.7978846
          %v4506 = vmul.f32 %v4378, 0.7978846
          %v4507 = vmul.f32 %v4379, 0.7978846
          %v4508 = vmul.f32 %v4380, 0.7978846
          %v4509 = vmul.f32 %v4381, 0.7978846
          %v4510 = vmul.f32 %v4382, 0.7978846
          %v4511 = vmul.f32 %v4383, 0.7978846
          %v4512 = vmul.f32 %v4384, 0.7978846
          %v4513 = vmul.f32 %v4385, 0.7978846
          %v4514 = vmul.f32 %v4386, 0.7978846
          %v4515 = vmul.f32 %v4387, 0.7978846
          %v4516 = vmul.f32 %v4388, 0.7978846
          %v4517 = vmul.f32 %v4389, 0.7978846
          %v4518 = vmul.f32 %v4390, 0.7978846
          %v4519 = vmul.f32 %v4391, 0.7978846
          %v4520 = vmul.f32 %v4392, 0.7978846
          %v4521 = vmul.f32 %v4393, 0.7978846
          %v4522 = vmul.f32 %v4394, 0.7978846
          %v4523 = vmul.f32 %v4395, 0.7978846
          %v4524 = vmul.f32 %v4396, 0.7978846
          %v4525 = vmul.f32 %v4397, 0.7978846
          %v4526 = vmul.f32 %v4398, 0.7978846
          %v4527 = vmul.f32 %v4399, 0.7978846
          %v4528 = vmul.f32 %v4400, 0.7978846
          %v4529 = vmul.f32 %v4401, 0.7978846
          %v4530 = vmul.f32 %v4402, 0.7978846
          %v4531 = vmul.f32 %v4403, 0.7978846
          %v4532 = vmul.f32 %v4404, 0.7978846
          %v4533 = vmul.f32 %v4405, 0.7978846
          %v4534 = vmul.f32 %v4406, 0.7978846
          %v4535 = vmul.f32 %v4407, 0.7978846
          %v4536 = vmul.f32 %v4408, 0.7978846
          %v4537 = vmul.f32 %v4409, 0.7978846
          %v4538 = vmul.f32 %v4410, 0.7978846
          %v4539 = vmul.f32 %v4411, 0.7978846
          %v4540 = vmul.f32 %v4412, 0.7978846
          %v4541 = vmul.f32 %v4413, 0.7978846
          %v4542 = vmul.f32 %v4414, 0.7978846
          %v4543 = vmul.f32 %v4415, 0.7978846
          %v4544 = vmul.f32 %v4416, 0.7978846
          %v4545 = vmul.f32 %v4417, 0.7978846
          %v4546 = vmul.f32 %v4418, 0.7978846
          %v4547 = vmul.f32 %v4419, 0.7978846
          %v4548 = vmul.f32 %v4420, 0.7978846
          %v4549 = vmul.f32 %v4421, 0.7978846
          %v4550 = vmul.f32 %v4422, 0.7978846
          %v4551 = vmul.f32 %v4423, 0.7978846
          %v4552 = vmul.f32 %v4424, 0.7978846
          %v4553 = vmul.f32 %v4425, 0.7978846
          %v4554 = vmul.f32 %v4426, 0.7978846
          %v4555 = vmul.f32 %v4427, 0.7978846
          %v4556 = vmul.f32 %v4428, 0.7978846
          %v4557 = vmul.f32 %v4429, 0.7978846
          %v4558 = vmul.f32 %v4430, 0.7978846
          %v4559 = vtanh.pop %v4431
          %v4560 = vtanh.pop %v4432
          %v4561 = vtanh.pop %v4433
          %v4562 = vtanh.pop %v4434
          %v4563 = vtanh.pop %v4435
          %v4564 = vtanh.pop %v4436
          %v4565 = vtanh.pop %v4437
          %v4566 = vtanh.pop %v4438
          %v4567 = vtanh.pop %v4439
          %v4568 = vtanh.pop %v4440
          %v4569 = vtanh.pop %v4441
          %v4570 = vtanh.pop %v4442
          %v4571 = vtanh.pop %v4443
          %v4572 = vtanh.pop %v4444
          %v4573 = vtanh.pop %v4445
          %v4574 = vtanh.pop %v4446
          %v4575 = vtanh.pop %v4447
          %v4576 = vtanh.pop %v4448
          %v4577 = vtanh.pop %v4449
          %v4578 = vtanh.pop %v4450
          %v4579 = vtanh.pop %v4451
          %v4580 = vtanh.pop %v4452
          %v4581 = vtanh.pop %v4453
          %v4582 = vtanh.pop %v4454
          %v4583 = vtanh.pop %v4455
          %v4584 = vtanh.pop %v4456
          %v4585 = vtanh.pop %v4457
          %v4586 = vtanh.pop %v4458
          %v4587 = vtanh.pop %v4459
          %v4588 = vtanh.pop %v4460
          %v4589 = vtanh.pop %v4461
          %v4590 = vtanh.pop %v4462
          %v4591 = vtanh.pop %v4463
          %v4592 = vtanh.pop %v4464
          %v4593 = vtanh.pop %v4465
          %v4594 = vtanh.pop %v4466
          %v4595 = vtanh.pop %v4467
          %v4596 = vtanh.pop %v4468
          %v4597 = vtanh.pop %v4469
          %v4598 = vtanh.pop %v4470
          %v4599 = vtanh.pop %v4471
          %v4600 = vtanh.pop %v4472
          %v4601 = vtanh.pop %v4473
          %v4602 = vtanh.pop %v4474
          %v4603 = vtanh.pop %v4475
          %v4604 = vtanh.pop %v4476
          %v4605 = vtanh.pop %v4477
          %v4606 = vtanh.pop %v4478
          %v4607 = vtanh.pop %v4479
          %v4608 = vtanh.pop %v4480
          %v4609 = vtanh.pop %v4481
          %v4610 = vtanh.pop %v4482
          %v4611 = vtanh.pop %v4483
          %v4612 = vtanh.pop %v4484
          %v4613 = vtanh.pop %v4485
          %v4614 = vtanh.pop %v4486
          %v4615 = vtanh.pop %v4487
          %v4616 = vtanh.pop %v4488
          %v4617 = vtanh.pop %v4489
          %v4618 = vtanh.pop %v4490
          %v4619 = vtanh.pop %v4491
          %v4620 = vtanh.pop %v4492
          %v4621 = vtanh.pop %v4493
          %v4622 = vtanh.pop %v4494
          %v4623 = vtanh.pop %v4495
          %v4624 = vtanh.pop %v4496
          %v4625 = vtanh.pop %v4497
          %v4626 = vtanh.pop %v4498
          %v4627 = vtanh.pop %v4499
          %v4628 = vtanh.pop %v4500
          %v4629 = vtanh.pop %v4501
          %v4630 = vtanh.pop %v4502
          %v4631 = vtanh.pop %v4503
          %v4632 = vtanh.pop %v4504
          %v4633 = vtanh.pop %v4505
          %v4634 = vtanh.pop %v4506
          %v4635 = vtanh.pop %v4507
          %v4636 = vtanh.pop %v4508
          %v4637 = vtanh.pop %v4509
          %v4638 = vtanh.pop %v4510
          %v4639 = vtanh.pop %v4511
          %v4640 = vtanh.pop %v4512
          %v4641 = vtanh.pop %v4513
          %v4642 = vtanh.pop %v4514
          %v4643 = vtanh.pop %v4515
          %v4644 = vtanh.pop %v4516
          %v4645 = vtanh.pop %v4517
          %v4646 = vtanh.pop %v4518
          %v4647 = vtanh.pop %v4519
          %v4648 = vtanh.pop %v4520
          %v4649 = vtanh.pop %v4521
          %v4650 = vtanh.pop %v4522
          %v4651 = vtanh.pop %v4523
          %v4652 = vtanh.pop %v4524
          %v4653 = vtanh.pop %v4525
          %v4654 = vtanh.pop %v4526
          %v4655 = vtanh.pop %v4527
          %v4656 = vtanh.pop %v4528
          %v4657 = vtanh.pop %v4529
          %v4658 = vtanh.pop %v4530
          %v4659 = vtanh.pop %v4531
          %v4660 = vtanh.pop %v4532
          %v4661 = vtanh.pop %v4533
          %v4662 = vtanh.pop %v4534
          %v4663 = vtanh.pop %v4535
          %v4664 = vtanh.pop %v4536
          %v4665 = vtanh.pop %v4537
          %v4666 = vtanh.pop %v4538
          %v4667 = vtanh.pop %v4539
          %v4668 = vtanh.pop %v4540
          %v4669 = vtanh.pop %v4541
          %v4670 = vtanh.pop %v4542
          %v4671 = vtanh.pop %v4543
          %v4672 = vtanh.pop %v4544
          %v4673 = vtanh.pop %v4545
          %v4674 = vtanh.pop %v4546
          %v4675 = vtanh.pop %v4547
          %v4676 = vtanh.pop %v4548
          %v4677 = vtanh.pop %v4549
          %v4678 = vtanh.pop %v4550
          %v4679 = vtanh.pop %v4551
          %v4680 = vtanh.pop %v4552
          %v4681 = vtanh.pop %v4553
          %v4682 = vtanh.pop %v4554
          %v4683 = vtanh.pop %v4555
          %v4684 = vtanh.pop %v4556
          %v4685 = vtanh.pop %v4557
          %v4686 = vtanh.pop %v4558
          %v4687 = vadd.f32 %v4559, 1.0
          %v4688 = vadd.f32 %v4560, 1.0
          %v4689 = vadd.f32 %v4561, 1.0
          %v4690 = vadd.f32 %v4562, 1.0
          %v4691 = vadd.f32 %v4563, 1.0
          %v4692 = vadd.f32 %v4564, 1.0
          %v4693 = vadd.f32 %v4565, 1.0
          %v4694 = vadd.f32 %v4566, 1.0
          %v4695 = vadd.f32 %v4567, 1.0
          %v4696 = vadd.f32 %v4568, 1.0
          %v4697 = vadd.f32 %v4569, 1.0
          %v4698 = vadd.f32 %v4570, 1.0
          %v4699 = vadd.f32 %v4571, 1.0
          %v4700 = vadd.f32 %v4572, 1.0
          %v4701 = vadd.f32 %v4573, 1.0
          %v4702 = vadd.f32 %v4574, 1.0
          %v4703 = vadd.f32 %v4575, 1.0
          %v4704 = vadd.f32 %v4576, 1.0
          %v4705 = vadd.f32 %v4577, 1.0
          %v4706 = vadd.f32 %v4578, 1.0
          %v4707 = vadd.f32 %v4579, 1.0
          %v4708 = vadd.f32 %v4580, 1.0
          %v4709 = vadd.f32 %v4581, 1.0
          %v4710 = vadd.f32 %v4582, 1.0
          %v4711 = vadd.f32 %v4583, 1.0
          %v4712 = vadd.f32 %v4584, 1.0
          %v4713 = vadd.f32 %v4585, 1.0
          %v4714 = vadd.f32 %v4586, 1.0
          %v4715 = vadd.f32 %v4587, 1.0
          %v4716 = vadd.f32 %v4588, 1.0
          %v4717 = vadd.f32 %v4589, 1.0
          %v4718 = vadd.f32 %v4590, 1.0
          %v4719 = vadd.f32 %v4591, 1.0
          %v4720 = vadd.f32 %v4592, 1.0
          %v4721 = vadd.f32 %v4593, 1.0
          %v4722 = vadd.f32 %v4594, 1.0
          %v4723 = vadd.f32 %v4595, 1.0
          %v4724 = vadd.f32 %v4596, 1.0
          %v4725 = vadd.f32 %v4597, 1.0
          %v4726 = vadd.f32 %v4598, 1.0
          %v4727 = vadd.f32 %v4599, 1.0
          %v4728 = vadd.f32 %v4600, 1.0
          %v4729 = vadd.f32 %v4601, 1.0
          %v4730 = vadd.f32 %v4602, 1.0
          %v4731 = vadd.f32 %v4603, 1.0
          %v4732 = vadd.f32 %v4604, 1.0
          %v4733 = vadd.f32 %v4605, 1.0
          %v4734 = vadd.f32 %v4606, 1.0
          %v4735 = vadd.f32 %v4607, 1.0
          %v4736 = vadd.f32 %v4608, 1.0
          %v4737 = vadd.f32 %v4609, 1.0
          %v4738 = vadd.f32 %v4610, 1.0
          %v4739 = vadd.f32 %v4611, 1.0
          %v4740 = vadd.f32 %v4612, 1.0
          %v4741 = vadd.f32 %v4613, 1.0
          %v4742 = vadd.f32 %v4614, 1.0
          %v4743 = vadd.f32 %v4615, 1.0
          %v4744 = vadd.f32 %v4616, 1.0
          %v4745 = vadd.f32 %v4617, 1.0
          %v4746 = vadd.f32 %v4618, 1.0
          %v4747 = vadd.f32 %v4619, 1.0
          %v4748 = vadd.f32 %v4620, 1.0
          %v4749 = vadd.f32 %v4621, 1.0
          %v4750 = vadd.f32 %v4622, 1.0
          %v4751 = vadd.f32 %v4623, 1.0
          %v4752 = vadd.f32 %v4624, 1.0
          %v4753 = vadd.f32 %v4625, 1.0
          %v4754 = vadd.f32 %v4626, 1.0
          %v4755 = vadd.f32 %v4627, 1.0
          %v4756 = vadd.f32 %v4628, 1.0
          %v4757 = vadd.f32 %v4629, 1.0
          %v4758 = vadd.f32 %v4630, 1.0
          %v4759 = vadd.f32 %v4631, 1.0
          %v4760 = vadd.f32 %v4632, 1.0
          %v4761 = vadd.f32 %v4633, 1.0
          %v4762 = vadd.f32 %v4634, 1.0
          %v4763 = vadd.f32 %v4635, 1.0
          %v4764 = vadd.f32 %v4636, 1.0
          %v4765 = vadd.f32 %v4637, 1.0
          %v4766 = vadd.f32 %v4638, 1.0
          %v4767 = vadd.f32 %v4639, 1.0
          %v4768 = vadd.f32 %v4640, 1.0
          %v4769 = vadd.f32 %v4641, 1.0
          %v4770 = vadd.f32 %v4642, 1.0
          %v4771 = vadd.f32 %v4643, 1.0
          %v4772 = vadd.f32 %v4644, 1.0
          %v4773 = vadd.f32 %v4645, 1.0
          %v4774 = vadd.f32 %v4646, 1.0
          %v4775 = vadd.f32 %v4647, 1.0
          %v4776 = vadd.f32 %v4648, 1.0
          %v4777 = vadd.f32 %v4649, 1.0
          %v4778 = vadd.f32 %v4650, 1.0
          %v4779 = vadd.f32 %v4651, 1.0
          %v4780 = vadd.f32 %v4652, 1.0
          %v4781 = vadd.f32 %v4653, 1.0
          %v4782 = vadd.f32 %v4654, 1.0
          %v4783 = vadd.f32 %v4655, 1.0
          %v4784 = vadd.f32 %v4656, 1.0
          %v4785 = vadd.f32 %v4657, 1.0
          %v4786 = vadd.f32 %v4658, 1.0
          %v4787 = vadd.f32 %v4659, 1.0
          %v4788 = vadd.f32 %v4660, 1.0
          %v4789 = vadd.f32 %v4661, 1.0
          %v4790 = vadd.f32 %v4662, 1.0
          %v4791 = vadd.f32 %v4663, 1.0
          %v4792 = vadd.f32 %v4664, 1.0
          %v4793 = vadd.f32 %v4665, 1.0
          %v4794 = vadd.f32 %v4666, 1.0
          %v4795 = vadd.f32 %v4667, 1.0
          %v4796 = vadd.f32 %v4668, 1.0
          %v4797 = vadd.f32 %v4669, 1.0
          %v4798 = vadd.f32 %v4670, 1.0
          %v4799 = vadd.f32 %v4671, 1.0
          %v4800 = vadd.f32 %v4672, 1.0
          %v4801 = vadd.f32 %v4673, 1.0
          %v4802 = vadd.f32 %v4674, 1.0
          %v4803 = vadd.f32 %v4675, 1.0
          %v4804 = vadd.f32 %v4676, 1.0
          %v4805 = vadd.f32 %v4677, 1.0
          %v4806 = vadd.f32 %v4678, 1.0
          %v4807 = vadd.f32 %v4679, 1.0
          %v4808 = vadd.f32 %v4680, 1.0
          %v4809 = vadd.f32 %v4681, 1.0
          %v4810 = vadd.f32 %v4682, 1.0
          %v4811 = vadd.f32 %v4683, 1.0
          %v4812 = vadd.f32 %v4684, 1.0
          %v4813 = vadd.f32 %v4685, 1.0
          %v4814 = vadd.f32 %v4686, 1.0
          %v4815 = vmul.f32 %v3791, %v4687
          %v4816 = vmul.f32 %v3792, %v4688
          %v4817 = vmul.f32 %v3793, %v4689
          %v4818 = vmul.f32 %v3794, %v4690
          %v4819 = vmul.f32 %v3795, %v4691
          %v4820 = vmul.f32 %v3796, %v4692
          %v4821 = vmul.f32 %v3797, %v4693
          %v4822 = vmul.f32 %v3798, %v4694
          %v4823 = vmul.f32 %v3799, %v4695
          %v4824 = vmul.f32 %v3800, %v4696
          %v4825 = vmul.f32 %v3801, %v4697
          %v4826 = vmul.f32 %v3802, %v4698
          %v4827 = vmul.f32 %v3803, %v4699
          %v4828 = vmul.f32 %v3804, %v4700
          %v4829 = vmul.f32 %v3805, %v4701
          %v4830 = vmul.f32 %v3806, %v4702
          %v4831 = vmul.f32 %v3807, %v4703
          %v4832 = vmul.f32 %v3808, %v4704
          %v4833 = vmul.f32 %v3809, %v4705
          %v4834 = vmul.f32 %v3810, %v4706
          %v4835 = vmul.f32 %v3811, %v4707
          %v4836 = vmul.f32 %v3812, %v4708
          %v4837 = vmul.f32 %v3813, %v4709
          %v4838 = vmul.f32 %v3814, %v4710
          %v4839 = vmul.f32 %v3815, %v4711
          %v4840 = vmul.f32 %v3816, %v4712
          %v4841 = vmul.f32 %v3817, %v4713
          %v4842 = vmul.f32 %v3818, %v4714
          %v4843 = vmul.f32 %v3819, %v4715
          %v4844 = vmul.f32 %v3820, %v4716
          %v4845 = vmul.f32 %v3821, %v4717
          %v4846 = vmul.f32 %v3822, %v4718
          %v4847 = vmul.f32 %v3823, %v4719
          %v4848 = vmul.f32 %v3824, %v4720
          %v4849 = vmul.f32 %v3825, %v4721
          %v4850 = vmul.f32 %v3826, %v4722
          %v4851 = vmul.f32 %v3827, %v4723
          %v4852 = vmul.f32 %v3828, %v4724
          %v4853 = vmul.f32 %v3829, %v4725
          %v4854 = vmul.f32 %v3830, %v4726
          %v4855 = vmul.f32 %v3831, %v4727
          %v4856 = vmul.f32 %v3832, %v4728
          %v4857 = vmul.f32 %v3833, %v4729
          %v4858 = vmul.f32 %v3834, %v4730
          %v4859 = vmul.f32 %v3835, %v4731
          %v4860 = vmul.f32 %v3836, %v4732
          %v4861 = vmul.f32 %v3837, %v4733
          %v4862 = vmul.f32 %v3838, %v4734
          %v4863 = vmul.f32 %v3839, %v4735
          %v4864 = vmul.f32 %v3840, %v4736
          %v4865 = vmul.f32 %v3841, %v4737
          %v4866 = vmul.f32 %v3842, %v4738
          %v4867 = vmul.f32 %v3843, %v4739
          %v4868 = vmul.f32 %v3844, %v4740
          %v4869 = vmul.f32 %v3845, %v4741
          %v4870 = vmul.f32 %v3846, %v4742
          %v4871 = vmul.f32 %v3847, %v4743
          %v4872 = vmul.f32 %v3848, %v4744
          %v4873 = vmul.f32 %v3849, %v4745
          %v4874 = vmul.f32 %v3850, %v4746
          %v4875 = vmul.f32 %v3851, %v4747
          %v4876 = vmul.f32 %v3852, %v4748
          %v4877 = vmul.f32 %v3853, %v4749
          %v4878 = vmul.f32 %v3854, %v4750
          %v4879 = vmul.f32 %v3855, %v4751
          %v4880 = vmul.f32 %v3856, %v4752
          %v4881 = vmul.f32 %v3857, %v4753
          %v4882 = vmul.f32 %v3858, %v4754
          %v4883 = vmul.f32 %v3859, %v4755
          %v4884 = vmul.f32 %v3860, %v4756
          %v4885 = vmul.f32 %v3861, %v4757
          %v4886 = vmul.f32 %v3862, %v4758
          %v4887 = vmul.f32 %v3863, %v4759
          %v4888 = vmul.f32 %v3864, %v4760
          %v4889 = vmul.f32 %v3865, %v4761
          %v4890 = vmul.f32 %v3866, %v4762
          %v4891 = vmul.f32 %v3867, %v4763
          %v4892 = vmul.f32 %v3868, %v4764
          %v4893 = vmul.f32 %v3869, %v4765
          %v4894 = vmul.f32 %v3870, %v4766
          %v4895 = vmul.f32 %v3871, %v4767
          %v4896 = vmul.f32 %v3872, %v4768
          %v4897 = vmul.f32 %v3873, %v4769
          %v4898 = vmul.f32 %v3874, %v4770
          %v4899 = vmul.f32 %v3875, %v4771
          %v4900 = vmul.f32 %v3876, %v4772
          %v4901 = vmul.f32 %v3877, %v4773
          %v4902 = vmul.f32 %v3878, %v4774
          %v4903 = vmul.f32 %v3879, %v4775
          %v4904 = vmul.f32 %v3880, %v4776
          %v4905 = vmul.f32 %v3881, %v4777
          %v4906 = vmul.f32 %v3882, %v4778
          %v4907 = vmul.f32 %v3883, %v4779
          %v4908 = vmul.f32 %v3884, %v4780
          %v4909 = vmul.f32 %v3885, %v4781
          %v4910 = vmul.f32 %v3886, %v4782
          %v4911 = vmul.f32 %v3887, %v4783
          %v4912 = vmul.f32 %v3888, %v4784
          %v4913 = vmul.f32 %v3889, %v4785
          %v4914 = vmul.f32 %v3890, %v4786
          %v4915 = vmul.f32 %v3891, %v4787
          %v4916 = vmul.f32 %v3892, %v4788
          %v4917 = vmul.f32 %v3893, %v4789
          %v4918 = vmul.f32 %v3894, %v4790
          %v4919 = vmul.f32 %v3895, %v4791
          %v4920 = vmul.f32 %v3896, %v4792
          %v4921 = vmul.f32 %v3897, %v4793
          %v4922 = vmul.f32 %v3898, %v4794
          %v4923 = vmul.f32 %v3899, %v4795
          %v4924 = vmul.f32 %v3900, %v4796
          %v4925 = vmul.f32 %v3901, %v4797
          %v4926 = vmul.f32 %v3902, %v4798
          %v4927 = vmul.f32 %v3903, %v4799
          %v4928 = vmul.f32 %v3904, %v4800
          %v4929 = vmul.f32 %v3905, %v4801
          %v4930 = vmul.f32 %v3906, %v4802
          %v4931 = vmul.f32 %v3907, %v4803
          %v4932 = vmul.f32 %v3908, %v4804
          %v4933 = vmul.f32 %v3909, %v4805
          %v4934 = vmul.f32 %v3910, %v4806
          %v4935 = vmul.f32 %v3911, %v4807
          %v4936 = vmul.f32 %v3912, %v4808
          %v4937 = vmul.f32 %v3913, %v4809
          %v4938 = vmul.f32 %v3914, %v4810
          %v4939 = vmul.f32 %v3915, %v4811
          %v4940 = vmul.f32 %v3916, %v4812
          %v4941 = vmul.f32 %v3917, %v4813
          %v4942 = vmul.f32 %v3918, %v4814
          %v4943 = vpack.c.bf16 %v4823, %v4815
          %v4944 = vpack.c.bf16 %v4824, %v4816
          %v4945 = vpack.c.bf16 %v4825, %v4817
          %v4946 = vpack.c.bf16 %v4826, %v4818
          %v4947 = vpack.c.bf16 %v4827, %v4819
          %v4948 = vpack.c.bf16 %v4828, %v4820
          %v4949 = vpack.c.bf16 %v4829, %v4821
          %v4950 = vpack.c.bf16 %v4830, %v4822
          %v4951 = vpack.c.bf16 %v4839, %v4831
          %v4952 = vpack.c.bf16 %v4840, %v4832
          %v4953 = vpack.c.bf16 %v4841, %v4833
          %v4954 = vpack.c.bf16 %v4842, %v4834
          %v4955 = vpack.c.bf16 %v4843, %v4835
          %v4956 = vpack.c.bf16 %v4844, %v4836
          %v4957 = vpack.c.bf16 %v4845, %v4837
          %v4958 = vpack.c.bf16 %v4846, %v4838
          %v4959 = vpack.c.bf16 %v4855, %v4847
          %v4960 = vpack.c.bf16 %v4856, %v4848
          %v4961 = vpack.c.bf16 %v4857, %v4849
          %v4962 = vpack.c.bf16 %v4858, %v4850
          %v4963 = vpack.c.bf16 %v4859, %v4851
          %v4964 = vpack.c.bf16 %v4860, %v4852
          %v4965 = vpack.c.bf16 %v4861, %v4853
          %v4966 = vpack.c.bf16 %v4862, %v4854
          %v4967 = vpack.c.bf16 %v4871, %v4863
          %v4968 = vpack.c.bf16 %v4872, %v4864
          %v4969 = vpack.c.bf16 %v4873, %v4865
          %v4970 = vpack.c.bf16 %v4874, %v4866
          %v4971 = vpack.c.bf16 %v4875, %v4867
          %v4972 = vpack.c.bf16 %v4876, %v4868
          %v4973 = vpack.c.bf16 %v4877, %v4869
          %v4974 = vpack.c.bf16 %v4878, %v4870
          %v4975 = vpack.c.bf16 %v4887, %v4879
          %v4976 = vpack.c.bf16 %v4888, %v4880
          %v4977 = vpack.c.bf16 %v4889, %v4881
          %v4978 = vpack.c.bf16 %v4890, %v4882
          %v4979 = vpack.c.bf16 %v4891, %v4883
          %v4980 = vpack.c.bf16 %v4892, %v4884
          %v4981 = vpack.c.bf16 %v4893, %v4885
          %v4982 = vpack.c.bf16 %v4894, %v4886
          %v4983 = vpack.c.bf16 %v4903, %v4895
          %v4984 = vpack.c.bf16 %v4904, %v4896
          %v4985 = vpack.c.bf16 %v4905, %v4897
          %v4986 = vpack.c.bf16 %v4906, %v4898
          %v4987 = vpack.c.bf16 %v4907, %v4899
          %v4988 = vpack.c.bf16 %v4908, %v4900
          %v4989 = vpack.c.bf16 %v4909, %v4901
          %v4990 = vpack.c.bf16 %v4910, %v4902
          %v4991 = vpack.c.bf16 %v4919, %v4911
          %v4992 = vpack.c.bf16 %v4920, %v4912
          %v4993 = vpack.c.bf16 %v4921, %v4913
          %v4994 = vpack.c.bf16 %v4922, %v4914
          %v4995 = vpack.c.bf16 %v4923, %v4915
          %v4996 = vpack.c.bf16 %v4924, %v4916
          %v4997 = vpack.c.bf16 %v4925, %v4917
          %v4998 = vpack.c.bf16 %v4926, %v4918
          %v4999 = vpack.c.bf16 %v4935, %v4927
          %v5000 = vpack.c.bf16 %v4936, %v4928
          %v5001 = vpack.c.bf16 %v4937, %v4929
          %v5002 = vpack.c.bf16 %v4938, %v4930
          %v5003 = vpack.c.bf16 %v4939, %v4931
          %v5004 = vpack.c.bf16 %v4940, %v4932
          %v5005 = vpack.c.bf16 %v4941, %v4933
          %v5006 = vpack.c.bf16 %v4942, %v4934
          %v5007 = vld [vmem:[#allocation13] sm:$0xff]
          %v5008 = vld [vmem:[#allocation13 + $0x8] sm:$0xff]
          %v5009 = vld [vmem:[#allocation13 + $0x10] sm:$0xff]
          %v5010 = vld [vmem:[#allocation13 + $0x18] sm:$0xff]
          %v5011 = vld [vmem:[#allocation13 + $0x20] sm:$0xff]
          %v5012 = vld [vmem:[#allocation13 + $0x28] sm:$0xff]
          %v5013 = vld [vmem:[#allocation13 + $0x30] sm:$0xff]
          %v5014 = vld [vmem:[#allocation13 + $0x38] sm:$0xff]
          %v5015 = vld [vmem:[#allocation13 + $0x40] sm:$0xff]
          %v5016 = vld [vmem:[#allocation13 + $0x48] sm:$0xff]
          %v5017 = vld [vmem:[#allocation13 + $0x50] sm:$0xff]
          %v5018 = vld [vmem:[#allocation13 + $0x58] sm:$0xff]
          %v5019 = vld [vmem:[#allocation13 + $0x60] sm:$0xff]
          %v5020 = vld [vmem:[#allocation13 + $0x68] sm:$0xff]
          %v5021 = vld [vmem:[#allocation13 + $0x70] sm:$0xff]
          %v5022 = vld [vmem:[#allocation13 + $0x78] sm:$0xff]
          %v5023 = vld [vmem:[#allocation13 + $0x80] sm:$0xff]
          %v5024 = vld [vmem:[#allocation13 + $0x88] sm:$0xff]
          %v5025 = vld [vmem:[#allocation13 + $0x90] sm:$0xff]
          %v5026 = vld [vmem:[#allocation13 + $0x98] sm:$0xff]
          %v5027 = vld [vmem:[#allocation13 + $0xa0] sm:$0xff]
          %v5028 = vld [vmem:[#allocation13 + $0xa8] sm:$0xff]
          %v5029 = vld [vmem:[#allocation13 + $0xb0] sm:$0xff]
          %v5030 = vld [vmem:[#allocation13 + $0xb8] sm:$0xff]
          %v5031 = vld [vmem:[#allocation13 + $0xc0] sm:$0xff]
          %v5032 = vld [vmem:[#allocation13 + $0xc8] sm:$0xff]
          %v5033 = vld [vmem:[#allocation13 + $0xd0] sm:$0xff]
          %v5034 = vld [vmem:[#allocation13 + $0xd8] sm:$0xff]
          %v5035 = vld [vmem:[#allocation13 + $0xe0] sm:$0xff]
          %v5036 = vld [vmem:[#allocation13 + $0xe8] sm:$0xff]
          %v5037 = vld [vmem:[#allocation13 + $0xf0] sm:$0xff]
          %v5038 = vld [vmem:[#allocation13 + $0xf8] sm:$0xff]
          %v5039 = vld [vmem:[#allocation13 + $0x100] sm:$0xff]
          %v5040 = vld [vmem:[#allocation13 + $0x108] sm:$0xff]
          %v5041 = vld [vmem:[#allocation13 + $0x110] sm:$0xff]
          %v5042 = vld [vmem:[#allocation13 + $0x118] sm:$0xff]
          %v5043 = vld [vmem:[#allocation13 + $0x120] sm:$0xff]
          %v5044 = vld [vmem:[#allocation13 + $0x128] sm:$0xff]
          %v5045 = vld [vmem:[#allocation13 + $0x130] sm:$0xff]
          %v5046 = vld [vmem:[#allocation13 + $0x138] sm:$0xff]
          %v5047 = vld [vmem:[#allocation13 + $0x140] sm:$0xff]
          %v5048 = vld [vmem:[#allocation13 + $0x148] sm:$0xff]
          %v5049 = vld [vmem:[#allocation13 + $0x150] sm:$0xff]
          %v5050 = vld [vmem:[#allocation13 + $0x158] sm:$0xff]
          %v5051 = vld [vmem:[#allocation13 + $0x160] sm:$0xff]
          %v5052 = vld [vmem:[#allocation13 + $0x168] sm:$0xff]
          %v5053 = vld [vmem:[#allocation13 + $0x170] sm:$0xff]
          %v5054 = vld [vmem:[#allocation13 + $0x178] sm:$0xff]
          %v5055 = vld [vmem:[#allocation13 + $0x180] sm:$0xff]
          %v5056 = vld [vmem:[#allocation13 + $0x188] sm:$0xff]
          %v5057 = vld [vmem:[#allocation13 + $0x190] sm:$0xff]
          %v5058 = vld [vmem:[#allocation13 + $0x198] sm:$0xff]
          %v5059 = vld [vmem:[#allocation13 + $0x1a0] sm:$0xff]
          %v5060 = vld [vmem:[#allocation13 + $0x1a8] sm:$0xff]
          %v5061 = vld [vmem:[#allocation13 + $0x1b0] sm:$0xff]
          %v5062 = vld [vmem:[#allocation13 + $0x1b8] sm:$0xff]
          %v5063 = vld [vmem:[#allocation13 + $0x1c0] sm:$0xff]
          %v5064 = vld [vmem:[#allocation13 + $0x1c8] sm:$0xff]
          %v5065 = vld [vmem:[#allocation13 + $0x1d0] sm:$0xff]
          %v5066 = vld [vmem:[#allocation13 + $0x1d8] sm:$0xff]
          %v5067 = vld [vmem:[#allocation13 + $0x1e0] sm:$0xff]
          %v5068 = vld [vmem:[#allocation13 + $0x1e8] sm:$0xff]
          %v5069 = vld [vmem:[#allocation13 + $0x1f0] sm:$0xff]
          %v5070 = vld [vmem:[#allocation13 + $0x1f8] sm:$0xff]
          %v5071 = vld [vmem:[#allocation13 + $0x200] sm:$0xff]
          %v5072 = vld [vmem:[#allocation13 + $0x208] sm:$0xff]
          %v5073 = vld [vmem:[#allocation13 + $0x210] sm:$0xff]
          %v5074 = vld [vmem:[#allocation13 + $0x218] sm:$0xff]
          %v5075 = vld [vmem:[#allocation13 + $0x220] sm:$0xff]
          %v5076 = vld [vmem:[#allocation13 + $0x228] sm:$0xff]
          %v5077 = vld [vmem:[#allocation13 + $0x230] sm:$0xff]
          %v5078 = vld [vmem:[#allocation13 + $0x238] sm:$0xff]
          %v5079 = vld [vmem:[#allocation13 + $0x240] sm:$0xff]
          %v5080 = vld [vmem:[#allocation13 + $0x248] sm:$0xff]
          %v5081 = vld [vmem:[#allocation13 + $0x250] sm:$0xff]
          %v5082 = vld [vmem:[#allocation13 + $0x258] sm:$0xff]
          %v5083 = vld [vmem:[#allocation13 + $0x260] sm:$0xff]
          %v5084 = vld [vmem:[#allocation13 + $0x268] sm:$0xff]
          %v5085 = vld [vmem:[#allocation13 + $0x270] sm:$0xff]
          %v5086 = vld [vmem:[#allocation13 + $0x278] sm:$0xff]
          %v5087 = vld [vmem:[#allocation13 + $0x280] sm:$0xff]
          %v5088 = vld [vmem:[#allocation13 + $0x288] sm:$0xff]
          %v5089 = vld [vmem:[#allocation13 + $0x290] sm:$0xff]
          %v5090 = vld [vmem:[#allocation13 + $0x298] sm:$0xff]
          %v5091 = vld [vmem:[#allocation13 + $0x2a0] sm:$0xff]
          %v5092 = vld [vmem:[#allocation13 + $0x2a8] sm:$0xff]
          %v5093 = vld [vmem:[#allocation13 + $0x2b0] sm:$0xff]
          %v5094 = vld [vmem:[#allocation13 + $0x2b8] sm:$0xff]
          %v5095 = vld [vmem:[#allocation13 + $0x2c0] sm:$0xff]
          %v5096 = vld [vmem:[#allocation13 + $0x2c8] sm:$0xff]
          %v5097 = vld [vmem:[#allocation13 + $0x2d0] sm:$0xff]
          %v5098 = vld [vmem:[#allocation13 + $0x2d8] sm:$0xff]
          %v5099 = vld [vmem:[#allocation13 + $0x2e0] sm:$0xff]
          %v5100 = vld [vmem:[#allocation13 + $0x2e8] sm:$0xff]
          %v5101 = vld [vmem:[#allocation13 + $0x2f0] sm:$0xff]
          %v5102 = vld [vmem:[#allocation13 + $0x2f8] sm:$0xff]
          %v5103 = vld [vmem:[#allocation13 + $0x300] sm:$0xff]
          %v5104 = vld [vmem:[#allocation13 + $0x308] sm:$0xff]
          %v5105 = vld [vmem:[#allocation13 + $0x310] sm:$0xff]
          %v5106 = vld [vmem:[#allocation13 + $0x318] sm:$0xff]
          %v5107 = vld [vmem:[#allocation13 + $0x320] sm:$0xff]
          %v5108 = vld [vmem:[#allocation13 + $0x328] sm:$0xff]
          %v5109 = vld [vmem:[#allocation13 + $0x330] sm:$0xff]
          %v5110 = vld [vmem:[#allocation13 + $0x338] sm:$0xff]
          %v5111 = vld [vmem:[#allocation13 + $0x340] sm:$0xff]
          %v5112 = vld [vmem:[#allocation13 + $0x348] sm:$0xff]
          %v5113 = vld [vmem:[#allocation13 + $0x350] sm:$0xff]
          %v5114 = vld [vmem:[#allocation13 + $0x358] sm:$0xff]
          %v5115 = vld [vmem:[#allocation13 + $0x360] sm:$0xff]
          %v5116 = vld [vmem:[#allocation13 + $0x368] sm:$0xff]
          %v5117 = vld [vmem:[#allocation13 + $0x370] sm:$0xff]
          %v5118 = vld [vmem:[#allocation13 + $0x378] sm:$0xff]
          %v5119 = vld [vmem:[#allocation13 + $0x380] sm:$0xff]
          %v5120 = vld [vmem:[#allocation13 + $0x388] sm:$0xff]
          %v5121 = vld [vmem:[#allocation13 + $0x390] sm:$0xff]
          %v5122 = vld [vmem:[#allocation13 + $0x398] sm:$0xff]
          %v5123 = vld [vmem:[#allocation13 + $0x3a0] sm:$0xff]
          %v5124 = vld [vmem:[#allocation13 + $0x3a8] sm:$0xff]
          %v5125 = vld [vmem:[#allocation13 + $0x3b0] sm:$0xff]
          %v5126 = vld [vmem:[#allocation13 + $0x3b8] sm:$0xff]
          %v5127 = vld [vmem:[#allocation13 + $0x3c0] sm:$0xff]
          %v5128 = vld [vmem:[#allocation13 + $0x3c8] sm:$0xff]
          %v5129 = vld [vmem:[#allocation13 + $0x3d0] sm:$0xff]
          %v5130 = vld [vmem:[#allocation13 + $0x3d8] sm:$0xff]
          %v5131 = vld [vmem:[#allocation13 + $0x3e0] sm:$0xff]
          %v5132 = vld [vmem:[#allocation13 + $0x3e8] sm:$0xff]
          %v5133 = vld [vmem:[#allocation13 + $0x3f0] sm:$0xff]
          %v5134 = vld [vmem:[#allocation13 + $0x3f8] sm:$0xff]
          %v5135 = vld [vmem:[%s11] sm:$0x3]
          %v5137 = vlaneseq
          %v5138 = vshrl.u32 %v5137, 7
          %v5139 = vsub.s32 0, %v5138
          %v5140 = vrot.slane %v5135, %v5139
          %v5141 = vlaneseq
          %v5142 = vshrl.u32 %v5141, 7
          %v5143 = vsub.s32 1, %v5142
          %v5144 = vrot.slane %v5135, %v5143
          %v5275 = vunpack.c.l.b16 %v5007
          %v5276 = vunpack.c.h.b16 %v5007
          %v5277 = vunpack.c.l.b16 %v5008
          %v5278 = vunpack.c.h.b16 %v5008
          %v5279 = vunpack.c.l.b16 %v5009
          %v5280 = vunpack.c.h.b16 %v5009
          %v5281 = vunpack.c.l.b16 %v5010
          %v5282 = vunpack.c.h.b16 %v5010
          %v5283 = vunpack.c.l.b16 %v5011
          %v5284 = vunpack.c.h.b16 %v5011
          %v5285 = vunpack.c.l.b16 %v5012
          %v5286 = vunpack.c.h.b16 %v5012
          %v5287 = vunpack.c.l.b16 %v5013
          %v5288 = vunpack.c.h.b16 %v5013
          %v5289 = vunpack.c.l.b16 %v5014
          %v5290 = vunpack.c.h.b16 %v5014
          %v5291 = vunpack.c.l.b16 %v5015
          %v5292 = vunpack.c.h.b16 %v5015
          %v5293 = vunpack.c.l.b16 %v5016
          %v5294 = vunpack.c.h.b16 %v5016
          %v5295 = vunpack.c.l.b16 %v5017
          %v5296 = vunpack.c.h.b16 %v5017
          %v5297 = vunpack.c.l.b16 %v5018
          %v5298 = vunpack.c.h.b16 %v5018
          %v5299 = vunpack.c.l.b16 %v5019
          %v5300 = vunpack.c.h.b16 %v5019
          %v5301 = vunpack.c.l.b16 %v5020
          %v5302 = vunpack.c.h.b16 %v5020
          %v5303 = vunpack.c.l.b16 %v5021
          %v5304 = vunpack.c.h.b16 %v5021
          %v5305 = vunpack.c.l.b16 %v5022
          %v5306 = vunpack.c.h.b16 %v5022
          %v5307 = vunpack.c.l.b16 %v5023
          %v5308 = vunpack.c.h.b16 %v5023
          %v5309 = vunpack.c.l.b16 %v5024
          %v5310 = vunpack.c.h.b16 %v5024
          %v5311 = vunpack.c.l.b16 %v5025
          %v5312 = vunpack.c.h.b16 %v5025
          %v5313 = vunpack.c.l.b16 %v5026
          %v5314 = vunpack.c.h.b16 %v5026
          %v5315 = vunpack.c.l.b16 %v5027
          %v5316 = vunpack.c.h.b16 %v5027
          %v5317 = vunpack.c.l.b16 %v5028
          %v5318 = vunpack.c.h.b16 %v5028
          %v5319 = vunpack.c.l.b16 %v5029
          %v5320 = vunpack.c.h.b16 %v5029
          %v5321 = vunpack.c.l.b16 %v5030
          %v5322 = vunpack.c.h.b16 %v5030
          %v5323 = vunpack.c.l.b16 %v5031
          %v5324 = vunpack.c.h.b16 %v5031
          %v5325 = vunpack.c.l.b16 %v5032
          %v5326 = vunpack.c.h.b16 %v5032
          %v5327 = vunpack.c.l.b16 %v5033
          %v5328 = vunpack.c.h.b16 %v5033
          %v5329 = vunpack.c.l.b16 %v5034
          %v5330 = vunpack.c.h.b16 %v5034
          %v5331 = vunpack.c.l.b16 %v5035
          %v5332 = vunpack.c.h.b16 %v5035
          %v5333 = vunpack.c.l.b16 %v5036
          %v5334 = vunpack.c.h.b16 %v5036
          %v5335 = vunpack.c.l.b16 %v5037
          %v5336 = vunpack.c.h.b16 %v5037
          %v5337 = vunpack.c.l.b16 %v5038
          %v5338 = vunpack.c.h.b16 %v5038
          %v5339 = vunpack.c.l.b16 %v5039
          %v5340 = vunpack.c.h.b16 %v5039
          %v5341 = vunpack.c.l.b16 %v5040
          %v5342 = vunpack.c.h.b16 %v5040
          %v5343 = vunpack.c.l.b16 %v5041
          %v5344 = vunpack.c.h.b16 %v5041
          %v5345 = vunpack.c.l.b16 %v5042
          %v5346 = vunpack.c.h.b16 %v5042
          %v5347 = vunpack.c.l.b16 %v5043
          %v5348 = vunpack.c.h.b16 %v5043
          %v5349 = vunpack.c.l.b16 %v5044
          %v5350 = vunpack.c.h.b16 %v5044
          %v5351 = vunpack.c.l.b16 %v5045
          %v5352 = vunpack.c.h.b16 %v5045
          %v5353 = vunpack.c.l.b16 %v5046
          %v5354 = vunpack.c.h.b16 %v5046
          %v5355 = vunpack.c.l.b16 %v5047
          %v5356 = vunpack.c.h.b16 %v5047
          %v5357 = vunpack.c.l.b16 %v5048
          %v5358 = vunpack.c.h.b16 %v5048
          %v5359 = vunpack.c.l.b16 %v5049
          %v5360 = vunpack.c.h.b16 %v5049
          %v5361 = vunpack.c.l.b16 %v5050
          %v5362 = vunpack.c.h.b16 %v5050
          %v5363 = vunpack.c.l.b16 %v5051
          %v5364 = vunpack.c.h.b16 %v5051
          %v5365 = vunpack.c.l.b16 %v5052
          %v5366 = vunpack.c.h.b16 %v5052
          %v5367 = vunpack.c.l.b16 %v5053
          %v5368 = vunpack.c.h.b16 %v5053
          %v5369 = vunpack.c.l.b16 %v5054
          %v5370 = vunpack.c.h.b16 %v5054
          %v5371 = vunpack.c.l.b16 %v5055
          %v5372 = vunpack.c.h.b16 %v5055
          %v5373 = vunpack.c.l.b16 %v5056
          %v5374 = vunpack.c.h.b16 %v5056
          %v5375 = vunpack.c.l.b16 %v5057
          %v5376 = vunpack.c.h.b16 %v5057
          %v5377 = vunpack.c.l.b16 %v5058
          %v5378 = vunpack.c.h.b16 %v5058
          %v5379 = vunpack.c.l.b16 %v5059
          %v5380 = vunpack.c.h.b16 %v5059
          %v5381 = vunpack.c.l.b16 %v5060
          %v5382 = vunpack.c.h.b16 %v5060
          %v5383 = vunpack.c.l.b16 %v5061
          %v5384 = vunpack.c.h.b16 %v5061
          %v5385 = vunpack.c.l.b16 %v5062
          %v5386 = vunpack.c.h.b16 %v5062
          %v5387 = vunpack.c.l.b16 %v5063
          %v5388 = vunpack.c.h.b16 %v5063
          %v5389 = vunpack.c.l.b16 %v5064
          %v5390 = vunpack.c.h.b16 %v5064
          %v5391 = vunpack.c.l.b16 %v5065
          %v5392 = vunpack.c.h.b16 %v5065
          %v5393 = vunpack.c.l.b16 %v5066
          %v5394 = vunpack.c.h.b16 %v5066
          %v5395 = vunpack.c.l.b16 %v5067
          %v5396 = vunpack.c.h.b16 %v5067
          %v5397 = vunpack.c.l.b16 %v5068
          %v5398 = vunpack.c.h.b16 %v5068
          %v5399 = vunpack.c.l.b16 %v5069
          %v5400 = vunpack.c.h.b16 %v5069
          %v5401 = vunpack.c.l.b16 %v5070
          %v5402 = vunpack.c.h.b16 %v5070
          %v5403 = vunpack.c.l.b16 %v5071
          %v5404 = vunpack.c.h.b16 %v5071
          %v5405 = vunpack.c.l.b16 %v5072
          %v5406 = vunpack.c.h.b16 %v5072
          %v5407 = vunpack.c.l.b16 %v5073
          %v5408 = vunpack.c.h.b16 %v5073
          %v5409 = vunpack.c.l.b16 %v5074
          %v5410 = vunpack.c.h.b16 %v5074
          %v5411 = vunpack.c.l.b16 %v5075
          %v5412 = vunpack.c.h.b16 %v5075
          %v5413 = vunpack.c.l.b16 %v5076
          %v5414 = vunpack.c.h.b16 %v5076
          %v5415 = vunpack.c.l.b16 %v5077
          %v5416 = vunpack.c.h.b16 %v5077
          %v5417 = vunpack.c.l.b16 %v5078
          %v5418 = vunpack.c.h.b16 %v5078
          %v5419 = vunpack.c.l.b16 %v5079
          %v5420 = vunpack.c.h.b16 %v5079
          %v5421 = vunpack.c.l.b16 %v5080
          %v5422 = vunpack.c.h.b16 %v5080
          %v5423 = vunpack.c.l.b16 %v5081
          %v5424 = vunpack.c.h.b16 %v5081
          %v5425 = vunpack.c.l.b16 %v5082
          %v5426 = vunpack.c.h.b16 %v5082
          %v5427 = vunpack.c.l.b16 %v5083
          %v5428 = vunpack.c.h.b16 %v5083
          %v5429 = vunpack.c.l.b16 %v5084
          %v5430 = vunpack.c.h.b16 %v5084
          %v5431 = vunpack.c.l.b16 %v5085
          %v5432 = vunpack.c.h.b16 %v5085
          %v5433 = vunpack.c.l.b16 %v5086
          %v5434 = vunpack.c.h.b16 %v5086
          %v5435 = vunpack.c.l.b16 %v5087
          %v5436 = vunpack.c.h.b16 %v5087
          %v5437 = vunpack.c.l.b16 %v5088
          %v5438 = vunpack.c.h.b16 %v5088
          %v5439 = vunpack.c.l.b16 %v5089
          %v5440 = vunpack.c.h.b16 %v5089
          %v5441 = vunpack.c.l.b16 %v5090
          %v5442 = vunpack.c.h.b16 %v5090
          %v5443 = vunpack.c.l.b16 %v5091
          %v5444 = vunpack.c.h.b16 %v5091
          %v5445 = vunpack.c.l.b16 %v5092
          %v5446 = vunpack.c.h.b16 %v5092
          %v5447 = vunpack.c.l.b16 %v5093
          %v5448 = vunpack.c.h.b16 %v5093
          %v5449 = vunpack.c.l.b16 %v5094
          %v5450 = vunpack.c.h.b16 %v5094
          %v5451 = vunpack.c.l.b16 %v5095
          %v5452 = vunpack.c.h.b16 %v5095
          %v5453 = vunpack.c.l.b16 %v5096
          %v5454 = vunpack.c.h.b16 %v5096
          %v5455 = vunpack.c.l.b16 %v5097
          %v5456 = vunpack.c.h.b16 %v5097
          %v5457 = vunpack.c.l.b16 %v5098
          %v5458 = vunpack.c.h.b16 %v5098
          %v5459 = vunpack.c.l.b16 %v5099
          %v5460 = vunpack.c.h.b16 %v5099
          %v5461 = vunpack.c.l.b16 %v5100
          %v5462 = vunpack.c.h.b16 %v5100
          %v5463 = vunpack.c.l.b16 %v5101
          %v5464 = vunpack.c.h.b16 %v5101
          %v5465 = vunpack.c.l.b16 %v5102
          %v5466 = vunpack.c.h.b16 %v5102
          %v5467 = vunpack.c.l.b16 %v5103
          %v5468 = vunpack.c.h.b16 %v5103
          %v5469 = vunpack.c.l.b16 %v5104
          %v5470 = vunpack.c.h.b16 %v5104
          %v5471 = vunpack.c.l.b16 %v5105
          %v5472 = vunpack.c.h.b16 %v5105
          %v5473 = vunpack.c.l.b16 %v5106
          %v5474 = vunpack.c.h.b16 %v5106
          %v5475 = vunpack.c.l.b16 %v5107
          %v5476 = vunpack.c.h.b16 %v5107
          %v5477 = vunpack.c.l.b16 %v5108
          %v5478 = vunpack.c.h.b16 %v5108
          %v5479 = vunpack.c.l.b16 %v5109
          %v5480 = vunpack.c.h.b16 %v5109
          %v5481 = vunpack.c.l.b16 %v5110
          %v5482 = vunpack.c.h.b16 %v5110
          %v5483 = vunpack.c.l.b16 %v5111
          %v5484 = vunpack.c.h.b16 %v5111
          %v5485 = vunpack.c.l.b16 %v5112
          %v5486 = vunpack.c.h.b16 %v5112
          %v5487 = vunpack.c.l.b16 %v5113
          %v5488 = vunpack.c.h.b16 %v5113
          %v5489 = vunpack.c.l.b16 %v5114
          %v5490 = vunpack.c.h.b16 %v5114
          %v5491 = vunpack.c.l.b16 %v5115
          %v5492 = vunpack.c.h.b16 %v5115
          %v5493 = vunpack.c.l.b16 %v5116
          %v5494 = vunpack.c.h.b16 %v5116
          %v5495 = vunpack.c.l.b16 %v5117
          %v5496 = vunpack.c.h.b16 %v5117
          %v5497 = vunpack.c.l.b16 %v5118
          %v5498 = vunpack.c.h.b16 %v5118
          %v5499 = vunpack.c.l.b16 %v5119
          %v5500 = vunpack.c.h.b16 %v5119
          %v5501 = vunpack.c.l.b16 %v5120
          %v5502 = vunpack.c.h.b16 %v5120
          %v5503 = vunpack.c.l.b16 %v5121
          %v5504 = vunpack.c.h.b16 %v5121
          %v5505 = vunpack.c.l.b16 %v5122
          %v5506 = vunpack.c.h.b16 %v5122
          %v5507 = vunpack.c.l.b16 %v5123
          %v5508 = vunpack.c.h.b16 %v5123
          %v5509 = vunpack.c.l.b16 %v5124
          %v5510 = vunpack.c.h.b16 %v5124
          %v5511 = vunpack.c.l.b16 %v5125
          %v5512 = vunpack.c.h.b16 %v5125
          %v5513 = vunpack.c.l.b16 %v5126
          %v5514 = vunpack.c.h.b16 %v5126
          %v5515 = vunpack.c.l.b16 %v5127
          %v5516 = vunpack.c.h.b16 %v5127
          %v5517 = vunpack.c.l.b16 %v5128
          %v5518 = vunpack.c.h.b16 %v5128
          %v5519 = vunpack.c.l.b16 %v5129
          %v5520 = vunpack.c.h.b16 %v5129
          %v5521 = vunpack.c.l.b16 %v5130
          %v5522 = vunpack.c.h.b16 %v5130
          %v5523 = vunpack.c.l.b16 %v5131
          %v5524 = vunpack.c.h.b16 %v5131
          %v5525 = vunpack.c.l.b16 %v5132
          %v5526 = vunpack.c.h.b16 %v5132
          %v5527 = vunpack.c.l.b16 %v5133
          %v5528 = vunpack.c.h.b16 %v5133
          %v5529 = vunpack.c.l.b16 %v5134
          %v5530 = vunpack.c.h.b16 %v5134
          %v5531 = vpack.c.b16 %v5277, %v5275
          %v5532 = vpack.c.b16 %v5278, %v5276
          %v5533 = vpack.c.b16 %v5281, %v5279
          %v5534 = vpack.c.b16 %v5282, %v5280
          %v5535 = vpack.c.b16 %v5285, %v5283
          %v5536 = vpack.c.b16 %v5286, %v5284
          %v5537 = vpack.c.b16 %v5289, %v5287
          %v5538 = vpack.c.b16 %v5290, %v5288
          %v5539 = vpack.c.b16 %v5293, %v5291
          %v5540 = vpack.c.b16 %v5294, %v5292
          %v5541 = vpack.c.b16 %v5297, %v5295
          %v5542 = vpack.c.b16 %v5298, %v5296
          %v5543 = vpack.c.b16 %v5301, %v5299
          %v5544 = vpack.c.b16 %v5302, %v5300
          %v5545 = vpack.c.b16 %v5305, %v5303
          %v5546 = vpack.c.b16 %v5306, %v5304
          %v5547 = vpack.c.b16 %v5309, %v5307
          %v5548 = vpack.c.b16 %v5310, %v5308
          %v5549 = vpack.c.b16 %v5313, %v5311
          %v5550 = vpack.c.b16 %v5314, %v5312
          %v5551 = vpack.c.b16 %v5317, %v5315
          %v5552 = vpack.c.b16 %v5318, %v5316
          %v5553 = vpack.c.b16 %v5321, %v5319
          %v5554 = vpack.c.b16 %v5322, %v5320
          %v5555 = vpack.c.b16 %v5325, %v5323
          %v5556 = vpack.c.b16 %v5326, %v5324
          %v5557 = vpack.c.b16 %v5329, %v5327
          %v5558 = vpack.c.b16 %v5330, %v5328
          %v5559 = vpack.c.b16 %v5333, %v5331
          %v5560 = vpack.c.b16 %v5334, %v5332
          %v5561 = vpack.c.b16 %v5337, %v5335
          %v5562 = vpack.c.b16 %v5338, %v5336
          %v5563 = vpack.c.b16 %v5341, %v5339
          %v5564 = vpack.c.b16 %v5342, %v5340
          %v5565 = vpack.c.b16 %v5345, %v5343
          %v5566 = vpack.c.b16 %v5346, %v5344
          %v5567 = vpack.c.b16 %v5349, %v5347
          %v5568 = vpack.c.b16 %v5350, %v5348
          %v5569 = vpack.c.b16 %v5353, %v5351
          %v5570 = vpack.c.b16 %v5354, %v5352
          %v5571 = vpack.c.b16 %v5357, %v5355
          %v5572 = vpack.c.b16 %v5358, %v5356
          %v5573 = vpack.c.b16 %v5361, %v5359
          %v5574 = vpack.c.b16 %v5362, %v5360
          %v5575 = vpack.c.b16 %v5365, %v5363
          %v5576 = vpack.c.b16 %v5366, %v5364
          %v5577 = vpack.c.b16 %v5369, %v5367
          %v5578 = vpack.c.b16 %v5370, %v5368
          %v5579 = vpack.c.b16 %v5373, %v5371
          %v5580 = vpack.c.b16 %v5374, %v5372
          %v5581 = vpack.c.b16 %v5377, %v5375
          %v5582 = vpack.c.b16 %v5378, %v5376
          %v5583 = vpack.c.b16 %v5381, %v5379
          %v5584 = vpack.c.b16 %v5382, %v5380
          %v5585 = vpack.c.b16 %v5385, %v5383
          %v5586 = vpack.c.b16 %v5386, %v5384
          %v5587 = vpack.c.b16 %v5389, %v5387
          %v5588 = vpack.c.b16 %v5390, %v5388
          %v5589 = vpack.c.b16 %v5393, %v5391
          %v5590 = vpack.c.b16 %v5394, %v5392
          %v5591 = vpack.c.b16 %v5397, %v5395
          %v5592 = vpack.c.b16 %v5398, %v5396
          %v5593 = vpack.c.b16 %v5401, %v5399
          %v5594 = vpack.c.b16 %v5402, %v5400
          %v5595 = vpack.c.b16 %v5405, %v5403
          %v5596 = vpack.c.b16 %v5406, %v5404
          %v5597 = vpack.c.b16 %v5409, %v5407
          %v5598 = vpack.c.b16 %v5410, %v5408
          %v5599 = vpack.c.b16 %v5413, %v5411
          %v5600 = vpack.c.b16 %v5414, %v5412
          %v5601 = vpack.c.b16 %v5417, %v5415
          %v5602 = vpack.c.b16 %v5418, %v5416
          %v5603 = vpack.c.b16 %v5421, %v5419
          %v5604 = vpack.c.b16 %v5422, %v5420
          %v5605 = vpack.c.b16 %v5425, %v5423
          %v5606 = vpack.c.b16 %v5426, %v5424
          %v5607 = vpack.c.b16 %v5429, %v5427
          %v5608 = vpack.c.b16 %v5430, %v5428
          %v5609 = vpack.c.b16 %v5433, %v5431
          %v5610 = vpack.c.b16 %v5434, %v5432
          %v5611 = vpack.c.b16 %v5437, %v5435
          %v5612 = vpack.c.b16 %v5438, %v5436
          %v5613 = vpack.c.b16 %v5441, %v5439
          %v5614 = vpack.c.b16 %v5442, %v5440
          %v5615 = vpack.c.b16 %v5445, %v5443
          %v5616 = vpack.c.b16 %v5446, %v5444
          %v5617 = vpack.c.b16 %v5449, %v5447
          %v5618 = vpack.c.b16 %v5450, %v5448
          %v5619 = vpack.c.b16 %v5453, %v5451
          %v5620 = vpack.c.b16 %v5454, %v5452
          %v5621 = vpack.c.b16 %v5457, %v5455
          %v5622 = vpack.c.b16 %v5458, %v5456
          %v5623 = vpack.c.b16 %v5461, %v5459
          %v5624 = vpack.c.b16 %v5462, %v5460
          %v5625 = vpack.c.b16 %v5465, %v5463
          %v5626 = vpack.c.b16 %v5466, %v5464
          %v5627 = vpack.c.b16 %v5469, %v5467
          %v5628 = vpack.c.b16 %v5470, %v5468
          %v5629 = vpack.c.b16 %v5473, %v5471
          %v5630 = vpack.c.b16 %v5474, %v5472
          %v5631 = vpack.c.b16 %v5477, %v5475
          %v5632 = vpack.c.b16 %v5478, %v5476
          %v5633 = vpack.c.b16 %v5481, %v5479
          %v5634 = vpack.c.b16 %v5482, %v5480
          %v5635 = vpack.c.b16 %v5485, %v5483
          %v5636 = vpack.c.b16 %v5486, %v5484
          %v5637 = vpack.c.b16 %v5489, %v5487
          %v5638 = vpack.c.b16 %v5490, %v5488
          %v5639 = vpack.c.b16 %v5493, %v5491
          %v5640 = vpack.c.b16 %v5494, %v5492
          %v5641 = vpack.c.b16 %v5497, %v5495
          %v5642 = vpack.c.b16 %v5498, %v5496
          %v5643 = vpack.c.b16 %v5501, %v5499
          %v5644 = vpack.c.b16 %v5502, %v5500
          %v5645 = vpack.c.b16 %v5505, %v5503
          %v5646 = vpack.c.b16 %v5506, %v5504
          %v5647 = vpack.c.b16 %v5509, %v5507
          %v5648 = vpack.c.b16 %v5510, %v5508
          %v5649 = vpack.c.b16 %v5513, %v5511
          %v5650 = vpack.c.b16 %v5514, %v5512
          %v5651 = vpack.c.b16 %v5517, %v5515
          %v5652 = vpack.c.b16 %v5518, %v5516
          %v5653 = vpack.c.b16 %v5521, %v5519
          %v5654 = vpack.c.b16 %v5522, %v5520
          %v5655 = vpack.c.b16 %v5525, %v5523
          %v5656 = vpack.c.b16 %v5526, %v5524
          %v5657 = vpack.c.b16 %v5529, %v5527
          %v5658 = vpack.c.b16 %v5530, %v5528
          %5787 = vmatprep.subr.bf16.mxu0 %v5532
          %5788 = vmatpush1.bf16.msra.mxu0 %v5531
          %5789 = vmatprep.subr.bf16.mxu0 %v5534
          %5790 = vmatpush1.bf16.msra.mxu0 %v5533
          %5791 = vmatprep.subr.bf16.mxu0 %v5536
          %5792 = vmatpush1.bf16.msra.mxu0 %v5535
          %5793 = vmatprep.subr.bf16.mxu0 %v5538
          %5794 = vmatpush1.bf16.msra.mxu0 %v5537
          %5795 = vmatprep.subr.bf16.mxu0 %v5540
          %5796 = vmatpush1.bf16.msra.mxu0 %v5539
          %5797 = vmatprep.subr.bf16.mxu0 %v5542
          %5798 = vmatpush1.bf16.msra.mxu0 %v5541
          %5799 = vmatprep.subr.bf16.mxu0 %v5544
          %5800 = vmatpush1.bf16.msra.mxu0 %v5543
          %5801 = vmatprep.subr.bf16.mxu0 %v5546
          %5802 = vmatpush1.bf16.msra.mxu0 %v5545
          %5803 = vmatprep.subr.bf16.mxu0 %v5548
          %5804 = vmatpush1.bf16.msra.mxu0 %v5547
          %5805 = vmatprep.subr.bf16.mxu0 %v5550
          %5806 = vmatpush1.bf16.msra.mxu0 %v5549
          %5807 = vmatprep.subr.bf16.mxu0 %v5552
          %5808 = vmatpush1.bf16.msra.mxu0 %v5551
          %5809 = vmatprep.subr.bf16.mxu0 %v5554
          %5810 = vmatpush1.bf16.msra.mxu0 %v5553
          %5811 = vmatprep.subr.bf16.mxu0 %v5556
          %5812 = vmatpush1.bf16.msra.mxu0 %v5555
          %5813 = vmatprep.subr.bf16.mxu0 %v5558
          %5814 = vmatpush1.bf16.msra.mxu0 %v5557
          %5815 = vmatprep.subr.bf16.mxu0 %v5560
          %5816 = vmatpush1.bf16.msra.mxu0 %v5559
          %5817 = vmatprep.subr.bf16.mxu0 %v5562
          %5818 = vmatpush1.bf16.msra.mxu0 %v5561
          %5819 = vmatprep.mubr.bf16.mxu0 %v4944
          %5820 = vmatmul.mubr.bf16.gmra.mrb[0].mxu0 %v4943
          %v5821 = vpop.f32.mrb[0].mxu0
          %v5822 = vadd.f32 %v5140, %v5821
          %v5823 = vpop.f32.mrb[0].mxu0
          %v5824 = vadd.f32 %v5144, %v5823
          %v5825 = vpop.f32.mrb[0].mxu0
          %v5826 = vadd.f32 %v5140, %v5825
          %v5827 = vpop.f32.mrb[0].mxu0
          %v5828 = vadd.f32 %v5144, %v5827
          %5829 = vmatprep.mubr.bf16.mxu0 %v4952
          %5830 = vmatmul.mubr.bf16.gmra.mrb[0].mxu0 %v4951
          %v5831 = vpop.f32.mrb[0].mxu0
          %v5832 = vadd.f32 %v5140, %v5831
          %v5833 = vpop.f32.mrb[0].mxu0
          %v5834 = vadd.f32 %v5144, %v5833
          %v5835 = vpop.f32.mrb[0].mxu0
          %v5836 = vadd.f32 %v5140, %v5835
          %v5837 = vpop.f32.mrb[0].mxu0
          %v5838 = vadd.f32 %v5144, %v5837
          %5839 = vmatprep.mubr.bf16.mxu0 %v4960
          %5840 = vmatmul.mubr.bf16.gmra.mrb[0].mxu0 %v4959
          %v5841 = vpop.f32.mrb[0].mxu0
          %v5842 = vadd.f32 %v5140, %v5841
          %v5843 = vpop.f32.mrb[0].mxu0
          %v5844 = vadd.f32 %v5144, %v5843
          %v5845 = vpop.f32.mrb[0].mxu0
          %v5846 = vadd.f32 %v5140, %v5845
          %v5847 = vpop.f32.mrb[0].mxu0
          %v5848 = vadd.f32 %v5144, %v5847
          %5849 = vmatprep.mubr.bf16.mxu0 %v4968
          %5850 = vmatmul.mubr.bf16.gmra.mrb[0].mxu0 %v4967
          %v5851 = vpop.f32.mrb[0].mxu0
          %v5852 = vadd.f32 %v5140, %v5851
          %v5853 = vpop.f32.mrb[0].mxu0
          %v5854 = vadd.f32 %v5144, %v5853
          %v5855 = vpop.f32.mrb[0].mxu0
          %v5856 = vadd.f32 %v5140, %v5855
          %v5857 = vpop.f32.mrb[0].mxu0
          %v5858 = vadd.f32 %v5144, %v5857
          %5859 = vmatprep.mubr.bf16.mxu0 %v4976
          %5860 = vmatmul.mubr.bf16.gmra.mrb[0].mxu0 %v4975
          %v5861 = vpop.f32.mrb[0].mxu0
          %v5862 = vadd.f32 %v5140, %v5861
          %v5863 = vpop.f32.mrb[0].mxu0
          %v5864 = vadd.f32 %v5144, %v5863
          %v5865 = vpop.f32.mrb[0].mxu0
          %v5866 = vadd.f32 %v5140, %v5865
          %v5867 = vpop.f32.mrb[0].mxu0
          %v5868 = vadd.f32 %v5144, %v5867
          %5869 = vmatprep.mubr.bf16.mxu0 %v4984
          %5870 = vmatmul.mubr.bf16.gmra.mrb[0].mxu0 %v4983
          %v5871 = vpop.f32.mrb[0].mxu0
          %v5872 = vadd.f32 %v5140, %v5871
          %v5873 = vpop.f32.mrb[0].mxu0
          %v5874 = vadd.f32 %v5144, %v5873
          %v5875 = vpop.f32.mrb[0].mxu0
          %v5876 = vadd.f32 %v5140, %v5875
          %v5877 = vpop.f32.mrb[0].mxu0
          %v5878 = vadd.f32 %v5144, %v5877
          %5879 = vmatprep.mubr.bf16.mxu0 %v4992
          %5880 = vmatmul.mubr.bf16.gmra.mrb[0].mxu0 %v4991
          %v5881 = vpop.f32.mrb[0].mxu0
          %v5882 = vadd.f32 %v5140, %v5881
          %v5883 = vpop.f32.mrb[0].mxu0
          %v5884 = vadd.f32 %v5144, %v5883
          %v5885 = vpop.f32.mrb[0].mxu0
          %v5886 = vadd.f32 %v5140, %v5885
          %v5887 = vpop.f32.mrb[0].mxu0
          %v5888 = vadd.f32 %v5144, %v5887
          %5889 = vmatprep.mubr.bf16.mxu0 %v5000
          %5890 = vmatmul.mubr.bf16.gmra.mrb[0].mxu0 %v4999
          %v5891 = vpop.f32.mrb[0].mxu0
          %v5892 = vadd.f32 %v5140, %v5891
          %v5893 = vpop.f32.mrb[0].mxu0
          %v5894 = vadd.f32 %v5144, %v5893
          %v5895 = vpop.f32.mrb[0].mxu0
          %v5896 = vadd.f32 %v5140, %v5895
          %v5897 = vpop.f32.mrb[0].mxu0
          %v5898 = vadd.f32 %v5144, %v5897
          %5899 = vdwg.mxu0
          %5900 = vmatprep.subr.bf16.mxu0 %v5564
          %5901 = vmatpush1.bf16.msra.mxu0 %v5563
          %5902 = vmatprep.subr.bf16.mxu0 %v5566
          %5903 = vmatpush1.bf16.msra.mxu0 %v5565
          %5904 = vmatprep.subr.bf16.mxu0 %v5568
          %5905 = vmatpush1.bf16.msra.mxu0 %v5567
          %5906 = vmatprep.subr.bf16.mxu0 %v5570
          %5907 = vmatpush1.bf16.msra.mxu0 %v5569
          %5908 = vmatprep.subr.bf16.mxu0 %v5572
          %5909 = vmatpush1.bf16.msra.mxu0 %v5571
          %5910 = vmatprep.subr.bf16.mxu0 %v5574
          %5911 = vmatpush1.bf16.msra.mxu0 %v5573
          %5912 = vmatprep.subr.bf16.mxu0 %v5576
          %5913 = vmatpush1.bf16.msra.mxu0 %v5575
          %5914 = vmatprep.subr.bf16.mxu0 %v5578
          %5915 = vmatpush1.bf16.msra.mxu0 %v5577
          %5916 = vmatprep.subr.bf16.mxu0 %v5580
          %5917 = vmatpush1.bf16.msra.mxu0 %v5579
          %5918 = vmatprep.subr.bf16.mxu0 %v5582
          %5919 = vmatpush1.bf16.msra.mxu0 %v5581
          %5920 = vmatprep.subr.bf16.mxu0 %v5584
          %5921 = vmatpush1.bf16.msra.mxu0 %v5583
          %5922 = vmatprep.subr.bf16.mxu0 %v5586
          %5923 = vmatpush1.bf16.msra.mxu0 %v5585
          %5924 = vmatprep.subr.bf16.mxu0 %v5588
          %5925 = vmatpush1.bf16.msra.mxu0 %v5587
          %5926 = vmatprep.subr.bf16.mxu0 %v5590
          %5927 = vmatpush1.bf16.msra.mxu0 %v5589
          %5928 = vmatprep.subr.bf16.mxu0 %v5592
          %5929 = vmatpush1.bf16.msra.mxu0 %v5591
          %5930 = vmatprep.subr.bf16.mxu0 %v5594
          %5931 = vmatpush1.bf16.msra.mxu0 %v5593
          %5932 = vmatprep.mubr.bf16.mxu0 %v4946
          %5933 = vmatmul.mubr.bf16.gmra.mrb[0].mxu0 %v4945
          %v5934 = vpop.f32.mrb[0].mxu0
          %v5935 = vadd.f32 %v5822, %v5934
          %v5936 = vpop.f32.mrb[0].mxu0
          %v5937 = vadd.f32 %v5824, %v5936
          %v5938 = vpop.f32.mrb[0].mxu0
          %v5939 = vadd.f32 %v5826, %v5938
          %v5940 = vpop.f32.mrb[0].mxu0
          %v5941 = vadd.f32 %v5828, %v5940
          %5942 = vmatprep.mubr.bf16.mxu0 %v4954
          %5943 = vmatmul.mubr.bf16.gmra.mrb[0].mxu0 %v4953
          %v5944 = vpop.f32.mrb[0].mxu0
          %v5945 = vadd.f32 %v5832, %v5944
          %v5946 = vpop.f32.mrb[0].mxu0
          %v5947 = vadd.f32 %v5834, %v5946
          %v5948 = vpop.f32.mrb[0].mxu0
          %v5949 = vadd.f32 %v5836, %v5948
          %v5950 = vpop.f32.mrb[0].mxu0
          %v5951 = vadd.f32 %v5838, %v5950
          %5952 = vmatprep.mubr.bf16.mxu0 %v4962
          %5953 = vmatmul.mubr.bf16.gmra.mrb[0].mxu0 %v4961
          %v5954 = vpop.f32.mrb[0].mxu0
          %v5955 = vadd.f32 %v5842, %v5954
          %v5956 = vpop.f32.mrb[0].mxu0
          %v5957 = vadd.f32 %v5844, %v5956
          %v5958 = vpop.f32.mrb[0].mxu0
          %v5959 = vadd.f32 %v5846, %v5958
          %v5960 = vpop.f32.mrb[0].mxu0
          %v5961 = vadd.f32 %v5848, %v5960
          %5962 = vmatprep.mubr.bf16.mxu0 %v4970
          %5963 = vmatmul.mubr.bf16.gmra.mrb[0].mxu0 %v4969
          %v5964 = vpop.f32.mrb[0].mxu0
          %v5965 = vadd.f32 %v5852, %v5964
          %v5966 = vpop.f32.mrb[0].mxu0
          %v5967 = vadd.f32 %v5854, %v5966
          %v5968 = vpop.f32.mrb[0].mxu0
          %v5969 = vadd.f32 %v5856, %v5968
          %v5970 = vpop.f32.mrb[0].mxu0
          %v5971 = vadd.f32 %v5858, %v5970
          %5972 = vmatprep.mubr.bf16.mxu0 %v4978
          %5973 = vmatmul.mubr.bf16.gmra.mrb[0].mxu0 %v4977
          %v5974 = vpop.f32.mrb[0].mxu0
          %v5975 = vadd.f32 %v5862, %v5974
          %v5976 = vpop.f32.mrb[0].mxu0
          %v5977 = vadd.f32 %v5864, %v5976
          %v5978 = vpop.f32.mrb[0].mxu0
          %v5979 = vadd.f32 %v5866, %v5978
          %v5980 = vpop.f32.mrb[0].mxu0
          %v5981 = vadd.f32 %v5868, %v5980
          %5982 = vmatprep.mubr.bf16.mxu0 %v4986
          %5983 = vmatmul.mubr.bf16.gmra.mrb[0].mxu0 %v4985
          %v5984 = vpop.f32.mrb[0].mxu0
          %v5985 = vadd.f32 %v5872, %v5984
          %v5986 = vpop.f32.mrb[0].mxu0
          %v5987 = vadd.f32 %v5874, %v5986
          %v5988 = vpop.f32.mrb[0].mxu0
          %v5989 = vadd.f32 %v5876, %v5988
          %v5990 = vpop.f32.mrb[0].mxu0
          %v5991 = vadd.f32 %v5878, %v5990
          %5992 = vmatprep.mubr.bf16.mxu0 %v4994
          %5993 = vmatmul.mubr.bf16.gmra.mrb[0].mxu0 %v4993
          %v5994 = vpop.f32.mrb[0].mxu0
          %v5995 = vadd.f32 %v5882, %v5994
          %v5996 = vpop.f32.mrb[0].mxu0
          %v5997 = vadd.f32 %v5884, %v5996
          %v5998 = vpop.f32.mrb[0].mxu0
          %v5999 = vadd.f32 %v5886, %v5998
          %v6000 = vpop.f32.mrb[0].mxu0
          %v6001 = vadd.f32 %v5888, %v6000
          %6002 = vmatprep.mubr.bf16.mxu0 %v5002
          %6003 = vmatmul.mubr.bf16.gmra.mrb[0].mxu0 %v5001
          %v6004 = vpop.f32.mrb[0].mxu0
          %v6005 = vadd.f32 %v5892, %v6004
          %v6006 = vpop.f32.mrb[0].mxu0
          %v6007 = vadd.f32 %v5894, %v6006
          %v6008 = vpop.f32.mrb[0].mxu0
          %v6009 = vadd.f32 %v5896, %v6008
          %v6010 = vpop.f32.mrb[0].mxu0
          %v6011 = vadd.f32 %v5898, %v6010
          %6012 = vdwg.mxu0
          %6013 = vmatprep.subr.bf16.mxu0 %v5596
          %6014 = vmatpush1.bf16.msra.mxu0 %v5595
          %6015 = vmatprep.subr.bf16.mxu0 %v5598
          %6016 = vmatpush1.bf16.msra.mxu0 %v5597
          %6017 = vmatprep.subr.bf16.mxu0 %v5600
          %6018 = vmatpush1.bf16.msra.mxu0 %v5599
          %6019 = vmatprep.subr.bf16.mxu0 %v5602
          %6020 = vmatpush1.bf16.msra.mxu0 %v5601
          %6021 = vmatprep.subr.bf16.mxu0 %v5604
          %6022 = vmatpush1.bf16.msra.mxu0 %v5603
          %6023 = vmatprep.subr.bf16.mxu0 %v5606
          %6024 = vmatpush1.bf16.msra.mxu0 %v5605
          %6025 = vmatprep.subr.bf16.mxu0 %v5608
          %6026 = vmatpush1.bf16.msra.mxu0 %v5607
          %6027 = vmatprep.subr.bf16.mxu0 %v5610
          %6028 = vmatpush1.bf16.msra.mxu0 %v5609
          %6029 = vmatprep.subr.bf16.mxu0 %v5612
          %6030 = vmatpush1.bf16.msra.mxu0 %v5611
          %6031 = vmatprep.subr.bf16.mxu0 %v5614
          %6032 = vmatpush1.bf16.msra.mxu0 %v5613
          %6033 = vmatprep.subr.bf16.mxu0 %v5616
          %6034 = vmatpush1.bf16.msra.mxu0 %v5615
          %6035 = vmatprep.subr.bf16.mxu0 %v5618
          %6036 = vmatpush1.bf16.msra.mxu0 %v5617
          %6037 = vmatprep.subr.bf16.mxu0 %v5620
          %6038 = vmatpush1.bf16.msra.mxu0 %v5619
          %6039 = vmatprep.subr.bf16.mxu0 %v5622
          %6040 = vmatpush1.bf16.msra.mxu0 %v5621
          %6041 = vmatprep.subr.bf16.mxu0 %v5624
          %6042 = vmatpush1.bf16.msra.mxu0 %v5623
          %6043 = vmatprep.subr.bf16.mxu0 %v5626
          %6044 = vmatpush1.bf16.msra.mxu0 %v5625
          %6045 = vmatprep.mubr.bf16.mxu0 %v4948
          %6046 = vmatmul.mubr.bf16.gmra.mrb[0].mxu0 %v4947
          %v6047 = vpop.f32.mrb[0].mxu0
          %v6048 = vadd.f32 %v5935, %v6047
          %v6049 = vpop.f32.mrb[0].mxu0
          %v6050 = vadd.f32 %v5937, %v6049
          %v6051 = vpop.f32.mrb[0].mxu0
          %v6052 = vadd.f32 %v5939, %v6051
          %v6053 = vpop.f32.mrb[0].mxu0
          %v6054 = vadd.f32 %v5941, %v6053
          %6055 = vmatprep.mubr.bf16.mxu0 %v4956
          %6056 = vmatmul.mubr.bf16.gmra.mrb[0].mxu0 %v4955
          %v6057 = vpop.f32.mrb[0].mxu0
          %v6058 = vadd.f32 %v5945, %v6057
          %v6059 = vpop.f32.mrb[0].mxu0
          %v6060 = vadd.f32 %v5947, %v6059
          %v6061 = vpop.f32.mrb[0].mxu0
          %v6062 = vadd.f32 %v5949, %v6061
          %v6063 = vpop.f32.mrb[0].mxu0
          %v6064 = vadd.f32 %v5951, %v6063
          %6065 = vmatprep.mubr.bf16.mxu0 %v4964
          %6066 = vmatmul.mubr.bf16.gmra.mrb[0].mxu0 %v4963
          %v6067 = vpop.f32.mrb[0].mxu0
          %v6068 = vadd.f32 %v5955, %v6067
          %v6069 = vpop.f32.mrb[0].mxu0
          %v6070 = vadd.f32 %v5957, %v6069
          %v6071 = vpop.f32.mrb[0].mxu0
          %v6072 = vadd.f32 %v5959, %v6071
          %v6073 = vpop.f32.mrb[0].mxu0
          %v6074 = vadd.f32 %v5961, %v6073
          %6075 = vmatprep.mubr.bf16.mxu0 %v4972
          %6076 = vmatmul.mubr.bf16.gmra.mrb[0].mxu0 %v4971
          %v6077 = vpop.f32.mrb[0].mxu0
          %v6078 = vadd.f32 %v5965, %v6077
          %v6079 = vpop.f32.mrb[0].mxu0
          %v6080 = vadd.f32 %v5967, %v6079
          %v6081 = vpop.f32.mrb[0].mxu0
          %v6082 = vadd.f32 %v5969, %v6081
          %v6083 = vpop.f32.mrb[0].mxu0
          %v6084 = vadd.f32 %v5971, %v6083
          %6085 = vmatprep.mubr.bf16.mxu0 %v4980
          %6086 = vmatmul.mubr.bf16.gmra.mrb[0].mxu0 %v4979
          %v6087 = vpop.f32.mrb[0].mxu0
          %v6088 = vadd.f32 %v5975, %v6087
          %v6089 = vpop.f32.mrb[0].mxu0
          %v6090 = vadd.f32 %v5977, %v6089
          %v6091 = vpop.f32.mrb[0].mxu0
          %v6092 = vadd.f32 %v5979, %v6091
          %v6093 = vpop.f32.mrb[0].mxu0
          %v6094 = vadd.f32 %v5981, %v6093
          %6095 = vmatprep.mubr.bf16.mxu0 %v4988
          %6096 = vmatmul.mubr.bf16.gmra.mrb[0].mxu0 %v4987
          %v6097 = vpop.f32.mrb[0].mxu0
          %v6098 = vadd.f32 %v5985, %v6097
          %v6099 = vpop.f32.mrb[0].mxu0
          %v6100 = vadd.f32 %v5987, %v6099
          %v6101 = vpop.f32.mrb[0].mxu0
          %v6102 = vadd.f32 %v5989, %v6101
          %v6103 = vpop.f32.mrb[0].mxu0
          %v6104 = vadd.f32 %v5991, %v6103
          %6105 = vmatprep.mubr.bf16.mxu0 %v4996
          %6106 = vmatmul.mubr.bf16.gmra.mrb[0].mxu0 %v4995
          %v6107 = vpop.f32.mrb[0].mxu0
          %v6108 = vadd.f32 %v5995, %v6107
          %v6109 = vpop.f32.mrb[0].mxu0
          %v6110 = vadd.f32 %v5997, %v6109
          %v6111 = vpop.f32.mrb[0].mxu0
          %v6112 = vadd.f32 %v5999, %v6111
          %v6113 = vpop.f32.mrb[0].mxu0
          %v6114 = vadd.f32 %v6001, %v6113
          %6115 = vmatprep.mubr.bf16.mxu0 %v5004
          %6116 = vmatmul.mubr.bf16.gmra.mrb[0].mxu0 %v5003
          %v6117 = vpop.f32.mrb[0].mxu0
          %v6118 = vadd.f32 %v6005, %v6117
          %v6119 = vpop.f32.mrb[0].mxu0
          %v6120 = vadd.f32 %v6007, %v6119
          %v6121 = vpop.f32.mrb[0].mxu0
          %v6122 = vadd.f32 %v6009, %v6121
          %v6123 = vpop.f32.mrb[0].mxu0
          %v6124 = vadd.f32 %v6011, %v6123
          %6125 = vdwg.mxu0
          %6126 = vmatprep.subr.bf16.mxu0 %v5628
          %6127 = vmatpush1.bf16.msra.mxu0 %v5627
          %6128 = vmatprep.subr.bf16.mxu0 %v5630
          %6129 = vmatpush1.bf16.msra.mxu0 %v5629
          %6130 = vmatprep.subr.bf16.mxu0 %v5632
          %6131 = vmatpush1.bf16.msra.mxu0 %v5631
          %6132 = vmatprep.subr.bf16.mxu0 %v5634
          %6133 = vmatpush1.bf16.msra.mxu0 %v5633
          %6134 = vmatprep.subr.bf16.mxu0 %v5636
          %6135 = vmatpush1.bf16.msra.mxu0 %v5635
          %6136 = vmatprep.subr.bf16.mxu0 %v5638
          %6137 = vmatpush1.bf16.msra.mxu0 %v5637
          %6138 = vmatprep.subr.bf16.mxu0 %v5640
          %6139 = vmatpush1.bf16.msra.mxu0 %v5639
          %6140 = vmatprep.subr.bf16.mxu0 %v5642
          %6141 = vmatpush1.bf16.msra.mxu0 %v5641
          %6142 = vmatprep.subr.bf16.mxu0 %v5644
          %6143 = vmatpush1.bf16.msra.mxu0 %v5643
          %6144 = vmatprep.subr.bf16.mxu0 %v5646
          %6145 = vmatpush1.bf16.msra.mxu0 %v5645
          %6146 = vmatprep.subr.bf16.mxu0 %v5648
          %6147 = vmatpush1.bf16.msra.mxu0 %v5647
          %6148 = vmatprep.subr.bf16.mxu0 %v5650
          %6149 = vmatpush1.bf16.msra.mxu0 %v5649
          %6150 = vmatprep.subr.bf16.mxu0 %v5652
          %6151 = vmatpush1.bf16.msra.mxu0 %v5651
          %6152 = vmatprep.subr.bf16.mxu0 %v5654
          %6153 = vmatpush1.bf16.msra.mxu0 %v5653
          %6154 = vmatprep.subr.bf16.mxu0 %v5656
          %6155 = vmatpush1.bf16.msra.mxu0 %v5655
          %6156 = vmatprep.subr.bf16.mxu0 %v5658
          %6157 = vmatpush1.bf16.msra.mxu0 %v5657
          %6158 = vmatprep.mubr.bf16.mxu0 %v4950
          %6159 = vmatmul.mubr.bf16.gmra.mrb[0].mxu0 %v4949
          %v6160 = vpop.f32.mrb[0].mxu0
          %v6161 = vadd.f32 %v6048, %v6160
          %v6162 = vpop.f32.mrb[0].mxu0
          %v6163 = vadd.f32 %v6050, %v6162
          %v6164 = vpop.f32.mrb[0].mxu0
          %v6165 = vadd.f32 %v6052, %v6164
          %v6166 = vpop.f32.mrb[0].mxu0
          %v6167 = vadd.f32 %v6054, %v6166
          %6168 = vmatprep.mubr.bf16.mxu0 %v4958
          %6169 = vmatmul.mubr.bf16.gmra.mrb[0].mxu0 %v4957
          %v6170 = vpop.f32.mrb[0].mxu0
          %v6171 = vadd.f32 %v6058, %v6170
          %v6172 = vpop.f32.mrb[0].mxu0
          %v6173 = vadd.f32 %v6060, %v6172
          %v6174 = vpop.f32.mrb[0].mxu0
          %v6175 = vadd.f32 %v6062, %v6174
          %v6176 = vpop.f32.mrb[0].mxu0
          %v6177 = vadd.f32 %v6064, %v6176
          %6178 = vmatprep.mubr.bf16.mxu0 %v4966
          %6179 = vmatmul.mubr.bf16.gmra.mrb[0].mxu0 %v4965
          %v6180 = vpop.f32.mrb[0].mxu0
          %v6181 = vadd.f32 %v6068, %v6180
          %v6182 = vpop.f32.mrb[0].mxu0
          %v6183 = vadd.f32 %v6070, %v6182
          %v6184 = vpop.f32.mrb[0].mxu0
          %v6185 = vadd.f32 %v6072, %v6184
          %v6186 = vpop.f32.mrb[0].mxu0
          %v6187 = vadd.f32 %v6074, %v6186
          %6188 = vmatprep.mubr.bf16.mxu0 %v4974
          %6189 = vmatmul.mubr.bf16.gmra.mrb[0].mxu0 %v4973
          %v6190 = vpop.f32.mrb[0].mxu0
          %v6191 = vadd.f32 %v6078, %v6190
          %v6192 = vpop.f32.mrb[0].mxu0
          %v6193 = vadd.f32 %v6080, %v6192
          %v6194 = vpop.f32.mrb[0].mxu0
          %v6195 = vadd.f32 %v6082, %v6194
          %v6196 = vpop.f32.mrb[0].mxu0
          %v6197 = vadd.f32 %v6084, %v6196
          %6198 = vmatprep.mubr.bf16.mxu0 %v4982
          %6199 = vmatmul.mubr.bf16.gmra.mrb[0].mxu0 %v4981
          %v6200 = vpop.f32.mrb[0].mxu0
          %v6201 = vadd.f32 %v6088, %v6200
          %v6202 = vpop.f32.mrb[0].mxu0
          %v6203 = vadd.f32 %v6090, %v6202
          %v6204 = vpop.f32.mrb[0].mxu0
          %v6205 = vadd.f32 %v6092, %v6204
          %v6206 = vpop.f32.mrb[0].mxu0
          %v6207 = vadd.f32 %v6094, %v6206
          %6208 = vmatprep.mubr.bf16.mxu0 %v4990
          %6209 = vmatmul.mubr.bf16.gmra.mrb[0].mxu0 %v4989
          %v6210 = vpop.f32.mrb[0].mxu0
          %v6211 = vadd.f32 %v6098, %v6210
          %v6212 = vpop.f32.mrb[0].mxu0
          %v6213 = vadd.f32 %v6100, %v6212
          %v6214 = vpop.f32.mrb[0].mxu0
          %v6215 = vadd.f32 %v6102, %v6214
          %v6216 = vpop.f32.mrb[0].mxu0
          %v6217 = vadd.f32 %v6104, %v6216
          %6218 = vmatprep.mubr.bf16.mxu0 %v4998
          %6219 = vmatmul.mubr.bf16.gmra.mrb[0].mxu0 %v4997
          %v6220 = vpop.f32.mrb[0].mxu0
          %v6221 = vadd.f32 %v6108, %v6220
          %v6222 = vpop.f32.mrb[0].mxu0
          %v6223 = vadd.f32 %v6110, %v6222
          %v6224 = vpop.f32.mrb[0].mxu0
          %v6225 = vadd.f32 %v6112, %v6224
          %v6226 = vpop.f32.mrb[0].mxu0
          %v6227 = vadd.f32 %v6114, %v6226
          %6228 = vmatprep.mubr.bf16.mxu0 %v5006
          %6229 = vmatmul.mubr.bf16.gmra.mrb[0].mxu0 %v5005
          %v6230 = vpop.f32.mrb[0].mxu0
          %v6231 = vadd.f32 %v6118, %v6230
          %v6232 = vpop.f32.mrb[0].mxu0
          %v6233 = vadd.f32 %v6120, %v6232
          %v6234 = vpop.f32.mrb[0].mxu0
          %v6235 = vadd.f32 %v6122, %v6234
          %v6236 = vpop.f32.mrb[0].mxu0
          %v6237 = vadd.f32 %v6124, %v6236
          %6238 = vdwg.mxu0
          %v6239 = vadd.f32 %v6161, %v2481
          %v6240 = vadd.f32 %v6163, %v2482
          %v6241 = vadd.f32 %v6165, %v2483
          %v6242 = vadd.f32 %v6167, %v2484
          %v6243 = vadd.f32 %v6171, %v2485
          %v6244 = vadd.f32 %v6173, %v2486
          %v6245 = vadd.f32 %v6175, %v2487
          %v6246 = vadd.f32 %v6177, %v2488
          %v6247 = vadd.f32 %v6181, %v2489
          %v6248 = vadd.f32 %v6183, %v2490
          %v6249 = vadd.f32 %v6185, %v2491
          %v6250 = vadd.f32 %v6187, %v2492
          %v6251 = vadd.f32 %v6191, %v2493
          %v6252 = vadd.f32 %v6193, %v2494
          %v6253 = vadd.f32 %v6195, %v2495
          %v6254 = vadd.f32 %v6197, %v2496
          %v6255 = vadd.f32 %v6201, %v2497
          %v6256 = vadd.f32 %v6203, %v2498
          %v6257 = vadd.f32 %v6205, %v2499
          %v6258 = vadd.f32 %v6207, %v2500
          %v6259 = vadd.f32 %v6211, %v2501
          %v6260 = vadd.f32 %v6213, %v2502
          %v6261 = vadd.f32 %v6215, %v2503
          %v6262 = vadd.f32 %v6217, %v2504
          %v6263 = vadd.f32 %v6221, %v2505
          %v6264 = vadd.f32 %v6223, %v2506
          %v6265 = vadd.f32 %v6225, %v2507
          %v6266 = vadd.f32 %v6227, %v2508
          %v6267 = vadd.f32 %v6231, %v2509
          %v6268 = vadd.f32 %v6233, %v2510
          %v6269 = vadd.f32 %v6235, %v2511
          %v6270 = vadd.f32 %v6237, %v2512
          %v6271 = vadd.f32 %v6239, %v6240
          %6272 = vadd.xlane.f32.xlu0 %v6271
          %v6273 = vpop.xlane.xlu0 %6272
          %v6274 = vadd.f32 %v6241, %v6242
          %6275 = vadd.xlane.f32.xlu0 %v6274
          %v6276 = vpop.xlane.xlu0 %6275
          %v6277 = vadd.f32 %v6243, %v6244
          %6278 = vadd.xlane.f32.xlu0 %v6277
          %v6279 = vpop.xlane.xlu0 %6278
          %v6280 = vadd.f32 %v6245, %v6246
          %6281 = vadd.xlane.f32.xlu0 %v6280
          %v6282 = vpop.xlane.xlu0 %6281
          %v6283 = vadd.f32 %v6247, %v6248
          %6284 = vadd.xlane.f32.xlu0 %v6283
          %v6285 = vpop.xlane.xlu0 %6284
          %v6286 = vadd.f32 %v6249, %v6250
          %6287 = vadd.xlane.f32.xlu0 %v6286
          %v6288 = vpop.xlane.xlu0 %6287
          %v6289 = vadd.f32 %v6251, %v6252
          %6290 = vadd.xlane.f32.xlu0 %v6289
          %v6291 = vpop.xlane.xlu0 %6290
          %v6292 = vadd.f32 %v6253, %v6254
          %6293 = vadd.xlane.f32.xlu0 %v6292
          %v6294 = vpop.xlane.xlu0 %6293
          %v6295 = vadd.f32 %v6255, %v6256
          %6296 = vadd.xlane.f32.xlu0 %v6295
          %v6297 = vpop.xlane.xlu0 %6296
          %v6298 = vadd.f32 %v6257, %v6258
          %6299 = vadd.xlane.f32.xlu0 %v6298
          %v6300 = vpop.xlane.xlu0 %6299
          %v6301 = vadd.f32 %v6259, %v6260
          %6302 = vadd.xlane.f32.xlu0 %v6301
          %v6303 = vpop.xlane.xlu0 %6302
          %v6304 = vadd.f32 %v6261, %v6262
          %6305 = vadd.xlane.f32.xlu0 %v6304
          %v6306 = vpop.xlane.xlu0 %6305
          %v6307 = vadd.f32 %v6263, %v6264
          %6308 = vadd.xlane.f32.xlu0 %v6307
          %v6309 = vpop.xlane.xlu0 %6308
          %v6310 = vadd.f32 %v6265, %v6266
          %6311 = vadd.xlane.f32.xlu0 %v6310
          %v6312 = vpop.xlane.xlu0 %6311
          %v6313 = vadd.f32 %v6267, %v6268
          %6314 = vadd.xlane.f32.xlu0 %v6313
          %v6315 = vpop.xlane.xlu0 %6314
          %v6316 = vadd.f32 %v6269, %v6270
          %6317 = vadd.xlane.f32.xlu0 %v6316
          %v6318 = vpop.xlane.xlu0 %6317
          %v6319 = vmul.f32 %v6273, %v2216
          %v6320 = vmul.f32 %v6276, %v2216
          %v6321 = vmul.f32 %v6279, %v2216
          %v6322 = vmul.f32 %v6282, %v2216
          %v6323 = vmul.f32 %v6285, %v2216
          %v6324 = vmul.f32 %v6288, %v2216
          %v6325 = vmul.f32 %v6291, %v2216
          %v6326 = vmul.f32 %v6294, %v2216
          %v6327 = vmul.f32 %v6297, %v2216
          %v6328 = vmul.f32 %v6300, %v2216
          %v6329 = vmul.f32 %v6303, %v2216
          %v6330 = vmul.f32 %v6306, %v2216
          %v6331 = vmul.f32 %v6309, %v2216
          %v6332 = vmul.f32 %v6312, %v2216
          %v6333 = vmul.f32 %v6315, %v2216
          %v6334 = vmul.f32 %v6318, %v2216
          %v6335 = vsub.f32 %v6239, %v6319
          %v6336 = vsub.f32 %v6240, %v6319
          %v6337 = vsub.f32 %v6241, %v6320
          %v6338 = vsub.f32 %v6242, %v6320
          %v6339 = vsub.f32 %v6243, %v6321
          %v6340 = vsub.f32 %v6244, %v6321
          %v6341 = vsub.f32 %v6245, %v6322
          %v6342 = vsub.f32 %v6246, %v6322
          %v6343 = vsub.f32 %v6247, %v6323
          %v6344 = vsub.f32 %v6248, %v6323
          %v6345 = vsub.f32 %v6249, %v6324
          %v6346 = vsub.f32 %v6250, %v6324
          %v6347 = vsub.f32 %v6251, %v6325
          %v6348 = vsub.f32 %v6252, %v6325
          %v6349 = vsub.f32 %v6253, %v6326
          %v6350 = vsub.f32 %v6254, %v6326
          %v6351 = vsub.f32 %v6255, %v6327
          %v6352 = vsub.f32 %v6256, %v6327
          %v6353 = vsub.f32 %v6257, %v6328
          %v6354 = vsub.f32 %v6258, %v6328
          %v6355 = vsub.f32 %v6259, %v6329
          %v6356 = vsub.f32 %v6260, %v6329
          %v6357 = vsub.f32 %v6261, %v6330
          %v6358 = vsub.f32 %v6262, %v6330
          %v6359 = vsub.f32 %v6263, %v6331
          %v6360 = vsub.f32 %v6264, %v6331
          %v6361 = vsub.f32 %v6265, %v6332
          %v6362 = vsub.f32 %v6266, %v6332
          %v6363 = vsub.f32 %v6267, %v6333
          %v6364 = vsub.f32 %v6268, %v6333
          %v6365 = vsub.f32 %v6269, %v6334
          %v6366 = vsub.f32 %v6270, %v6334
          %v6367 = vmul.f32 %v6335, %v6335
          %v6368 = vmul.f32 %v6336, %v6336
          %v6369 = vmul.f32 %v6337, %v6337
          %v6370 = vmul.f32 %v6338, %v6338
          %v6371 = vmul.f32 %v6339, %v6339
          %v6372 = vmul.f32 %v6340, %v6340
          %v6373 = vmul.f32 %v6341, %v6341
          %v6374 = vmul.f32 %v6342, %v6342
          %v6375 = vmul.f32 %v6343, %v6343
          %v6376 = vmul.f32 %v6344, %v6344
          %v6377 = vmul.f32 %v6345, %v6345
          %v6378 = vmul.f32 %v6346, %v6346
          %v6379 = vmul.f32 %v6347, %v6347
          %v6380 = vmul.f32 %v6348, %v6348
          %v6381 = vmul.f32 %v6349, %v6349
          %v6382 = vmul.f32 %v6350, %v6350
          %v6383 = vmul.f32 %v6351, %v6351
          %v6384 = vmul.f32 %v6352, %v6352
          %v6385 = vmul.f32 %v6353, %v6353
          %v6386 = vmul.f32 %v6354, %v6354
          %v6387 = vmul.f32 %v6355, %v6355
          %v6388 = vmul.f32 %v6356, %v6356
          %v6389 = vmul.f32 %v6357, %v6357
          %v6390 = vmul.f32 %v6358, %v6358
          %v6391 = vmul.f32 %v6359, %v6359
          %v6392 = vmul.f32 %v6360, %v6360
          %v6393 = vmul.f32 %v6361, %v6361
          %v6394 = vmul.f32 %v6362, %v6362
          %v6395 = vmul.f32 %v6363, %v6363
          %v6396 = vmul.f32 %v6364, %v6364
          %v6397 = vmul.f32 %v6365, %v6365
          %v6398 = vmul.f32 %v6366, %v6366
          %v6399 = vadd.f32 %v6367, %v6368
          %6400 = vadd.xlane.f32.xlu0 %v6399
          %v6401 = vpop.xlane.xlu0 %6400
          %v6402 = vadd.f32 %v6369, %v6370
          %6403 = vadd.xlane.f32.xlu0 %v6402
          %v6404 = vpop.xlane.xlu0 %6403
          %v6405 = vadd.f32 %v6371, %v6372
          %6406 = vadd.xlane.f32.xlu0 %v6405
          %v6407 = vpop.xlane.xlu0 %6406
          %v6408 = vadd.f32 %v6373, %v6374
          %6409 = vadd.xlane.f32.xlu0 %v6408
          %v6410 = vpop.xlane.xlu0 %6409
          %v6411 = vadd.f32 %v6375, %v6376
          %6412 = vadd.xlane.f32.xlu0 %v6411
          %v6413 = vpop.xlane.xlu0 %6412
          %v6414 = vadd.f32 %v6377, %v6378
          %6415 = vadd.xlane.f32.xlu0 %v6414
          %v6416 = vpop.xlane.xlu0 %6415
          %v6417 = vadd.f32 %v6379, %v6380
          %6418 = vadd.xlane.f32.xlu0 %v6417
          %v6419 = vpop.xlane.xlu0 %6418
          %v6420 = vadd.f32 %v6381, %v6382
          %6421 = vadd.xlane.f32.xlu0 %v6420
          %v6422 = vpop.xlane.xlu0 %6421
          %v6423 = vadd.f32 %v6383, %v6384
          %6424 = vadd.xlane.f32.xlu0 %v6423
          %v6425 = vpop.xlane.xlu0 %6424
          %v6426 = vadd.f32 %v6385, %v6386
          %6427 = vadd.xlane.f32.xlu0 %v6426
          %v6428 = vpop.xlane.xlu0 %6427
          %v6429 = vadd.f32 %v6387, %v6388
          %6430 = vadd.xlane.f32.xlu0 %v6429
          %v6431 = vpop.xlane.xlu0 %6430
          %v6432 = vadd.f32 %v6389, %v6390
          %6433 = vadd.xlane.f32.xlu0 %v6432
          %v6434 = vpop.xlane.xlu0 %6433
          %v6435 = vadd.f32 %v6391, %v6392
          %6436 = vadd.xlane.f32.xlu0 %v6435
          %v6437 = vpop.xlane.xlu0 %6436
          %v6438 = vadd.f32 %v6393, %v6394
          %6439 = vadd.xlane.f32.xlu0 %v6438
          %v6440 = vpop.xlane.xlu0 %6439
          %v6441 = vadd.f32 %v6395, %v6396
          %6442 = vadd.xlane.f32.xlu0 %v6441
          %v6443 = vpop.xlane.xlu0 %6442
          %v6444 = vadd.f32 %v6397, %v6398
          %6445 = vadd.xlane.f32.xlu0 %v6444
          %v6446 = vpop.xlane.xlu0 %6445
          %v6447 = vmul.f32 %v6401, %v2216
          %v6448 = vmul.f32 %v6404, %v2216
          %v6449 = vmul.f32 %v6407, %v2216
          %v6450 = vmul.f32 %v6410, %v2216
          %v6451 = vmul.f32 %v6413, %v2216
          %v6452 = vmul.f32 %v6416, %v2216
          %v6453 = vmul.f32 %v6419, %v2216
          %v6454 = vmul.f32 %v6422, %v2216
          %v6455 = vmul.f32 %v6425, %v2216
          %v6456 = vmul.f32 %v6428, %v2216
          %v6457 = vmul.f32 %v6431, %v2216
          %v6458 = vmul.f32 %v6434, %v2216
          %v6459 = vmul.f32 %v6437, %v2216
          %v6460 = vmul.f32 %v6440, %v2216
          %v6461 = vmul.f32 %v6443, %v2216
          %v6462 = vmul.f32 %v6446, %v2216
          %v6463 = vadd.f32 %v6447, 1e-12
          %v6464 = vadd.f32 %v6448, 1e-12
          %v6465 = vadd.f32 %v6449, 1e-12
          %v6466 = vadd.f32 %v6450, 1e-12
          %v6467 = vadd.f32 %v6451, 1e-12
          %v6468 = vadd.f32 %v6452, 1e-12
          %v6469 = vadd.f32 %v6453, 1e-12
          %v6470 = vadd.f32 %v6454, 1e-12
          %v6471 = vadd.f32 %v6455, 1e-12
          %v6472 = vadd.f32 %v6456, 1e-12
          %v6473 = vadd.f32 %v6457, 1e-12
          %v6474 = vadd.f32 %v6458, 1e-12
          %v6475 = vadd.f32 %v6459, 1e-12
          %v6476 = vadd.f32 %v6460, 1e-12
          %v6477 = vadd.f32 %v6461, 1e-12
          %v6478 = vadd.f32 %v6462, 1e-12
          %v6479 = vrsqrt.pop %v6463
          %v6480 = vrsqrt.pop %v6464
          %v6481 = vrsqrt.pop %v6465
          %v6482 = vrsqrt.pop %v6466
          %v6483 = vrsqrt.pop %v6467
          %v6484 = vrsqrt.pop %v6468
          %v6485 = vrsqrt.pop %v6469
          %v6486 = vrsqrt.pop %v6470
          %v6487 = vrsqrt.pop %v6471
          %v6488 = vrsqrt.pop %v6472
          %v6489 = vrsqrt.pop %v6473
          %v6490 = vrsqrt.pop %v6474
          %v6491 = vrsqrt.pop %v6475
          %v6492 = vrsqrt.pop %v6476
          %v6493 = vrsqrt.pop %v6477
          %v6494 = vrsqrt.pop %v6478
          %v6495 = vmul.f32 %v6335, %v6479
          %v6496 = vmul.f32 %v6336, %v6479
          %v6497 = vmul.f32 %v6337, %v6480
          %v6498 = vmul.f32 %v6338, %v6480
          %v6499 = vmul.f32 %v6339, %v6481
          %v6500 = vmul.f32 %v6340, %v6481
          %v6501 = vmul.f32 %v6341, %v6482
          %v6502 = vmul.f32 %v6342, %v6482
          %v6503 = vmul.f32 %v6343, %v6483
          %v6504 = vmul.f32 %v6344, %v6483
          %v6505 = vmul.f32 %v6345, %v6484
          %v6506 = vmul.f32 %v6346, %v6484
          %v6507 = vmul.f32 %v6347, %v6485
          %v6508 = vmul.f32 %v6348, %v6485
          %v6509 = vmul.f32 %v6349, %v6486
          %v6510 = vmul.f32 %v6350, %v6486
          %v6511 = vmul.f32 %v6351, %v6487
          %v6512 = vmul.f32 %v6352, %v6487
          %v6513 = vmul.f32 %v6353, %v6488
          %v6514 = vmul.f32 %v6354, %v6488
          %v6515 = vmul.f32 %v6355, %v6489
          %v6516 = vmul.f32 %v6356, %v6489
          %v6517 = vmul.f32 %v6357, %v6490
          %v6518 = vmul.f32 %v6358, %v6490
          %v6519 = vmul.f32 %v6359, %v6491
          %v6520 = vmul.f32 %v6360, %v6491
          %v6521 = vmul.f32 %v6361, %v6492
          %v6522 = vmul.f32 %v6362, %v6492
          %v6523 = vmul.f32 %v6363, %v6493
          %v6524 = vmul.f32 %v6364, %v6493
          %v6525 = vmul.f32 %v6365, %v6494
          %v6526 = vmul.f32 %v6366, %v6494
          %v6527 = vld [vmem:[%s12] sm:$0x3]
          %v6529 = vlaneseq
          %v6530 = vshrl.u32 %v6529, 7
          %v6531 = vsub.s32 0, %v6530
          %v6532 = vrot.slane %v6527, %v6531
          %v6533 = vlaneseq
          %v6534 = vshrl.u32 %v6533, 7
          %v6535 = vsub.s32 1, %v6534
          %v6536 = vrot.slane %v6527, %v6535
          %v6539 = vmul.f32 %v6495, %v6532
          %v6540 = vmul.f32 %v6496, %v6536
          %v6541 = vmul.f32 %v6497, %v6532
          %v6542 = vmul.f32 %v6498, %v6536
          %v6543 = vmul.f32 %v6499, %v6532
          %v6544 = vmul.f32 %v6500, %v6536
          %v6545 = vmul.f32 %v6501, %v6532
          %v6546 = vmul.f32 %v6502, %v6536
          %v6547 = vmul.f32 %v6503, %v6532
          %v6548 = vmul.f32 %v6504, %v6536
          %v6549 = vmul.f32 %v6505, %v6532
          %v6550 = vmul.f32 %v6506, %v6536
          %v6551 = vmul.f32 %v6507, %v6532
          %v6552 = vmul.f32 %v6508, %v6536
          %v6553 = vmul.f32 %v6509, %v6532
          %v6554 = vmul.f32 %v6510, %v6536
          %v6555 = vmul.f32 %v6511, %v6532
          %v6556 = vmul.f32 %v6512, %v6536
          %v6557 = vmul.f32 %v6513, %v6532
          %v6558 = vmul.f32 %v6514, %v6536
          %v6559 = vmul.f32 %v6515, %v6532
          %v6560 = vmul.f32 %v6516, %v6536
          %v6561 = vmul.f32 %v6517, %v6532
          %v6562 = vmul.f32 %v6518, %v6536
          %v6563 = vmul.f32 %v6519, %v6532
          %v6564 = vmul.f32 %v6520, %v6536
          %v6565 = vmul.f32 %v6521, %v6532
          %v6566 = vmul.f32 %v6522, %v6536
          %v6567 = vmul.f32 %v6523, %v6532
          %v6568 = vmul.f32 %v6524, %v6536
          %v6569 = vmul.f32 %v6525, %v6532
          %v6570 = vmul.f32 %v6526, %v6536
          %v6571 = vld [vmem:[%s13] sm:$0x3]
          %v6573 = vlaneseq
          %v6574 = vshrl.u32 %v6573, 7
          %v6575 = vsub.s32 0, %v6574
          %v6576 = vrot.slane %v6571, %v6575
          %v6577 = vlaneseq
          %v6578 = vshrl.u32 %v6577, 7
          %v6579 = vsub.s32 1, %v6578
          %v6580 = vrot.slane %v6571, %v6579
          %v6583 = vadd.f32 %v6539, %v6576
          %v6584 = vadd.f32 %v6540, %v6580
          %v6585 = vadd.f32 %v6541, %v6576
          %v6586 = vadd.f32 %v6542, %v6580
          %v6587 = vadd.f32 %v6543, %v6576
          %v6588 = vadd.f32 %v6544, %v6580
          %v6589 = vadd.f32 %v6545, %v6576
          %v6590 = vadd.f32 %v6546, %v6580
          %v6591 = vadd.f32 %v6547, %v6576
          %v6592 = vadd.f32 %v6548, %v6580
          %v6593 = vadd.f32 %v6549, %v6576
          %v6594 = vadd.f32 %v6550, %v6580
          %v6595 = vadd.f32 %v6551, %v6576
          %v6596 = vadd.f32 %v6552, %v6580
          %v6597 = vadd.f32 %v6553, %v6576
          %v6598 = vadd.f32 %v6554, %v6580
          %v6599 = vadd.f32 %v6555, %v6576
          %v6600 = vadd.f32 %v6556, %v6580
          %v6601 = vadd.f32 %v6557, %v6576
          %v6602 = vadd.f32 %v6558, %v6580
          %v6603 = vadd.f32 %v6559, %v6576
          %v6604 = vadd.f32 %v6560, %v6580
          %v6605 = vadd.f32 %v6561, %v6576
          %v6606 = vadd.f32 %v6562, %v6580
          %v6607 = vadd.f32 %v6563, %v6576
          %v6608 = vadd.f32 %v6564, %v6580
          %v6609 = vadd.f32 %v6565, %v6576
          %v6610 = vadd.f32 %v6566, %v6580
          %v6611 = vadd.f32 %v6567, %v6576
          %v6612 = vadd.f32 %v6568, %v6580
          %v6613 = vadd.f32 %v6569, %v6576
          %v6614 = vadd.f32 %v6570, %v6580
          %6615 = vst [vmem:[%s567] sm:$0xff] %v6583
          %6616 = vst [vmem:[%s567 + $0x8] sm:$0xff] %v6584
          %6617 = vst [vmem:[%s567 + $0x10] sm:$0xff] %v6585
          %6618 = vst [vmem:[%s567 + $0x18] sm:$0xff] %v6586
          %6619 = vst [vmem:[%s567 + $0x20] sm:$0xff] %v6587
          %6620 = vst [vmem:[%s567 + $0x28] sm:$0xff] %v6588
          %6621 = vst [vmem:[%s567 + $0x30] sm:$0xff] %v6589
          %6622 = vst [vmem:[%s567 + $0x38] sm:$0xff] %v6590
          %6623 = vst [vmem:[%s567 + $0x40] sm:$0xff] %v6591
          %6624 = vst [vmem:[%s567 + $0x48] sm:$0xff] %v6592
          %6625 = vst [vmem:[%s567 + $0x50] sm:$0xff] %v6593
          %6626 = vst [vmem:[%s567 + $0x58] sm:$0xff] %v6594
          %6627 = vst [vmem:[%s567 + $0x60] sm:$0xff] %v6595
          %6628 = vst [vmem:[%s567 + $0x68] sm:$0xff] %v6596
          %6629 = vst [vmem:[%s567 + $0x70] sm:$0xff] %v6597
          %6630 = vst [vmem:[%s567 + $0x78] sm:$0xff] %v6598
          %6631 = vst [vmem:[%s567 + $0x80] sm:$0xff] %v6599
          %6632 = vst [vmem:[%s567 + $0x88] sm:$0xff] %v6600
          %6633 = vst [vmem:[%s567 + $0x90] sm:$0xff] %v6601
          %6634 = vst [vmem:[%s567 + $0x98] sm:$0xff] %v6602
          %6635 = vst [vmem:[%s567 + $0xa0] sm:$0xff] %v6603
          %6636 = vst [vmem:[%s567 + $0xa8] sm:$0xff] %v6604
          %6637 = vst [vmem:[%s567 + $0xb0] sm:$0xff] %v6605
          %6638 = vst [vmem:[%s567 + $0xb8] sm:$0xff] %v6606
          %6639 = vst [vmem:[%s567 + $0xc0] sm:$0xff] %v6607
          %6640 = vst [vmem:[%s567 + $0xc8] sm:$0xff] %v6608
          %6641 = vst [vmem:[%s567 + $0xd0] sm:$0xff] %v6609
          %6642 = vst [vmem:[%s567 + $0xd8] sm:$0xff] %v6610
          %6643 = vst [vmem:[%s567 + $0xe0] sm:$0xff] %v6611
          %6644 = vst [vmem:[%s567 + $0xe8] sm:$0xff] %v6612
          %6645 = vst [vmem:[%s567 + $0xf0] sm:$0xff] %v6613
          %6646 = vst [vmem:[%s567 + $0xf8] sm:$0xff] %v6614
        $region108: #{tpu_custom_call.1} parent=75 // pred_fallthru
          _
        %s6647 = sand.u32 %s353, 1
        %s6648 = scalar_lea.sflag [#allocation5], %s6647
        %s6649 = sand.u32 %s353, 1
        %s6650 = smul.addr %s6649, 256
        %s6651 = scalar_lea.vmem [#allocation14], %s6650
        // Predicated region
        $region109: #{tpu_custom_call.1} parent=75 // pred_check
          %p6652 = pneg %p363
        $region110: #{tpu_custom_call.1} parent=75 // pred_check_branch
          %6654 = sbr.rel (%p6652) target = $region112
        $region111: #{tpu_custom_call.1} parent=75 // pred_region
          %s6656 = ssub.s32 4096, 4096
          %6657 = vsyncadd %s6648, %s6656
          %s6658 = smul.addr %s38, 32
          %s6659 = smul.addr %s6658, 128
          %s6660 = scalar_lea.hbm %s14, %s6659
          %s6661 = sshll.u32 %s6651, 4
          %s6662 = int_to_ptr.vmem [resolvable:$true] %s6661
          %6667 = dma.vmem_to_hbm [thread:$0]  %s6662, 4096, %s6660, %s6648, 256, 256, 16
        $region112: #{tpu_custom_call.1} parent=75 // pred_fallthru
          _
      $region76: #{tpu_custom_call.1} parent=5 // pred_fallthru
        _
      %p6668 = scmp.le.s32.totalorder 2, %s29
      // Predicated region
      $region113: #{tpu_custom_call.1} parent=5 // pred_check
        %p6669 = pneg %p6668
      $region114: #{tpu_custom_call.1} parent=5 // pred_check_branch
        %6671 = sbr.rel (%p6669) target = $region116
      $region115: #{tpu_custom_call.1} parent=5 // pred_region
        %s6672 = ssub.s32 %s29, 2
        // Predicated region
        $region117: #{tpu_custom_call.1} parent=115 // pred_check
          %p6673 = pneg %p369
        $region118: #{tpu_custom_call.1} parent=115 // pred_check_branch
          %6675 = sbr.rel (%p6673) target = $region120
        $region119: #{tpu_custom_call.1} parent=115 // pred_region
          %s6676 = sand.u32 %s354, 1
          %s6677 = scalar_lea.sflag [#allocation5], %s6676
          %s6678 = sand.u32 %s354, 1
          %s6679 = smul.addr %s6678, 256
          %s6680 = scalar_lea.vmem [#allocation14], %s6679
          %6681 = dma.done %s6677, 4096
        $region120: #{tpu_custom_call.1} parent=115 // pred_fallthru
          _
      $region116: #{tpu_custom_call.1} parent=5 // pred_fallthru
        _
    $region6: #{tpu_custom_call.1} parent=1 // loop_footer
      %s33 = sadd.s32 1, %s29
    $region7: #{tpu_custom_call.1} parent=1 // loop_footer_branch
      %28 = sbr.rel target = $region3
    $region8: #{tpu_custom_call.1} parent=1 // loop_exit
      _
    %6682 = vsyncpa [#allocation4], 1
    %s6683 = scalar_lea.sflag [#allocation4], 1
    %6684 = vsyncpa %s6683, 1
    %6685 = vsyncpa [#allocation9], 1
    %6686 = vsyncpa [#allocation12], 1
    %6687 = vsyncpa [#allocation5], 1
    %s6688 = scalar_lea.sflag [#allocation5], 1
    %6689 = vsyncpa %s6688, 1
    %6690 = vsyncpa [#allocation6], 1
    %s6691 = scalar_lea.sflag [#allocation6], 1
    %6692 = vsyncpa %s6691, 1

</llo_original>
